<compile_context>
chip_gen: v7x
topology: tpu7x:2x2x1
jax: 0.10.0
libtpu: 0.0.40
codegen_flags: <defaults>
</compile_context>

<pallas_src>
import functools

import jax
import jax.numpy as jnp
from jax.experimental import pallas as pl
from jax.experimental.pallas import tpu as pltpu


_TAPS = tuple((dy, dx) for dy in range(3) for dx in range(3))
_C = 128  # every layer's channel count, zero-padded to one full lane width


def _fused_convnet_kernel(x_ref, w1_ref, b1_ref, w2_ref, b2_ref,
                          w3_ref, b3_ref, w4_ref, b4_ref,
                          out_ref, pad_ref, col_ref, *, B, H, W):
    """B images per grid step; all four conv layers fused, activations in VMEM.

    x_ref  : (B, H, W, 1)        f32  input images (channel-last, C == 1)
    wN_ref : (9*128, 128)        bf16 conv1..3 weights, taps+channels folded to K
    bN_ref : (1, 128)            f32  conv1..3 biases (zero-padded channels)
    w4_ref : (9, 128)            f32  conv4 per-tap channel vectors (zero-padded)
    b4_ref : (1,)                f32  conv4 bias (SMEM scalar)
    out_ref: (B, H, W, 1)        f32  final output
    pad_ref: (B, H+2, W+2, 128)  f32  zero-padded activation scratch (halo = pad 1)
    col_ref: (B, H, W, 9*128)    bf16 lane-dense im2col staging scratch
    """
    M = B * H * W
    K = 9 * _C

    # Zero the padded activation buffer. Only the 1-pixel halo must be zero
    # (interiors are fully rewritten below), but a full memset costs roughly the
    # same number of store ops as ring-only zeroing and stays correct when the
    # "parallel" grid axis is split across TensorCores (per-core scratch).
    pad_ref[...] = jnp.zeros_like(pad_ref)

    # Stage the single real input channel into channel 0 of the padded buffer.
    pad_ref[:, 1:H + 1, 1:W + 1, 0:1] = x_ref[...].astype(pad_ref.dtype)

    def stage_im2col():
        # col[b, h, w, t*128 + c] = act_padded[b, h+dy, w+dx, c]
        # Whole 128-lane slabs -> unmasked, lane-aligned stores; no per-tap
        # reshape of a non-contiguous slice (no materialized relayout).
        for t, (dy, dx) in enumerate(_TAPS):
            col_ref[:, :, :, t * _C:(t + 1) * _C] = (
                pad_ref[:, dy:dy + H, dx:dx + W, :].astype(jnp.bfloat16))

    def conv_relu_layer(w_ref, b_ref):
        # One big-K MXU matmul per layer: (B*H*W, 1152) x (1152, 128); the 3x3
        # taps and channels are folded into the contraction dim and the
        # accumulation stays in f32 inside the MXU.
        stage_im2col()
        lhs = col_ref[...].reshape(M, K)   # contiguous scratch: free collapse
        acc = jax.lax.dot_general(
            lhs, w_ref[...],
            dimension_numbers=(((1,), (0,)), ((), ())),
            preferred_element_type=jnp.float32)            # (M, 128) f32
        acc = jnp.maximum(acc + b_ref[...], 0.0)
        # Padded channels stay exactly 0 (zero weight cols, zero bias, ReLU),
        # so writing all 128 lanes back is both unmasked and correct.
        pad_ref[:, 1:H + 1, 1:W + 1, :] = acc.reshape(B, H, W, _C)

    conv_relu_layer(w1_ref, b1_ref)   # conv1:   1 ->  64  (padded to 128)
    conv_relu_layer(w2_ref, b2_ref)   # conv2:  64 -> 128
    conv_relu_layer(w3_ref, b3_ref)   # conv3: 128 ->  64  (padded to 128)

    # conv4: 64 -> 1. Only one output channel is real, so skip the MXU and the
    # 128x-inflated writeback: per-tap VPU multiply + lane reduction produces a
    # compact (B, H, W, 1) result that goes straight to HBM.
    acc4 = jnp.zeros((B, H, W, 1), jnp.float32)
    for t, (dy, dx) in enumerate(_TAPS):
        slab = pad_ref[:, dy:dy + H, dx:dx + W, :]          # (B, H, W, 128) f32
        acc4 = acc4 + jnp.sum(slab * w4_ref[t, :], axis=-1, keepdims=True)
    out_ref[...] = acc4 + b4_ref[0]


def _pick_block_batch(n):
    """Largest block batch <= 8 that keeps >= 2 grid steps (v7x: 2 TensorCores)."""
    for b in (8, 4, 2, 1):
        if n % b == 0 and n // b >= 2:
            return b
    for b in (8, 4, 2, 1):
        if n % b == 0:
            return b
    return 1


def fused_forward(x_nhwc1, kparams, *, H, W):
    """x_nhwc1: (N, H, W, 1) f32. Returns (N, H, W, 1) f32."""
    N = x_nhwc1.shape[0]
    B = _pick_block_batch(N)
    (w1, b1), (w2, b2), (w3, b3), (w4t, b4) = kparams

    def full_spec(arr):
        nd = arr.ndim
        return pl.BlockSpec(arr.shape, lambda n, _nd=nd: (0,) * _nd)

    kernel = functools.partial(_fused_convnet_kernel, B=B, H=H, W=W)
    return pl.pallas_call(
        kernel,
        out_shape=jax.ShapeDtypeStruct((N, H, W, 1), jnp.float32),
        grid_spec=pltpu.PrefetchScalarGridSpec(
            num_scalar_prefetch=0,
            grid=(N // B,),
            in_specs=[
                pl.BlockSpec((B, H, W, 1), lambda n: (n, 0, 0, 0)),
                full_spec(w1), full_spec(b1),
                full_spec(w2), full_spec(b2),
                full_spec(w3), full_spec(b3),
                full_spec(w4t),
                pl.BlockSpec(memory_space=pltpu.MemorySpace.SMEM),
            ],
            out_specs=pl.BlockSpec((B, H, W, 1), lambda n: (n, 0, 0, 0)),
            scratch_shapes=[
                pltpu.VMEM((B, H + 2, W + 2, _C), jnp.float32),   # padded activations
                pltpu.VMEM((B, H, W, 9 * _C), jnp.bfloat16),      # im2col staging
            ],
        ),
        compiler_params=pltpu.CompilerParams(
            dimension_semantics=("parallel",),
            vmem_limit_bytes=32 * 1024 * 1024,
        ),
    )(x_nhwc1, w1, b1, w2, b2, w3, b3, w4t, b4)


def init_params(key):
    """Deterministic synthetic params matching the PyTorch module's shapes (HWIO)."""
    dims = [(1, 64), (64, 128), (128, 64), (64, 1)]
    params = []
    for cin, cout in dims:
        key, kw = jax.random.split(key)
        w = jax.random.normal(kw, (3, 3, cin, cout), jnp.float32) * 0.05
        b = jnp.full((cout,), 0.01, jnp.float32)
        params.append((w, b))
    return params


def prepare_kernel_params(params):
    """Zero-pad all channels to 128 and fold 3x3 taps into the contraction dim."""
    (w1, b1), (w2, b2), (w3, b3), (w4, b4) = params

    def pack(w, b):
        cin, cout = w.shape[2], w.shape[3]
        wp = jnp.zeros((3, 3, _C, _C), jnp.float32).at[:, :, :cin, :cout].set(w)
        bp = jnp.zeros((1, _C), jnp.float32).at[0, :cout].set(b)
        # (3,3,128,128) -> (9*128, 128); row index = (dy*3+dx)*128 + cin, matching
        # the _TAPS / col_ref lane layout in the kernel.
        return wp.reshape(9 * _C, _C).astype(jnp.bfloat16), bp

    w1k, b1k = pack(w1, b1)
    w2k, b2k = pack(w2, b2)
    w3k, b3k = pack(w3, b3)

    # conv4 (64 -> 1): per-tap channel vectors, zero-padded to 128 lanes.
    cin4 = w4.shape[2]
    w4t = jnp.zeros((9, _C), jnp.float32).at[:, :cin4].set(
        w4[:, :, :, 0].reshape(9, cin4))
    b4k = b4.reshape(1).astype(jnp.float32)
    return (w1k, b1k), (w2k, b2k), (w3k, b3k), (w4t, b4k)


def diffusion_model_forward(x_nchw, t, params):
    """Equivalent of DiffusionModel.forward; t is accepted but unused (as in PyTorch)."""
    del t  # the reference forward ignores the timestep
    N, C, H, W = x_nchw.shape
    assert C == 1
    x = x_nchw.reshape(N, H, W, 1).astype(jnp.float32)   # C == 1: pure reshape
    kparams = prepare_kernel_params(params)
    out = fused_forward(x, kparams, H=H, W=W)            # (N, H, W, 1)
    return out.reshape(N, 1, H, W)                        # back to NCHW, C == 1


def _reference_forward(x_nchw, params):
    """Pure-JAX f32 reference of the PyTorch module."""
    y = x_nchw
    relus = (True, True, True, False)
    for (w, b), relu in zip(params, relus):
        k = jnp.transpose(w, (3, 2, 0, 1))                # HWIO -> OIHW
        y = jax.lax.conv_general_dilated(
            y, k, window_strides=(1, 1), padding="SAME",
            dimension_numbers=("NCHW", "OIHW", "NCHW"))
        y = y + b.reshape(1, -1, 1, 1)
        if relu:
            y = jnp.maximum(y, 0.0)
    return y


if __name__ == "__main__":
    key = jax.random.PRNGKey(0)
    kx, kp = jax.random.split(key)

    # Small shapes consistent with the module: N=2, C=1 (grayscale), 16x16 image.
    x = jax.random.normal(kx, (2, 1, 16, 16), jnp.float32)
    t = jnp.array([3, 7], jnp.int32)   # ignored by the forward pass
    params = init_params(kp)

    out = jax.block_until_ready(diffusion_model_forward(x, t, params))
    assert out.shape == (2, 1, 16, 16), out.shape
    assert bool(jnp.all(jnp.isfinite(out)))

    # Correctness vs. pure-JAX f32 conv (loose tol: kernel uses bf16 MXU operands).
    ref = _reference_forward(x, params)
    max_err = float(jnp.max(jnp.abs(out - ref)))
    assert max_err < 5e-2, f"max abs error {max_err}"
    print("KERNEL_OK")
</pallas_src>

<mosaic_0001>
module attributes {stable_mosaic.version = 11 : i64} {
  func.func @_fused_convnet_kernel(%arg0: i32, %arg1: memref<1x16x16x1xf32, #tpu.memory_space<vmem>>, %arg2: memref<1152x128xbf16, #tpu.memory_space<vmem>>, %arg3: memref<1x128xf32, #tpu.memory_space<vmem>>, %arg4: memref<1152x128xbf16, #tpu.memory_space<vmem>>, %arg5: memref<1x128xf32, #tpu.memory_space<vmem>>, %arg6: memref<1152x128xbf16, #tpu.memory_space<vmem>>, %arg7: memref<1x128xf32, #tpu.memory_space<vmem>>, %arg8: memref<9x128xf32, #tpu.memory_space<vmem>>, %arg9: memref<1xf32, #tpu.memory_space<smem>>, %arg10: memref<1x16x16x1xf32, #tpu.memory_space<vmem>>, %arg11: memref<1x18x18x128xf32, #tpu.memory_space<vmem>>, %arg12: memref<1x16x16x1152xbf16, #tpu.memory_space<vmem>>) attributes {dimension_semantics = [#tpu.dimension_semantics<parallel>], iteration_bounds = array<i64: 2>, scalar_prefetch = 0 : i64, scratch_operands = 2 : i64, tpu.core_type = #tpu.core_type<tc>, window_params = [{transform_indices = @transform_0, window_bounds = array<i64: 1, 16, 16, 1>}, {pipeline_mode = #tpu.pipeline_mode<synchronous>, transform_indices = @transform_1, window_bounds = array<i64: 1152, 128>}, {pipeline_mode = #tpu.pipeline_mode<synchronous>, transform_indices = @transform_2, window_bounds = array<i64: 1, 128>}, {pipeline_mode = #tpu.pipeline_mode<synchronous>, transform_indices = @transform_3, window_bounds = array<i64: 1152, 128>}, {pipeline_mode = #tpu.pipeline_mode<synchronous>, transform_indices = @transform_4, window_bounds = array<i64: 1, 128>}, {pipeline_mode = #tpu.pipeline_mode<synchronous>, transform_indices = @transform_5, window_bounds = array<i64: 1152, 128>}, {pipeline_mode = #tpu.pipeline_mode<synchronous>, transform_indices = @transform_6, window_bounds = array<i64: 1, 128>}, {pipeline_mode = #tpu.pipeline_mode<synchronous>, transform_indices = @transform_7, window_bounds = array<i64: 9, 128>}, {transform_indices = @transform_8, window_bounds = array<i64: 1>}, {transform_indices = @transform_9, window_bounds = array<i64: 1, 16, 16, 1>}]} {
    %cst = arith.constant 0.000000e+00 : f32
    %0 = vector.broadcast %cst : f32 to vector<1x18x18x128xf32>
    %c0 = arith.constant 0 : index
    %c0_0 = arith.constant 0 : index
    %c0_1 = arith.constant 0 : index
    %c0_2 = arith.constant 0 : index
    %1 = vector.load %arg11[%c0, %c0_0, %c0_1, %c0_2] : memref<1x18x18x128xf32, #tpu.memory_space<vmem>>, vector<1x18x18x128xf32>
    tpu.vector_store %arg11[%c0, %c0_0, %c0_1, %c0_2], %0 {strides = array<i32>} : memref<1x18x18x128xf32, #tpu.memory_space<vmem>>, vector<1x18x18x128xf32>,
    %c0_3 = arith.constant 0 : index
    %c0_4 = arith.constant 0 : index
    %c0_5 = arith.constant 0 : index
    %c0_6 = arith.constant 0 : index
    %2 = vector.load %arg1[%c0_3, %c0_4, %c0_5, %c0_6] : memref<1x16x16x1xf32, #tpu.memory_space<vmem>>, vector<1x16x16x1xf32>
    %c0_7 = arith.constant 0 : index
    %c1 = arith.constant 1 : index
    %c1_8 = arith.constant 1 : index
    %c0_9 = arith.constant 0 : index
    %3 = vector.load %arg11[%c0_7, %c1, %c1_8, %c0_9] : memref<1x18x18x128xf32, #tpu.memory_space<vmem>>, vector<1x16x16x1xf32>
    tpu.vector_store %arg11[%c0_7, %c1, %c1_8, %c0_9], %2 {strides = array<i32>} : memref<1x18x18x128xf32, #tpu.memory_space<vmem>>, vector<1x16x16x1xf32>,
    %c0_10 = arith.constant 0 : index
    %c0_11 = arith.constant 0 : index
    %c0_12 = arith.constant 0 : index
    %c0_13 = arith.constant 0 : index
    %4 = vector.load %arg11[%c0_10, %c0_11, %c0_12, %c0_13] : memref<1x18x18x128xf32, #tpu.memory_space<vmem>>, vector<1x16x16x128xf32>
    %5 = arith.truncf %4 : vector<1x16x16x128xf32> to vector<1x16x16x128xbf16>
    %c0_14 = arith.constant 0 : index
    %c0_15 = arith.constant 0 : index
    %c0_16 = arith.constant 0 : index
    %c0_17 = arith.constant 0 : index
    %6 = vector.load %arg12[%c0_14, %c0_15, %c0_16, %c0_17] : memref<1x16x16x1152xbf16, #tpu.memory_space<vmem>>, vector<1x16x16x128xbf16>
    tpu.vector_store %arg12[%c0_14, %c0_15, %c0_16, %c0_17], %5 {strides = array<i32>} : memref<1x16x16x1152xbf16, #tpu.memory_space<vmem>>, vector<1x16x16x128xbf16>,
    %c0_18 = arith.constant 0 : index
    %c0_19 = arith.constant 0 : index
    %c1_20 = arith.constant 1 : index
    %c0_21 = arith.constant 0 : index
    %7 = vector.load %arg11[%c0_18, %c0_19, %c1_20, %c0_21] : memref<1x18x18x128xf32, #tpu.memory_space<vmem>>, vector<1x16x16x128xf32>
    %8 = arith.truncf %7 : vector<1x16x16x128xf32> to vector<1x16x16x128xbf16>
    %c0_22 = arith.constant 0 : index
    %c0_23 = arith.constant 0 : index
    %c0_24 = arith.constant 0 : index
    %c128 = arith.constant 128 : index
    %9 = vector.load %arg12[%c0_22, %c0_23, %c0_24, %c128] : memref<1x16x16x1152xbf16, #tpu.memory_space<vmem>>, vector<1x16x16x128xbf16>
    tpu.vector_store %arg12[%c0_22, %c0_23, %c0_24, %c128], %8 {strides = array<i32>} : memref<1x16x16x1152xbf16, #tpu.memory_space<vmem>>, vector<1x16x16x128xbf16>,
    %c0_25 = arith.constant 0 : index
    %c0_26 = arith.constant 0 : index
    %c2 = arith.constant 2 : index
    %c0_27 = arith.constant 0 : index
    %10 = vector.load %arg11[%c0_25, %c0_26, %c2, %c0_27] : memref<1x18x18x128xf32, #tpu.memory_space<vmem>>, vector<1x16x16x128xf32>
    %11 = arith.truncf %10 : vector<1x16x16x128xf32> to vector<1x16x16x128xbf16>
    %c0_28 = arith.constant 0 : index
    %c0_29 = arith.constant 0 : index
    %c0_30 = arith.constant 0 : index
    %c256 = arith.constant 256 : index
    %12 = vector.load %arg12[%c0_28, %c0_29, %c0_30, %c256] : memref<1x16x16x1152xbf16, #tpu.memory_space<vmem>>, vector<1x16x16x128xbf16>
    tpu.vector_store %arg12[%c0_28, %c0_29, %c0_30, %c256], %11 {strides = array<i32>} : memref<1x16x16x1152xbf16, #tpu.memory_space<vmem>>, vector<1x16x16x128xbf16>,
    %c0_31 = arith.constant 0 : index
    %c1_32 = arith.constant 1 : index
    %c0_33 = arith.constant 0 : index
    %c0_34 = arith.constant 0 : index
    %13 = vector.load %arg11[%c0_31, %c1_32, %c0_33, %c0_34] : memref<1x18x18x128xf32, #tpu.memory_space<vmem>>, vector<1x16x16x128xf32>
    %14 = arith.truncf %13 : vector<1x16x16x128xf32> to vector<1x16x16x128xbf16>
    %c0_35 = arith.constant 0 : index
    %c0_36 = arith.constant 0 : index
    %c0_37 = arith.constant 0 : index
    %c384 = arith.constant 384 : index
    %15 = vector.load %arg12[%c0_35, %c0_36, %c0_37, %c384] : memref<1x16x16x1152xbf16, #tpu.memory_space<vmem>>, vector<1x16x16x128xbf16>
    tpu.vector_store %arg12[%c0_35, %c0_36, %c0_37, %c384], %14 {strides = array<i32>} : memref<1x16x16x1152xbf16, #tpu.memory_space<vmem>>, vector<1x16x16x128xbf16>,
    %c0_38 = arith.constant 0 : index
    %c1_39 = arith.constant 1 : index
    %c1_40 = arith.constant 1 : index
    %c0_41 = arith.constant 0 : index
    %16 = vector.load %arg11[%c0_38, %c1_39, %c1_40, %c0_41] : memref<1x18x18x128xf32, #tpu.memory_space<vmem>>, vector<1x16x16x128xf32>
    %17 = arith.truncf %16 : vector<1x16x16x128xf32> to vector<1x16x16x128xbf16>
    %c0_42 = arith.constant 0 : index
    %c0_43 = arith.constant 0 : index
    %c0_44 = arith.constant 0 : index
    %c512 = arith.constant 512 : index
    %18 = vector.load %arg12[%c0_42, %c0_43, %c0_44, %c512] : memref<1x16x16x1152xbf16, #tpu.memory_space<vmem>>, vector<1x16x16x128xbf16>
    tpu.vector_store %arg12[%c0_42, %c0_43, %c0_44, %c512], %17 {strides = array<i32>} : memref<1x16x16x1152xbf16, #tpu.memory_space<vmem>>, vector<1x16x16x128xbf16>,
    %c0_45 = arith.constant 0 : index
    %c1_46 = arith.constant 1 : index
    %c2_47 = arith.constant 2 : index
    %c0_48 = arith.constant 0 : index
    %19 = vector.load %arg11[%c0_45, %c1_46, %c2_47, %c0_48] : memref<1x18x18x128xf32, #tpu.memory_space<vmem>>, vector<1x16x16x128xf32>
    %20 = arith.truncf %19 : vector<1x16x16x128xf32> to vector<1x16x16x128xbf16>
    %c0_49 = arith.constant 0 : index
    %c0_50 = arith.constant 0 : index
    %c0_51 = arith.constant 0 : index
    %c640 = arith.constant 640 : index
    %21 = vector.load %arg12[%c0_49, %c0_50, %c0_51, %c640] : memref<1x16x16x1152xbf16, #tpu.memory_space<vmem>>, vector<1x16x16x128xbf16>
    tpu.vector_store %arg12[%c0_49, %c0_50, %c0_51, %c640], %20 {strides = array<i32>} : memref<1x16x16x1152xbf16, #tpu.memory_space<vmem>>, vector<1x16x16x128xbf16>,
    %c0_52 = arith.constant 0 : index
    %c2_53 = arith.constant 2 : index
    %c0_54 = arith.constant 0 : index
    %c0_55 = arith.constant 0 : index
    %22 = vector.load %arg11[%c0_52, %c2_53, %c0_54, %c0_55] : memref<1x18x18x128xf32, #tpu.memory_space<vmem>>, vector<1x16x16x128xf32>
    %23 = arith.truncf %22 : vector<1x16x16x128xf32> to vector<1x16x16x128xbf16>
    %c0_56 = arith.constant 0 : index
    %c0_57 = arith.constant 0 : index
    %c0_58 = arith.constant 0 : index
    %c768 = arith.constant 768 : index
    %24 = vector.load %arg12[%c0_56, %c0_57, %c0_58, %c768] : memref<1x16x16x1152xbf16, #tpu.memory_space<vmem>>, vector<1x16x16x128xbf16>
    tpu.vector_store %arg12[%c0_56, %c0_57, %c0_58, %c768], %23 {strides = array<i32>} : memref<1x16x16x1152xbf16, #tpu.memory_space<vmem>>, vector<1x16x16x128xbf16>,
    %c0_59 = arith.constant 0 : index
    %c2_60 = arith.constant 2 : index
    %c1_61 = arith.constant 1 : index
    %c0_62 = arith.constant 0 : index
    %25 = vector.load %arg11[%c0_59, %c2_60, %c1_61, %c0_62] : memref<1x18x18x128xf32, #tpu.memory_space<vmem>>, vector<1x16x16x128xf32>
    %26 = arith.truncf %25 : vector<1x16x16x128xf32> to vector<1x16x16x128xbf16>
    %c0_63 = arith.constant 0 : index
    %c0_64 = arith.constant 0 : index
    %c0_65 = arith.constant 0 : index
    %c896 = arith.constant 896 : index
    %27 = vector.load %arg12[%c0_63, %c0_64, %c0_65, %c896] : memref<1x16x16x1152xbf16, #tpu.memory_space<vmem>>, vector<1x16x16x128xbf16>
    tpu.vector_store %arg12[%c0_63, %c0_64, %c0_65, %c896], %26 {strides = array<i32>} : memref<1x16x16x1152xbf16, #tpu.memory_space<vmem>>, vector<1x16x16x128xbf16>,
    %c0_66 = arith.constant 0 : index
    %c2_67 = arith.constant 2 : index
    %c2_68 = arith.constant 2 : index
    %c0_69 = arith.constant 0 : index
    %28 = vector.load %arg11[%c0_66, %c2_67, %c2_68, %c0_69] : memref<1x18x18x128xf32, #tpu.memory_space<vmem>>, vector<1x16x16x128xf32>
    %29 = arith.truncf %28 : vector<1x16x16x128xf32> to vector<1x16x16x128xbf16>
    %c0_70 = arith.constant 0 : index
    %c0_71 = arith.constant 0 : index
    %c0_72 = arith.constant 0 : index
    %c1024 = arith.constant 1024 : index
    %30 = vector.load %arg12[%c0_70, %c0_71, %c0_72, %c1024] : memref<1x16x16x1152xbf16, #tpu.memory_space<vmem>>, vector<1x16x16x128xbf16>
    tpu.vector_store %arg12[%c0_70, %c0_71, %c0_72, %c1024], %29 {strides = array<i32>} : memref<1x16x16x1152xbf16, #tpu.memory_space<vmem>>, vector<1x16x16x128xbf16>,
    %c0_73 = arith.constant 0 : index
    %c0_74 = arith.constant 0 : index
    %c0_75 = arith.constant 0 : index
    %c0_76 = arith.constant 0 : index
    %31 = vector.load %arg12[%c0_73, %c0_74, %c0_75, %c0_76] : memref<1x16x16x1152xbf16, #tpu.memory_space<vmem>>, vector<1x16x16x1152xbf16>
    %32 = vector.shape_cast %31 : vector<1x16x16x1152xbf16> to vector<256x1152xbf16>
    %c0_77 = arith.constant 0 : index
    %c0_78 = arith.constant 0 : index
    %33 = vector.load %arg2[%c0_77, %c0_78] : memref<1152x128xbf16, #tpu.memory_space<vmem>>, vector<1152x128xbf16>
    %cst_79 = arith.constant dense<0.000000e+00> : vector<256x128xf32>
    %34 = tpu.matmul %32, %33, %cst_79 {dimension_numbers = #tpu.dot_dimension_numbers<[1], [0], [0], [1], [0, 0, 1, 1], [], []>} : vector<256x1152xbf16>, vector<1152x128xbf16>, vector<256x128xf32> -> vector<256x128xf32>
    %c0_80 = arith.constant 0 : index
    %c0_81 = arith.constant 0 : index
    %35 = vector.load %arg3[%c0_80, %c0_81] : memref<1x128xf32, #tpu.memory_space<vmem>>, vector<1x128xf32>
    %36 = vector.broadcast %35 : vector<1x128xf32> to vector<256x128xf32>
    %37 = arith.addf %34, %36 : vector<256x128xf32>
    %cst_82 = arith.constant 0.000000e+00 : f32
    %38 = vector.broadcast %cst_82 : f32 to vector<256x128xf32>
    %39 = arith.maximumf %37, %38 : vector<256x128xf32>
    %40 = vector.shape_cast %39 : vector<256x128xf32> to vector<1x16x16x128xf32>
    %c0_83 = arith.constant 0 : index
    %c1_84 = arith.constant 1 : index
    %c1_85 = arith.constant 1 : index
    %c0_86 = arith.constant 0 : index
    %41 = vector.load %arg11[%c0_83, %c1_84, %c1_85, %c0_86] : memref<1x18x18x128xf32, #tpu.memory_space<vmem>>, vector<1x16x16x128xf32>
    tpu.vector_store %arg11[%c0_83, %c1_84, %c1_85, %c0_86], %40 {strides = array<i32>} : memref<1x18x18x128xf32, #tpu.memory_space<vmem>>, vector<1x16x16x128xf32>,
    %c0_87 = arith.constant 0 : index
    %c0_88 = arith.constant 0 : index
    %c0_89 = arith.constant 0 : index
    %c0_90 = arith.constant 0 : index
    %42 = vector.load %arg11[%c0_87, %c0_88, %c0_89, %c0_90] : memref<1x18x18x128xf32, #tpu.memory_space<vmem>>, vector<1x16x16x128xf32>
    %43 = arith.truncf %42 : vector<1x16x16x128xf32> to vector<1x16x16x128xbf16>
    %c0_91 = arith.constant 0 : index
    %c0_92 = arith.constant 0 : index
    %c0_93 = arith.constant 0 : index
    %c0_94 = arith.constant 0 : index
    %44 = vector.load %arg12[%c0_91, %c0_92, %c0_93, %c0_94] : memref<1x16x16x1152xbf16, #tpu.memory_space<vmem>>, vector<1x16x16x128xbf16>
    tpu.vector_store %arg12[%c0_91, %c0_92, %c0_93, %c0_94], %43 {strides = array<i32>} : memref<1x16x16x1152xbf16, #tpu.memory_space<vmem>>, vector<1x16x16x128xbf16>,
    %c0_95 = arith.constant 0 : index
    %c0_96 = arith.constant 0 : index
    %c1_97 = arith.constant 1 : index
    %c0_98 = arith.constant 0 : index
    %45 = vector.load %arg11[%c0_95, %c0_96, %c1_97, %c0_98] : memref<1x18x18x128xf32, #tpu.memory_space<vmem>>, vector<1x16x16x128xf32>
    %46 = arith.truncf %45 : vector<1x16x16x128xf32> to vector<1x16x16x128xbf16>
    %c0_99 = arith.constant 0 : index
    %c0_100 = arith.constant 0 : index
    %c0_101 = arith.constant 0 : index
    %c128_102 = arith.constant 128 : index
    %47 = vector.load %arg12[%c0_99, %c0_100, %c0_101, %c128_102] : memref<1x16x16x1152xbf16, #tpu.memory_space<vmem>>, vector<1x16x16x128xbf16>
    tpu.vector_store %arg12[%c0_99, %c0_100, %c0_101, %c128_102], %46 {strides = array<i32>} : memref<1x16x16x1152xbf16, #tpu.memory_space<vmem>>, vector<1x16x16x128xbf16>,
    %c0_103 = arith.constant 0 : index
    %c0_104 = arith.constant 0 : index
    %c2_105 = arith.constant 2 : index
    %c0_106 = arith.constant 0 : index
    %48 = vector.load %arg11[%c0_103, %c0_104, %c2_105, %c0_106] : memref<1x18x18x128xf32, #tpu.memory_space<vmem>>, vector<1x16x16x128xf32>
    %49 = arith.truncf %48 : vector<1x16x16x128xf32> to vector<1x16x16x128xbf16>
    %c0_107 = arith.constant 0 : index
    %c0_108 = arith.constant 0 : index
    %c0_109 = arith.constant 0 : index
    %c256_110 = arith.constant 256 : index
    %50 = vector.load %arg12[%c0_107, %c0_108, %c0_109, %c256_110] : memref<1x16x16x1152xbf16, #tpu.memory_space<vmem>>, vector<1x16x16x128xbf16>
    tpu.vector_store %arg12[%c0_107, %c0_108, %c0_109, %c256_110], %49 {strides = array<i32>} : memref<1x16x16x1152xbf16, #tpu.memory_space<vmem>>, vector<1x16x16x128xbf16>,
    %c0_111 = arith.constant 0 : index
    %c1_112 = arith.constant 1 : index
    %c0_113 = arith.constant 0 : index
    %c0_114 = arith.constant 0 : index
    %51 = vector.load %arg11[%c0_111, %c1_112, %c0_113, %c0_114] : memref<1x18x18x128xf32, #tpu.memory_space<vmem>>, vector<1x16x16x128xf32>
    %52 = arith.truncf %51 : vector<1x16x16x128xf32> to vector<1x16x16x128xbf16>
    %c0_115 = arith.constant 0 : index
    %c0_116 = arith.constant 0 : index
    %c0_117 = arith.constant 0 : index
    %c384_118 = arith.constant 384 : index
    %53 = vector.load %arg12[%c0_115, %c0_116, %c0_117, %c384_118] : memref<1x16x16x1152xbf16, #tpu.memory_space<vmem>>, vector<1x16x16x128xbf16>
    tpu.vector_store %arg12[%c0_115, %c0_116, %c0_117, %c384_118], %52 {strides = array<i32>} : memref<1x16x16x1152xbf16, #tpu.memory_space<vmem>>, vector<1x16x16x128xbf16>,
    %c0_119 = arith.constant 0 : index
    %c1_120 = arith.constant 1 : index
    %c1_121 = arith.constant 1 : index
    %c0_122 = arith.constant 0 : index
    %54 = vector.load %arg11[%c0_119, %c1_120, %c1_121, %c0_122] : memref<1x18x18x128xf32, #tpu.memory_space<vmem>>, vector<1x16x16x128xf32>
    %55 = arith.truncf %54 : vector<1x16x16x128xf32> to vector<1x16x16x128xbf16>
    %c0_123 = arith.constant 0 : index
    %c0_124 = arith.constant 0 : index
    %c0_125 = arith.constant 0 : index
    %c512_126 = arith.constant 512 : index
    %56 = vector.load %arg12[%c0_123, %c0_124, %c0_125, %c512_126] : memref<1x16x16x1152xbf16, #tpu.memory_space<vmem>>, vector<1x16x16x128xbf16>
    tpu.vector_store %arg12[%c0_123, %c0_124, %c0_125, %c512_126], %55 {strides = array<i32>} : memref<1x16x16x1152xbf16, #tpu.memory_space<vmem>>, vector<1x16x16x128xbf16>,
    %c0_127 = arith.constant 0 : index
    %c1_128 = arith.constant 1 : index
    %c2_129 = arith.constant 2 : index
    %c0_130 = arith.constant 0 : index
    %57 = vector.load %arg11[%c0_127, %c1_128, %c2_129, %c0_130] : memref<1x18x18x128xf32, #tpu.memory_space<vmem>>, vector<1x16x16x128xf32>
    %58 = arith.truncf %57 : vector<1x16x16x128xf32> to vector<1x16x16x128xbf16>
    %c0_131 = arith.constant 0 : index
    %c0_132 = arith.constant 0 : index
    %c0_133 = arith.constant 0 : index
    %c640_134 = arith.constant 640 : index
    %59 = vector.load %arg12[%c0_131, %c0_132, %c0_133, %c640_134] : memref<1x16x16x1152xbf16, #tpu.memory_space<vmem>>, vector<1x16x16x128xbf16>
    tpu.vector_store %arg12[%c0_131, %c0_132, %c0_133, %c640_134], %58 {strides = array<i32>} : memref<1x16x16x1152xbf16, #tpu.memory_space<vmem>>, vector<1x16x16x128xbf16>,
    %c0_135 = arith.constant 0 : index
    %c2_136 = arith.constant 2 : index
    %c0_137 = arith.constant 0 : index
    %c0_138 = arith.constant 0 : index
    %60 = vector.load %arg11[%c0_135, %c2_136, %c0_137, %c0_138] : memref<1x18x18x128xf32, #tpu.memory_space<vmem>>, vector<1x16x16x128xf32>
    %61 = arith.truncf %60 : vector<1x16x16x128xf32> to vector<1x16x16x128xbf16>
    %c0_139 = arith.constant 0 : index
    %c0_140 = arith.constant 0 : index
    %c0_141 = arith.constant 0 : index
    %c768_142 = arith.constant 768 : index
    %62 = vector.load %arg12[%c0_139, %c0_140, %c0_141, %c768_142] : memref<1x16x16x1152xbf16, #tpu.memory_space<vmem>>, vector<1x16x16x128xbf16>
    tpu.vector_store %arg12[%c0_139, %c0_140, %c0_141, %c768_142], %61 {strides = array<i32>} : memref<1x16x16x1152xbf16, #tpu.memory_space<vmem>>, vector<1x16x16x128xbf16>,
    %c0_143 = arith.constant 0 : index
    %c2_144 = arith.constant 2 : index
    %c1_145 = arith.constant 1 : index
    %c0_146 = arith.constant 0 : index
    %63 = vector.load %arg11[%c0_143, %c2_144, %c1_145, %c0_146] : memref<1x18x18x128xf32, #tpu.memory_space<vmem>>, vector<1x16x16x128xf32>
    %64 = arith.truncf %63 : vector<1x16x16x128xf32> to vector<1x16x16x128xbf16>
    %c0_147 = arith.constant 0 : index
    %c0_148 = arith.constant 0 : index
    %c0_149 = arith.constant 0 : index
    %c896_150 = arith.constant 896 : index
    %65 = vector.load %arg12[%c0_147, %c0_148, %c0_149, %c896_150] : memref<1x16x16x1152xbf16, #tpu.memory_space<vmem>>, vector<1x16x16x128xbf16>
    tpu.vector_store %arg12[%c0_147, %c0_148, %c0_149, %c896_150], %64 {strides = array<i32>} : memref<1x16x16x1152xbf16, #tpu.memory_space<vmem>>, vector<1x16x16x128xbf16>,
    %c0_151 = arith.constant 0 : index
    %c2_152 = arith.constant 2 : index
    %c2_153 = arith.constant 2 : index
    %c0_154 = arith.constant 0 : index
    %66 = vector.load %arg11[%c0_151, %c2_152, %c2_153, %c0_154] : memref<1x18x18x128xf32, #tpu.memory_space<vmem>>, vector<1x16x16x128xf32>
    %67 = arith.truncf %66 : vector<1x16x16x128xf32> to vector<1x16x16x128xbf16>
    %c0_155 = arith.constant 0 : index
    %c0_156 = arith.constant 0 : index
    %c0_157 = arith.constant 0 : index
    %c1024_158 = arith.constant 1024 : index
    %68 = vector.load %arg12[%c0_155, %c0_156, %c0_157, %c1024_158] : memref<1x16x16x1152xbf16, #tpu.memory_space<vmem>>, vector<1x16x16x128xbf16>
    tpu.vector_store %arg12[%c0_155, %c0_156, %c0_157, %c1024_158], %67 {strides = array<i32>} : memref<1x16x16x1152xbf16, #tpu.memory_space<vmem>>, vector<1x16x16x128xbf16>,
    %c0_159 = arith.constant 0 : index
    %c0_160 = arith.constant 0 : index
    %c0_161 = arith.constant 0 : index
    %c0_162 = arith.constant 0 : index
    %69 = vector.load %arg12[%c0_159, %c0_160, %c0_161, %c0_162] : memref<1x16x16x1152xbf16, #tpu.memory_space<vmem>>, vector<1x16x16x1152xbf16>
    %70 = vector.shape_cast %69 : vector<1x16x16x1152xbf16> to vector<256x1152xbf16>
    %c0_163 = arith.constant 0 : index
    %c0_164 = arith.constant 0 : index
    %71 = vector.load %arg4[%c0_163, %c0_164] : memref<1152x128xbf16, #tpu.memory_space<vmem>>, vector<1152x128xbf16>
    %cst_165 = arith.constant dense<0.000000e+00> : vector<256x128xf32>
    %72 = tpu.matmul %70, %71, %cst_165 {dimension_numbers = #tpu.dot_dimension_numbers<[1], [0], [0], [1], [0, 0, 1, 1], [], []>} : vector<256x1152xbf16>, vector<1152x128xbf16>, vector<256x128xf32> -> vector<256x128xf32>
    %c0_166 = arith.constant 0 : index
    %c0_167 = arith.constant 0 : index
    %73 = vector.load %arg5[%c0_166, %c0_167] : memref<1x128xf32, #tpu.memory_space<vmem>>, vector<1x128xf32>
    %74 = vector.broadcast %73 : vector<1x128xf32> to vector<256x128xf32>
    %75 = arith.addf %72, %74 : vector<256x128xf32>
    %cst_168 = arith.constant 0.000000e+00 : f32
    %76 = vector.broadcast %cst_168 : f32 to vector<256x128xf32>
    %77 = arith.maximumf %75, %76 : vector<256x128xf32>
    %78 = vector.shape_cast %77 : vector<256x128xf32> to vector<1x16x16x128xf32>
    %c0_169 = arith.constant 0 : index
    %c1_170 = arith.constant 1 : index
    %c1_171 = arith.constant 1 : index
    %c0_172 = arith.constant 0 : index
    %79 = vector.load %arg11[%c0_169, %c1_170, %c1_171, %c0_172] : memref<1x18x18x128xf32, #tpu.memory_space<vmem>>, vector<1x16x16x128xf32>
    tpu.vector_store %arg11[%c0_169, %c1_170, %c1_171, %c0_172], %78 {strides = array<i32>} : memref<1x18x18x128xf32, #tpu.memory_space<vmem>>, vector<1x16x16x128xf32>,
    %c0_173 = arith.constant 0 : index
    %c0_174 = arith.constant 0 : index
    %c0_175 = arith.constant 0 : index
    %c0_176 = arith.constant 0 : index
    %80 = vector.load %arg11[%c0_173, %c0_174, %c0_175, %c0_176] : memref<1x18x18x128xf32, #tpu.memory_space<vmem>>, vector<1x16x16x128xf32>
    %81 = arith.truncf %80 : vector<1x16x16x128xf32> to vector<1x16x16x128xbf16>
    %c0_177 = arith.constant 0 : index
    %c0_178 = arith.constant 0 : index
    %c0_179 = arith.constant 0 : index
    %c0_180 = arith.constant 0 : index
    %82 = vector.load %arg12[%c0_177, %c0_178, %c0_179, %c0_180] : memref<1x16x16x1152xbf16, #tpu.memory_space<vmem>>, vector<1x16x16x128xbf16>
    tpu.vector_store %arg12[%c0_177, %c0_178, %c0_179, %c0_180], %81 {strides = array<i32>} : memref<1x16x16x1152xbf16, #tpu.memory_space<vmem>>, vector<1x16x16x128xbf16>,
    %c0_181 = arith.constant 0 : index
    %c0_182 = arith.constant 0 : index
    %c1_183 = arith.constant 1 : index
    %c0_184 = arith.constant 0 : index
    %83 = vector.load %arg11[%c0_181, %c0_182, %c1_183, %c0_184] : memref<1x18x18x128xf32, #tpu.memory_space<vmem>>, vector<1x16x16x128xf32>
    %84 = arith.truncf %83 : vector<1x16x16x128xf32> to vector<1x16x16x128xbf16>
    %c0_185 = arith.constant 0 : index
    %c0_186 = arith.constant 0 : index
    %c0_187 = arith.constant 0 : index
    %c128_188 = arith.constant 128 : index
    %85 = vector.load %arg12[%c0_185, %c0_186, %c0_187, %c128_188] : memref<1x16x16x1152xbf16, #tpu.memory_space<vmem>>, vector<1x16x16x128xbf16>
    tpu.vector_store %arg12[%c0_185, %c0_186, %c0_187, %c128_188], %84 {strides = array<i32>} : memref<1x16x16x1152xbf16, #tpu.memory_space<vmem>>, vector<1x16x16x128xbf16>,
    %c0_189 = arith.constant 0 : index
    %c0_190 = arith.constant 0 : index
    %c2_191 = arith.constant 2 : index
    %c0_192 = arith.constant 0 : index
    %86 = vector.load %arg11[%c0_189, %c0_190, %c2_191, %c0_192] : memref<1x18x18x128xf32, #tpu.memory_space<vmem>>, vector<1x16x16x128xf32>
    %87 = arith.truncf %86 : vector<1x16x16x128xf32> to vector<1x16x16x128xbf16>
    %c0_193 = arith.constant 0 : index
    %c0_194 = arith.constant 0 : index
    %c0_195 = arith.constant 0 : index
    %c256_196 = arith.constant 256 : index
    %88 = vector.load %arg12[%c0_193, %c0_194, %c0_195, %c256_196] : memref<1x16x16x1152xbf16, #tpu.memory_space<vmem>>, vector<1x16x16x128xbf16>
    tpu.vector_store %arg12[%c0_193, %c0_194, %c0_195, %c256_196], %87 {strides = array<i32>} : memref<1x16x16x1152xbf16, #tpu.memory_space<vmem>>, vector<1x16x16x128xbf16>,
    %c0_197 = arith.constant 0 : index
    %c1_198 = arith.constant 1 : index
    %c0_199 = arith.constant 0 : index
    %c0_200 = arith.constant 0 : index
    %89 = vector.load %arg11[%c0_197, %c1_198, %c0_199, %c0_200] : memref<1x18x18x128xf32, #tpu.memory_space<vmem>>, vector<1x16x16x128xf32>
    %90 = arith.truncf %89 : vector<1x16x16x128xf32> to vector<1x16x16x128xbf16>
    %c0_201 = arith.constant 0 : index
    %c0_202 = arith.constant 0 : index
    %c0_203 = arith.constant 0 : index
    %c384_204 = arith.constant 384 : index
    %91 = vector.load %arg12[%c0_201, %c0_202, %c0_203, %c384_204] : memref<1x16x16x1152xbf16, #tpu.memory_space<vmem>>, vector<1x16x16x128xbf16>
    tpu.vector_store %arg12[%c0_201, %c0_202, %c0_203, %c384_204], %90 {strides = array<i32>} : memref<1x16x16x1152xbf16, #tpu.memory_space<vmem>>, vector<1x16x16x128xbf16>,
    %c0_205 = arith.constant 0 : index
    %c1_206 = arith.constant 1 : index
    %c1_207 = arith.constant 1 : index
    %c0_208 = arith.constant 0 : index
    %92 = vector.load %arg11[%c0_205, %c1_206, %c1_207, %c0_208] : memref<1x18x18x128xf32, #tpu.memory_space<vmem>>, vector<1x16x16x128xf32>
    %93 = arith.truncf %92 : vector<1x16x16x128xf32> to vector<1x16x16x128xbf16>
    %c0_209 = arith.constant 0 : index
    %c0_210 = arith.constant 0 : index
    %c0_211 = arith.constant 0 : index
    %c512_212 = arith.constant 512 : index
    %94 = vector.load %arg12[%c0_209, %c0_210, %c0_211, %c512_212] : memref<1x16x16x1152xbf16, #tpu.memory_space<vmem>>, vector<1x16x16x128xbf16>
    tpu.vector_store %arg12[%c0_209, %c0_210, %c0_211, %c512_212], %93 {strides = array<i32>} : memref<1x16x16x1152xbf16, #tpu.memory_space<vmem>>, vector<1x16x16x128xbf16>,
    %c0_213 = arith.constant 0 : index
    %c1_214 = arith.constant 1 : index
    %c2_215 = arith.constant 2 : index
    %c0_216 = arith.constant 0 : index
    %95 = vector.load %arg11[%c0_213, %c1_214, %c2_215, %c0_216] : memref<1x18x18x128xf32, #tpu.memory_space<vmem>>, vector<1x16x16x128xf32>
    %96 = arith.truncf %95 : vector<1x16x16x128xf32> to vector<1x16x16x128xbf16>
    %c0_217 = arith.constant 0 : index
    %c0_218 = arith.constant 0 : index
    %c0_219 = arith.constant 0 : index
    %c640_220 = arith.constant 640 : index
    %97 = vector.load %arg12[%c0_217, %c0_218, %c0_219, %c640_220] : memref<1x16x16x1152xbf16, #tpu.memory_space<vmem>>, vector<1x16x16x128xbf16>
    tpu.vector_store %arg12[%c0_217, %c0_218, %c0_219, %c640_220], %96 {strides = array<i32>} : memref<1x16x16x1152xbf16, #tpu.memory_space<vmem>>, vector<1x16x16x128xbf16>,
    %c0_221 = arith.constant 0 : index
    %c2_222 = arith.constant 2 : index
    %c0_223 = arith.constant 0 : index
    %c0_224 = arith.constant 0 : index
    %98 = vector.load %arg11[%c0_221, %c2_222, %c0_223, %c0_224] : memref<1x18x18x128xf32, #tpu.memory_space<vmem>>, vector<1x16x16x128xf32>
    %99 = arith.truncf %98 : vector<1x16x16x128xf32> to vector<1x16x16x128xbf16>
    %c0_225 = arith.constant 0 : index
    %c0_226 = arith.constant 0 : index
    %c0_227 = arith.constant 0 : index
    %c768_228 = arith.constant 768 : index
    %100 = vector.load %arg12[%c0_225, %c0_226, %c0_227, %c768_228] : memref<1x16x16x1152xbf16, #tpu.memory_space<vmem>>, vector<1x16x16x128xbf16>
    tpu.vector_store %arg12[%c0_225, %c0_226, %c0_227, %c768_228], %99 {strides = array<i32>} : memref<1x16x16x1152xbf16, #tpu.memory_space<vmem>>, vector<1x16x16x128xbf16>,
    %c0_229 = arith.constant 0 : index
    %c2_230 = arith.constant 2 : index
    %c1_231 = arith.constant 1 : index
    %c0_232 = arith.constant 0 : index
    %101 = vector.load %arg11[%c0_229, %c2_230, %c1_231, %c0_232] : memref<1x18x18x128xf32, #tpu.memory_space<vmem>>, vector<1x16x16x128xf32>
    %102 = arith.truncf %101 : vector<1x16x16x128xf32> to vector<1x16x16x128xbf16>
    %c0_233 = arith.constant 0 : index
    %c0_234 = arith.constant 0 : index
    %c0_235 = arith.constant 0 : index
    %c896_236 = arith.constant 896 : index
    %103 = vector.load %arg12[%c0_233, %c0_234, %c0_235, %c896_236] : memref<1x16x16x1152xbf16, #tpu.memory_space<vmem>>, vector<1x16x16x128xbf16>
    tpu.vector_store %arg12[%c0_233, %c0_234, %c0_235, %c896_236], %102 {strides = array<i32>} : memref<1x16x16x1152xbf16, #tpu.memory_space<vmem>>, vector<1x16x16x128xbf16>,
    %c0_237 = arith.constant 0 : index
    %c2_238 = arith.constant 2 : index
    %c2_239 = arith.constant 2 : index
    %c0_240 = arith.constant 0 : index
    %104 = vector.load %arg11[%c0_237, %c2_238, %c2_239, %c0_240] : memref<1x18x18x128xf32, #tpu.memory_space<vmem>>, vector<1x16x16x128xf32>
    %105 = arith.truncf %104 : vector<1x16x16x128xf32> to vector<1x16x16x128xbf16>
    %c0_241 = arith.constant 0 : index
    %c0_242 = arith.constant 0 : index
    %c0_243 = arith.constant 0 : index
    %c1024_244 = arith.constant 1024 : index
    %106 = vector.load %arg12[%c0_241, %c0_242, %c0_243, %c1024_244] : memref<1x16x16x1152xbf16, #tpu.memory_space<vmem>>, vector<1x16x16x128xbf16>
    tpu.vector_store %arg12[%c0_241, %c0_242, %c0_243, %c1024_244], %105 {strides = array<i32>} : memref<1x16x16x1152xbf16, #tpu.memory_space<vmem>>, vector<1x16x16x128xbf16>,
    %c0_245 = arith.constant 0 : index
    %c0_246 = arith.constant 0 : index
    %c0_247 = arith.constant 0 : index
    %c0_248 = arith.constant 0 : index
    %107 = vector.load %arg12[%c0_245, %c0_246, %c0_247, %c0_248] : memref<1x16x16x1152xbf16, #tpu.memory_space<vmem>>, vector<1x16x16x1152xbf16>
    %108 = vector.shape_cast %107 : vector<1x16x16x1152xbf16> to vector<256x1152xbf16>
    %c0_249 = arith.constant 0 : index
    %c0_250 = arith.constant 0 : index
    %109 = vector.load %arg6[%c0_249, %c0_250] : memref<1152x128xbf16, #tpu.memory_space<vmem>>, vector<1152x128xbf16>
    %cst_251 = arith.constant dense<0.000000e+00> : vector<256x128xf32>
    %110 = tpu.matmul %108, %109, %cst_251 {dimension_numbers = #tpu.dot_dimension_numbers<[1], [0], [0], [1], [0, 0, 1, 1], [], []>} : vector<256x1152xbf16>, vector<1152x128xbf16>, vector<256x128xf32> -> vector<256x128xf32>
    %c0_252 = arith.constant 0 : index
    %c0_253 = arith.constant 0 : index
    %111 = vector.load %arg7[%c0_252, %c0_253] : memref<1x128xf32, #tpu.memory_space<vmem>>, vector<1x128xf32>
    %112 = vector.broadcast %111 : vector<1x128xf32> to vector<256x128xf32>
    %113 = arith.addf %110, %112 : vector<256x128xf32>
    %cst_254 = arith.constant 0.000000e+00 : f32
    %114 = vector.broadcast %cst_254 : f32 to vector<256x128xf32>
    %115 = arith.maximumf %113, %114 : vector<256x128xf32>
    %116 = vector.shape_cast %115 : vector<256x128xf32> to vector<1x16x16x128xf32>
    %c0_255 = arith.constant 0 : index
    %c1_256 = arith.constant 1 : index
    %c1_257 = arith.constant 1 : index
    %c0_258 = arith.constant 0 : index
    %117 = vector.load %arg11[%c0_255, %c1_256, %c1_257, %c0_258] : memref<1x18x18x128xf32, #tpu.memory_space<vmem>>, vector<1x16x16x128xf32>
    tpu.vector_store %arg11[%c0_255, %c1_256, %c1_257, %c0_258], %116 {strides = array<i32>} : memref<1x18x18x128xf32, #tpu.memory_space<vmem>>, vector<1x16x16x128xf32>,
    %cst_259 = arith.constant 0.000000e+00 : f32
    %118 = vector.broadcast %cst_259 : f32 to vector<1x16x16x1xf32>
    %c0_260 = arith.constant 0 : index
    %c0_261 = arith.constant 0 : index
    %c0_262 = arith.constant 0 : index
    %c0_263 = arith.constant 0 : index
    %119 = vector.load %arg11[%c0_260, %c0_261, %c0_262, %c0_263] : memref<1x18x18x128xf32, #tpu.memory_space<vmem>>, vector<1x16x16x128xf32>
    %c0_264 = arith.constant 0 : index
    %c0_265 = arith.constant 0 : index
    %120 = vector.load %arg8[%c0_264, %c0_265] : memref<9x128xf32, #tpu.memory_space<vmem>>, vector<1x128xf32>
    %121 = vector.shape_cast %120 : vector<1x128xf32> to vector<128xf32>
    %122 = vector.shape_cast %121 : vector<128xf32> to vector<1x1x1x128xf32>
    %123 = vector.broadcast %122 : vector<1x1x1x128xf32> to vector<1x16x16x128xf32>
    %124 = arith.mulf %119, %123 : vector<1x16x16x128xf32>
    %cst_266 = arith.constant dense<0.000000e+00> : vector<1x16x16xf32>
    %125 = vector.multi_reduction <add>, %124, %cst_266 [3] : vector<1x16x16x128xf32> to vector<1x16x16xf32>
    %126 = vector.shape_cast %125 : vector<1x16x16xf32> to vector<1x16x16x1xf32>
    %127 = arith.addf %118, %126 : vector<1x16x16x1xf32>
    %c0_267 = arith.constant 0 : index
    %c0_268 = arith.constant 0 : index
    %c1_269 = arith.constant 1 : index
    %c0_270 = arith.constant 0 : index
    %128 = vector.load %arg11[%c0_267, %c0_268, %c1_269, %c0_270] : memref<1x18x18x128xf32, #tpu.memory_space<vmem>>, vector<1x16x16x128xf32>
    %c1_271 = arith.constant 1 : index
    %c0_272 = arith.constant 0 : index
    %129 = vector.load %arg8[%c1_271, %c0_272] : memref<9x128xf32, #tpu.memory_space<vmem>>, vector<1x128xf32>
    %130 = vector.shape_cast %129 : vector<1x128xf32> to vector<128xf32>
    %131 = vector.shape_cast %130 : vector<128xf32> to vector<1x1x1x128xf32>
    %132 = vector.broadcast %131 : vector<1x1x1x128xf32> to vector<1x16x16x128xf32>
    %133 = arith.mulf %128, %132 : vector<1x16x16x128xf32>
    %cst_273 = arith.constant dense<0.000000e+00> : vector<1x16x16xf32>
    %134 = vector.multi_reduction <add>, %133, %cst_273 [3] : vector<1x16x16x128xf32> to vector<1x16x16xf32>
    %135 = vector.shape_cast %134 : vector<1x16x16xf32> to vector<1x16x16x1xf32>
    %136 = arith.addf %127, %135 : vector<1x16x16x1xf32>
    %c0_274 = arith.constant 0 : index
    %c0_275 = arith.constant 0 : index
    %c2_276 = arith.constant 2 : index
    %c0_277 = arith.constant 0 : index
    %137 = vector.load %arg11[%c0_274, %c0_275, %c2_276, %c0_277] : memref<1x18x18x128xf32, #tpu.memory_space<vmem>>, vector<1x16x16x128xf32>
    %c2_278 = arith.constant 2 : index
    %c0_279 = arith.constant 0 : index
    %138 = vector.load %arg8[%c2_278, %c0_279] : memref<9x128xf32, #tpu.memory_space<vmem>>, vector<1x128xf32>
    %139 = vector.shape_cast %138 : vector<1x128xf32> to vector<128xf32>
    %140 = vector.shape_cast %139 : vector<128xf32> to vector<1x1x1x128xf32>
    %141 = vector.broadcast %140 : vector<1x1x1x128xf32> to vector<1x16x16x128xf32>
    %142 = arith.mulf %137, %141 : vector<1x16x16x128xf32>
    %cst_280 = arith.constant dense<0.000000e+00> : vector<1x16x16xf32>
    %143 = vector.multi_reduction <add>, %142, %cst_280 [3] : vector<1x16x16x128xf32> to vector<1x16x16xf32>
    %144 = vector.shape_cast %143 : vector<1x16x16xf32> to vector<1x16x16x1xf32>
    %145 = arith.addf %136, %144 : vector<1x16x16x1xf32>
    %c0_281 = arith.constant 0 : index
    %c1_282 = arith.constant 1 : index
    %c0_283 = arith.constant 0 : index
    %c0_284 = arith.constant 0 : index
    %146 = vector.load %arg11[%c0_281, %c1_282, %c0_283, %c0_284] : memref<1x18x18x128xf32, #tpu.memory_space<vmem>>, vector<1x16x16x128xf32>
    %c3 = arith.constant 3 : index
    %c0_285 = arith.constant 0 : index
    %147 = vector.load %arg8[%c3, %c0_285] : memref<9x128xf32, #tpu.memory_space<vmem>>, vector<1x128xf32>
    %148 = vector.shape_cast %147 : vector<1x128xf32> to vector<128xf32>
    %149 = vector.shape_cast %148 : vector<128xf32> to vector<1x1x1x128xf32>
    %150 = vector.broadcast %149 : vector<1x1x1x128xf32> to vector<1x16x16x128xf32>
    %151 = arith.mulf %146, %150 : vector<1x16x16x128xf32>
    %cst_286 = arith.constant dense<0.000000e+00> : vector<1x16x16xf32>
    %152 = vector.multi_reduction <add>, %151, %cst_286 [3] : vector<1x16x16x128xf32> to vector<1x16x16xf32>
    %153 = vector.shape_cast %152 : vector<1x16x16xf32> to vector<1x16x16x1xf32>
    %154 = arith.addf %145, %153 : vector<1x16x16x1xf32>
    %c0_287 = arith.constant 0 : index
    %c1_288 = arith.constant 1 : index
    %c1_289 = arith.constant 1 : index
    %c0_290 = arith.constant 0 : index
    %155 = vector.load %arg11[%c0_287, %c1_288, %c1_289, %c0_290] : memref<1x18x18x128xf32, #tpu.memory_space<vmem>>, vector<1x16x16x128xf32>
    %c4 = arith.constant 4 : index
    %c0_291 = arith.constant 0 : index
    %156 = vector.load %arg8[%c4, %c0_291] : memref<9x128xf32, #tpu.memory_space<vmem>>, vector<1x128xf32>
    %157 = vector.shape_cast %156 : vector<1x128xf32> to vector<128xf32>
    %158 = vector.shape_cast %157 : vector<128xf32> to vector<1x1x1x128xf32>
    %159 = vector.broadcast %158 : vector<1x1x1x128xf32> to vector<1x16x16x128xf32>
    %160 = arith.mulf %155, %159 : vector<1x16x16x128xf32>
    %cst_292 = arith.constant dense<0.000000e+00> : vector<1x16x16xf32>
    %161 = vector.multi_reduction <add>, %160, %cst_292 [3] : vector<1x16x16x128xf32> to vector<1x16x16xf32>
    %162 = vector.shape_cast %161 : vector<1x16x16xf32> to vector<1x16x16x1xf32>
    %163 = arith.addf %154, %162 : vector<1x16x16x1xf32>
    %c0_293 = arith.constant 0 : index
    %c1_294 = arith.constant 1 : index
    %c2_295 = arith.constant 2 : index
    %c0_296 = arith.constant 0 : index
    %164 = vector.load %arg11[%c0_293, %c1_294, %c2_295, %c0_296] : memref<1x18x18x128xf32, #tpu.memory_space<vmem>>, vector<1x16x16x128xf32>
    %c5 = arith.constant 5 : index
    %c0_297 = arith.constant 0 : index
    %165 = vector.load %arg8[%c5, %c0_297] : memref<9x128xf32, #tpu.memory_space<vmem>>, vector<1x128xf32>
    %166 = vector.shape_cast %165 : vector<1x128xf32> to vector<128xf32>
    %167 = vector.shape_cast %166 : vector<128xf32> to vector<1x1x1x128xf32>
    %168 = vector.broadcast %167 : vector<1x1x1x128xf32> to vector<1x16x16x128xf32>
    %169 = arith.mulf %164, %168 : vector<1x16x16x128xf32>
    %cst_298 = arith.constant dense<0.000000e+00> : vector<1x16x16xf32>
    %170 = vector.multi_reduction <add>, %169, %cst_298 [3] : vector<1x16x16x128xf32> to vector<1x16x16xf32>
    %171 = vector.shape_cast %170 : vector<1x16x16xf32> to vector<1x16x16x1xf32>
    %172 = arith.addf %163, %171 : vector<1x16x16x1xf32>
    %c0_299 = arith.constant 0 : index
    %c2_300 = arith.constant 2 : index
    %c0_301 = arith.constant 0 : index
    %c0_302 = arith.constant 0 : index
    %173 = vector.load %arg11[%c0_299, %c2_300, %c0_301, %c0_302] : memref<1x18x18x128xf32, #tpu.memory_space<vmem>>, vector<1x16x16x128xf32>
    %c6 = arith.constant 6 : index
    %c0_303 = arith.constant 0 : index
    %174 = vector.load %arg8[%c6, %c0_303] : memref<9x128xf32, #tpu.memory_space<vmem>>, vector<1x128xf32>
    %175 = vector.shape_cast %174 : vector<1x128xf32> to vector<128xf32>
    %176 = vector.shape_cast %175 : vector<128xf32> to vector<1x1x1x128xf32>
    %177 = vector.broadcast %176 : vector<1x1x1x128xf32> to vector<1x16x16x128xf32>
    %178 = arith.mulf %173, %177 : vector<1x16x16x128xf32>
    %cst_304 = arith.constant dense<0.000000e+00> : vector<1x16x16xf32>
    %179 = vector.multi_reduction <add>, %178, %cst_304 [3] : vector<1x16x16x128xf32> to vector<1x16x16xf32>
    %180 = vector.shape_cast %179 : vector<1x16x16xf32> to vector<1x16x16x1xf32>
    %181 = arith.addf %172, %180 : vector<1x16x16x1xf32>
    %c0_305 = arith.constant 0 : index
    %c2_306 = arith.constant 2 : index
    %c1_307 = arith.constant 1 : index
    %c0_308 = arith.constant 0 : index
    %182 = vector.load %arg11[%c0_305, %c2_306, %c1_307, %c0_308] : memref<1x18x18x128xf32, #tpu.memory_space<vmem>>, vector<1x16x16x128xf32>
    %c7 = arith.constant 7 : index
    %c0_309 = arith.constant 0 : index
    %183 = vector.load %arg8[%c7, %c0_309] : memref<9x128xf32, #tpu.memory_space<vmem>>, vector<1x128xf32>
    %184 = vector.shape_cast %183 : vector<1x128xf32> to vector<128xf32>
    %185 = vector.shape_cast %184 : vector<128xf32> to vector<1x1x1x128xf32>
    %186 = vector.broadcast %185 : vector<1x1x1x128xf32> to vector<1x16x16x128xf32>
    %187 = arith.mulf %182, %186 : vector<1x16x16x128xf32>
    %cst_310 = arith.constant dense<0.000000e+00> : vector<1x16x16xf32>
    %188 = vector.multi_reduction <add>, %187, %cst_310 [3] : vector<1x16x16x128xf32> to vector<1x16x16xf32>
    %189 = vector.shape_cast %188 : vector<1x16x16xf32> to vector<1x16x16x1xf32>
    %190 = arith.addf %181, %189 : vector<1x16x16x1xf32>
    %c0_311 = arith.constant 0 : index
    %c2_312 = arith.constant 2 : index
    %c2_313 = arith.constant 2 : index
    %c0_314 = arith.constant 0 : index
    %191 = vector.load %arg11[%c0_311, %c2_312, %c2_313, %c0_314] : memref<1x18x18x128xf32, #tpu.memory_space<vmem>>, vector<1x16x16x128xf32>
    %c8 = arith.constant 8 : index
    %c0_315 = arith.constant 0 : index
    %192 = vector.load %arg8[%c8, %c0_315] : memref<9x128xf32, #tpu.memory_space<vmem>>, vector<1x128xf32>
    %193 = vector.shape_cast %192 : vector<1x128xf32> to vector<128xf32>
    %194 = vector.shape_cast %193 : vector<128xf32> to vector<1x1x1x128xf32>
    %195 = vector.broadcast %194 : vector<1x1x1x128xf32> to vector<1x16x16x128xf32>
    %196 = arith.mulf %191, %195 : vector<1x16x16x128xf32>
    %cst_316 = arith.constant dense<0.000000e+00> : vector<1x16x16xf32>
    %197 = vector.multi_reduction <add>, %196, %cst_316 [3] : vector<1x16x16x128xf32> to vector<1x16x16xf32>
    %198 = vector.shape_cast %197 : vector<1x16x16xf32> to vector<1x16x16x1xf32>
    %199 = arith.addf %190, %198 : vector<1x16x16x1xf32>
    %c0_317 = arith.constant 0 : index
    %200 = memref.load %arg9[%c0_317] : memref<1xf32, #tpu.memory_space<smem>>
    %201 = vector.broadcast %200 : f32 to vector<1x16x16x1xf32>
    %202 = arith.addf %199, %201 : vector<1x16x16x1xf32>
    %c0_318 = arith.constant 0 : index
    %c0_319 = arith.constant 0 : index
    %c0_320 = arith.constant 0 : index
    %c0_321 = arith.constant 0 : index
    %203 = vector.load %arg10[%c0_318, %c0_319, %c0_320, %c0_321] : memref<1x16x16x1xf32, #tpu.memory_space<vmem>>, vector<1x16x16x1xf32>
    tpu.vector_store %arg10[%c0_318, %c0_319, %c0_320, %c0_321], %202 {strides = array<i32>} : memref<1x16x16x1xf32, #tpu.memory_space<vmem>>, vector<1x16x16x1xf32>,
    return
  }
  func.func @transform_0(%arg0: i32) -> (i32, i32, i32, i32) {
    %c0_i32 = arith.constant 0 : i32
    %c0_i32_0 = arith.constant 0 : i32
    %c0_i32_1 = arith.constant 0 : i32
    %c0_i32_2 = arith.constant 0 : i32
    return %arg0, %c0_i32, %c0_i32_0, %c0_i32_1 : i32, i32, i32, i32
  }
  func.func @transform_1(%arg0: i32) -> (i32, i32) {
    %c0_i32 = arith.constant 0 : i32
    %c0_i32_0 = arith.constant 0 : i32
    %c0_i32_1 = arith.constant 0 : i32
    return %c0_i32, %c0_i32_0 : i32, i32
  }
  func.func @transform_2(%arg0: i32) -> (i32, i32) {
    %c0_i32 = arith.constant 0 : i32
    %c0_i32_0 = arith.constant 0 : i32
    %c0_i32_1 = arith.constant 0 : i32
    return %c0_i32, %c0_i32_0 : i32, i32
  }
  func.func @transform_3(%arg0: i32) -> (i32, i32) {
    %c0_i32 = arith.constant 0 : i32
    %c0_i32_0 = arith.constant 0 : i32
    %c0_i32_1 = arith.constant 0 : i32
    return %c0_i32, %c0_i32_0 : i32, i32
  }
  func.func @transform_4(%arg0: i32) -> (i32, i32) {
    %c0_i32 = arith.constant 0 : i32
    %c0_i32_0 = arith.constant 0 : i32
    %c0_i32_1 = arith.constant 0 : i32
    return %c0_i32, %c0_i32_0 : i32, i32
  }
  func.func @transform_5(%arg0: i32) -> (i32, i32) {
    %c0_i32 = arith.constant 0 : i32
    %c0_i32_0 = arith.constant 0 : i32
    %c0_i32_1 = arith.constant 0 : i32
    return %c0_i32, %c0_i32_0 : i32, i32
  }
  func.func @transform_6(%arg0: i32) -> (i32, i32) {
    %c0_i32 = arith.constant 0 : i32
    %c0_i32_0 = arith.constant 0 : i32
    %c0_i32_1 = arith.constant 0 : i32
    return %c0_i32, %c0_i32_0 : i32, i32
  }
  func.func @transform_7(%arg0: i32) -> (i32, i32) {
    %c0_i32 = arith.constant 0 : i32
    %c0_i32_0 = arith.constant 0 : i32
    %c0_i32_1 = arith.constant 0 : i32
    return %c0_i32, %c0_i32_0 : i32, i32
  }
  func.func @transform_8(%arg0: i32) -> i32 {
    %c0_i32 = arith.constant 0 : i32
    %c0_i32_0 = arith.constant 0 : i32
    return %c0_i32 : i32
  }
  func.func @transform_9(%arg0: i32) -> (i32, i32, i32, i32) {
    %c0_i32 = arith.constant 0 : i32
    %c0_i32_0 = arith.constant 0 : i32
    %c0_i32_1 = arith.constant 0 : i32
    %c0_i32_2 = arith.constant 0 : i32
    return %arg0, %c0_i32, %c0_i32_0, %c0_i32_1 : i32, i32, i32, i32
  }
}

</mosaic_0001>

<llo_original>
// kernel: tpu_custom_call.1
$region0: #{tpu_custom_call.1}
  #allocation0 [shape = 'u32[]', space=smem, size = 0x4, offset = 0x4, fixed_abs, tag = 'smem constant byte address 0x4 - core index']
  #allocation1 [shape = 'u32[144,128]{1,0:T(1,128)}', space=vmem, size = 0x12000, scoped, tag = 'internal scratch']
  #allocation2 [shape = 'f32[1,18,18,128]{3,2,1,0:T(8,128)}', space=vmem, size = 0x36000, scoped, tag = 'scratch operand']
  #allocation3 [shape = 'bf16[1,16,16,1152]{3,2,1,0:T(16,128)(2,1)}', space=vmem, size = 0x90000, scoped, tag = 'scratch operand']
  #allocation4 [shape = 'f32[1]{0:T(128)S(6)}', space=smem, size = 0x200, scoped, tag = 'scoped memory for tpu_custom_call.1']
  %s0 = inlined_call_operand.vmem [shape: f32[2,16,16,1], index: 0, kind: input, shape index: {}]
  %s1 = inlined_call_operand.hbm [shape: bf16[1152,128], index: 1, kind: input, shape index: {}]
  %s2 = inlined_call_operand.vmem [shape: f32[1,128], index: 2, kind: input, shape index: {}]
  %s3 = inlined_call_operand.hbm [shape: bf16[1152,128], index: 3, kind: input, shape index: {}]
  %s4 = inlined_call_operand.vmem [shape: f32[1,128], index: 4, kind: input, shape index: {}]
  %s5 = inlined_call_operand.hbm [shape: bf16[1152,128], index: 5, kind: input, shape index: {}]
  %s6 = inlined_call_operand.vmem [shape: f32[1,128], index: 6, kind: input, shape index: {}]
  %s7 = inlined_call_operand.vmem [shape: f32[9,128], index: 7, kind: input, shape index: {}]
  %s8 = inlined_call_operand.<no memory space> [shape: f32[1], index: 8, kind: input, shape index: {}]
  %s9 = inlined_call_operand.vmem [shape: f32[2,16,16,1], index: 9, kind: output, shape index: {}]
  %s10 = sld [smem:[#allocation0]]
  $region81: #{tpu_custom_call.1} parent=0
    _
  %s12 = ssub.s32 1, %s10
  %s13 = scalar_select 0, %s12, %s10
  %14 = sst [smem:[#allocation4]] %s8
  $region1: #{tpu_custom_call.1} parent=0
    #allocation5 [shape = 'u8[294912]{0}', space=vmem, size = 0x48000, scoped, tag = 'input window, operand 1, single buffered']
    #allocation6 [shape = 's32[2]{0}', space=sflag, size = 0x8, scoped, tag = 'scoped memory for tpu_custom_call.1']
    #allocation7 [shape = 'u8[294912]{0}', space=vmem, size = 0x48000, scoped, tag = 'input window, operand 3, single buffered']
    #allocation8 [shape = 's32[1]{0}', space=sflag, size = 0x4, scoped, tag = 'scoped memory for tpu_custom_call.1']
    #allocation9 [shape = 'u8[294912]{0}', space=vmem, size = 0x48000, scoped, tag = 'input window, operand 5, single buffered']
    %15 = vsyncpa [#allocation6], 0
    %16 = vsyncpa [#allocation8], 0
    loop: start=0, step=1, limit=4
    $region2: #{tpu_custom_call.1} parent=1 // loop_pre_header
      _
    $region3: #{tpu_custom_call.1} parent=1 // loop_header
      %s18 = sphi 0, %s22
      %p19 = scmp.ge.s32.totalorder %s18, 4
      %s28 = sphi 0, %s30
      %s31 = sphi 0, %s28
      %s32 = sphi 0, %s31
      %s48 = sphi 0, %s32
      %s52 = sphi 0, %s52
      %s54 = sphi 0, %s52
      %s55 = sphi 0, %s54
      %s69 = sphi 0, %s55
      %s73 = sphi 0, %s73
      %s75 = sphi 0, %s73
      %s76 = sphi 0, %s75
      %s90 = sphi 0, %s76
      %s94 = sphi 0, %s94
      %s96 = sphi 0, %s94
      %s97 = sphi 0, %s96
      %s111 = sphi 0, %s97
      %s115 = sphi 0, %s115
      %s117 = sphi 0, %s115
      %s118 = sphi 0, %s117
      %s132 = sphi 0, %s118
      %s136 = sphi 0, %s136
      %s138 = sphi 0, %s136
      %s139 = sphi 0, %s138
      %s153 = sphi 0, %s139
      %s157 = sphi 0, %s157
      %s159 = sphi 0, %s157
      %s160 = sphi 0, %s159
      %s174 = sphi 0, %s160
      %s178 = sphi 0, %s178
      %s180 = sphi 0, %s178
      %s181 = sphi 0, %s180
      %s195 = sphi 0, %s181
      %s199 = sphi 0, %s199
      %s201 = sphi 0, %s199
      %s202 = sphi 0, %s201
      %s216 = sphi 0, %s202
      %s222 = sphi 0, %s224
      %s225 = sphi 0, %s222
      %s226 = sphi 0, %s225
      %s242 = sphi 0, %s226
    $region4: #{tpu_custom_call.1} parent=1 // loop_header_branch
      %21 = sbr.rel (%p19) target = $region8
    $region5: #{tpu_custom_call.1} parent=1 // loop_body
      %s23 = ssub.s32 %s18, 1
      %s24 = ssub.s32 %s18, 2
      %s25 = sadd.s32 %s18, 1
      %s26 = ssub.s32 %s18, %s25
      %p27 = scmp.eq.s32.totalorder %s26, 0
      %s29 = sadd.s32 %s28, 1
      %s30 = scalar_select %p27, %s28, %s29
      %p33 = pneg %p27
      %p34 = scmp.eq.s32.totalorder %s18, 1
      %p35 = por %p33, %p34
      %p36 = scmp.ne.s32.totalorder %s28, %s31
      %p37 = scmp.eq.s32.totalorder %s18, 0
      %p38 = por %p36, %p37
      %p39 = scmp.ne.s32.totalorder %s28, %s31
      %p40 = scmp.eq.s32.totalorder %s23, 1
      %p41 = por %p39, %p40
      %p42 = scmp.ne.s32.totalorder %s31, %s32
      %p43 = scmp.eq.s32.totalorder %s23, 0
      %p44 = por %p42, %p43
      %p45 = scmp.ne.s32.totalorder %s31, %s32
      %p46 = scmp.eq.s32.totalorder %s24, 1
      %p47 = por %p45, %p46
      %p49 = scmp.ne.s32.totalorder %s32, %s48
      %p50 = scmp.eq.s32.totalorder %s24, 0
      %p51 = por %p49, %p50
      %s53 = sadd.s32 %s52, 1
      %p56 = scmp.eq.s32.totalorder %s18, 1
      %p57 = scmp.ne.s32.totalorder %s52, %s54
      %p58 = scmp.eq.s32.totalorder %s18, 0
      %p59 = por %p57, %p58
      %p60 = scmp.ne.s32.totalorder %s52, %s54
      %p61 = scmp.eq.s32.totalorder %s23, 1
      %p62 = por %p60, %p61
      %p63 = scmp.ne.s32.totalorder %s54, %s55
      %p64 = scmp.eq.s32.totalorder %s23, 0
      %p65 = por %p63, %p64
      %p66 = scmp.ne.s32.totalorder %s54, %s55
      %p67 = scmp.eq.s32.totalorder %s24, 1
      %p68 = por %p66, %p67
      %p70 = scmp.ne.s32.totalorder %s55, %s69
      %p71 = scmp.eq.s32.totalorder %s24, 0
      %p72 = por %p70, %p71
      %s74 = sadd.s32 %s73, 1
      %p77 = scmp.eq.s32.totalorder %s18, 1
      %p78 = scmp.ne.s32.totalorder %s73, %s75
      %p79 = scmp.eq.s32.totalorder %s18, 0
      %p80 = por %p78, %p79
      %p81 = scmp.ne.s32.totalorder %s73, %s75
      %p82 = scmp.eq.s32.totalorder %s23, 1
      %p83 = por %p81, %p82
      %p84 = scmp.ne.s32.totalorder %s75, %s76
      %p85 = scmp.eq.s32.totalorder %s23, 0
      %p86 = por %p84, %p85
      %p87 = scmp.ne.s32.totalorder %s75, %s76
      %p88 = scmp.eq.s32.totalorder %s24, 1
      %p89 = por %p87, %p88
      %p91 = scmp.ne.s32.totalorder %s76, %s90
      %p92 = scmp.eq.s32.totalorder %s24, 0
      %p93 = por %p91, %p92
      %s95 = sadd.s32 %s94, 1
      %p98 = scmp.eq.s32.totalorder %s18, 1
      %p99 = scmp.ne.s32.totalorder %s94, %s96
      %p100 = scmp.eq.s32.totalorder %s18, 0
      %p101 = por %p99, %p100
      %p102 = scmp.ne.s32.totalorder %s94, %s96
      %p103 = scmp.eq.s32.totalorder %s23, 1
      %p104 = por %p102, %p103
      %p105 = scmp.ne.s32.totalorder %s96, %s97
      %p106 = scmp.eq.s32.totalorder %s23, 0
      %p107 = por %p105, %p106
      %p108 = scmp.ne.s32.totalorder %s96, %s97
      %p109 = scmp.eq.s32.totalorder %s24, 1
      %p110 = por %p108, %p109
      %p112 = scmp.ne.s32.totalorder %s97, %s111
      %p113 = scmp.eq.s32.totalorder %s24, 0
      %p114 = por %p112, %p113
      %s116 = sadd.s32 %s115, 1
      %p119 = scmp.eq.s32.totalorder %s18, 1
      %p120 = scmp.ne.s32.totalorder %s115, %s117
      %p121 = scmp.eq.s32.totalorder %s18, 0
      %p122 = por %p120, %p121
      %p123 = scmp.ne.s32.totalorder %s115, %s117
      %p124 = scmp.eq.s32.totalorder %s23, 1
      %p125 = por %p123, %p124
      %p126 = scmp.ne.s32.totalorder %s117, %s118
      %p127 = scmp.eq.s32.totalorder %s23, 0
      %p128 = por %p126, %p127
      %p129 = scmp.ne.s32.totalorder %s117, %s118
      %p130 = scmp.eq.s32.totalorder %s24, 1
      %p131 = por %p129, %p130
      %p133 = scmp.ne.s32.totalorder %s118, %s132
      %p134 = scmp.eq.s32.totalorder %s24, 0
      %p135 = por %p133, %p134
      %s137 = sadd.s32 %s136, 1
      %p140 = scmp.eq.s32.totalorder %s18, 1
      %p141 = scmp.ne.s32.totalorder %s136, %s138
      %p142 = scmp.eq.s32.totalorder %s18, 0
      %p143 = por %p141, %p142
      %p144 = scmp.ne.s32.totalorder %s136, %s138
      %p145 = scmp.eq.s32.totalorder %s23, 1
      %p146 = por %p144, %p145
      %p147 = scmp.ne.s32.totalorder %s138, %s139
      %p148 = scmp.eq.s32.totalorder %s23, 0
      %p149 = por %p147, %p148
      %p150 = scmp.ne.s32.totalorder %s138, %s139
      %p151 = scmp.eq.s32.totalorder %s24, 1
      %p152 = por %p150, %p151
      %p154 = scmp.ne.s32.totalorder %s139, %s153
      %p155 = scmp.eq.s32.totalorder %s24, 0
      %p156 = por %p154, %p155
      %s158 = sadd.s32 %s157, 1
      %p161 = scmp.eq.s32.totalorder %s18, 1
      %p162 = scmp.ne.s32.totalorder %s157, %s159
      %p163 = scmp.eq.s32.totalorder %s18, 0
      %p164 = por %p162, %p163
      %p165 = scmp.ne.s32.totalorder %s157, %s159
      %p166 = scmp.eq.s32.totalorder %s23, 1
      %p167 = por %p165, %p166
      %p168 = scmp.ne.s32.totalorder %s159, %s160
      %p169 = scmp.eq.s32.totalorder %s23, 0
      %p170 = por %p168, %p169
      %p171 = scmp.ne.s32.totalorder %s159, %s160
      %p172 = scmp.eq.s32.totalorder %s24, 1
      %p173 = por %p171, %p172
      %p175 = scmp.ne.s32.totalorder %s160, %s174
      %p176 = scmp.eq.s32.totalorder %s24, 0
      %p177 = por %p175, %p176
      %s179 = sadd.s32 %s178, 1
      %p182 = scmp.eq.s32.totalorder %s18, 1
      %p183 = scmp.ne.s32.totalorder %s178, %s180
      %p184 = scmp.eq.s32.totalorder %s18, 0
      %p185 = por %p183, %p184
      %p186 = scmp.ne.s32.totalorder %s178, %s180
      %p187 = scmp.eq.s32.totalorder %s23, 1
      %p188 = por %p186, %p187
      %p189 = scmp.ne.s32.totalorder %s180, %s181
      %p190 = scmp.eq.s32.totalorder %s23, 0
      %p191 = por %p189, %p190
      %p192 = scmp.ne.s32.totalorder %s180, %s181
      %p193 = scmp.eq.s32.totalorder %s24, 1
      %p194 = por %p192, %p193
      %p196 = scmp.ne.s32.totalorder %s181, %s195
      %p197 = scmp.eq.s32.totalorder %s24, 0
      %p198 = por %p196, %p197
      %s200 = sadd.s32 %s199, 1
      %p203 = scmp.eq.s32.totalorder %s18, 1
      %p204 = scmp.ne.s32.totalorder %s199, %s201
      %p205 = scmp.eq.s32.totalorder %s18, 0
      %p206 = por %p204, %p205
      %p207 = scmp.ne.s32.totalorder %s199, %s201
      %p208 = scmp.eq.s32.totalorder %s23, 1
      %p209 = por %p207, %p208
      %p210 = scmp.ne.s32.totalorder %s201, %s202
      %p211 = scmp.eq.s32.totalorder %s23, 0
      %p212 = por %p210, %p211
      %p213 = scmp.ne.s32.totalorder %s201, %s202
      %p214 = scmp.eq.s32.totalorder %s24, 1
      %p215 = por %p213, %p214
      %p217 = scmp.ne.s32.totalorder %s202, %s216
      %p218 = scmp.eq.s32.totalorder %s24, 0
      %p219 = por %p217, %p218
      %s220 = ssub.s32 %s18, %s25
      %p221 = scmp.eq.s32.totalorder %s220, 0
      %s223 = sadd.s32 %s222, 1
      %s224 = scalar_select %p221, %s222, %s223
      %p227 = pneg %p221
      %p228 = scmp.eq.s32.totalorder %s18, 1
      %p229 = por %p227, %p228
      %p230 = scmp.ne.s32.totalorder %s222, %s225
      %p231 = scmp.eq.s32.totalorder %s18, 0
      %p232 = por %p230, %p231
      %p233 = scmp.ne.s32.totalorder %s222, %s225
      %p234 = scmp.eq.s32.totalorder %s23, 1
      %p235 = por %p233, %p234
      %p236 = scmp.ne.s32.totalorder %s225, %s226
      %p237 = scmp.eq.s32.totalorder %s23, 0
      %p238 = por %p236, %p237
      %p239 = scmp.ne.s32.totalorder %s225, %s226
      %p240 = scmp.eq.s32.totalorder %s24, 1
      %p241 = por %p239, %p240
      %p243 = scmp.ne.s32.totalorder %s226, %s242
      %p244 = scmp.eq.s32.totalorder %s24, 0
      %p245 = por %p243, %p244
      %p246 = scmp.le.s32.totalorder 1, %s18
      %p247 = scmp.lt.s32.totalorder %s18, 3
      %p248 = pnand %p246, %p247
      %p249 = pneg %p248
      // Predicated region
      $region9: #{tpu_custom_call.1} parent=5 // pred_check
        _
      $region10: #{tpu_custom_call.1} parent=5 // pred_check_branch
        %251 = sbr.rel (%p248) target = $region12
      $region11: #{tpu_custom_call.1} parent=5 // pred_region
        %s252 = ssub.s32 %s18, 1
        // Predicated region
        $region13: #{tpu_custom_call.1} parent=11 // pred_check
          %p253 = pneg %p65
        $region14: #{tpu_custom_call.1} parent=11 // pred_check_branch
          %255 = sbr.rel (%p253) target = $region16
        $region15: #{tpu_custom_call.1} parent=11 // pred_region
          %s257 = ssub.s32 9216, 9216
          %258 = vsyncadd [#allocation6], %s257
          %s259 = sshll.u32 [#allocation5], 4
          %s260 = int_to_ptr.vmem [resolvable:$true] %s259
          %265 = dma.hbm_to_vmem [thread:$0]  %s1, 9216, %s260, [#allocation6], 64, 64, 4
        $region16: #{tpu_custom_call.1} parent=11 // pred_fallthru
          _
        // Predicated region
        $region17: #{tpu_custom_call.1} parent=11 // pred_check
          %p266 = pneg %p86
        $region18: #{tpu_custom_call.1} parent=11 // pred_check_branch
          %268 = sbr.rel (%p266) target = $region20
        $region19: #{tpu_custom_call.1} parent=11 // pred_region
          _
        $region20: #{tpu_custom_call.1} parent=11 // pred_fallthru
          _
        // Predicated region
        $region21: #{tpu_custom_call.1} parent=11 // pred_check
          %p269 = pneg %p107
        $region22: #{tpu_custom_call.1} parent=11 // pred_check_branch
          %271 = sbr.rel (%p269) target = $region24
        $region23: #{tpu_custom_call.1} parent=11 // pred_region
          %s273 = ssub.s32 9216, 9216
          %274 = vsyncadd [#allocation8], %s273
          %s275 = sshll.u32 [#allocation7], 4
          %s276 = int_to_ptr.vmem [resolvable:$true] %s275
          %281 = dma.hbm_to_vmem [thread:$0]  %s3, 9216, %s276, [#allocation8], 64, 64, 4
        $region24: #{tpu_custom_call.1} parent=11 // pred_fallthru
          _
        // Predicated region
        $region25: #{tpu_custom_call.1} parent=11 // pred_check
          %p282 = pneg %p128
        $region26: #{tpu_custom_call.1} parent=11 // pred_check_branch
          %284 = sbr.rel (%p282) target = $region28
        $region27: #{tpu_custom_call.1} parent=11 // pred_region
          _
        $region28: #{tpu_custom_call.1} parent=11 // pred_fallthru
          _
        // Predicated region
        $region29: #{tpu_custom_call.1} parent=11 // pred_check
          %p285 = pneg %p149
        $region30: #{tpu_custom_call.1} parent=11 // pred_check_branch
          %287 = sbr.rel (%p285) target = $region32
        $region31: #{tpu_custom_call.1} parent=11 // pred_region
          %s289 = ssub.s32 9216, 9216
          %290 = vsyncadd [#allocation8], %s289
          %s291 = sshll.u32 [#allocation9], 4
          %s292 = int_to_ptr.vmem [resolvable:$true] %s291
          %297 = dma.hbm_to_vmem [thread:$0]  %s5, 9216, %s292, [#allocation8], 64, 64, 4
        $region32: #{tpu_custom_call.1} parent=11 // pred_fallthru
          _
        // Predicated region
        $region33: #{tpu_custom_call.1} parent=11 // pred_check
          %p298 = pneg %p170
        $region34: #{tpu_custom_call.1} parent=11 // pred_check_branch
          %300 = sbr.rel (%p298) target = $region36
        $region35: #{tpu_custom_call.1} parent=11 // pred_region
          _
        $region36: #{tpu_custom_call.1} parent=11 // pred_fallthru
          _
        // Predicated region
        $region37: #{tpu_custom_call.1} parent=11 // pred_check
          %p301 = pneg %p191
        $region38: #{tpu_custom_call.1} parent=11 // pred_check_branch
          %303 = sbr.rel (%p301) target = $region40
        $region39: #{tpu_custom_call.1} parent=11 // pred_region
          _
        $region40: #{tpu_custom_call.1} parent=11 // pred_fallthru
          _
        // Predicated region
        $region41: #{tpu_custom_call.1} parent=11 // pred_check
          %p304 = pneg %p212
        $region42: #{tpu_custom_call.1} parent=11 // pred_check_branch
          %306 = sbr.rel (%p304) target = $region44
        $region43: #{tpu_custom_call.1} parent=11 // pred_region
          _
        $region44: #{tpu_custom_call.1} parent=11 // pred_fallthru
          _
      $region12: #{tpu_custom_call.1} parent=5 // pred_fallthru
        _
      %p307 = scmp.lt.s32.totalorder %s18, 2
      // Predicated region
      $region45: #{tpu_custom_call.1} parent=5 // pred_check
        %p308 = pneg %p307
      $region46: #{tpu_custom_call.1} parent=5 // pred_check_branch
        %310 = sbr.rel (%p308) target = $region48
      $region47: #{tpu_custom_call.1} parent=5 // pred_region
        // Predicated region
        $region49: #{tpu_custom_call.1} parent=47 // pred_check
          %p311 = pneg %p38
        $region50: #{tpu_custom_call.1} parent=47 // pred_check_branch
          %313 = sbr.rel (%p311) target = $region52
        $region51: #{tpu_custom_call.1} parent=47 // pred_region
          %p314 = scmp.lt.s32.totalorder %s18, 1
          %s315 = scalar_select %p314, %s18, 1
          %s316 = smul.addr %s315, 32
          %s317 = smul.addr %s316, 8
          %s318 = scalar_lea.vmem %s0, %s317
        $region52: #{tpu_custom_call.1} parent=47 // pred_fallthru
          _
      $region48: #{tpu_custom_call.1} parent=5 // pred_fallthru
        _
      %p319 = scmp.le.s32.totalorder 1, %s18
      %p320 = scmp.lt.s32.totalorder %s18, 3
      %p321 = pnand %p319, %p320
      %p322 = pneg %p321
      // Predicated region
      $region53: #{tpu_custom_call.1} parent=5 // pred_check
        _
      $region54: #{tpu_custom_call.1} parent=5 // pred_check_branch
        %324 = sbr.rel (%p321) target = $region56
      $region55: #{tpu_custom_call.1} parent=5 // pred_region
        %s325 = ssub.s32 %s18, 1
        // Predicated region
        $region57: #{tpu_custom_call.1} parent=55 // pred_check
          %p326 = pneg %p65
        $region58: #{tpu_custom_call.1} parent=55 // pred_check_branch
          %328 = sbr.rel (%p326) target = $region60
        $region59: #{tpu_custom_call.1} parent=55 // pred_region
          %329 = dma.done [#allocation6], 9216
        $region60: #{tpu_custom_call.1} parent=55 // pred_fallthru
          _
        // Predicated region
        $region61: #{tpu_custom_call.1} parent=55 // pred_check
          %p330 = pneg %p107
        $region62: #{tpu_custom_call.1} parent=55 // pred_check_branch
          %332 = sbr.rel (%p330) target = $region64
        $region63: #{tpu_custom_call.1} parent=55 // pred_region
          %333 = dma.done [#allocation8], 9216
        $region64: #{tpu_custom_call.1} parent=55 // pred_fallthru
          _
        // Predicated region
        $region65: #{tpu_custom_call.1} parent=55 // pred_check
          %p334 = pneg %p149
        $region66: #{tpu_custom_call.1} parent=55 // pred_check_branch
          %336 = sbr.rel (%p334) target = $region68
        $region67: #{tpu_custom_call.1} parent=55 // pred_region
          %337 = dma.done [#allocation8], 9216
        $region68: #{tpu_custom_call.1} parent=55 // pred_fallthru
          _
        %p338 = scmp.lt.s32.totalorder %s23, 1
        %s339 = scalar_select %p338, %s23, 1
        %s340 = smul.addr %s339, 32
        %s341 = smul.addr %s340, 8
        %s342 = scalar_lea.vmem %s0, %s341
        %p343 = pneg %p44
        %p344 = pneg %p41
        %p345 = pneg %p65
        %p346 = pneg %p62
        %p347 = pneg %p86
        %p348 = pneg %p83
        %p349 = pneg %p107
        %p350 = pneg %p104
        %p351 = pneg %p128
        %p352 = pneg %p125
        %p353 = pneg %p149
        %p354 = pneg %p146
        %p355 = pneg %p170
        %p356 = pneg %p167
        %p357 = pneg %p191
        %p358 = pneg %p188
        %p359 = pneg %p212
        %p360 = pneg %p209
        %p361 = pneg %p238
        %p362 = pneg %p235
        %p363 = scmp.lt.s32.totalorder %s23, 1
        %s364 = scalar_select %p363, %s23, 1
        %s365 = smul.addr %s364, 32
        %s366 = smul.addr %s365, 8
        %s367 = scalar_lea.vmem %s9, %s366
        %p368 = scmp.lt.s32.totalorder %s23, 1
        %s369 = scalar_select %p368, %s23, 1
        %s370 = smul.addr %s369, 32
        %s371 = smul.addr %s370, 8
        %s372 = scalar_lea.vmem %s0, %s371
        %p373 = scmp.lt.s32.totalorder %s23, 1
        %s374 = scalar_select %p373, %s23, 1
        %s375 = smul.addr %s374, 32
        %s376 = smul.addr %s375, 8
        %s377 = scalar_lea.vmem %s9, %s376
        %379 = vst [vmem:[#allocation2] sm:$0xff] 0.0
        %380 = vst [vmem:[#allocation2 + $0x8] sm:$0xff] 0.0
        %381 = vst [vmem:[#allocation2 + $0x10] sm:$0x3] 0.0
        %382 = vst [vmem:[#allocation2 + $0x18] sm:$0xff] 0.0
        %383 = vst [vmem:[#allocation2 + $0x20] sm:$0xff] 0.0
        %384 = vst [vmem:[#allocation2 + $0x28] sm:$0x3] 0.0
        %385 = vst [vmem:[#allocation2 + $0x30] sm:$0xff] 0.0
        %386 = vst [vmem:[#allocation2 + $0x38] sm:$0xff] 0.0
        %387 = vst [vmem:[#allocation2 + $0x40] sm:$0x3] 0.0
        %388 = vst [vmem:[#allocation2 + $0x48] sm:$0xff] 0.0
        %389 = vst [vmem:[#allocation2 + $0x50] sm:$0xff] 0.0
        %390 = vst [vmem:[#allocation2 + $0x58] sm:$0x3] 0.0
        %391 = vst [vmem:[#allocation2 + $0x60] sm:$0xff] 0.0
        %392 = vst [vmem:[#allocation2 + $0x68] sm:$0xff] 0.0
        %393 = vst [vmem:[#allocation2 + $0x70] sm:$0x3] 0.0
        %394 = vst [vmem:[#allocation2 + $0x78] sm:$0xff] 0.0
        %395 = vst [vmem:[#allocation2 + $0x80] sm:$0xff] 0.0
        %396 = vst [vmem:[#allocation2 + $0x88] sm:$0x3] 0.0
        %397 = vst [vmem:[#allocation2 + $0x90] sm:$0xff] 0.0
        %398 = vst [vmem:[#allocation2 + $0x98] sm:$0xff] 0.0
        %399 = vst [vmem:[#allocation2 + $0xa0] sm:$0x3] 0.0
        %400 = vst [vmem:[#allocation2 + $0xa8] sm:$0xff] 0.0
        %401 = vst [vmem:[#allocation2 + $0xb0] sm:$0xff] 0.0
        %402 = vst [vmem:[#allocation2 + $0xb8] sm:$0x3] 0.0
        %403 = vst [vmem:[#allocation2 + $0xc0] sm:$0xff] 0.0
        %404 = vst [vmem:[#allocation2 + $0xc8] sm:$0xff] 0.0
        %405 = vst [vmem:[#allocation2 + $0xd0] sm:$0x3] 0.0
        %406 = vst [vmem:[#allocation2 + $0xd8] sm:$0xff] 0.0
        %407 = vst [vmem:[#allocation2 + $0xe0] sm:$0xff] 0.0
        %408 = vst [vmem:[#allocation2 + $0xe8] sm:$0x3] 0.0
        %409 = vst [vmem:[#allocation2 + $0xf0] sm:$0xff] 0.0
        %410 = vst [vmem:[#allocation2 + $0xf8] sm:$0xff] 0.0
        %411 = vst [vmem:[#allocation2 + $0x100] sm:$0x3] 0.0
        %412 = vst [vmem:[#allocation2 + $0x108] sm:$0xff] 0.0
        %413 = vst [vmem:[#allocation2 + $0x110] sm:$0xff] 0.0
        %414 = vst [vmem:[#allocation2 + $0x118] sm:$0x3] 0.0
        %415 = vst [vmem:[#allocation2 + $0x120] sm:$0xff] 0.0
        %416 = vst [vmem:[#allocation2 + $0x128] sm:$0xff] 0.0
        %417 = vst [vmem:[#allocation2 + $0x130] sm:$0x3] 0.0
        %418 = vst [vmem:[#allocation2 + $0x138] sm:$0xff] 0.0
        %419 = vst [vmem:[#allocation2 + $0x140] sm:$0xff] 0.0
        %420 = vst [vmem:[#allocation2 + $0x148] sm:$0x3] 0.0
        %421 = vst [vmem:[#allocation2 + $0x150] sm:$0xff] 0.0
        %422 = vst [vmem:[#allocation2 + $0x158] sm:$0xff] 0.0
        %423 = vst [vmem:[#allocation2 + $0x160] sm:$0x3] 0.0
        %424 = vst [vmem:[#allocation2 + $0x168] sm:$0xff] 0.0
        %425 = vst [vmem:[#allocation2 + $0x170] sm:$0xff] 0.0
        %426 = vst [vmem:[#allocation2 + $0x178] sm:$0x3] 0.0
        %427 = vst [vmem:[#allocation2 + $0x180] sm:$0xff] 0.0
        %428 = vst [vmem:[#allocation2 + $0x188] sm:$0xff] 0.0
        %429 = vst [vmem:[#allocation2 + $0x190] sm:$0x3] 0.0
        %430 = vst [vmem:[#allocation2 + $0x198] sm:$0xff] 0.0
        %431 = vst [vmem:[#allocation2 + $0x1a0] sm:$0xff] 0.0
        %432 = vst [vmem:[#allocation2 + $0x1a8] sm:$0x3] 0.0
        %v433 = vld [vmem:[%s372] sm:$0xff]
        %v434 = vld [vmem:[%s372 + $0x8] sm:$0xff]
        %v435 = vld [vmem:[%s372 + $0x10] sm:$0xff]
        %v436 = vld [vmem:[%s372 + $0x18] sm:$0xff]
        %v437 = vld [vmem:[%s372 + $0x20] sm:$0xff]
        %v438 = vld [vmem:[%s372 + $0x28] sm:$0xff]
        %v439 = vld [vmem:[%s372 + $0x30] sm:$0xff]
        %v440 = vld [vmem:[%s372 + $0x38] sm:$0xff]
        %v441 = vld [vmem:[%s372 + $0x40] sm:$0xff]
        %v442 = vld [vmem:[%s372 + $0x48] sm:$0xff]
        %v443 = vld [vmem:[%s372 + $0x50] sm:$0xff]
        %v444 = vld [vmem:[%s372 + $0x58] sm:$0xff]
        %v445 = vld [vmem:[%s372 + $0x60] sm:$0xff]
        %v446 = vld [vmem:[%s372 + $0x68] sm:$0xff]
        %v447 = vld [vmem:[%s372 + $0x70] sm:$0xff]
        %v448 = vld [vmem:[%s372 + $0x78] sm:$0xff]
        %v449 = vld [vmem:[%s372 + $0x80] sm:$0xff]
        %v450 = vld [vmem:[%s372 + $0x88] sm:$0xff]
        %v451 = vld [vmem:[%s372 + $0x90] sm:$0xff]
        %v452 = vld [vmem:[%s372 + $0x98] sm:$0xff]
        %v453 = vld [vmem:[%s372 + $0xa0] sm:$0xff]
        %v454 = vld [vmem:[%s372 + $0xa8] sm:$0xff]
        %v455 = vld [vmem:[%s372 + $0xb0] sm:$0xff]
        %v456 = vld [vmem:[%s372 + $0xb8] sm:$0xff]
        %v457 = vld [vmem:[%s372 + $0xc0] sm:$0xff]
        %v458 = vld [vmem:[%s372 + $0xc8] sm:$0xff]
        %v459 = vld [vmem:[%s372 + $0xd0] sm:$0xff]
        %v460 = vld [vmem:[%s372 + $0xd8] sm:$0xff]
        %v461 = vld [vmem:[%s372 + $0xe0] sm:$0xff]
        %v462 = vld [vmem:[%s372 + $0xe8] sm:$0xff]
        %v463 = vld [vmem:[%s372 + $0xf0] sm:$0xff]
        %v464 = vld [vmem:[%s372 + $0xf8] sm:$0xff]
        %s465 = scalar_lea.vmem [#allocation2], 24
        %vm466 = vcmask 7168
        %467 = vst.msk [vmem:[%s465 + $0x1] sm:$0xff] %vm466, %v433
        %468 = vst.msk [vmem:[%s465 + $0x9] sm:$0xff] %vm466, %v434
        %469 = vst.msk [vmem:[%s465 + $0x19] sm:$0xff] %vm466, %v435
        %470 = vst.msk [vmem:[%s465 + $0x21] sm:$0xff] %vm466, %v436
        %471 = vst.msk [vmem:[%s465 + $0x31] sm:$0xff] %vm466, %v437
        %472 = vst.msk [vmem:[%s465 + $0x39] sm:$0xff] %vm466, %v438
        %473 = vst.msk [vmem:[%s465 + $0x49] sm:$0xff] %vm466, %v439
        %474 = vst.msk [vmem:[%s465 + $0x51] sm:$0xff] %vm466, %v440
        %475 = vst.msk [vmem:[%s465 + $0x61] sm:$0xff] %vm466, %v441
        %476 = vst.msk [vmem:[%s465 + $0x69] sm:$0xff] %vm466, %v442
        %477 = vst.msk [vmem:[%s465 + $0x79] sm:$0xff] %vm466, %v443
        %478 = vst.msk [vmem:[%s465 + $0x81] sm:$0xff] %vm466, %v444
        %479 = vst.msk [vmem:[%s465 + $0x91] sm:$0xff] %vm466, %v445
        %480 = vst.msk [vmem:[%s465 + $0x99] sm:$0xff] %vm466, %v446
        %481 = vst.msk [vmem:[%s465 + $0xa9] sm:$0xff] %vm466, %v447
        %482 = vst.msk [vmem:[%s465 + $0xb1] sm:$0xff] %vm466, %v448
        %483 = vst.msk [vmem:[%s465 + $0xc1] sm:$0xff] %vm466, %v449
        %484 = vst.msk [vmem:[%s465 + $0xc9] sm:$0xff] %vm466, %v450
        %485 = vst.msk [vmem:[%s465 + $0xd9] sm:$0xff] %vm466, %v451
        %486 = vst.msk [vmem:[%s465 + $0xe1] sm:$0xff] %vm466, %v452
        %487 = vst.msk [vmem:[%s465 + $0xf1] sm:$0xff] %vm466, %v453
        %488 = vst.msk [vmem:[%s465 + $0xf9] sm:$0xff] %vm466, %v454
        %489 = vst.msk [vmem:[%s465 + $0x109] sm:$0xff] %vm466, %v455
        %490 = vst.msk [vmem:[%s465 + $0x111] sm:$0xff] %vm466, %v456
        %491 = vst.msk [vmem:[%s465 + $0x121] sm:$0xff] %vm466, %v457
        %492 = vst.msk [vmem:[%s465 + $0x129] sm:$0xff] %vm466, %v458
        %493 = vst.msk [vmem:[%s465 + $0x139] sm:$0xff] %vm466, %v459
        %494 = vst.msk [vmem:[%s465 + $0x141] sm:$0xff] %vm466, %v460
        %495 = vst.msk [vmem:[%s465 + $0x151] sm:$0xff] %vm466, %v461
        %496 = vst.msk [vmem:[%s465 + $0x159] sm:$0xff] %vm466, %v462
        %497 = vst.msk [vmem:[%s465 + $0x169] sm:$0xff] %vm466, %v463
        %498 = vst.msk [vmem:[%s465 + $0x171] sm:$0xff] %vm466, %v464
        %v499 = vld [vmem:[#allocation2] sm:$0xff]
        %v500 = vld [vmem:[#allocation2 + $0x8] sm:$0xff]
        %v501 = vld [vmem:[#allocation2 + $0x18] sm:$0xff]
        %v502 = vld [vmem:[#allocation2 + $0x20] sm:$0xff]
        %v503 = vld [vmem:[#allocation2 + $0x30] sm:$0xff]
        %v504 = vld [vmem:[#allocation2 + $0x38] sm:$0xff]
        %v505 = vld [vmem:[#allocation2 + $0x48] sm:$0xff]
        %v506 = vld [vmem:[#allocation2 + $0x50] sm:$0xff]
        %v507 = vld [vmem:[#allocation2 + $0x60] sm:$0xff]
        %v508 = vld [vmem:[#allocation2 + $0x68] sm:$0xff]
        %v509 = vld [vmem:[#allocation2 + $0x78] sm:$0xff]
        %v510 = vld [vmem:[#allocation2 + $0x80] sm:$0xff]
        %v511 = vld [vmem:[#allocation2 + $0x90] sm:$0xff]
        %v512 = vld [vmem:[#allocation2 + $0x98] sm:$0xff]
        %v513 = vld [vmem:[#allocation2 + $0xa8] sm:$0xff]
        %v514 = vld [vmem:[#allocation2 + $0xb0] sm:$0xff]
        %v515 = vld [vmem:[#allocation2 + $0xc0] sm:$0xff]
        %v516 = vld [vmem:[#allocation2 + $0xc8] sm:$0xff]
        %v517 = vld [vmem:[#allocation2 + $0xd8] sm:$0xff]
        %v518 = vld [vmem:[#allocation2 + $0xe0] sm:$0xff]
        %v519 = vld [vmem:[#allocation2 + $0xf0] sm:$0xff]
        %v520 = vld [vmem:[#allocation2 + $0xf8] sm:$0xff]
        %v521 = vld [vmem:[#allocation2 + $0x108] sm:$0xff]
        %v522 = vld [vmem:[#allocation2 + $0x110] sm:$0xff]
        %v523 = vld [vmem:[#allocation2 + $0x120] sm:$0xff]
        %v524 = vld [vmem:[#allocation2 + $0x128] sm:$0xff]
        %v525 = vld [vmem:[#allocation2 + $0x138] sm:$0xff]
        %v526 = vld [vmem:[#allocation2 + $0x140] sm:$0xff]
        %v527 = vld [vmem:[#allocation2 + $0x150] sm:$0xff]
        %v528 = vld [vmem:[#allocation2 + $0x158] sm:$0xff]
        %v529 = vld [vmem:[#allocation2 + $0x168] sm:$0xff]
        %v530 = vld [vmem:[#allocation2 + $0x170] sm:$0xff]
        %v531 = vpack.c.bf16 %v500, %v499
        %v532 = vpack.c.bf16 %v502, %v501
        %v533 = vpack.c.bf16 %v504, %v503
        %v534 = vpack.c.bf16 %v506, %v505
        %v535 = vpack.c.bf16 %v508, %v507
        %v536 = vpack.c.bf16 %v510, %v509
        %v537 = vpack.c.bf16 %v512, %v511
        %v538 = vpack.c.bf16 %v514, %v513
        %v539 = vpack.c.bf16 %v516, %v515
        %v540 = vpack.c.bf16 %v518, %v517
        %v541 = vpack.c.bf16 %v520, %v519
        %v542 = vpack.c.bf16 %v522, %v521
        %v543 = vpack.c.bf16 %v524, %v523
        %v544 = vpack.c.bf16 %v526, %v525
        %v545 = vpack.c.bf16 %v528, %v527
        %v546 = vpack.c.bf16 %v530, %v529
        %547 = vst [vmem:[#allocation3] sm:$0xff] %v531
        %548 = vst [vmem:[#allocation3 + $0x48] sm:$0xff] %v532
        %549 = vst [vmem:[#allocation3 + $0x90] sm:$0xff] %v533
        %550 = vst [vmem:[#allocation3 + $0xd8] sm:$0xff] %v534
        %551 = vst [vmem:[#allocation3 + $0x120] sm:$0xff] %v535
        %552 = vst [vmem:[#allocation3 + $0x168] sm:$0xff] %v536
        %553 = vst [vmem:[#allocation3 + $0x1b0] sm:$0xff] %v537
        %554 = vst [vmem:[#allocation3 + $0x1f8] sm:$0xff] %v538
        %555 = vst [vmem:[#allocation3 + $0x240] sm:$0xff] %v539
        %556 = vst [vmem:[#allocation3 + $0x288] sm:$0xff] %v540
        %557 = vst [vmem:[#allocation3 + $0x2d0] sm:$0xff] %v541
        %558 = vst [vmem:[#allocation3 + $0x318] sm:$0xff] %v542
        %559 = vst [vmem:[#allocation3 + $0x360] sm:$0xff] %v543
        %560 = vst [vmem:[#allocation3 + $0x3a8] sm:$0xff] %v544
        %561 = vst [vmem:[#allocation3 + $0x3f0] sm:$0xff] %v545
        %562 = vst [vmem:[#allocation3 + $0x438] sm:$0xff] %v546
        %v563 = vld [vmem:[#allocation2 + $0x1] sm:$0xff]
        %v564 = vld [vmem:[#allocation2 + $0x9] sm:$0xff]
        %v565 = vld [vmem:[#allocation2 + $0x19] sm:$0xff]
        %v566 = vld [vmem:[#allocation2 + $0x21] sm:$0xff]
        %v567 = vld [vmem:[#allocation2 + $0x31] sm:$0xff]
        %v568 = vld [vmem:[#allocation2 + $0x39] sm:$0xff]
        %v569 = vld [vmem:[#allocation2 + $0x49] sm:$0xff]
        %v570 = vld [vmem:[#allocation2 + $0x51] sm:$0xff]
        %v571 = vld [vmem:[#allocation2 + $0x61] sm:$0xff]
        %v572 = vld [vmem:[#allocation2 + $0x69] sm:$0xff]
        %v573 = vld [vmem:[#allocation2 + $0x79] sm:$0xff]
        %v574 = vld [vmem:[#allocation2 + $0x81] sm:$0xff]
        %v575 = vld [vmem:[#allocation2 + $0x91] sm:$0xff]
        %v576 = vld [vmem:[#allocation2 + $0x99] sm:$0xff]
        %v577 = vld [vmem:[#allocation2 + $0xa9] sm:$0xff]
        %v578 = vld [vmem:[#allocation2 + $0xb1] sm:$0xff]
        %v579 = vld [vmem:[#allocation2 + $0xc1] sm:$0xff]
        %v580 = vld [vmem:[#allocation2 + $0xc9] sm:$0xff]
        %v581 = vld [vmem:[#allocation2 + $0xd9] sm:$0xff]
        %v582 = vld [vmem:[#allocation2 + $0xe1] sm:$0xff]
        %v583 = vld [vmem:[#allocation2 + $0xf1] sm:$0xff]
        %v584 = vld [vmem:[#allocation2 + $0xf9] sm:$0xff]
        %v585 = vld [vmem:[#allocation2 + $0x109] sm:$0xff]
        %v586 = vld [vmem:[#allocation2 + $0x111] sm:$0xff]
        %v587 = vld [vmem:[#allocation2 + $0x121] sm:$0xff]
        %v588 = vld [vmem:[#allocation2 + $0x129] sm:$0xff]
        %v589 = vld [vmem:[#allocation2 + $0x139] sm:$0xff]
        %v590 = vld [vmem:[#allocation2 + $0x141] sm:$0xff]
        %v591 = vld [vmem:[#allocation2 + $0x151] sm:$0xff]
        %v592 = vld [vmem:[#allocation2 + $0x159] sm:$0xff]
        %v593 = vld [vmem:[#allocation2 + $0x169] sm:$0xff]
        %v594 = vld [vmem:[#allocation2 + $0x171] sm:$0xff]
        %v595 = vpack.c.bf16 %v564, %v563
        %v596 = vpack.c.bf16 %v566, %v565
        %v597 = vpack.c.bf16 %v568, %v567
        %v598 = vpack.c.bf16 %v570, %v569
        %v599 = vpack.c.bf16 %v572, %v571
        %v600 = vpack.c.bf16 %v574, %v573
        %v601 = vpack.c.bf16 %v576, %v575
        %v602 = vpack.c.bf16 %v578, %v577
        %v603 = vpack.c.bf16 %v580, %v579
        %v604 = vpack.c.bf16 %v582, %v581
        %v605 = vpack.c.bf16 %v584, %v583
        %v606 = vpack.c.bf16 %v586, %v585
        %v607 = vpack.c.bf16 %v588, %v587
        %v608 = vpack.c.bf16 %v590, %v589
        %v609 = vpack.c.bf16 %v592, %v591
        %v610 = vpack.c.bf16 %v594, %v593
        %611 = vst [vmem:[#allocation3 + $0x8] sm:$0xff] %v595
        %612 = vst [vmem:[#allocation3 + $0x50] sm:$0xff] %v596
        %613 = vst [vmem:[#allocation3 + $0x98] sm:$0xff] %v597
        %614 = vst [vmem:[#allocation3 + $0xe0] sm:$0xff] %v598
        %615 = vst [vmem:[#allocation3 + $0x128] sm:$0xff] %v599
        %616 = vst [vmem:[#allocation3 + $0x170] sm:$0xff] %v600
        %617 = vst [vmem:[#allocation3 + $0x1b8] sm:$0xff] %v601
        %618 = vst [vmem:[#allocation3 + $0x200] sm:$0xff] %v602
        %619 = vst [vmem:[#allocation3 + $0x248] sm:$0xff] %v603
        %620 = vst [vmem:[#allocation3 + $0x290] sm:$0xff] %v604
        %621 = vst [vmem:[#allocation3 + $0x2d8] sm:$0xff] %v605
        %622 = vst [vmem:[#allocation3 + $0x320] sm:$0xff] %v606
        %623 = vst [vmem:[#allocation3 + $0x368] sm:$0xff] %v607
        %624 = vst [vmem:[#allocation3 + $0x3b0] sm:$0xff] %v608
        %625 = vst [vmem:[#allocation3 + $0x3f8] sm:$0xff] %v609
        %626 = vst [vmem:[#allocation3 + $0x440] sm:$0xff] %v610
        %v627 = vld [vmem:[#allocation2 + $0x2] sm:$0xff]
        %v628 = vld [vmem:[#allocation2 + $0xa] sm:$0xff]
        %v629 = vld [vmem:[#allocation2 + $0x1a] sm:$0xff]
        %v630 = vld [vmem:[#allocation2 + $0x22] sm:$0xff]
        %v631 = vld [vmem:[#allocation2 + $0x32] sm:$0xff]
        %v632 = vld [vmem:[#allocation2 + $0x3a] sm:$0xff]
        %v633 = vld [vmem:[#allocation2 + $0x4a] sm:$0xff]
        %v634 = vld [vmem:[#allocation2 + $0x52] sm:$0xff]
        %v635 = vld [vmem:[#allocation2 + $0x62] sm:$0xff]
        %v636 = vld [vmem:[#allocation2 + $0x6a] sm:$0xff]
        %v637 = vld [vmem:[#allocation2 + $0x7a] sm:$0xff]
        %v638 = vld [vmem:[#allocation2 + $0x82] sm:$0xff]
        %v639 = vld [vmem:[#allocation2 + $0x92] sm:$0xff]
        %v640 = vld [vmem:[#allocation2 + $0x9a] sm:$0xff]
        %v641 = vld [vmem:[#allocation2 + $0xaa] sm:$0xff]
        %v642 = vld [vmem:[#allocation2 + $0xb2] sm:$0xff]
        %v643 = vld [vmem:[#allocation2 + $0xc2] sm:$0xff]
        %v644 = vld [vmem:[#allocation2 + $0xca] sm:$0xff]
        %v645 = vld [vmem:[#allocation2 + $0xda] sm:$0xff]
        %v646 = vld [vmem:[#allocation2 + $0xe2] sm:$0xff]
        %v647 = vld [vmem:[#allocation2 + $0xf2] sm:$0xff]
        %v648 = vld [vmem:[#allocation2 + $0xfa] sm:$0xff]
        %v649 = vld [vmem:[#allocation2 + $0x10a] sm:$0xff]
        %v650 = vld [vmem:[#allocation2 + $0x112] sm:$0xff]
        %v651 = vld [vmem:[#allocation2 + $0x122] sm:$0xff]
        %v652 = vld [vmem:[#allocation2 + $0x12a] sm:$0xff]
        %v653 = vld [vmem:[#allocation2 + $0x13a] sm:$0xff]
        %v654 = vld [vmem:[#allocation2 + $0x142] sm:$0xff]
        %v655 = vld [vmem:[#allocation2 + $0x152] sm:$0xff]
        %v656 = vld [vmem:[#allocation2 + $0x15a] sm:$0xff]
        %v657 = vld [vmem:[#allocation2 + $0x16a] sm:$0xff]
        %v658 = vld [vmem:[#allocation2 + $0x172] sm:$0xff]
        %v659 = vpack.c.bf16 %v628, %v627
        %v660 = vpack.c.bf16 %v630, %v629
        %v661 = vpack.c.bf16 %v632, %v631
        %v662 = vpack.c.bf16 %v634, %v633
        %v663 = vpack.c.bf16 %v636, %v635
        %v664 = vpack.c.bf16 %v638, %v637
        %v665 = vpack.c.bf16 %v640, %v639
        %v666 = vpack.c.bf16 %v642, %v641
        %v667 = vpack.c.bf16 %v644, %v643
        %v668 = vpack.c.bf16 %v646, %v645
        %v669 = vpack.c.bf16 %v648, %v647
        %v670 = vpack.c.bf16 %v650, %v649
        %v671 = vpack.c.bf16 %v652, %v651
        %v672 = vpack.c.bf16 %v654, %v653
        %v673 = vpack.c.bf16 %v656, %v655
        %v674 = vpack.c.bf16 %v658, %v657
        %675 = vst [vmem:[#allocation3 + $0x10] sm:$0xff] %v659
        %676 = vst [vmem:[#allocation3 + $0x58] sm:$0xff] %v660
        %677 = vst [vmem:[#allocation3 + $0xa0] sm:$0xff] %v661
        %678 = vst [vmem:[#allocation3 + $0xe8] sm:$0xff] %v662
        %679 = vst [vmem:[#allocation3 + $0x130] sm:$0xff] %v663
        %680 = vst [vmem:[#allocation3 + $0x178] sm:$0xff] %v664
        %681 = vst [vmem:[#allocation3 + $0x1c0] sm:$0xff] %v665
        %682 = vst [vmem:[#allocation3 + $0x208] sm:$0xff] %v666
        %683 = vst [vmem:[#allocation3 + $0x250] sm:$0xff] %v667
        %684 = vst [vmem:[#allocation3 + $0x298] sm:$0xff] %v668
        %685 = vst [vmem:[#allocation3 + $0x2e0] sm:$0xff] %v669
        %686 = vst [vmem:[#allocation3 + $0x328] sm:$0xff] %v670
        %687 = vst [vmem:[#allocation3 + $0x370] sm:$0xff] %v671
        %688 = vst [vmem:[#allocation3 + $0x3b8] sm:$0xff] %v672
        %689 = vst [vmem:[#allocation3 + $0x400] sm:$0xff] %v673
        %690 = vst [vmem:[#allocation3 + $0x448] sm:$0xff] %v674
        %v691 = vld [vmem:[%s465] sm:$0xff]
        %v692 = vld [vmem:[%s465 + $0x8] sm:$0xff]
        %v693 = vld [vmem:[%s465 + $0x18] sm:$0xff]
        %v694 = vld [vmem:[%s465 + $0x20] sm:$0xff]
        %v695 = vld [vmem:[%s465 + $0x30] sm:$0xff]
        %v696 = vld [vmem:[%s465 + $0x38] sm:$0xff]
        %v697 = vld [vmem:[%s465 + $0x48] sm:$0xff]
        %v698 = vld [vmem:[%s465 + $0x50] sm:$0xff]
        %v699 = vld [vmem:[%s465 + $0x60] sm:$0xff]
        %v700 = vld [vmem:[%s465 + $0x68] sm:$0xff]
        %v701 = vld [vmem:[%s465 + $0x78] sm:$0xff]
        %v702 = vld [vmem:[%s465 + $0x80] sm:$0xff]
        %v703 = vld [vmem:[%s465 + $0x90] sm:$0xff]
        %v704 = vld [vmem:[%s465 + $0x98] sm:$0xff]
        %v705 = vld [vmem:[%s465 + $0xa8] sm:$0xff]
        %v706 = vld [vmem:[%s465 + $0xb0] sm:$0xff]
        %v707 = vld [vmem:[%s465 + $0xc0] sm:$0xff]
        %v708 = vld [vmem:[%s465 + $0xc8] sm:$0xff]
        %v709 = vld [vmem:[%s465 + $0xd8] sm:$0xff]
        %v710 = vld [vmem:[%s465 + $0xe0] sm:$0xff]
        %v711 = vld [vmem:[%s465 + $0xf0] sm:$0xff]
        %v712 = vld [vmem:[%s465 + $0xf8] sm:$0xff]
        %v713 = vld [vmem:[%s465 + $0x108] sm:$0xff]
        %v714 = vld [vmem:[%s465 + $0x110] sm:$0xff]
        %v715 = vld [vmem:[%s465 + $0x120] sm:$0xff]
        %v716 = vld [vmem:[%s465 + $0x128] sm:$0xff]
        %v717 = vld [vmem:[%s465 + $0x138] sm:$0xff]
        %v718 = vld [vmem:[%s465 + $0x140] sm:$0xff]
        %v719 = vld [vmem:[%s465 + $0x150] sm:$0xff]
        %v720 = vld [vmem:[%s465 + $0x158] sm:$0xff]
        %v721 = vld [vmem:[%s465 + $0x168] sm:$0xff]
        %v722 = vld [vmem:[%s465 + $0x170] sm:$0xff]
        %v723 = vpack.c.bf16 %v692, %v691
        %v724 = vpack.c.bf16 %v694, %v693
        %v725 = vpack.c.bf16 %v696, %v695
        %v726 = vpack.c.bf16 %v698, %v697
        %v727 = vpack.c.bf16 %v700, %v699
        %v728 = vpack.c.bf16 %v702, %v701
        %v729 = vpack.c.bf16 %v704, %v703
        %v730 = vpack.c.bf16 %v706, %v705
        %v731 = vpack.c.bf16 %v708, %v707
        %v732 = vpack.c.bf16 %v710, %v709
        %v733 = vpack.c.bf16 %v712, %v711
        %v734 = vpack.c.bf16 %v714, %v713
        %v735 = vpack.c.bf16 %v716, %v715
        %v736 = vpack.c.bf16 %v718, %v717
        %v737 = vpack.c.bf16 %v720, %v719
        %v738 = vpack.c.bf16 %v722, %v721
        %739 = vst [vmem:[#allocation3 + $0x18] sm:$0xff] %v723
        %740 = vst [vmem:[#allocation3 + $0x60] sm:$0xff] %v724
        %741 = vst [vmem:[#allocation3 + $0xa8] sm:$0xff] %v725
        %742 = vst [vmem:[#allocation3 + $0xf0] sm:$0xff] %v726
        %743 = vst [vmem:[#allocation3 + $0x138] sm:$0xff] %v727
        %744 = vst [vmem:[#allocation3 + $0x180] sm:$0xff] %v728
        %745 = vst [vmem:[#allocation3 + $0x1c8] sm:$0xff] %v729
        %746 = vst [vmem:[#allocation3 + $0x210] sm:$0xff] %v730
        %747 = vst [vmem:[#allocation3 + $0x258] sm:$0xff] %v731
        %748 = vst [vmem:[#allocation3 + $0x2a0] sm:$0xff] %v732
        %749 = vst [vmem:[#allocation3 + $0x2e8] sm:$0xff] %v733
        %750 = vst [vmem:[#allocation3 + $0x330] sm:$0xff] %v734
        %751 = vst [vmem:[#allocation3 + $0x378] sm:$0xff] %v735
        %752 = vst [vmem:[#allocation3 + $0x3c0] sm:$0xff] %v736
        %753 = vst [vmem:[#allocation3 + $0x408] sm:$0xff] %v737
        %754 = vst [vmem:[#allocation3 + $0x450] sm:$0xff] %v738
        %v755 = vld [vmem:[%s465 + $0x1] sm:$0xff]
        %v756 = vld [vmem:[%s465 + $0x9] sm:$0xff]
        %v757 = vld [vmem:[%s465 + $0x19] sm:$0xff]
        %v758 = vld [vmem:[%s465 + $0x21] sm:$0xff]
        %v759 = vld [vmem:[%s465 + $0x31] sm:$0xff]
        %v760 = vld [vmem:[%s465 + $0x39] sm:$0xff]
        %v761 = vld [vmem:[%s465 + $0x49] sm:$0xff]
        %v762 = vld [vmem:[%s465 + $0x51] sm:$0xff]
        %v763 = vld [vmem:[%s465 + $0x61] sm:$0xff]
        %v764 = vld [vmem:[%s465 + $0x69] sm:$0xff]
        %v765 = vld [vmem:[%s465 + $0x79] sm:$0xff]
        %v766 = vld [vmem:[%s465 + $0x81] sm:$0xff]
        %v767 = vld [vmem:[%s465 + $0x91] sm:$0xff]
        %v768 = vld [vmem:[%s465 + $0x99] sm:$0xff]
        %v769 = vld [vmem:[%s465 + $0xa9] sm:$0xff]
        %v770 = vld [vmem:[%s465 + $0xb1] sm:$0xff]
        %v771 = vld [vmem:[%s465 + $0xc1] sm:$0xff]
        %v772 = vld [vmem:[%s465 + $0xc9] sm:$0xff]
        %v773 = vld [vmem:[%s465 + $0xd9] sm:$0xff]
        %v774 = vld [vmem:[%s465 + $0xe1] sm:$0xff]
        %v775 = vld [vmem:[%s465 + $0xf1] sm:$0xff]
        %v776 = vld [vmem:[%s465 + $0xf9] sm:$0xff]
        %v777 = vld [vmem:[%s465 + $0x109] sm:$0xff]
        %v778 = vld [vmem:[%s465 + $0x111] sm:$0xff]
        %v779 = vld [vmem:[%s465 + $0x121] sm:$0xff]
        %v780 = vld [vmem:[%s465 + $0x129] sm:$0xff]
        %v781 = vld [vmem:[%s465 + $0x139] sm:$0xff]
        %v782 = vld [vmem:[%s465 + $0x141] sm:$0xff]
        %v783 = vld [vmem:[%s465 + $0x151] sm:$0xff]
        %v784 = vld [vmem:[%s465 + $0x159] sm:$0xff]
        %v785 = vld [vmem:[%s465 + $0x169] sm:$0xff]
        %v786 = vld [vmem:[%s465 + $0x171] sm:$0xff]
        %v787 = vpack.c.bf16 %v756, %v755
        %v788 = vpack.c.bf16 %v758, %v757
        %v789 = vpack.c.bf16 %v760, %v759
        %v790 = vpack.c.bf16 %v762, %v761
        %v791 = vpack.c.bf16 %v764, %v763
        %v792 = vpack.c.bf16 %v766, %v765
        %v793 = vpack.c.bf16 %v768, %v767
        %v794 = vpack.c.bf16 %v770, %v769
        %v795 = vpack.c.bf16 %v772, %v771
        %v796 = vpack.c.bf16 %v774, %v773
        %v797 = vpack.c.bf16 %v776, %v775
        %v798 = vpack.c.bf16 %v778, %v777
        %v799 = vpack.c.bf16 %v780, %v779
        %v800 = vpack.c.bf16 %v782, %v781
        %v801 = vpack.c.bf16 %v784, %v783
        %v802 = vpack.c.bf16 %v786, %v785
        %803 = vst [vmem:[#allocation3 + $0x20] sm:$0xff] %v787
        %804 = vst [vmem:[#allocation3 + $0x68] sm:$0xff] %v788
        %805 = vst [vmem:[#allocation3 + $0xb0] sm:$0xff] %v789
        %806 = vst [vmem:[#allocation3 + $0xf8] sm:$0xff] %v790
        %807 = vst [vmem:[#allocation3 + $0x140] sm:$0xff] %v791
        %808 = vst [vmem:[#allocation3 + $0x188] sm:$0xff] %v792
        %809 = vst [vmem:[#allocation3 + $0x1d0] sm:$0xff] %v793
        %810 = vst [vmem:[#allocation3 + $0x218] sm:$0xff] %v794
        %811 = vst [vmem:[#allocation3 + $0x260] sm:$0xff] %v795
        %812 = vst [vmem:[#allocation3 + $0x2a8] sm:$0xff] %v796
        %813 = vst [vmem:[#allocation3 + $0x2f0] sm:$0xff] %v797
        %814 = vst [vmem:[#allocation3 + $0x338] sm:$0xff] %v798
        %815 = vst [vmem:[#allocation3 + $0x380] sm:$0xff] %v799
        %816 = vst [vmem:[#allocation3 + $0x3c8] sm:$0xff] %v800
        %817 = vst [vmem:[#allocation3 + $0x410] sm:$0xff] %v801
        %818 = vst [vmem:[#allocation3 + $0x458] sm:$0xff] %v802
        %v819 = vld [vmem:[%s465 + $0x2] sm:$0xff]
        %v820 = vld [vmem:[%s465 + $0xa] sm:$0xff]
        %v821 = vld [vmem:[%s465 + $0x1a] sm:$0xff]
        %v822 = vld [vmem:[%s465 + $0x22] sm:$0xff]
        %v823 = vld [vmem:[%s465 + $0x32] sm:$0xff]
        %v824 = vld [vmem:[%s465 + $0x3a] sm:$0xff]
        %v825 = vld [vmem:[%s465 + $0x4a] sm:$0xff]
        %v826 = vld [vmem:[%s465 + $0x52] sm:$0xff]
        %v827 = vld [vmem:[%s465 + $0x62] sm:$0xff]
        %v828 = vld [vmem:[%s465 + $0x6a] sm:$0xff]
        %v829 = vld [vmem:[%s465 + $0x7a] sm:$0xff]
        %v830 = vld [vmem:[%s465 + $0x82] sm:$0xff]
        %v831 = vld [vmem:[%s465 + $0x92] sm:$0xff]
        %v832 = vld [vmem:[%s465 + $0x9a] sm:$0xff]
        %v833 = vld [vmem:[%s465 + $0xaa] sm:$0xff]
        %v834 = vld [vmem:[%s465 + $0xb2] sm:$0xff]
        %v835 = vld [vmem:[%s465 + $0xc2] sm:$0xff]
        %v836 = vld [vmem:[%s465 + $0xca] sm:$0xff]
        %v837 = vld [vmem:[%s465 + $0xda] sm:$0xff]
        %v838 = vld [vmem:[%s465 + $0xe2] sm:$0xff]
        %v839 = vld [vmem:[%s465 + $0xf2] sm:$0xff]
        %v840 = vld [vmem:[%s465 + $0xfa] sm:$0xff]
        %v841 = vld [vmem:[%s465 + $0x10a] sm:$0xff]
        %v842 = vld [vmem:[%s465 + $0x112] sm:$0xff]
        %v843 = vld [vmem:[%s465 + $0x122] sm:$0xff]
        %v844 = vld [vmem:[%s465 + $0x12a] sm:$0xff]
        %v845 = vld [vmem:[%s465 + $0x13a] sm:$0xff]
        %v846 = vld [vmem:[%s465 + $0x142] sm:$0xff]
        %v847 = vld [vmem:[%s465 + $0x152] sm:$0xff]
        %v848 = vld [vmem:[%s465 + $0x15a] sm:$0xff]
        %v849 = vld [vmem:[%s465 + $0x16a] sm:$0xff]
        %v850 = vld [vmem:[%s465 + $0x172] sm:$0xff]
        %v851 = vpack.c.bf16 %v820, %v819
        %v852 = vpack.c.bf16 %v822, %v821
        %v853 = vpack.c.bf16 %v824, %v823
        %v854 = vpack.c.bf16 %v826, %v825
        %v855 = vpack.c.bf16 %v828, %v827
        %v856 = vpack.c.bf16 %v830, %v829
        %v857 = vpack.c.bf16 %v832, %v831
        %v858 = vpack.c.bf16 %v834, %v833
        %v859 = vpack.c.bf16 %v836, %v835
        %v860 = vpack.c.bf16 %v838, %v837
        %v861 = vpack.c.bf16 %v840, %v839
        %v862 = vpack.c.bf16 %v842, %v841
        %v863 = vpack.c.bf16 %v844, %v843
        %v864 = vpack.c.bf16 %v846, %v845
        %v865 = vpack.c.bf16 %v848, %v847
        %v866 = vpack.c.bf16 %v850, %v849
        %867 = vst [vmem:[#allocation3 + $0x28] sm:$0xff] %v851
        %868 = vst [vmem:[#allocation3 + $0x70] sm:$0xff] %v852
        %869 = vst [vmem:[#allocation3 + $0xb8] sm:$0xff] %v853
        %870 = vst [vmem:[#allocation3 + $0x100] sm:$0xff] %v854
        %871 = vst [vmem:[#allocation3 + $0x148] sm:$0xff] %v855
        %872 = vst [vmem:[#allocation3 + $0x190] sm:$0xff] %v856
        %873 = vst [vmem:[#allocation3 + $0x1d8] sm:$0xff] %v857
        %874 = vst [vmem:[#allocation3 + $0x220] sm:$0xff] %v858
        %875 = vst [vmem:[#allocation3 + $0x268] sm:$0xff] %v859
        %876 = vst [vmem:[#allocation3 + $0x2b0] sm:$0xff] %v860
        %877 = vst [vmem:[#allocation3 + $0x2f8] sm:$0xff] %v861
        %878 = vst [vmem:[#allocation3 + $0x340] sm:$0xff] %v862
        %879 = vst [vmem:[#allocation3 + $0x388] sm:$0xff] %v863
        %880 = vst [vmem:[#allocation3 + $0x3d0] sm:$0xff] %v864
        %881 = vst [vmem:[#allocation3 + $0x418] sm:$0xff] %v865
        %882 = vst [vmem:[#allocation3 + $0x460] sm:$0xff] %v866
        %s883 = scalar_lea.vmem [#allocation2], 48
        %v884 = vld [vmem:[%s883] sm:$0xff]
        %v885 = vld [vmem:[%s883 + $0x8] sm:$0xff]
        %v886 = vld [vmem:[%s883 + $0x18] sm:$0xff]
        %v887 = vld [vmem:[%s883 + $0x20] sm:$0xff]
        %v888 = vld [vmem:[%s883 + $0x30] sm:$0xff]
        %v889 = vld [vmem:[%s883 + $0x38] sm:$0xff]
        %v890 = vld [vmem:[%s883 + $0x48] sm:$0xff]
        %v891 = vld [vmem:[%s883 + $0x50] sm:$0xff]
        %v892 = vld [vmem:[%s883 + $0x60] sm:$0xff]
        %v893 = vld [vmem:[%s883 + $0x68] sm:$0xff]
        %v894 = vld [vmem:[%s883 + $0x78] sm:$0xff]
        %v895 = vld [vmem:[%s883 + $0x80] sm:$0xff]
        %v896 = vld [vmem:[%s883 + $0x90] sm:$0xff]
        %v897 = vld [vmem:[%s883 + $0x98] sm:$0xff]
        %v898 = vld [vmem:[%s883 + $0xa8] sm:$0xff]
        %v899 = vld [vmem:[%s883 + $0xb0] sm:$0xff]
        %v900 = vld [vmem:[%s883 + $0xc0] sm:$0xff]
        %v901 = vld [vmem:[%s883 + $0xc8] sm:$0xff]
        %v902 = vld [vmem:[%s883 + $0xd8] sm:$0xff]
        %v903 = vld [vmem:[%s883 + $0xe0] sm:$0xff]
        %v904 = vld [vmem:[%s883 + $0xf0] sm:$0xff]
        %v905 = vld [vmem:[%s883 + $0xf8] sm:$0xff]
        %v906 = vld [vmem:[%s883 + $0x108] sm:$0xff]
        %v907 = vld [vmem:[%s883 + $0x110] sm:$0xff]
        %v908 = vld [vmem:[%s883 + $0x120] sm:$0xff]
        %v909 = vld [vmem:[%s883 + $0x128] sm:$0xff]
        %v910 = vld [vmem:[%s883 + $0x138] sm:$0xff]
        %v911 = vld [vmem:[%s883 + $0x140] sm:$0xff]
        %v912 = vld [vmem:[%s883 + $0x150] sm:$0xff]
        %v913 = vld [vmem:[%s883 + $0x158] sm:$0xff]
        %v914 = vld [vmem:[%s883 + $0x168] sm:$0xff]
        %v915 = vld [vmem:[%s883 + $0x170] sm:$0xff]
        %v916 = vpack.c.bf16 %v885, %v884
        %v917 = vpack.c.bf16 %v887, %v886
        %v918 = vpack.c.bf16 %v889, %v888
        %v919 = vpack.c.bf16 %v891, %v890
        %v920 = vpack.c.bf16 %v893, %v892
        %v921 = vpack.c.bf16 %v895, %v894
        %v922 = vpack.c.bf16 %v897, %v896
        %v923 = vpack.c.bf16 %v899, %v898
        %v924 = vpack.c.bf16 %v901, %v900
        %v925 = vpack.c.bf16 %v903, %v902
        %v926 = vpack.c.bf16 %v905, %v904
        %v927 = vpack.c.bf16 %v907, %v906
        %v928 = vpack.c.bf16 %v909, %v908
        %v929 = vpack.c.bf16 %v911, %v910
        %v930 = vpack.c.bf16 %v913, %v912
        %v931 = vpack.c.bf16 %v915, %v914
        %932 = vst [vmem:[#allocation3 + $0x30] sm:$0xff] %v916
        %933 = vst [vmem:[#allocation3 + $0x78] sm:$0xff] %v917
        %934 = vst [vmem:[#allocation3 + $0xc0] sm:$0xff] %v918
        %935 = vst [vmem:[#allocation3 + $0x108] sm:$0xff] %v919
        %936 = vst [vmem:[#allocation3 + $0x150] sm:$0xff] %v920
        %937 = vst [vmem:[#allocation3 + $0x198] sm:$0xff] %v921
        %938 = vst [vmem:[#allocation3 + $0x1e0] sm:$0xff] %v922
        %939 = vst [vmem:[#allocation3 + $0x228] sm:$0xff] %v923
        %940 = vst [vmem:[#allocation3 + $0x270] sm:$0xff] %v924
        %941 = vst [vmem:[#allocation3 + $0x2b8] sm:$0xff] %v925
        %942 = vst [vmem:[#allocation3 + $0x300] sm:$0xff] %v926
        %943 = vst [vmem:[#allocation3 + $0x348] sm:$0xff] %v927
        %944 = vst [vmem:[#allocation3 + $0x390] sm:$0xff] %v928
        %945 = vst [vmem:[#allocation3 + $0x3d8] sm:$0xff] %v929
        %946 = vst [vmem:[#allocation3 + $0x420] sm:$0xff] %v930
        %947 = vst [vmem:[#allocation3 + $0x468] sm:$0xff] %v931
        %v948 = vld [vmem:[%s883 + $0x1] sm:$0xff]
        %v949 = vld [vmem:[%s883 + $0x9] sm:$0xff]
        %v950 = vld [vmem:[%s883 + $0x19] sm:$0xff]
        %v951 = vld [vmem:[%s883 + $0x21] sm:$0xff]
        %v952 = vld [vmem:[%s883 + $0x31] sm:$0xff]
        %v953 = vld [vmem:[%s883 + $0x39] sm:$0xff]
        %v954 = vld [vmem:[%s883 + $0x49] sm:$0xff]
        %v955 = vld [vmem:[%s883 + $0x51] sm:$0xff]
        %v956 = vld [vmem:[%s883 + $0x61] sm:$0xff]
        %v957 = vld [vmem:[%s883 + $0x69] sm:$0xff]
        %v958 = vld [vmem:[%s883 + $0x79] sm:$0xff]
        %v959 = vld [vmem:[%s883 + $0x81] sm:$0xff]
        %v960 = vld [vmem:[%s883 + $0x91] sm:$0xff]
        %v961 = vld [vmem:[%s883 + $0x99] sm:$0xff]
        %v962 = vld [vmem:[%s883 + $0xa9] sm:$0xff]
        %v963 = vld [vmem:[%s883 + $0xb1] sm:$0xff]
        %v964 = vld [vmem:[%s883 + $0xc1] sm:$0xff]
        %v965 = vld [vmem:[%s883 + $0xc9] sm:$0xff]
        %v966 = vld [vmem:[%s883 + $0xd9] sm:$0xff]
        %v967 = vld [vmem:[%s883 + $0xe1] sm:$0xff]
        %v968 = vld [vmem:[%s883 + $0xf1] sm:$0xff]
        %v969 = vld [vmem:[%s883 + $0xf9] sm:$0xff]
        %v970 = vld [vmem:[%s883 + $0x109] sm:$0xff]
        %v971 = vld [vmem:[%s883 + $0x111] sm:$0xff]
        %v972 = vld [vmem:[%s883 + $0x121] sm:$0xff]
        %v973 = vld [vmem:[%s883 + $0x129] sm:$0xff]
        %v974 = vld [vmem:[%s883 + $0x139] sm:$0xff]
        %v975 = vld [vmem:[%s883 + $0x141] sm:$0xff]
        %v976 = vld [vmem:[%s883 + $0x151] sm:$0xff]
        %v977 = vld [vmem:[%s883 + $0x159] sm:$0xff]
        %v978 = vld [vmem:[%s883 + $0x169] sm:$0xff]
        %v979 = vld [vmem:[%s883 + $0x171] sm:$0xff]
        %v980 = vpack.c.bf16 %v949, %v948
        %v981 = vpack.c.bf16 %v951, %v950
        %v982 = vpack.c.bf16 %v953, %v952
        %v983 = vpack.c.bf16 %v955, %v954
        %v984 = vpack.c.bf16 %v957, %v956
        %v985 = vpack.c.bf16 %v959, %v958
        %v986 = vpack.c.bf16 %v961, %v960
        %v987 = vpack.c.bf16 %v963, %v962
        %v988 = vpack.c.bf16 %v965, %v964
        %v989 = vpack.c.bf16 %v967, %v966
        %v990 = vpack.c.bf16 %v969, %v968
        %v991 = vpack.c.bf16 %v971, %v970
        %v992 = vpack.c.bf16 %v973, %v972
        %v993 = vpack.c.bf16 %v975, %v974
        %v994 = vpack.c.bf16 %v977, %v976
        %v995 = vpack.c.bf16 %v979, %v978
        %996 = vst [vmem:[#allocation3 + $0x38] sm:$0xff] %v980
        %997 = vst [vmem:[#allocation3 + $0x80] sm:$0xff] %v981
        %998 = vst [vmem:[#allocation3 + $0xc8] sm:$0xff] %v982
        %999 = vst [vmem:[#allocation3 + $0x110] sm:$0xff] %v983
        %1000 = vst [vmem:[#allocation3 + $0x158] sm:$0xff] %v984
        %1001 = vst [vmem:[#allocation3 + $0x1a0] sm:$0xff] %v985
        %1002 = vst [vmem:[#allocation3 + $0x1e8] sm:$0xff] %v986
        %1003 = vst [vmem:[#allocation3 + $0x230] sm:$0xff] %v987
        %1004 = vst [vmem:[#allocation3 + $0x278] sm:$0xff] %v988
        %1005 = vst [vmem:[#allocation3 + $0x2c0] sm:$0xff] %v989
        %1006 = vst [vmem:[#allocation3 + $0x308] sm:$0xff] %v990
        %1007 = vst [vmem:[#allocation3 + $0x350] sm:$0xff] %v991
        %1008 = vst [vmem:[#allocation3 + $0x398] sm:$0xff] %v992
        %1009 = vst [vmem:[#allocation3 + $0x3e0] sm:$0xff] %v993
        %1010 = vst [vmem:[#allocation3 + $0x428] sm:$0xff] %v994
        %1011 = vst [vmem:[#allocation3 + $0x470] sm:$0xff] %v995
        %v1012 = vld [vmem:[%s883 + $0x2] sm:$0xff]
        %v1013 = vld [vmem:[%s883 + $0xa] sm:$0xff]
        %v1014 = vld [vmem:[%s883 + $0x1a] sm:$0xff]
        %v1015 = vld [vmem:[%s883 + $0x22] sm:$0xff]
        %v1016 = vld [vmem:[%s883 + $0x32] sm:$0xff]
        %v1017 = vld [vmem:[%s883 + $0x3a] sm:$0xff]
        %v1018 = vld [vmem:[%s883 + $0x4a] sm:$0xff]
        %v1019 = vld [vmem:[%s883 + $0x52] sm:$0xff]
        %v1020 = vld [vmem:[%s883 + $0x62] sm:$0xff]
        %v1021 = vld [vmem:[%s883 + $0x6a] sm:$0xff]
        %v1022 = vld [vmem:[%s883 + $0x7a] sm:$0xff]
        %v1023 = vld [vmem:[%s883 + $0x82] sm:$0xff]
        %v1024 = vld [vmem:[%s883 + $0x92] sm:$0xff]
        %v1025 = vld [vmem:[%s883 + $0x9a] sm:$0xff]
        %v1026 = vld [vmem:[%s883 + $0xaa] sm:$0xff]
        %v1027 = vld [vmem:[%s883 + $0xb2] sm:$0xff]
        %v1028 = vld [vmem:[%s883 + $0xc2] sm:$0xff]
        %v1029 = vld [vmem:[%s883 + $0xca] sm:$0xff]
        %v1030 = vld [vmem:[%s883 + $0xda] sm:$0xff]
        %v1031 = vld [vmem:[%s883 + $0xe2] sm:$0xff]
        %v1032 = vld [vmem:[%s883 + $0xf2] sm:$0xff]
        %v1033 = vld [vmem:[%s883 + $0xfa] sm:$0xff]
        %v1034 = vld [vmem:[%s883 + $0x10a] sm:$0xff]
        %v1035 = vld [vmem:[%s883 + $0x112] sm:$0xff]
        %v1036 = vld [vmem:[%s883 + $0x122] sm:$0xff]
        %v1037 = vld [vmem:[%s883 + $0x12a] sm:$0xff]
        %v1038 = vld [vmem:[%s883 + $0x13a] sm:$0xff]
        %v1039 = vld [vmem:[%s883 + $0x142] sm:$0xff]
        %v1040 = vld [vmem:[%s883 + $0x152] sm:$0xff]
        %v1041 = vld [vmem:[%s883 + $0x15a] sm:$0xff]
        %v1042 = vld [vmem:[%s883 + $0x16a] sm:$0xff]
        %v1043 = vld [vmem:[%s883 + $0x172] sm:$0xff]
        %v1044 = vpack.c.bf16 %v1013, %v1012
        %v1045 = vpack.c.bf16 %v1015, %v1014
        %v1046 = vpack.c.bf16 %v1017, %v1016
        %v1047 = vpack.c.bf16 %v1019, %v1018
        %v1048 = vpack.c.bf16 %v1021, %v1020
        %v1049 = vpack.c.bf16 %v1023, %v1022
        %v1050 = vpack.c.bf16 %v1025, %v1024
        %v1051 = vpack.c.bf16 %v1027, %v1026
        %v1052 = vpack.c.bf16 %v1029, %v1028
        %v1053 = vpack.c.bf16 %v1031, %v1030
        %v1054 = vpack.c.bf16 %v1033, %v1032
        %v1055 = vpack.c.bf16 %v1035, %v1034
        %v1056 = vpack.c.bf16 %v1037, %v1036
        %v1057 = vpack.c.bf16 %v1039, %v1038
        %v1058 = vpack.c.bf16 %v1041, %v1040
        %v1059 = vpack.c.bf16 %v1043, %v1042
        %1060 = vst [vmem:[#allocation3 + $0x40] sm:$0xff] %v1044
        %1061 = vst [vmem:[#allocation3 + $0x88] sm:$0xff] %v1045
        %1062 = vst [vmem:[#allocation3 + $0xd0] sm:$0xff] %v1046
        %1063 = vst [vmem:[#allocation3 + $0x118] sm:$0xff] %v1047
        %1064 = vst [vmem:[#allocation3 + $0x160] sm:$0xff] %v1048
        %1065 = vst [vmem:[#allocation3 + $0x1a8] sm:$0xff] %v1049
        %1066 = vst [vmem:[#allocation3 + $0x1f0] sm:$0xff] %v1050
        %1067 = vst [vmem:[#allocation3 + $0x238] sm:$0xff] %v1051
        %1068 = vst [vmem:[#allocation3 + $0x280] sm:$0xff] %v1052
        %1069 = vst [vmem:[#allocation3 + $0x2c8] sm:$0xff] %v1053
        %1070 = vst [vmem:[#allocation3 + $0x310] sm:$0xff] %v1054
        %1071 = vst [vmem:[#allocation3 + $0x358] sm:$0xff] %v1055
        %1072 = vst [vmem:[#allocation3 + $0x3a0] sm:$0xff] %v1056
        %1073 = vst [vmem:[#allocation3 + $0x3e8] sm:$0xff] %v1057
        %1074 = vst [vmem:[#allocation3 + $0x430] sm:$0xff] %v1058
        %1075 = vst [vmem:[#allocation3 + $0x478] sm:$0xff] %v1059
        %v1076 = vld [vmem:[#allocation3] sm:$0xff]
        %v1077 = vld [vmem:[#allocation3 + $0x8] sm:$0xff]
        %v1078 = vld [vmem:[#allocation3 + $0x10] sm:$0xff]
        %v1079 = vld [vmem:[#allocation3 + $0x18] sm:$0xff]
        %v1080 = vld [vmem:[#allocation3 + $0x20] sm:$0xff]
        %v1081 = vld [vmem:[#allocation3 + $0x28] sm:$0xff]
        %v1082 = vld [vmem:[#allocation3 + $0x30] sm:$0xff]
        %v1083 = vld [vmem:[#allocation3 + $0x38] sm:$0xff]
        %v1084 = vld [vmem:[#allocation3 + $0x40] sm:$0xff]
        %v1085 = vld [vmem:[#allocation3 + $0x48] sm:$0xff]
        %v1086 = vld [vmem:[#allocation3 + $0x50] sm:$0xff]
        %v1087 = vld [vmem:[#allocation3 + $0x58] sm:$0xff]
        %v1088 = vld [vmem:[#allocation3 + $0x60] sm:$0xff]
        %v1089 = vld [vmem:[#allocation3 + $0x68] sm:$0xff]
        %v1090 = vld [vmem:[#allocation3 + $0x70] sm:$0xff]
        %v1091 = vld [vmem:[#allocation3 + $0x78] sm:$0xff]
        %v1092 = vld [vmem:[#allocation3 + $0x80] sm:$0xff]
        %v1093 = vld [vmem:[#allocation3 + $0x88] sm:$0xff]
        %v1094 = vld [vmem:[#allocation3 + $0x90] sm:$0xff]
        %v1095 = vld [vmem:[#allocation3 + $0x98] sm:$0xff]
        %v1096 = vld [vmem:[#allocation3 + $0xa0] sm:$0xff]
        %v1097 = vld [vmem:[#allocation3 + $0xa8] sm:$0xff]
        %v1098 = vld [vmem:[#allocation3 + $0xb0] sm:$0xff]
        %v1099 = vld [vmem:[#allocation3 + $0xb8] sm:$0xff]
        %v1100 = vld [vmem:[#allocation3 + $0xc0] sm:$0xff]
        %v1101 = vld [vmem:[#allocation3 + $0xc8] sm:$0xff]
        %v1102 = vld [vmem:[#allocation3 + $0xd0] sm:$0xff]
        %v1103 = vld [vmem:[#allocation3 + $0xd8] sm:$0xff]
        %v1104 = vld [vmem:[#allocation3 + $0xe0] sm:$0xff]
        %v1105 = vld [vmem:[#allocation3 + $0xe8] sm:$0xff]
        %v1106 = vld [vmem:[#allocation3 + $0xf0] sm:$0xff]
        %v1107 = vld [vmem:[#allocation3 + $0xf8] sm:$0xff]
        %v1108 = vld [vmem:[#allocation3 + $0x100] sm:$0xff]
        %v1109 = vld [vmem:[#allocation3 + $0x108] sm:$0xff]
        %v1110 = vld [vmem:[#allocation3 + $0x110] sm:$0xff]
        %v1111 = vld [vmem:[#allocation3 + $0x118] sm:$0xff]
        %v1112 = vld [vmem:[#allocation3 + $0x120] sm:$0xff]
        %v1113 = vld [vmem:[#allocation3 + $0x128] sm:$0xff]
        %v1114 = vld [vmem:[#allocation3 + $0x130] sm:$0xff]
        %v1115 = vld [vmem:[#allocation3 + $0x138] sm:$0xff]
        %v1116 = vld [vmem:[#allocation3 + $0x140] sm:$0xff]
        %v1117 = vld [vmem:[#allocation3 + $0x148] sm:$0xff]
        %v1118 = vld [vmem:[#allocation3 + $0x150] sm:$0xff]
        %v1119 = vld [vmem:[#allocation3 + $0x158] sm:$0xff]
        %v1120 = vld [vmem:[#allocation3 + $0x160] sm:$0xff]
        %v1121 = vld [vmem:[#allocation3 + $0x168] sm:$0xff]
        %v1122 = vld [vmem:[#allocation3 + $0x170] sm:$0xff]
        %v1123 = vld [vmem:[#allocation3 + $0x178] sm:$0xff]
        %v1124 = vld [vmem:[#allocation3 + $0x180] sm:$0xff]
        %v1125 = vld [vmem:[#allocation3 + $0x188] sm:$0xff]
        %v1126 = vld [vmem:[#allocation3 + $0x190] sm:$0xff]
        %v1127 = vld [vmem:[#allocation3 + $0x198] sm:$0xff]
        %v1128 = vld [vmem:[#allocation3 + $0x1a0] sm:$0xff]
        %v1129 = vld [vmem:[#allocation3 + $0x1a8] sm:$0xff]
        %v1130 = vld [vmem:[#allocation3 + $0x1b0] sm:$0xff]
        %v1131 = vld [vmem:[#allocation3 + $0x1b8] sm:$0xff]
        %v1132 = vld [vmem:[#allocation3 + $0x1c0] sm:$0xff]
        %v1133 = vld [vmem:[#allocation3 + $0x1c8] sm:$0xff]
        %v1134 = vld [vmem:[#allocation3 + $0x1d0] sm:$0xff]
        %v1135 = vld [vmem:[#allocation3 + $0x1d8] sm:$0xff]
        %v1136 = vld [vmem:[#allocation3 + $0x1e0] sm:$0xff]
        %v1137 = vld [vmem:[#allocation3 + $0x1e8] sm:$0xff]
        %v1138 = vld [vmem:[#allocation3 + $0x1f0] sm:$0xff]
        %v1139 = vld [vmem:[#allocation3 + $0x1f8] sm:$0xff]
        %v1140 = vld [vmem:[#allocation3 + $0x200] sm:$0xff]
        %v1141 = vld [vmem:[#allocation3 + $0x208] sm:$0xff]
        %v1142 = vld [vmem:[#allocation3 + $0x210] sm:$0xff]
        %v1143 = vld [vmem:[#allocation3 + $0x218] sm:$0xff]
        %v1144 = vld [vmem:[#allocation3 + $0x220] sm:$0xff]
        %v1145 = vld [vmem:[#allocation3 + $0x228] sm:$0xff]
        %v1146 = vld [vmem:[#allocation3 + $0x230] sm:$0xff]
        %v1147 = vld [vmem:[#allocation3 + $0x238] sm:$0xff]
        %v1148 = vld [vmem:[#allocation3 + $0x240] sm:$0xff]
        %v1149 = vld [vmem:[#allocation3 + $0x248] sm:$0xff]
        %v1150 = vld [vmem:[#allocation3 + $0x250] sm:$0xff]
        %v1151 = vld [vmem:[#allocation3 + $0x258] sm:$0xff]
        %v1152 = vld [vmem:[#allocation3 + $0x260] sm:$0xff]
        %v1153 = vld [vmem:[#allocation3 + $0x268] sm:$0xff]
        %v1154 = vld [vmem:[#allocation3 + $0x270] sm:$0xff]
        %v1155 = vld [vmem:[#allocation3 + $0x278] sm:$0xff]
        %v1156 = vld [vmem:[#allocation3 + $0x280] sm:$0xff]
        %v1157 = vld [vmem:[#allocation3 + $0x288] sm:$0xff]
        %v1158 = vld [vmem:[#allocation3 + $0x290] sm:$0xff]
        %v1159 = vld [vmem:[#allocation3 + $0x298] sm:$0xff]
        %v1160 = vld [vmem:[#allocation3 + $0x2a0] sm:$0xff]
        %v1161 = vld [vmem:[#allocation3 + $0x2a8] sm:$0xff]
        %v1162 = vld [vmem:[#allocation3 + $0x2b0] sm:$0xff]
        %v1163 = vld [vmem:[#allocation3 + $0x2b8] sm:$0xff]
        %v1164 = vld [vmem:[#allocation3 + $0x2c0] sm:$0xff]
        %v1165 = vld [vmem:[#allocation3 + $0x2c8] sm:$0xff]
        %v1166 = vld [vmem:[#allocation3 + $0x2d0] sm:$0xff]
        %v1167 = vld [vmem:[#allocation3 + $0x2d8] sm:$0xff]
        %v1168 = vld [vmem:[#allocation3 + $0x2e0] sm:$0xff]
        %v1169 = vld [vmem:[#allocation3 + $0x2e8] sm:$0xff]
        %v1170 = vld [vmem:[#allocation3 + $0x2f0] sm:$0xff]
        %v1171 = vld [vmem:[#allocation3 + $0x2f8] sm:$0xff]
        %v1172 = vld [vmem:[#allocation3 + $0x300] sm:$0xff]
        %v1173 = vld [vmem:[#allocation3 + $0x308] sm:$0xff]
        %v1174 = vld [vmem:[#allocation3 + $0x310] sm:$0xff]
        %v1175 = vld [vmem:[#allocation3 + $0x318] sm:$0xff]
        %v1176 = vld [vmem:[#allocation3 + $0x320] sm:$0xff]
        %v1177 = vld [vmem:[#allocation3 + $0x328] sm:$0xff]
        %v1178 = vld [vmem:[#allocation3 + $0x330] sm:$0xff]
        %v1179 = vld [vmem:[#allocation3 + $0x338] sm:$0xff]
        %v1180 = vld [vmem:[#allocation3 + $0x340] sm:$0xff]
        %v1181 = vld [vmem:[#allocation3 + $0x348] sm:$0xff]
        %v1182 = vld [vmem:[#allocation3 + $0x350] sm:$0xff]
        %v1183 = vld [vmem:[#allocation3 + $0x358] sm:$0xff]
        %v1184 = vld [vmem:[#allocation3 + $0x360] sm:$0xff]
        %v1185 = vld [vmem:[#allocation3 + $0x368] sm:$0xff]
        %v1186 = vld [vmem:[#allocation3 + $0x370] sm:$0xff]
        %v1187 = vld [vmem:[#allocation3 + $0x378] sm:$0xff]
        %v1188 = vld [vmem:[#allocation3 + $0x380] sm:$0xff]
        %v1189 = vld [vmem:[#allocation3 + $0x388] sm:$0xff]
        %v1190 = vld [vmem:[#allocation3 + $0x390] sm:$0xff]
        %v1191 = vld [vmem:[#allocation3 + $0x398] sm:$0xff]
        %v1192 = vld [vmem:[#allocation3 + $0x3a0] sm:$0xff]
        %v1193 = vld [vmem:[#allocation3 + $0x3a8] sm:$0xff]
        %v1194 = vld [vmem:[#allocation3 + $0x3b0] sm:$0xff]
        %v1195 = vld [vmem:[#allocation3 + $0x3b8] sm:$0xff]
        %v1196 = vld [vmem:[#allocation3 + $0x3c0] sm:$0xff]
        %v1197 = vld [vmem:[#allocation3 + $0x3c8] sm:$0xff]
        %v1198 = vld [vmem:[#allocation3 + $0x3d0] sm:$0xff]
        %v1199 = vld [vmem:[#allocation3 + $0x3d8] sm:$0xff]
        %v1200 = vld [vmem:[#allocation3 + $0x3e0] sm:$0xff]
        %v1201 = vld [vmem:[#allocation3 + $0x3e8] sm:$0xff]
        %v1202 = vld [vmem:[#allocation3 + $0x3f0] sm:$0xff]
        %v1203 = vld [vmem:[#allocation3 + $0x3f8] sm:$0xff]
        %v1204 = vld [vmem:[#allocation3 + $0x400] sm:$0xff]
        %v1205 = vld [vmem:[#allocation3 + $0x408] sm:$0xff]
        %v1206 = vld [vmem:[#allocation3 + $0x410] sm:$0xff]
        %v1207 = vld [vmem:[#allocation3 + $0x418] sm:$0xff]
        %v1208 = vld [vmem:[#allocation3 + $0x420] sm:$0xff]
        %v1209 = vld [vmem:[#allocation3 + $0x428] sm:$0xff]
        %v1210 = vld [vmem:[#allocation3 + $0x430] sm:$0xff]
        %v1211 = vld [vmem:[#allocation3 + $0x438] sm:$0xff]
        %v1212 = vld [vmem:[#allocation3 + $0x440] sm:$0xff]
        %v1213 = vld [vmem:[#allocation3 + $0x448] sm:$0xff]
        %v1214 = vld [vmem:[#allocation3 + $0x450] sm:$0xff]
        %v1215 = vld [vmem:[#allocation3 + $0x458] sm:$0xff]
        %v1216 = vld [vmem:[#allocation3 + $0x460] sm:$0xff]
        %v1217 = vld [vmem:[#allocation3 + $0x468] sm:$0xff]
        %v1218 = vld [vmem:[#allocation3 + $0x470] sm:$0xff]
        %v1219 = vld [vmem:[#allocation3 + $0x478] sm:$0xff]
        %v1220 = vld [vmem:[#allocation5] sm:$0xf]
        %v1221 = vld [vmem:[#allocation5 + $0x4] sm:$0xf]
        %v1222 = vld [vmem:[#allocation5 + $0x8] sm:$0xf]
        %v1223 = vld [vmem:[#allocation5 + $0xc] sm:$0xf]
        %v1224 = vld [vmem:[#allocation5 + $0x10] sm:$0xf]
        %v1225 = vld [vmem:[#allocation5 + $0x14] sm:$0xf]
        %v1226 = vld [vmem:[#allocation5 + $0x18] sm:$0xf]
        %v1227 = vld [vmem:[#allocation5 + $0x1c] sm:$0xf]
        %v1228 = vld [vmem:[#allocation5 + $0x20] sm:$0xf]
        %v1229 = vld [vmem:[#allocation5 + $0x24] sm:$0xf]
        %v1230 = vld [vmem:[#allocation5 + $0x28] sm:$0xf]
        %v1231 = vld [vmem:[#allocation5 + $0x2c] sm:$0xf]
        %v1232 = vld [vmem:[#allocation5 + $0x30] sm:$0xf]
        %v1233 = vld [vmem:[#allocation5 + $0x34] sm:$0xf]
        %v1234 = vld [vmem:[#allocation5 + $0x38] sm:$0xf]
        %v1235 = vld [vmem:[#allocation5 + $0x3c] sm:$0xf]
        %v1236 = vld [vmem:[#allocation5 + $0x40] sm:$0xf]
        %v1237 = vld [vmem:[#allocation5 + $0x44] sm:$0xf]
        %v1238 = vld [vmem:[#allocation5 + $0x48] sm:$0xf]
        %v1239 = vld [vmem:[#allocation5 + $0x4c] sm:$0xf]
        %v1240 = vld [vmem:[#allocation5 + $0x50] sm:$0xf]
        %v1241 = vld [vmem:[#allocation5 + $0x54] sm:$0xf]
        %v1242 = vld [vmem:[#allocation5 + $0x58] sm:$0xf]
        %v1243 = vld [vmem:[#allocation5 + $0x5c] sm:$0xf]
        %v1244 = vld [vmem:[#allocation5 + $0x60] sm:$0xf]
        %v1245 = vld [vmem:[#allocation5 + $0x64] sm:$0xf]
        %v1246 = vld [vmem:[#allocation5 + $0x68] sm:$0xf]
        %v1247 = vld [vmem:[#allocation5 + $0x6c] sm:$0xf]
        %v1248 = vld [vmem:[#allocation5 + $0x70] sm:$0xf]
        %v1249 = vld [vmem:[#allocation5 + $0x74] sm:$0xf]
        %v1250 = vld [vmem:[#allocation5 + $0x78] sm:$0xf]
        %v1251 = vld [vmem:[#allocation5 + $0x7c] sm:$0xf]
        %v1252 = vld [vmem:[#allocation5 + $0x80] sm:$0xf]
        %v1253 = vld [vmem:[#allocation5 + $0x84] sm:$0xf]
        %v1254 = vld [vmem:[#allocation5 + $0x88] sm:$0xf]
        %v1255 = vld [vmem:[#allocation5 + $0x8c] sm:$0xf]
        %v1256 = vld [vmem:[#allocation5 + $0x90] sm:$0xf]
        %v1257 = vld [vmem:[#allocation5 + $0x94] sm:$0xf]
        %v1258 = vld [vmem:[#allocation5 + $0x98] sm:$0xf]
        %v1259 = vld [vmem:[#allocation5 + $0x9c] sm:$0xf]
        %v1260 = vld [vmem:[#allocation5 + $0xa0] sm:$0xf]
        %v1261 = vld [vmem:[#allocation5 + $0xa4] sm:$0xf]
        %v1262 = vld [vmem:[#allocation5 + $0xa8] sm:$0xf]
        %v1263 = vld [vmem:[#allocation5 + $0xac] sm:$0xf]
        %v1264 = vld [vmem:[#allocation5 + $0xb0] sm:$0xf]
        %v1265 = vld [vmem:[#allocation5 + $0xb4] sm:$0xf]
        %v1266 = vld [vmem:[#allocation5 + $0xb8] sm:$0xf]
        %v1267 = vld [vmem:[#allocation5 + $0xbc] sm:$0xf]
        %v1268 = vld [vmem:[#allocation5 + $0xc0] sm:$0xf]
        %v1269 = vld [vmem:[#allocation5 + $0xc4] sm:$0xf]
        %v1270 = vld [vmem:[#allocation5 + $0xc8] sm:$0xf]
        %v1271 = vld [vmem:[#allocation5 + $0xcc] sm:$0xf]
        %v1272 = vld [vmem:[#allocation5 + $0xd0] sm:$0xf]
        %v1273 = vld [vmem:[#allocation5 + $0xd4] sm:$0xf]
        %v1274 = vld [vmem:[#allocation5 + $0xd8] sm:$0xf]
        %v1275 = vld [vmem:[#allocation5 + $0xdc] sm:$0xf]
        %v1276 = vld [vmem:[#allocation5 + $0xe0] sm:$0xf]
        %v1277 = vld [vmem:[#allocation5 + $0xe4] sm:$0xf]
        %v1278 = vld [vmem:[#allocation5 + $0xe8] sm:$0xf]
        %v1279 = vld [vmem:[#allocation5 + $0xec] sm:$0xf]
        %v1280 = vld [vmem:[#allocation5 + $0xf0] sm:$0xf]
        %v1281 = vld [vmem:[#allocation5 + $0xf4] sm:$0xf]
        %v1282 = vld [vmem:[#allocation5 + $0xf8] sm:$0xf]
        %v1283 = vld [vmem:[#allocation5 + $0xfc] sm:$0xf]
        %v1284 = vld [vmem:[#allocation5 + $0x100] sm:$0xf]
        %v1285 = vld [vmem:[#allocation5 + $0x104] sm:$0xf]
        %v1286 = vld [vmem:[#allocation5 + $0x108] sm:$0xf]
        %v1287 = vld [vmem:[#allocation5 + $0x10c] sm:$0xf]
        %v1288 = vld [vmem:[#allocation5 + $0x110] sm:$0xf]
        %v1289 = vld [vmem:[#allocation5 + $0x114] sm:$0xf]
        %v1290 = vld [vmem:[#allocation5 + $0x118] sm:$0xf]
        %v1291 = vld [vmem:[#allocation5 + $0x11c] sm:$0xf]
        %v1292 = vld [vmem:[#allocation5 + $0x120] sm:$0xf]
        %v1293 = vld [vmem:[#allocation5 + $0x124] sm:$0xf]
        %v1294 = vld [vmem:[#allocation5 + $0x128] sm:$0xf]
        %v1295 = vld [vmem:[#allocation5 + $0x12c] sm:$0xf]
        %v1296 = vld [vmem:[#allocation5 + $0x130] sm:$0xf]
        %v1297 = vld [vmem:[#allocation5 + $0x134] sm:$0xf]
        %v1298 = vld [vmem:[#allocation5 + $0x138] sm:$0xf]
        %v1299 = vld [vmem:[#allocation5 + $0x13c] sm:$0xf]
        %v1300 = vld [vmem:[#allocation5 + $0x140] sm:$0xf]
        %v1301 = vld [vmem:[#allocation5 + $0x144] sm:$0xf]
        %v1302 = vld [vmem:[#allocation5 + $0x148] sm:$0xf]
        %v1303 = vld [vmem:[#allocation5 + $0x14c] sm:$0xf]
        %v1304 = vld [vmem:[#allocation5 + $0x150] sm:$0xf]
        %v1305 = vld [vmem:[#allocation5 + $0x154] sm:$0xf]
        %v1306 = vld [vmem:[#allocation5 + $0x158] sm:$0xf]
        %v1307 = vld [vmem:[#allocation5 + $0x15c] sm:$0xf]
        %v1308 = vld [vmem:[#allocation5 + $0x160] sm:$0xf]
        %v1309 = vld [vmem:[#allocation5 + $0x164] sm:$0xf]
        %v1310 = vld [vmem:[#allocation5 + $0x168] sm:$0xf]
        %v1311 = vld [vmem:[#allocation5 + $0x16c] sm:$0xf]
        %v1312 = vld [vmem:[#allocation5 + $0x170] sm:$0xf]
        %v1313 = vld [vmem:[#allocation5 + $0x174] sm:$0xf]
        %v1314 = vld [vmem:[#allocation5 + $0x178] sm:$0xf]
        %v1315 = vld [vmem:[#allocation5 + $0x17c] sm:$0xf]
        %v1316 = vld [vmem:[#allocation5 + $0x180] sm:$0xf]
        %v1317 = vld [vmem:[#allocation5 + $0x184] sm:$0xf]
        %v1318 = vld [vmem:[#allocation5 + $0x188] sm:$0xf]
        %v1319 = vld [vmem:[#allocation5 + $0x18c] sm:$0xf]
        %v1320 = vld [vmem:[#allocation5 + $0x190] sm:$0xf]
        %v1321 = vld [vmem:[#allocation5 + $0x194] sm:$0xf]
        %v1322 = vld [vmem:[#allocation5 + $0x198] sm:$0xf]
        %v1323 = vld [vmem:[#allocation5 + $0x19c] sm:$0xf]
        %v1324 = vld [vmem:[#allocation5 + $0x1a0] sm:$0xf]
        %v1325 = vld [vmem:[#allocation5 + $0x1a4] sm:$0xf]
        %v1326 = vld [vmem:[#allocation5 + $0x1a8] sm:$0xf]
        %v1327 = vld [vmem:[#allocation5 + $0x1ac] sm:$0xf]
        %v1328 = vld [vmem:[#allocation5 + $0x1b0] sm:$0xf]
        %v1329 = vld [vmem:[#allocation5 + $0x1b4] sm:$0xf]
        %v1330 = vld [vmem:[#allocation5 + $0x1b8] sm:$0xf]
        %v1331 = vld [vmem:[#allocation5 + $0x1bc] sm:$0xf]
        %v1332 = vld [vmem:[#allocation5 + $0x1c0] sm:$0xf]
        %v1333 = vld [vmem:[#allocation5 + $0x1c4] sm:$0xf]
        %v1334 = vld [vmem:[#allocation5 + $0x1c8] sm:$0xf]
        %v1335 = vld [vmem:[#allocation5 + $0x1cc] sm:$0xf]
        %v1336 = vld [vmem:[#allocation5 + $0x1d0] sm:$0xf]
        %v1337 = vld [vmem:[#allocation5 + $0x1d4] sm:$0xf]
        %v1338 = vld [vmem:[#allocation5 + $0x1d8] sm:$0xf]
        %v1339 = vld [vmem:[#allocation5 + $0x1dc] sm:$0xf]
        %v1340 = vld [vmem:[#allocation5 + $0x1e0] sm:$0xf]
        %v1341 = vld [vmem:[#allocation5 + $0x1e4] sm:$0xf]
        %v1342 = vld [vmem:[#allocation5 + $0x1e8] sm:$0xf]
        %v1343 = vld [vmem:[#allocation5 + $0x1ec] sm:$0xf]
        %v1344 = vld [vmem:[#allocation5 + $0x1f0] sm:$0xf]
        %v1345 = vld [vmem:[#allocation5 + $0x1f4] sm:$0xf]
        %v1346 = vld [vmem:[#allocation5 + $0x1f8] sm:$0xf]
        %v1347 = vld [vmem:[#allocation5 + $0x1fc] sm:$0xf]
        %v1348 = vld [vmem:[#allocation5 + $0x200] sm:$0xf]
        %v1349 = vld [vmem:[#allocation5 + $0x204] sm:$0xf]
        %v1350 = vld [vmem:[#allocation5 + $0x208] sm:$0xf]
        %v1351 = vld [vmem:[#allocation5 + $0x20c] sm:$0xf]
        %v1352 = vld [vmem:[#allocation5 + $0x210] sm:$0xf]
        %v1353 = vld [vmem:[#allocation5 + $0x214] sm:$0xf]
        %v1354 = vld [vmem:[#allocation5 + $0x218] sm:$0xf]
        %v1355 = vld [vmem:[#allocation5 + $0x21c] sm:$0xf]
        %v1356 = vld [vmem:[#allocation5 + $0x220] sm:$0xf]
        %v1357 = vld [vmem:[#allocation5 + $0x224] sm:$0xf]
        %v1358 = vld [vmem:[#allocation5 + $0x228] sm:$0xf]
        %v1359 = vld [vmem:[#allocation5 + $0x22c] sm:$0xf]
        %v1360 = vld [vmem:[#allocation5 + $0x230] sm:$0xf]
        %v1361 = vld [vmem:[#allocation5 + $0x234] sm:$0xf]
        %v1362 = vld [vmem:[#allocation5 + $0x238] sm:$0xf]
        %v1363 = vld [vmem:[#allocation5 + $0x23c] sm:$0xf]
        %v1364 = vld [vmem:[%s2] sm:$0x1]
        %v1366 = vlaneseq
        %v1367 = vshrl.u32 %v1366, 7
        %v1368 = vsub.s32 0, %v1367
        %v1369 = vrot.slane %v1364, %v1368
        %v1515 = vunpack.c.l.b16 %v1220
        %v1516 = vunpack.c.l.b16 %v1221
        %v1517 = vunpack.c.l.b16 %v1222
        %v1518 = vunpack.c.l.b16 %v1223
        %v1519 = vunpack.c.l.b16 %v1224
        %v1520 = vunpack.c.l.b16 %v1225
        %v1521 = vunpack.c.l.b16 %v1226
        %v1522 = vunpack.c.l.b16 %v1227
        %v1523 = vunpack.c.l.b16 %v1228
        %v1524 = vunpack.c.l.b16 %v1229
        %v1525 = vunpack.c.l.b16 %v1230
        %v1526 = vunpack.c.l.b16 %v1231
        %v1527 = vunpack.c.l.b16 %v1232
        %v1528 = vunpack.c.l.b16 %v1233
        %v1529 = vunpack.c.l.b16 %v1234
        %v1530 = vunpack.c.l.b16 %v1235
        %v1531 = vunpack.c.l.b16 %v1236
        %v1532 = vunpack.c.l.b16 %v1237
        %v1533 = vunpack.c.l.b16 %v1238
        %v1534 = vunpack.c.l.b16 %v1239
        %v1535 = vunpack.c.l.b16 %v1240
        %v1536 = vunpack.c.l.b16 %v1241
        %v1537 = vunpack.c.l.b16 %v1242
        %v1538 = vunpack.c.l.b16 %v1243
        %v1539 = vunpack.c.l.b16 %v1244
        %v1540 = vunpack.c.l.b16 %v1245
        %v1541 = vunpack.c.l.b16 %v1246
        %v1542 = vunpack.c.l.b16 %v1247
        %v1543 = vunpack.c.l.b16 %v1248
        %v1544 = vunpack.c.l.b16 %v1249
        %v1545 = vunpack.c.l.b16 %v1250
        %v1546 = vunpack.c.l.b16 %v1251
        %v1547 = vunpack.c.l.b16 %v1252
        %v1548 = vunpack.c.l.b16 %v1253
        %v1549 = vunpack.c.l.b16 %v1254
        %v1550 = vunpack.c.l.b16 %v1255
        %v1551 = vunpack.c.l.b16 %v1256
        %v1552 = vunpack.c.l.b16 %v1257
        %v1553 = vunpack.c.l.b16 %v1258
        %v1554 = vunpack.c.l.b16 %v1259
        %v1555 = vunpack.c.l.b16 %v1260
        %v1556 = vunpack.c.l.b16 %v1261
        %v1557 = vunpack.c.l.b16 %v1262
        %v1558 = vunpack.c.l.b16 %v1263
        %v1559 = vunpack.c.l.b16 %v1264
        %v1560 = vunpack.c.l.b16 %v1265
        %v1561 = vunpack.c.l.b16 %v1266
        %v1562 = vunpack.c.l.b16 %v1267
        %v1563 = vunpack.c.l.b16 %v1268
        %v1564 = vunpack.c.l.b16 %v1269
        %v1565 = vunpack.c.l.b16 %v1270
        %v1566 = vunpack.c.l.b16 %v1271
        %v1567 = vunpack.c.l.b16 %v1272
        %v1568 = vunpack.c.l.b16 %v1273
        %v1569 = vunpack.c.l.b16 %v1274
        %v1570 = vunpack.c.l.b16 %v1275
        %v1571 = vunpack.c.l.b16 %v1276
        %v1572 = vunpack.c.l.b16 %v1277
        %v1573 = vunpack.c.l.b16 %v1278
        %v1574 = vunpack.c.l.b16 %v1279
        %v1575 = vunpack.c.l.b16 %v1280
        %v1576 = vunpack.c.l.b16 %v1281
        %v1577 = vunpack.c.l.b16 %v1282
        %v1578 = vunpack.c.l.b16 %v1283
        %v1579 = vunpack.c.l.b16 %v1284
        %v1580 = vunpack.c.l.b16 %v1285
        %v1581 = vunpack.c.l.b16 %v1286
        %v1582 = vunpack.c.l.b16 %v1287
        %v1583 = vunpack.c.l.b16 %v1288
        %v1584 = vunpack.c.l.b16 %v1289
        %v1585 = vunpack.c.l.b16 %v1290
        %v1586 = vunpack.c.l.b16 %v1291
        %v1587 = vunpack.c.l.b16 %v1292
        %v1588 = vunpack.c.l.b16 %v1293
        %v1589 = vunpack.c.l.b16 %v1294
        %v1590 = vunpack.c.l.b16 %v1295
        %v1591 = vunpack.c.l.b16 %v1296
        %v1592 = vunpack.c.l.b16 %v1297
        %v1593 = vunpack.c.l.b16 %v1298
        %v1594 = vunpack.c.l.b16 %v1299
        %v1595 = vunpack.c.l.b16 %v1300
        %v1596 = vunpack.c.l.b16 %v1301
        %v1597 = vunpack.c.l.b16 %v1302
        %v1598 = vunpack.c.l.b16 %v1303
        %v1599 = vunpack.c.l.b16 %v1304
        %v1600 = vunpack.c.l.b16 %v1305
        %v1601 = vunpack.c.l.b16 %v1306
        %v1602 = vunpack.c.l.b16 %v1307
        %v1603 = vunpack.c.l.b16 %v1308
        %v1604 = vunpack.c.l.b16 %v1309
        %v1605 = vunpack.c.l.b16 %v1310
        %v1606 = vunpack.c.l.b16 %v1311
        %v1607 = vunpack.c.l.b16 %v1312
        %v1608 = vunpack.c.l.b16 %v1313
        %v1609 = vunpack.c.l.b16 %v1314
        %v1610 = vunpack.c.l.b16 %v1315
        %v1611 = vunpack.c.l.b16 %v1316
        %v1612 = vunpack.c.l.b16 %v1317
        %v1613 = vunpack.c.l.b16 %v1318
        %v1614 = vunpack.c.l.b16 %v1319
        %v1615 = vunpack.c.l.b16 %v1320
        %v1616 = vunpack.c.l.b16 %v1321
        %v1617 = vunpack.c.l.b16 %v1322
        %v1618 = vunpack.c.l.b16 %v1323
        %v1619 = vunpack.c.l.b16 %v1324
        %v1620 = vunpack.c.l.b16 %v1325
        %v1621 = vunpack.c.l.b16 %v1326
        %v1622 = vunpack.c.l.b16 %v1327
        %v1623 = vunpack.c.l.b16 %v1328
        %v1624 = vunpack.c.l.b16 %v1329
        %v1625 = vunpack.c.l.b16 %v1330
        %v1626 = vunpack.c.l.b16 %v1331
        %v1627 = vunpack.c.l.b16 %v1332
        %v1628 = vunpack.c.l.b16 %v1333
        %v1629 = vunpack.c.l.b16 %v1334
        %v1630 = vunpack.c.l.b16 %v1335
        %v1631 = vunpack.c.l.b16 %v1336
        %v1632 = vunpack.c.l.b16 %v1337
        %v1633 = vunpack.c.l.b16 %v1338
        %v1634 = vunpack.c.l.b16 %v1339
        %v1635 = vunpack.c.l.b16 %v1340
        %v1636 = vunpack.c.l.b16 %v1341
        %v1637 = vunpack.c.l.b16 %v1342
        %v1638 = vunpack.c.l.b16 %v1343
        %v1639 = vunpack.c.l.b16 %v1344
        %v1640 = vunpack.c.l.b16 %v1345
        %v1641 = vunpack.c.l.b16 %v1346
        %v1642 = vunpack.c.l.b16 %v1347
        %v1643 = vunpack.c.l.b16 %v1348
        %v1644 = vunpack.c.l.b16 %v1349
        %v1645 = vunpack.c.l.b16 %v1350
        %v1646 = vunpack.c.l.b16 %v1351
        %v1647 = vunpack.c.l.b16 %v1352
        %v1648 = vunpack.c.l.b16 %v1353
        %v1649 = vunpack.c.l.b16 %v1354
        %v1650 = vunpack.c.l.b16 %v1355
        %v1651 = vunpack.c.l.b16 %v1356
        %v1652 = vunpack.c.l.b16 %v1357
        %v1653 = vunpack.c.l.b16 %v1358
        %v1654 = vunpack.c.l.b16 %v1359
        %v1655 = vunpack.c.l.b16 %v1360
        %v1656 = vunpack.c.l.b16 %v1361
        %v1657 = vunpack.c.l.b16 %v1362
        %v1658 = vunpack.c.l.b16 %v1363
        %v1659 = vpack.c.b16 %v1516, %v1515
        %v1660 = vpack.c.b16 %v1518, %v1517
        %v1661 = vpack.c.b16 %v1520, %v1519
        %v1662 = vpack.c.b16 %v1522, %v1521
        %v1663 = vpack.c.b16 %v1524, %v1523
        %v1664 = vpack.c.b16 %v1526, %v1525
        %v1665 = vpack.c.b16 %v1528, %v1527
        %v1666 = vpack.c.b16 %v1530, %v1529
        %v1667 = vpack.c.b16 %v1532, %v1531
        %v1668 = vpack.c.b16 %v1534, %v1533
        %v1669 = vpack.c.b16 %v1536, %v1535
        %v1670 = vpack.c.b16 %v1538, %v1537
        %v1671 = vpack.c.b16 %v1540, %v1539
        %v1672 = vpack.c.b16 %v1542, %v1541
        %v1673 = vpack.c.b16 %v1544, %v1543
        %v1674 = vpack.c.b16 %v1546, %v1545
        %v1675 = vpack.c.b16 %v1548, %v1547
        %v1676 = vpack.c.b16 %v1550, %v1549
        %v1677 = vpack.c.b16 %v1552, %v1551
        %v1678 = vpack.c.b16 %v1554, %v1553
        %v1679 = vpack.c.b16 %v1556, %v1555
        %v1680 = vpack.c.b16 %v1558, %v1557
        %v1681 = vpack.c.b16 %v1560, %v1559
        %v1682 = vpack.c.b16 %v1562, %v1561
        %v1683 = vpack.c.b16 %v1564, %v1563
        %v1684 = vpack.c.b16 %v1566, %v1565
        %v1685 = vpack.c.b16 %v1568, %v1567
        %v1686 = vpack.c.b16 %v1570, %v1569
        %v1687 = vpack.c.b16 %v1572, %v1571
        %v1688 = vpack.c.b16 %v1574, %v1573
        %v1689 = vpack.c.b16 %v1576, %v1575
        %v1690 = vpack.c.b16 %v1578, %v1577
        %v1691 = vpack.c.b16 %v1580, %v1579
        %v1692 = vpack.c.b16 %v1582, %v1581
        %v1693 = vpack.c.b16 %v1584, %v1583
        %v1694 = vpack.c.b16 %v1586, %v1585
        %v1695 = vpack.c.b16 %v1588, %v1587
        %v1696 = vpack.c.b16 %v1590, %v1589
        %v1697 = vpack.c.b16 %v1592, %v1591
        %v1698 = vpack.c.b16 %v1594, %v1593
        %v1699 = vpack.c.b16 %v1596, %v1595
        %v1700 = vpack.c.b16 %v1598, %v1597
        %v1701 = vpack.c.b16 %v1600, %v1599
        %v1702 = vpack.c.b16 %v1602, %v1601
        %v1703 = vpack.c.b16 %v1604, %v1603
        %v1704 = vpack.c.b16 %v1606, %v1605
        %v1705 = vpack.c.b16 %v1608, %v1607
        %v1706 = vpack.c.b16 %v1610, %v1609
        %v1707 = vpack.c.b16 %v1612, %v1611
        %v1708 = vpack.c.b16 %v1614, %v1613
        %v1709 = vpack.c.b16 %v1616, %v1615
        %v1710 = vpack.c.b16 %v1618, %v1617
        %v1711 = vpack.c.b16 %v1620, %v1619
        %v1712 = vpack.c.b16 %v1622, %v1621
        %v1713 = vpack.c.b16 %v1624, %v1623
        %v1714 = vpack.c.b16 %v1626, %v1625
        %v1715 = vpack.c.b16 %v1628, %v1627
        %v1716 = vpack.c.b16 %v1630, %v1629
        %v1717 = vpack.c.b16 %v1632, %v1631
        %v1718 = vpack.c.b16 %v1634, %v1633
        %v1719 = vpack.c.b16 %v1636, %v1635
        %v1720 = vpack.c.b16 %v1638, %v1637
        %v1721 = vpack.c.b16 %v1640, %v1639
        %v1722 = vpack.c.b16 %v1642, %v1641
        %v1723 = vpack.c.b16 %v1644, %v1643
        %v1724 = vpack.c.b16 %v1646, %v1645
        %v1725 = vpack.c.b16 %v1648, %v1647
        %v1726 = vpack.c.b16 %v1650, %v1649
        %v1727 = vpack.c.b16 %v1652, %v1651
        %v1728 = vpack.c.b16 %v1654, %v1653
        %v1729 = vpack.c.b16 %v1656, %v1655
        %v1730 = vpack.c.b16 %v1658, %v1657
        %1803 = vmatprep.subr.bf16.mxu0 0
        %1804 = vmatpush1.bf16.msra.mxu0 %v1659
        %1805 = vmatprep.subr.bf16.mxu0 0
        %1806 = vmatpush1.bf16.msra.mxu0 %v1660
        %1807 = vmatprep.subr.bf16.mxu0 0
        %1808 = vmatpush1.bf16.msra.mxu0 %v1661
        %1809 = vmatprep.subr.bf16.mxu0 0
        %1810 = vmatpush1.bf16.msra.mxu0 %v1662
        %1811 = vmatprep.subr.bf16.mxu0 0
        %1812 = vmatpush1.bf16.msra.mxu0 %v1663
        %1813 = vmatprep.subr.bf16.mxu0 0
        %1814 = vmatpush1.bf16.msra.mxu0 %v1664
        %1815 = vmatprep.subr.bf16.mxu0 0
        %1816 = vmatpush1.bf16.msra.mxu0 %v1665
        %1817 = vmatprep.subr.bf16.mxu0 0
        %1818 = vmatpush1.bf16.msra.mxu0 %v1666
        %1819 = vmatprep.subr.bf16.mxu0 0
        %1820 = vmatpush1.bf16.msra.mxu0 %v1667
        %1821 = vmatprep.subr.bf16.mxu0 0
        %1822 = vmatpush1.bf16.msra.mxu0 %v1668
        %1823 = vmatprep.subr.bf16.mxu0 0
        %1824 = vmatpush1.bf16.msra.mxu0 %v1669
        %1825 = vmatprep.subr.bf16.mxu0 0
        %1826 = vmatpush1.bf16.msra.mxu0 %v1670
        %1827 = vmatprep.subr.bf16.mxu0 0
        %1828 = vmatpush1.bf16.msra.mxu0 %v1671
        %1829 = vmatprep.subr.bf16.mxu0 0
        %1830 = vmatpush1.bf16.msra.mxu0 %v1672
        %1831 = vmatprep.subr.bf16.mxu0 0
        %1832 = vmatpush1.bf16.msra.mxu0 %v1673
        %1833 = vmatprep.subr.bf16.mxu0 0
        %1834 = vmatpush1.bf16.msra.mxu0 %v1674
        %1835 = vmatprep.mubr.bf16.mxu0 %v1077
        %1836 = vmatmul.mubr.bf16.gmra.mrb[0].mxu0 %v1076
        %v1837 = vpop.f32.mrb[0].mxu0
        %v1838 = vadd.f32 %v1369, %v1837
        %v1839 = vpop.f32.mrb[0].mxu0
        %v1840 = vpop.f32.mrb[0].mxu0
        %v1841 = vadd.f32 %v1369, %v1840
        %v1842 = vpop.f32.mrb[0].mxu0
        %1843 = vmatprep.mubr.bf16.mxu0 %v1086
        %1844 = vmatmul.mubr.bf16.gmra.mrb[0].mxu0 %v1085
        %v1845 = vpop.f32.mrb[0].mxu0
        %v1846 = vadd.f32 %v1369, %v1845
        %v1847 = vpop.f32.mrb[0].mxu0
        %v1848 = vpop.f32.mrb[0].mxu0
        %v1849 = vadd.f32 %v1369, %v1848
        %v1850 = vpop.f32.mrb[0].mxu0
        %1851 = vmatprep.mubr.bf16.mxu0 %v1095
        %1852 = vmatmul.mubr.bf16.gmra.mrb[0].mxu0 %v1094
        %v1853 = vpop.f32.mrb[0].mxu0
        %v1854 = vadd.f32 %v1369, %v1853
        %v1855 = vpop.f32.mrb[0].mxu0
        %v1856 = vpop.f32.mrb[0].mxu0
        %v1857 = vadd.f32 %v1369, %v1856
        %v1858 = vpop.f32.mrb[0].mxu0
        %1859 = vmatprep.mubr.bf16.mxu0 %v1104
        %1860 = vmatmul.mubr.bf16.gmra.mrb[0].mxu0 %v1103
        %v1861 = vpop.f32.mrb[0].mxu0
        %v1862 = vadd.f32 %v1369, %v1861
        %v1863 = vpop.f32.mrb[0].mxu0
        %v1864 = vpop.f32.mrb[0].mxu0
        %v1865 = vadd.f32 %v1369, %v1864
        %v1866 = vpop.f32.mrb[0].mxu0
        %1867 = vmatprep.mubr.bf16.mxu0 %v1113
        %1868 = vmatmul.mubr.bf16.gmra.mrb[0].mxu0 %v1112
        %v1869 = vpop.f32.mrb[0].mxu0
        %v1870 = vadd.f32 %v1369, %v1869
        %v1871 = vpop.f32.mrb[0].mxu0
        %v1872 = vpop.f32.mrb[0].mxu0
        %v1873 = vadd.f32 %v1369, %v1872
        %v1874 = vpop.f32.mrb[0].mxu0
        %1875 = vmatprep.mubr.bf16.mxu0 %v1122
        %1876 = vmatmul.mubr.bf16.gmra.mrb[0].mxu0 %v1121
        %v1877 = vpop.f32.mrb[0].mxu0
        %v1878 = vadd.f32 %v1369, %v1877
        %v1879 = vpop.f32.mrb[0].mxu0
        %v1880 = vpop.f32.mrb[0].mxu0
        %v1881 = vadd.f32 %v1369, %v1880
        %v1882 = vpop.f32.mrb[0].mxu0
        %1883 = vmatprep.mubr.bf16.mxu0 %v1131
        %1884 = vmatmul.mubr.bf16.gmra.mrb[0].mxu0 %v1130
        %v1885 = vpop.f32.mrb[0].mxu0
        %v1886 = vadd.f32 %v1369, %v1885
        %v1887 = vpop.f32.mrb[0].mxu0
        %v1888 = vpop.f32.mrb[0].mxu0
        %v1889 = vadd.f32 %v1369, %v1888
        %v1890 = vpop.f32.mrb[0].mxu0
        %1891 = vmatprep.mubr.bf16.mxu0 %v1140
        %1892 = vmatmul.mubr.bf16.gmra.mrb[0].mxu0 %v1139
        %v1893 = vpop.f32.mrb[0].mxu0
        %v1894 = vadd.f32 %v1369, %v1893
        %v1895 = vpop.f32.mrb[0].mxu0
        %v1896 = vpop.f32.mrb[0].mxu0
        %v1897 = vadd.f32 %v1369, %v1896
        %v1898 = vpop.f32.mrb[0].mxu0
        %1899 = vmatprep.mubr.bf16.mxu0 %v1149
        %1900 = vmatmul.mubr.bf16.gmra.mrb[0].mxu0 %v1148
        %v1901 = vpop.f32.mrb[0].mxu0
        %v1902 = vadd.f32 %v1369, %v1901
        %v1903 = vpop.f32.mrb[0].mxu0
        %v1904 = vpop.f32.mrb[0].mxu0
        %v1905 = vadd.f32 %v1369, %v1904
        %v1906 = vpop.f32.mrb[0].mxu0
        %1907 = vmatprep.mubr.bf16.mxu0 %v1158
        %1908 = vmatmul.mubr.bf16.gmra.mrb[0].mxu0 %v1157
        %v1909 = vpop.f32.mrb[0].mxu0
        %v1910 = vadd.f32 %v1369, %v1909
        %v1911 = vpop.f32.mrb[0].mxu0
        %v1912 = vpop.f32.mrb[0].mxu0
        %v1913 = vadd.f32 %v1369, %v1912
        %v1914 = vpop.f32.mrb[0].mxu0
        %1915 = vmatprep.mubr.bf16.mxu0 %v1167
        %1916 = vmatmul.mubr.bf16.gmra.mrb[0].mxu0 %v1166
        %v1917 = vpop.f32.mrb[0].mxu0
        %v1918 = vadd.f32 %v1369, %v1917
        %v1919 = vpop.f32.mrb[0].mxu0
        %v1920 = vpop.f32.mrb[0].mxu0
        %v1921 = vadd.f32 %v1369, %v1920
        %v1922 = vpop.f32.mrb[0].mxu0
        %1923 = vmatprep.mubr.bf16.mxu0 %v1176
        %1924 = vmatmul.mubr.bf16.gmra.mrb[0].mxu0 %v1175
        %v1925 = vpop.f32.mrb[0].mxu0
        %v1926 = vadd.f32 %v1369, %v1925
        %v1927 = vpop.f32.mrb[0].mxu0
        %v1928 = vpop.f32.mrb[0].mxu0
        %v1929 = vadd.f32 %v1369, %v1928
        %v1930 = vpop.f32.mrb[0].mxu0
        %1931 = vmatprep.mubr.bf16.mxu0 %v1185
        %1932 = vmatmul.mubr.bf16.gmra.mrb[0].mxu0 %v1184
        %v1933 = vpop.f32.mrb[0].mxu0
        %v1934 = vadd.f32 %v1369, %v1933
        %v1935 = vpop.f32.mrb[0].mxu0
        %v1936 = vpop.f32.mrb[0].mxu0
        %v1937 = vadd.f32 %v1369, %v1936
        %v1938 = vpop.f32.mrb[0].mxu0
        %1939 = vmatprep.mubr.bf16.mxu0 %v1194
        %1940 = vmatmul.mubr.bf16.gmra.mrb[0].mxu0 %v1193
        %v1941 = vpop.f32.mrb[0].mxu0
        %v1942 = vadd.f32 %v1369, %v1941
        %v1943 = vpop.f32.mrb[0].mxu0
        %v1944 = vpop.f32.mrb[0].mxu0
        %v1945 = vadd.f32 %v1369, %v1944
        %v1946 = vpop.f32.mrb[0].mxu0
        %1947 = vmatprep.mubr.bf16.mxu0 %v1203
        %1948 = vmatmul.mubr.bf16.gmra.mrb[0].mxu0 %v1202
        %v1949 = vpop.f32.mrb[0].mxu0
        %v1950 = vadd.f32 %v1369, %v1949
        %v1951 = vpop.f32.mrb[0].mxu0
        %v1952 = vpop.f32.mrb[0].mxu0
        %v1953 = vadd.f32 %v1369, %v1952
        %v1954 = vpop.f32.mrb[0].mxu0
        %1955 = vmatprep.mubr.bf16.mxu0 %v1212
        %1956 = vmatmul.mubr.bf16.gmra.mrb[0].mxu0 %v1211
        %v1957 = vpop.f32.mrb[0].mxu0
        %v1958 = vadd.f32 %v1369, %v1957
        %v1959 = vpop.f32.mrb[0].mxu0
        %v1960 = vpop.f32.mrb[0].mxu0
        %v1961 = vadd.f32 %v1369, %v1960
        %v1962 = vpop.f32.mrb[0].mxu0
        %1963 = vdwg.mxu0
        %1964 = vmatprep.subr.bf16.mxu0 0
        %1965 = vmatpush1.bf16.msra.mxu0 %v1675
        %1966 = vmatprep.subr.bf16.mxu0 0
        %1967 = vmatpush1.bf16.msra.mxu0 %v1676
        %1968 = vmatprep.subr.bf16.mxu0 0
        %1969 = vmatpush1.bf16.msra.mxu0 %v1677
        %1970 = vmatprep.subr.bf16.mxu0 0
        %1971 = vmatpush1.bf16.msra.mxu0 %v1678
        %1972 = vmatprep.subr.bf16.mxu0 0
        %1973 = vmatpush1.bf16.msra.mxu0 %v1679
        %1974 = vmatprep.subr.bf16.mxu0 0
        %1975 = vmatpush1.bf16.msra.mxu0 %v1680
        %1976 = vmatprep.subr.bf16.mxu0 0
        %1977 = vmatpush1.bf16.msra.mxu0 %v1681
        %1978 = vmatprep.subr.bf16.mxu0 0
        %1979 = vmatpush1.bf16.msra.mxu0 %v1682
        %1980 = vmatprep.subr.bf16.mxu0 0
        %1981 = vmatpush1.bf16.msra.mxu0 %v1683
        %1982 = vmatprep.subr.bf16.mxu0 0
        %1983 = vmatpush1.bf16.msra.mxu0 %v1684
        %1984 = vmatprep.subr.bf16.mxu0 0
        %1985 = vmatpush1.bf16.msra.mxu0 %v1685
        %1986 = vmatprep.subr.bf16.mxu0 0
        %1987 = vmatpush1.bf16.msra.mxu0 %v1686
        %1988 = vmatprep.subr.bf16.mxu0 0
        %1989 = vmatpush1.bf16.msra.mxu0 %v1687
        %1990 = vmatprep.subr.bf16.mxu0 0
        %1991 = vmatpush1.bf16.msra.mxu0 %v1688
        %1992 = vmatprep.subr.bf16.mxu0 0
        %1993 = vmatpush1.bf16.msra.mxu0 %v1689
        %1994 = vmatprep.subr.bf16.mxu0 0
        %1995 = vmatpush1.bf16.msra.mxu0 %v1690
        %1996 = vmatprep.mubr.bf16.mxu0 %v1079
        %1997 = vmatmul.mubr.bf16.gmra.mrb[0].mxu0 %v1078
        %v1998 = vpop.f32.mrb[0].mxu0
        %v1999 = vadd.f32 %v1838, %v1998
        %v2000 = vpop.f32.mrb[0].mxu0
        %v2001 = vpop.f32.mrb[0].mxu0
        %v2002 = vadd.f32 %v1841, %v2001
        %v2003 = vpop.f32.mrb[0].mxu0
        %2004 = vmatprep.mubr.bf16.mxu0 %v1088
        %2005 = vmatmul.mubr.bf16.gmra.mrb[0].mxu0 %v1087
        %v2006 = vpop.f32.mrb[0].mxu0
        %v2007 = vadd.f32 %v1846, %v2006
        %v2008 = vpop.f32.mrb[0].mxu0
        %v2009 = vpop.f32.mrb[0].mxu0
        %v2010 = vadd.f32 %v1849, %v2009
        %v2011 = vpop.f32.mrb[0].mxu0
        %2012 = vmatprep.mubr.bf16.mxu0 %v1097
        %2013 = vmatmul.mubr.bf16.gmra.mrb[0].mxu0 %v1096
        %v2014 = vpop.f32.mrb[0].mxu0
        %v2015 = vadd.f32 %v1854, %v2014
        %v2016 = vpop.f32.mrb[0].mxu0
        %v2017 = vpop.f32.mrb[0].mxu0
        %v2018 = vadd.f32 %v1857, %v2017
        %v2019 = vpop.f32.mrb[0].mxu0
        %2020 = vmatprep.mubr.bf16.mxu0 %v1106
        %2021 = vmatmul.mubr.bf16.gmra.mrb[0].mxu0 %v1105
        %v2022 = vpop.f32.mrb[0].mxu0
        %v2023 = vadd.f32 %v1862, %v2022
        %v2024 = vpop.f32.mrb[0].mxu0
        %v2025 = vpop.f32.mrb[0].mxu0
        %v2026 = vadd.f32 %v1865, %v2025
        %v2027 = vpop.f32.mrb[0].mxu0
        %2028 = vmatprep.mubr.bf16.mxu0 %v1115
        %2029 = vmatmul.mubr.bf16.gmra.mrb[0].mxu0 %v1114
        %v2030 = vpop.f32.mrb[0].mxu0
        %v2031 = vadd.f32 %v1870, %v2030
        %v2032 = vpop.f32.mrb[0].mxu0
        %v2033 = vpop.f32.mrb[0].mxu0
        %v2034 = vadd.f32 %v1873, %v2033
        %v2035 = vpop.f32.mrb[0].mxu0
        %2036 = vmatprep.mubr.bf16.mxu0 %v1124
        %2037 = vmatmul.mubr.bf16.gmra.mrb[0].mxu0 %v1123
        %v2038 = vpop.f32.mrb[0].mxu0
        %v2039 = vadd.f32 %v1878, %v2038
        %v2040 = vpop.f32.mrb[0].mxu0
        %v2041 = vpop.f32.mrb[0].mxu0
        %v2042 = vadd.f32 %v1881, %v2041
        %v2043 = vpop.f32.mrb[0].mxu0
        %2044 = vmatprep.mubr.bf16.mxu0 %v1133
        %2045 = vmatmul.mubr.bf16.gmra.mrb[0].mxu0 %v1132
        %v2046 = vpop.f32.mrb[0].mxu0
        %v2047 = vadd.f32 %v1886, %v2046
        %v2048 = vpop.f32.mrb[0].mxu0
        %v2049 = vpop.f32.mrb[0].mxu0
        %v2050 = vadd.f32 %v1889, %v2049
        %v2051 = vpop.f32.mrb[0].mxu0
        %2052 = vmatprep.mubr.bf16.mxu0 %v1142
        %2053 = vmatmul.mubr.bf16.gmra.mrb[0].mxu0 %v1141
        %v2054 = vpop.f32.mrb[0].mxu0
        %v2055 = vadd.f32 %v1894, %v2054
        %v2056 = vpop.f32.mrb[0].mxu0
        %v2057 = vpop.f32.mrb[0].mxu0
        %v2058 = vadd.f32 %v1897, %v2057
        %v2059 = vpop.f32.mrb[0].mxu0
        %2060 = vmatprep.mubr.bf16.mxu0 %v1151
        %2061 = vmatmul.mubr.bf16.gmra.mrb[0].mxu0 %v1150
        %v2062 = vpop.f32.mrb[0].mxu0
        %v2063 = vadd.f32 %v1902, %v2062
        %v2064 = vpop.f32.mrb[0].mxu0
        %v2065 = vpop.f32.mrb[0].mxu0
        %v2066 = vadd.f32 %v1905, %v2065
        %v2067 = vpop.f32.mrb[0].mxu0
        %2068 = vmatprep.mubr.bf16.mxu0 %v1160
        %2069 = vmatmul.mubr.bf16.gmra.mrb[0].mxu0 %v1159
        %v2070 = vpop.f32.mrb[0].mxu0
        %v2071 = vadd.f32 %v1910, %v2070
        %v2072 = vpop.f32.mrb[0].mxu0
        %v2073 = vpop.f32.mrb[0].mxu0
        %v2074 = vadd.f32 %v1913, %v2073
        %v2075 = vpop.f32.mrb[0].mxu0
        %2076 = vmatprep.mubr.bf16.mxu0 %v1169
        %2077 = vmatmul.mubr.bf16.gmra.mrb[0].mxu0 %v1168
        %v2078 = vpop.f32.mrb[0].mxu0
        %v2079 = vadd.f32 %v1918, %v2078
        %v2080 = vpop.f32.mrb[0].mxu0
        %v2081 = vpop.f32.mrb[0].mxu0
        %v2082 = vadd.f32 %v1921, %v2081
        %v2083 = vpop.f32.mrb[0].mxu0
        %2084 = vmatprep.mubr.bf16.mxu0 %v1178
        %2085 = vmatmul.mubr.bf16.gmra.mrb[0].mxu0 %v1177
        %v2086 = vpop.f32.mrb[0].mxu0
        %v2087 = vadd.f32 %v1926, %v2086
        %v2088 = vpop.f32.mrb[0].mxu0
        %v2089 = vpop.f32.mrb[0].mxu0
        %v2090 = vadd.f32 %v1929, %v2089
        %v2091 = vpop.f32.mrb[0].mxu0
        %2092 = vmatprep.mubr.bf16.mxu0 %v1187
        %2093 = vmatmul.mubr.bf16.gmra.mrb[0].mxu0 %v1186
        %v2094 = vpop.f32.mrb[0].mxu0
        %v2095 = vadd.f32 %v1934, %v2094
        %v2096 = vpop.f32.mrb[0].mxu0
        %v2097 = vpop.f32.mrb[0].mxu0
        %v2098 = vadd.f32 %v1937, %v2097
        %v2099 = vpop.f32.mrb[0].mxu0
        %2100 = vmatprep.mubr.bf16.mxu0 %v1196
        %2101 = vmatmul.mubr.bf16.gmra.mrb[0].mxu0 %v1195
        %v2102 = vpop.f32.mrb[0].mxu0
        %v2103 = vadd.f32 %v1942, %v2102
        %v2104 = vpop.f32.mrb[0].mxu0
        %v2105 = vpop.f32.mrb[0].mxu0
        %v2106 = vadd.f32 %v1945, %v2105
        %v2107 = vpop.f32.mrb[0].mxu0
        %2108 = vmatprep.mubr.bf16.mxu0 %v1205
        %2109 = vmatmul.mubr.bf16.gmra.mrb[0].mxu0 %v1204
        %v2110 = vpop.f32.mrb[0].mxu0
        %v2111 = vadd.f32 %v1950, %v2110
        %v2112 = vpop.f32.mrb[0].mxu0
        %v2113 = vpop.f32.mrb[0].mxu0
        %v2114 = vadd.f32 %v1953, %v2113
        %v2115 = vpop.f32.mrb[0].mxu0
        %2116 = vmatprep.mubr.bf16.mxu0 %v1214
        %2117 = vmatmul.mubr.bf16.gmra.mrb[0].mxu0 %v1213
        %v2118 = vpop.f32.mrb[0].mxu0
        %v2119 = vadd.f32 %v1958, %v2118
        %v2120 = vpop.f32.mrb[0].mxu0
        %v2121 = vpop.f32.mrb[0].mxu0
        %v2122 = vadd.f32 %v1961, %v2121
        %v2123 = vpop.f32.mrb[0].mxu0
        %2124 = vdwg.mxu0
        %2125 = vmatprep.subr.bf16.mxu0 0
        %2126 = vmatpush1.bf16.msra.mxu0 %v1691
        %2127 = vmatprep.subr.bf16.mxu0 0
        %2128 = vmatpush1.bf16.msra.mxu0 %v1692
        %2129 = vmatprep.subr.bf16.mxu0 0
        %2130 = vmatpush1.bf16.msra.mxu0 %v1693
        %2131 = vmatprep.subr.bf16.mxu0 0
        %2132 = vmatpush1.bf16.msra.mxu0 %v1694
        %2133 = vmatprep.subr.bf16.mxu0 0
        %2134 = vmatpush1.bf16.msra.mxu0 %v1695
        %2135 = vmatprep.subr.bf16.mxu0 0
        %2136 = vmatpush1.bf16.msra.mxu0 %v1696
        %2137 = vmatprep.subr.bf16.mxu0 0
        %2138 = vmatpush1.bf16.msra.mxu0 %v1697
        %2139 = vmatprep.subr.bf16.mxu0 0
        %2140 = vmatpush1.bf16.msra.mxu0 %v1698
        %2141 = vmatprep.subr.bf16.mxu0 0
        %2142 = vmatpush1.bf16.msra.mxu0 %v1699
        %2143 = vmatprep.subr.bf16.mxu0 0
        %2144 = vmatpush1.bf16.msra.mxu0 %v1700
        %2145 = vmatprep.subr.bf16.mxu0 0
        %2146 = vmatpush1.bf16.msra.mxu0 %v1701
        %2147 = vmatprep.subr.bf16.mxu0 0
        %2148 = vmatpush1.bf16.msra.mxu0 %v1702
        %2149 = vmatprep.subr.bf16.mxu0 0
        %2150 = vmatpush1.bf16.msra.mxu0 %v1703
        %2151 = vmatprep.subr.bf16.mxu0 0
        %2152 = vmatpush1.bf16.msra.mxu0 %v1704
        %2153 = vmatprep.subr.bf16.mxu0 0
        %2154 = vmatpush1.bf16.msra.mxu0 %v1705
        %2155 = vmatprep.subr.bf16.mxu0 0
        %2156 = vmatpush1.bf16.msra.mxu0 %v1706
        %2157 = vmatprep.mubr.bf16.mxu0 %v1081
        %2158 = vmatmul.mubr.bf16.gmra.mrb[0].mxu0 %v1080
        %v2159 = vpop.f32.mrb[0].mxu0
        %v2160 = vadd.f32 %v1999, %v2159
        %v2161 = vpop.f32.mrb[0].mxu0
        %v2162 = vpop.f32.mrb[0].mxu0
        %v2163 = vadd.f32 %v2002, %v2162
        %v2164 = vpop.f32.mrb[0].mxu0
        %2165 = vmatprep.mubr.bf16.mxu0 %v1090
        %2166 = vmatmul.mubr.bf16.gmra.mrb[0].mxu0 %v1089
        %v2167 = vpop.f32.mrb[0].mxu0
        %v2168 = vadd.f32 %v2007, %v2167
        %v2169 = vpop.f32.mrb[0].mxu0
        %v2170 = vpop.f32.mrb[0].mxu0
        %v2171 = vadd.f32 %v2010, %v2170
        %v2172 = vpop.f32.mrb[0].mxu0
        %2173 = vmatprep.mubr.bf16.mxu0 %v1099
        %2174 = vmatmul.mubr.bf16.gmra.mrb[0].mxu0 %v1098
        %v2175 = vpop.f32.mrb[0].mxu0
        %v2176 = vadd.f32 %v2015, %v2175
        %v2177 = vpop.f32.mrb[0].mxu0
        %v2178 = vpop.f32.mrb[0].mxu0
        %v2179 = vadd.f32 %v2018, %v2178
        %v2180 = vpop.f32.mrb[0].mxu0
        %2181 = vmatprep.mubr.bf16.mxu0 %v1108
        %2182 = vmatmul.mubr.bf16.gmra.mrb[0].mxu0 %v1107
        %v2183 = vpop.f32.mrb[0].mxu0
        %v2184 = vadd.f32 %v2023, %v2183
        %v2185 = vpop.f32.mrb[0].mxu0
        %v2186 = vpop.f32.mrb[0].mxu0
        %v2187 = vadd.f32 %v2026, %v2186
        %v2188 = vpop.f32.mrb[0].mxu0
        %2189 = vmatprep.mubr.bf16.mxu0 %v1117
        %2190 = vmatmul.mubr.bf16.gmra.mrb[0].mxu0 %v1116
        %v2191 = vpop.f32.mrb[0].mxu0
        %v2192 = vadd.f32 %v2031, %v2191
        %v2193 = vpop.f32.mrb[0].mxu0
        %v2194 = vpop.f32.mrb[0].mxu0
        %v2195 = vadd.f32 %v2034, %v2194
        %v2196 = vpop.f32.mrb[0].mxu0
        %2197 = vmatprep.mubr.bf16.mxu0 %v1126
        %2198 = vmatmul.mubr.bf16.gmra.mrb[0].mxu0 %v1125
        %v2199 = vpop.f32.mrb[0].mxu0
        %v2200 = vadd.f32 %v2039, %v2199
        %v2201 = vpop.f32.mrb[0].mxu0
        %v2202 = vpop.f32.mrb[0].mxu0
        %v2203 = vadd.f32 %v2042, %v2202
        %v2204 = vpop.f32.mrb[0].mxu0
        %2205 = vmatprep.mubr.bf16.mxu0 %v1135
        %2206 = vmatmul.mubr.bf16.gmra.mrb[0].mxu0 %v1134
        %v2207 = vpop.f32.mrb[0].mxu0
        %v2208 = vadd.f32 %v2047, %v2207
        %v2209 = vpop.f32.mrb[0].mxu0
        %v2210 = vpop.f32.mrb[0].mxu0
        %v2211 = vadd.f32 %v2050, %v2210
        %v2212 = vpop.f32.mrb[0].mxu0
        %2213 = vmatprep.mubr.bf16.mxu0 %v1144
        %2214 = vmatmul.mubr.bf16.gmra.mrb[0].mxu0 %v1143
        %v2215 = vpop.f32.mrb[0].mxu0
        %v2216 = vadd.f32 %v2055, %v2215
        %v2217 = vpop.f32.mrb[0].mxu0
        %v2218 = vpop.f32.mrb[0].mxu0
        %v2219 = vadd.f32 %v2058, %v2218
        %v2220 = vpop.f32.mrb[0].mxu0
        %2221 = vmatprep.mubr.bf16.mxu0 %v1153
        %2222 = vmatmul.mubr.bf16.gmra.mrb[0].mxu0 %v1152
        %v2223 = vpop.f32.mrb[0].mxu0
        %v2224 = vadd.f32 %v2063, %v2223
        %v2225 = vpop.f32.mrb[0].mxu0
        %v2226 = vpop.f32.mrb[0].mxu0
        %v2227 = vadd.f32 %v2066, %v2226
        %v2228 = vpop.f32.mrb[0].mxu0
        %2229 = vmatprep.mubr.bf16.mxu0 %v1162
        %2230 = vmatmul.mubr.bf16.gmra.mrb[0].mxu0 %v1161
        %v2231 = vpop.f32.mrb[0].mxu0
        %v2232 = vadd.f32 %v2071, %v2231
        %v2233 = vpop.f32.mrb[0].mxu0
        %v2234 = vpop.f32.mrb[0].mxu0
        %v2235 = vadd.f32 %v2074, %v2234
        %v2236 = vpop.f32.mrb[0].mxu0
        %2237 = vmatprep.mubr.bf16.mxu0 %v1171
        %2238 = vmatmul.mubr.bf16.gmra.mrb[0].mxu0 %v1170
        %v2239 = vpop.f32.mrb[0].mxu0
        %v2240 = vadd.f32 %v2079, %v2239
        %v2241 = vpop.f32.mrb[0].mxu0
        %v2242 = vpop.f32.mrb[0].mxu0
        %v2243 = vadd.f32 %v2082, %v2242
        %v2244 = vpop.f32.mrb[0].mxu0
        %2245 = vmatprep.mubr.bf16.mxu0 %v1180
        %2246 = vmatmul.mubr.bf16.gmra.mrb[0].mxu0 %v1179
        %v2247 = vpop.f32.mrb[0].mxu0
        %v2248 = vadd.f32 %v2087, %v2247
        %v2249 = vpop.f32.mrb[0].mxu0
        %v2250 = vpop.f32.mrb[0].mxu0
        %v2251 = vadd.f32 %v2090, %v2250
        %v2252 = vpop.f32.mrb[0].mxu0
        %2253 = vmatprep.mubr.bf16.mxu0 %v1189
        %2254 = vmatmul.mubr.bf16.gmra.mrb[0].mxu0 %v1188
        %v2255 = vpop.f32.mrb[0].mxu0
        %v2256 = vadd.f32 %v2095, %v2255
        %v2257 = vpop.f32.mrb[0].mxu0
        %v2258 = vpop.f32.mrb[0].mxu0
        %v2259 = vadd.f32 %v2098, %v2258
        %v2260 = vpop.f32.mrb[0].mxu0
        %2261 = vmatprep.mubr.bf16.mxu0 %v1198
        %2262 = vmatmul.mubr.bf16.gmra.mrb[0].mxu0 %v1197
        %v2263 = vpop.f32.mrb[0].mxu0
        %v2264 = vadd.f32 %v2103, %v2263
        %v2265 = vpop.f32.mrb[0].mxu0
        %v2266 = vpop.f32.mrb[0].mxu0
        %v2267 = vadd.f32 %v2106, %v2266
        %v2268 = vpop.f32.mrb[0].mxu0
        %2269 = vmatprep.mubr.bf16.mxu0 %v1207
        %2270 = vmatmul.mubr.bf16.gmra.mrb[0].mxu0 %v1206
        %v2271 = vpop.f32.mrb[0].mxu0
        %v2272 = vadd.f32 %v2111, %v2271
        %v2273 = vpop.f32.mrb[0].mxu0
        %v2274 = vpop.f32.mrb[0].mxu0
        %v2275 = vadd.f32 %v2114, %v2274
        %v2276 = vpop.f32.mrb[0].mxu0
        %2277 = vmatprep.mubr.bf16.mxu0 %v1216
        %2278 = vmatmul.mubr.bf16.gmra.mrb[0].mxu0 %v1215
        %v2279 = vpop.f32.mrb[0].mxu0
        %v2280 = vadd.f32 %v2119, %v2279
        %v2281 = vpop.f32.mrb[0].mxu0
        %v2282 = vpop.f32.mrb[0].mxu0
        %v2283 = vadd.f32 %v2122, %v2282
        %v2284 = vpop.f32.mrb[0].mxu0
        %2285 = vdwg.mxu0
        %2286 = vmatprep.subr.bf16.mxu0 0
        %2287 = vmatpush1.bf16.msra.mxu0 %v1707
        %2288 = vmatprep.subr.bf16.mxu0 0
        %2289 = vmatpush1.bf16.msra.mxu0 %v1708
        %2290 = vmatprep.subr.bf16.mxu0 0
        %2291 = vmatpush1.bf16.msra.mxu0 %v1709
        %2292 = vmatprep.subr.bf16.mxu0 0
        %2293 = vmatpush1.bf16.msra.mxu0 %v1710
        %2294 = vmatprep.subr.bf16.mxu0 0
        %2295 = vmatpush1.bf16.msra.mxu0 %v1711
        %2296 = vmatprep.subr.bf16.mxu0 0
        %2297 = vmatpush1.bf16.msra.mxu0 %v1712
        %2298 = vmatprep.subr.bf16.mxu0 0
        %2299 = vmatpush1.bf16.msra.mxu0 %v1713
        %2300 = vmatprep.subr.bf16.mxu0 0
        %2301 = vmatpush1.bf16.msra.mxu0 %v1714
        %2302 = vmatprep.subr.bf16.mxu0 0
        %2303 = vmatpush1.bf16.msra.mxu0 %v1715
        %2304 = vmatprep.subr.bf16.mxu0 0
        %2305 = vmatpush1.bf16.msra.mxu0 %v1716
        %2306 = vmatprep.subr.bf16.mxu0 0
        %2307 = vmatpush1.bf16.msra.mxu0 %v1717
        %2308 = vmatprep.subr.bf16.mxu0 0
        %2309 = vmatpush1.bf16.msra.mxu0 %v1718
        %2310 = vmatprep.subr.bf16.mxu0 0
        %2311 = vmatpush1.bf16.msra.mxu0 %v1719
        %2312 = vmatprep.subr.bf16.mxu0 0
        %2313 = vmatpush1.bf16.msra.mxu0 %v1720
        %2314 = vmatprep.subr.bf16.mxu0 0
        %2315 = vmatpush1.bf16.msra.mxu0 %v1721
        %2316 = vmatprep.subr.bf16.mxu0 0
        %2317 = vmatpush1.bf16.msra.mxu0 %v1722
        %2318 = vmatprep.mubr.bf16.mxu0 %v1083
        %2319 = vmatmul.mubr.bf16.gmra.mrb[0].mxu0 %v1082
        %v2320 = vpop.f32.mrb[0].mxu0
        %v2321 = vadd.f32 %v2160, %v2320
        %v2322 = vpop.f32.mrb[0].mxu0
        %v2323 = vpop.f32.mrb[0].mxu0
        %v2324 = vadd.f32 %v2163, %v2323
        %v2325 = vpop.f32.mrb[0].mxu0
        %2326 = vmatprep.mubr.bf16.mxu0 %v1092
        %2327 = vmatmul.mubr.bf16.gmra.mrb[0].mxu0 %v1091
        %v2328 = vpop.f32.mrb[0].mxu0
        %v2329 = vadd.f32 %v2168, %v2328
        %v2330 = vpop.f32.mrb[0].mxu0
        %v2331 = vpop.f32.mrb[0].mxu0
        %v2332 = vadd.f32 %v2171, %v2331
        %v2333 = vpop.f32.mrb[0].mxu0
        %2334 = vmatprep.mubr.bf16.mxu0 %v1101
        %2335 = vmatmul.mubr.bf16.gmra.mrb[0].mxu0 %v1100
        %v2336 = vpop.f32.mrb[0].mxu0
        %v2337 = vadd.f32 %v2176, %v2336
        %v2338 = vpop.f32.mrb[0].mxu0
        %v2339 = vpop.f32.mrb[0].mxu0
        %v2340 = vadd.f32 %v2179, %v2339
        %v2341 = vpop.f32.mrb[0].mxu0
        %2342 = vmatprep.mubr.bf16.mxu0 %v1110
        %2343 = vmatmul.mubr.bf16.gmra.mrb[0].mxu0 %v1109
        %v2344 = vpop.f32.mrb[0].mxu0
        %v2345 = vadd.f32 %v2184, %v2344
        %v2346 = vpop.f32.mrb[0].mxu0
        %v2347 = vpop.f32.mrb[0].mxu0
        %v2348 = vadd.f32 %v2187, %v2347
        %v2349 = vpop.f32.mrb[0].mxu0
        %2350 = vmatprep.mubr.bf16.mxu0 %v1119
        %2351 = vmatmul.mubr.bf16.gmra.mrb[0].mxu0 %v1118
        %v2352 = vpop.f32.mrb[0].mxu0
        %v2353 = vadd.f32 %v2192, %v2352
        %v2354 = vpop.f32.mrb[0].mxu0
        %v2355 = vpop.f32.mrb[0].mxu0
        %v2356 = vadd.f32 %v2195, %v2355
        %v2357 = vpop.f32.mrb[0].mxu0
        %2358 = vmatprep.mubr.bf16.mxu0 %v1128
        %2359 = vmatmul.mubr.bf16.gmra.mrb[0].mxu0 %v1127
        %v2360 = vpop.f32.mrb[0].mxu0
        %v2361 = vadd.f32 %v2200, %v2360
        %v2362 = vpop.f32.mrb[0].mxu0
        %v2363 = vpop.f32.mrb[0].mxu0
        %v2364 = vadd.f32 %v2203, %v2363
        %v2365 = vpop.f32.mrb[0].mxu0
        %2366 = vmatprep.mubr.bf16.mxu0 %v1137
        %2367 = vmatmul.mubr.bf16.gmra.mrb[0].mxu0 %v1136
        %v2368 = vpop.f32.mrb[0].mxu0
        %v2369 = vadd.f32 %v2208, %v2368
        %v2370 = vpop.f32.mrb[0].mxu0
        %v2371 = vpop.f32.mrb[0].mxu0
        %v2372 = vadd.f32 %v2211, %v2371
        %v2373 = vpop.f32.mrb[0].mxu0
        %2374 = vmatprep.mubr.bf16.mxu0 %v1146
        %2375 = vmatmul.mubr.bf16.gmra.mrb[0].mxu0 %v1145
        %v2376 = vpop.f32.mrb[0].mxu0
        %v2377 = vadd.f32 %v2216, %v2376
        %v2378 = vpop.f32.mrb[0].mxu0
        %v2379 = vpop.f32.mrb[0].mxu0
        %v2380 = vadd.f32 %v2219, %v2379
        %v2381 = vpop.f32.mrb[0].mxu0
        %2382 = vmatprep.mubr.bf16.mxu0 %v1155
        %2383 = vmatmul.mubr.bf16.gmra.mrb[0].mxu0 %v1154
        %v2384 = vpop.f32.mrb[0].mxu0
        %v2385 = vadd.f32 %v2224, %v2384
        %v2386 = vpop.f32.mrb[0].mxu0
        %v2387 = vpop.f32.mrb[0].mxu0
        %v2388 = vadd.f32 %v2227, %v2387
        %v2389 = vpop.f32.mrb[0].mxu0
        %2390 = vmatprep.mubr.bf16.mxu0 %v1164
        %2391 = vmatmul.mubr.bf16.gmra.mrb[0].mxu0 %v1163
        %v2392 = vpop.f32.mrb[0].mxu0
        %v2393 = vadd.f32 %v2232, %v2392
        %v2394 = vpop.f32.mrb[0].mxu0
        %v2395 = vpop.f32.mrb[0].mxu0
        %v2396 = vadd.f32 %v2235, %v2395
        %v2397 = vpop.f32.mrb[0].mxu0
        %2398 = vmatprep.mubr.bf16.mxu0 %v1173
        %2399 = vmatmul.mubr.bf16.gmra.mrb[0].mxu0 %v1172
        %v2400 = vpop.f32.mrb[0].mxu0
        %v2401 = vadd.f32 %v2240, %v2400
        %v2402 = vpop.f32.mrb[0].mxu0
        %v2403 = vpop.f32.mrb[0].mxu0
        %v2404 = vadd.f32 %v2243, %v2403
        %v2405 = vpop.f32.mrb[0].mxu0
        %2406 = vmatprep.mubr.bf16.mxu0 %v1182
        %2407 = vmatmul.mubr.bf16.gmra.mrb[0].mxu0 %v1181
        %v2408 = vpop.f32.mrb[0].mxu0
        %v2409 = vadd.f32 %v2248, %v2408
        %v2410 = vpop.f32.mrb[0].mxu0
        %v2411 = vpop.f32.mrb[0].mxu0
        %v2412 = vadd.f32 %v2251, %v2411
        %v2413 = vpop.f32.mrb[0].mxu0
        %2414 = vmatprep.mubr.bf16.mxu0 %v1191
        %2415 = vmatmul.mubr.bf16.gmra.mrb[0].mxu0 %v1190
        %v2416 = vpop.f32.mrb[0].mxu0
        %v2417 = vadd.f32 %v2256, %v2416
        %v2418 = vpop.f32.mrb[0].mxu0
        %v2419 = vpop.f32.mrb[0].mxu0
        %v2420 = vadd.f32 %v2259, %v2419
        %v2421 = vpop.f32.mrb[0].mxu0
        %2422 = vmatprep.mubr.bf16.mxu0 %v1200
        %2423 = vmatmul.mubr.bf16.gmra.mrb[0].mxu0 %v1199
        %v2424 = vpop.f32.mrb[0].mxu0
        %v2425 = vadd.f32 %v2264, %v2424
        %v2426 = vpop.f32.mrb[0].mxu0
        %v2427 = vpop.f32.mrb[0].mxu0
        %v2428 = vadd.f32 %v2267, %v2427
        %v2429 = vpop.f32.mrb[0].mxu0
        %2430 = vmatprep.mubr.bf16.mxu0 %v1209
        %2431 = vmatmul.mubr.bf16.gmra.mrb[0].mxu0 %v1208
        %v2432 = vpop.f32.mrb[0].mxu0
        %v2433 = vadd.f32 %v2272, %v2432
        %v2434 = vpop.f32.mrb[0].mxu0
        %v2435 = vpop.f32.mrb[0].mxu0
        %v2436 = vadd.f32 %v2275, %v2435
        %v2437 = vpop.f32.mrb[0].mxu0
        %2438 = vmatprep.mubr.bf16.mxu0 %v1218
        %2439 = vmatmul.mubr.bf16.gmra.mrb[0].mxu0 %v1217
        %v2440 = vpop.f32.mrb[0].mxu0
        %v2441 = vadd.f32 %v2280, %v2440
        %v2442 = vpop.f32.mrb[0].mxu0
        %v2443 = vpop.f32.mrb[0].mxu0
        %v2444 = vadd.f32 %v2283, %v2443
        %v2445 = vpop.f32.mrb[0].mxu0
        %2446 = vdwg.mxu0
        %2447 = vmatprep.subr.bf16.mxu0 0
        %2448 = vmatpush1.bf16.msra.mxu0 %v1723
        %2449 = vmatprep.subr.bf16.mxu0 0
        %2450 = vmatpush1.bf16.msra.mxu0 %v1724
        %2451 = vmatprep.subr.bf16.mxu0 0
        %2452 = vmatpush1.bf16.msra.mxu0 %v1725
        %2453 = vmatprep.subr.bf16.mxu0 0
        %2454 = vmatpush1.bf16.msra.mxu0 %v1726
        %2455 = vmatprep.subr.bf16.mxu0 0
        %2456 = vmatpush1.bf16.msra.mxu0 %v1727
        %2457 = vmatprep.subr.bf16.mxu0 0
        %2458 = vmatpush1.bf16.msra.mxu0 %v1728
        %2459 = vmatprep.subr.bf16.mxu0 0
        %2460 = vmatpush1.bf16.msra.mxu0 %v1729
        %2461 = vmatprep.subr.bf16.mxu0 0
        %2462 = vmatpush1.bf16.msra.mxu0 %v1730
        %2463 = vmatprep.subr.bf16.mxu0 0
        %2464 = vmatpush1.bf16.msra.mxu0 0
        %2465 = vmatprep.subr.bf16.mxu0 0
        %2466 = vmatpush1.bf16.msra.mxu0 0
        %2467 = vmatprep.subr.bf16.mxu0 0
        %2468 = vmatpush1.bf16.msra.mxu0 0
        %2469 = vmatprep.subr.bf16.mxu0 0
        %2470 = vmatpush1.bf16.msra.mxu0 0
        %2471 = vmatprep.subr.bf16.mxu0 0
        %2472 = vmatpush1.bf16.msra.mxu0 0
        %2473 = vmatprep.subr.bf16.mxu0 0
        %2474 = vmatpush1.bf16.msra.mxu0 0
        %2475 = vmatprep.subr.bf16.mxu0 0
        %2476 = vmatpush1.bf16.msra.mxu0 0
        %2477 = vmatprep.subr.bf16.mxu0 0
        %2478 = vmatpush1.bf16.msra.mxu0 0
        %2479 = vmatprep.mubr.bf16.mxu0 0
        %2480 = vmatmul.mubr.bf16.gmra.mrb[0].mxu0 %v1084
        %v2481 = vpop.f32.mrb[0].mxu0
        %v2482 = vadd.f32 %v2321, %v2481
        %v2483 = vpop.f32.mrb[0].mxu0
        %v2484 = vpop.f32.mrb[0].mxu0
        %v2485 = vadd.f32 %v2324, %v2484
        %v2486 = vpop.f32.mrb[0].mxu0
        %2487 = vmatprep.mubr.bf16.mxu0 0
        %2488 = vmatmul.mubr.bf16.gmra.mrb[0].mxu0 %v1093
        %v2489 = vpop.f32.mrb[0].mxu0
        %v2490 = vadd.f32 %v2329, %v2489
        %v2491 = vpop.f32.mrb[0].mxu0
        %v2492 = vpop.f32.mrb[0].mxu0
        %v2493 = vadd.f32 %v2332, %v2492
        %v2494 = vpop.f32.mrb[0].mxu0
        %2495 = vmatprep.mubr.bf16.mxu0 0
        %2496 = vmatmul.mubr.bf16.gmra.mrb[0].mxu0 %v1102
        %v2497 = vpop.f32.mrb[0].mxu0
        %v2498 = vadd.f32 %v2337, %v2497
        %v2499 = vpop.f32.mrb[0].mxu0
        %v2500 = vpop.f32.mrb[0].mxu0
        %v2501 = vadd.f32 %v2340, %v2500
        %v2502 = vpop.f32.mrb[0].mxu0
        %2503 = vmatprep.mubr.bf16.mxu0 0
        %2504 = vmatmul.mubr.bf16.gmra.mrb[0].mxu0 %v1111
        %v2505 = vpop.f32.mrb[0].mxu0
        %v2506 = vadd.f32 %v2345, %v2505
        %v2507 = vpop.f32.mrb[0].mxu0
        %v2508 = vpop.f32.mrb[0].mxu0
        %v2509 = vadd.f32 %v2348, %v2508
        %v2510 = vpop.f32.mrb[0].mxu0
        %2511 = vmatprep.mubr.bf16.mxu0 0
        %2512 = vmatmul.mubr.bf16.gmra.mrb[0].mxu0 %v1120
        %v2513 = vpop.f32.mrb[0].mxu0
        %v2514 = vadd.f32 %v2353, %v2513
        %v2515 = vpop.f32.mrb[0].mxu0
        %v2516 = vpop.f32.mrb[0].mxu0
        %v2517 = vadd.f32 %v2356, %v2516
        %v2518 = vpop.f32.mrb[0].mxu0
        %2519 = vmatprep.mubr.bf16.mxu0 0
        %2520 = vmatmul.mubr.bf16.gmra.mrb[0].mxu0 %v1129
        %v2521 = vpop.f32.mrb[0].mxu0
        %v2522 = vadd.f32 %v2361, %v2521
        %v2523 = vpop.f32.mrb[0].mxu0
        %v2524 = vpop.f32.mrb[0].mxu0
        %v2525 = vadd.f32 %v2364, %v2524
        %v2526 = vpop.f32.mrb[0].mxu0
        %2527 = vmatprep.mubr.bf16.mxu0 0
        %2528 = vmatmul.mubr.bf16.gmra.mrb[0].mxu0 %v1138
        %v2529 = vpop.f32.mrb[0].mxu0
        %v2530 = vadd.f32 %v2369, %v2529
        %v2531 = vpop.f32.mrb[0].mxu0
        %v2532 = vpop.f32.mrb[0].mxu0
        %v2533 = vadd.f32 %v2372, %v2532
        %v2534 = vpop.f32.mrb[0].mxu0
        %2535 = vmatprep.mubr.bf16.mxu0 0
        %2536 = vmatmul.mubr.bf16.gmra.mrb[0].mxu0 %v1147
        %v2537 = vpop.f32.mrb[0].mxu0
        %v2538 = vadd.f32 %v2377, %v2537
        %v2539 = vpop.f32.mrb[0].mxu0
        %v2540 = vpop.f32.mrb[0].mxu0
        %v2541 = vadd.f32 %v2380, %v2540
        %v2542 = vpop.f32.mrb[0].mxu0
        %2543 = vmatprep.mubr.bf16.mxu0 0
        %2544 = vmatmul.mubr.bf16.gmra.mrb[0].mxu0 %v1156
        %v2545 = vpop.f32.mrb[0].mxu0
        %v2546 = vadd.f32 %v2385, %v2545
        %v2547 = vpop.f32.mrb[0].mxu0
        %v2548 = vpop.f32.mrb[0].mxu0
        %v2549 = vadd.f32 %v2388, %v2548
        %v2550 = vpop.f32.mrb[0].mxu0
        %2551 = vmatprep.mubr.bf16.mxu0 0
        %2552 = vmatmul.mubr.bf16.gmra.mrb[0].mxu0 %v1165
        %v2553 = vpop.f32.mrb[0].mxu0
        %v2554 = vadd.f32 %v2393, %v2553
        %v2555 = vpop.f32.mrb[0].mxu0
        %v2556 = vpop.f32.mrb[0].mxu0
        %v2557 = vadd.f32 %v2396, %v2556
        %v2558 = vpop.f32.mrb[0].mxu0
        %2559 = vmatprep.mubr.bf16.mxu0 0
        %2560 = vmatmul.mubr.bf16.gmra.mrb[0].mxu0 %v1174
        %v2561 = vpop.f32.mrb[0].mxu0
        %v2562 = vadd.f32 %v2401, %v2561
        %v2563 = vpop.f32.mrb[0].mxu0
        %v2564 = vpop.f32.mrb[0].mxu0
        %v2565 = vadd.f32 %v2404, %v2564
        %v2566 = vpop.f32.mrb[0].mxu0
        %2567 = vmatprep.mubr.bf16.mxu0 0
        %2568 = vmatmul.mubr.bf16.gmra.mrb[0].mxu0 %v1183
        %v2569 = vpop.f32.mrb[0].mxu0
        %v2570 = vadd.f32 %v2409, %v2569
        %v2571 = vpop.f32.mrb[0].mxu0
        %v2572 = vpop.f32.mrb[0].mxu0
        %v2573 = vadd.f32 %v2412, %v2572
        %v2574 = vpop.f32.mrb[0].mxu0
        %2575 = vmatprep.mubr.bf16.mxu0 0
        %2576 = vmatmul.mubr.bf16.gmra.mrb[0].mxu0 %v1192
        %v2577 = vpop.f32.mrb[0].mxu0
        %v2578 = vadd.f32 %v2417, %v2577
        %v2579 = vpop.f32.mrb[0].mxu0
        %v2580 = vpop.f32.mrb[0].mxu0
        %v2581 = vadd.f32 %v2420, %v2580
        %v2582 = vpop.f32.mrb[0].mxu0
        %2583 = vmatprep.mubr.bf16.mxu0 0
        %2584 = vmatmul.mubr.bf16.gmra.mrb[0].mxu0 %v1201
        %v2585 = vpop.f32.mrb[0].mxu0
        %v2586 = vadd.f32 %v2425, %v2585
        %v2587 = vpop.f32.mrb[0].mxu0
        %v2588 = vpop.f32.mrb[0].mxu0
        %v2589 = vadd.f32 %v2428, %v2588
        %v2590 = vpop.f32.mrb[0].mxu0
        %2591 = vmatprep.mubr.bf16.mxu0 0
        %2592 = vmatmul.mubr.bf16.gmra.mrb[0].mxu0 %v1210
        %v2593 = vpop.f32.mrb[0].mxu0
        %v2594 = vadd.f32 %v2433, %v2593
        %v2595 = vpop.f32.mrb[0].mxu0
        %v2596 = vpop.f32.mrb[0].mxu0
        %v2597 = vadd.f32 %v2436, %v2596
        %v2598 = vpop.f32.mrb[0].mxu0
        %2599 = vmatprep.mubr.bf16.mxu0 0
        %2600 = vmatmul.mubr.bf16.gmra.mrb[0].mxu0 %v1219
        %v2601 = vpop.f32.mrb[0].mxu0
        %v2602 = vadd.f32 %v2441, %v2601
        %v2603 = vpop.f32.mrb[0].mxu0
        %v2604 = vpop.f32.mrb[0].mxu0
        %v2605 = vadd.f32 %v2444, %v2604
        %v2606 = vpop.f32.mrb[0].mxu0
        %2607 = vdwg.mxu0
        %v2608 = vmax.f32 %v2482, 0.0
        %v2609 = vmax.f32 %v2485, 0.0
        %v2610 = vmax.f32 %v2490, 0.0
        %v2611 = vmax.f32 %v2493, 0.0
        %v2612 = vmax.f32 %v2498, 0.0
        %v2613 = vmax.f32 %v2501, 0.0
        %v2614 = vmax.f32 %v2506, 0.0
        %v2615 = vmax.f32 %v2509, 0.0
        %v2616 = vmax.f32 %v2514, 0.0
        %v2617 = vmax.f32 %v2517, 0.0
        %v2618 = vmax.f32 %v2522, 0.0
        %v2619 = vmax.f32 %v2525, 0.0
        %v2620 = vmax.f32 %v2530, 0.0
        %v2621 = vmax.f32 %v2533, 0.0
        %v2622 = vmax.f32 %v2538, 0.0
        %v2623 = vmax.f32 %v2541, 0.0
        %v2624 = vmax.f32 %v2546, 0.0
        %v2625 = vmax.f32 %v2549, 0.0
        %v2626 = vmax.f32 %v2554, 0.0
        %v2627 = vmax.f32 %v2557, 0.0
        %v2628 = vmax.f32 %v2562, 0.0
        %v2629 = vmax.f32 %v2565, 0.0
        %v2630 = vmax.f32 %v2570, 0.0
        %v2631 = vmax.f32 %v2573, 0.0
        %v2632 = vmax.f32 %v2578, 0.0
        %v2633 = vmax.f32 %v2581, 0.0
        %v2634 = vmax.f32 %v2586, 0.0
        %v2635 = vmax.f32 %v2589, 0.0
        %v2636 = vmax.f32 %v2594, 0.0
        %v2637 = vmax.f32 %v2597, 0.0
        %v2638 = vmax.f32 %v2602, 0.0
        %v2639 = vmax.f32 %v2605, 0.0
        %2640 = vst [vmem:[%s465 + $0x1] sm:$0xff] %v2608
        %2641 = vst [vmem:[%s465 + $0x9] sm:$0xff] %v2609
        %2642 = vst [vmem:[%s465 + $0x19] sm:$0xff] %v2610
        %2643 = vst [vmem:[%s465 + $0x21] sm:$0xff] %v2611
        %2644 = vst [vmem:[%s465 + $0x31] sm:$0xff] %v2612
        %2645 = vst [vmem:[%s465 + $0x39] sm:$0xff] %v2613
        %2646 = vst [vmem:[%s465 + $0x49] sm:$0xff] %v2614
        %2647 = vst [vmem:[%s465 + $0x51] sm:$0xff] %v2615
        %2648 = vst [vmem:[%s465 + $0x61] sm:$0xff] %v2616
        %2649 = vst [vmem:[%s465 + $0x69] sm:$0xff] %v2617
        %2650 = vst [vmem:[%s465 + $0x79] sm:$0xff] %v2618
        %2651 = vst [vmem:[%s465 + $0x81] sm:$0xff] %v2619
        %2652 = vst [vmem:[%s465 + $0x91] sm:$0xff] %v2620
        %2653 = vst [vmem:[%s465 + $0x99] sm:$0xff] %v2621
        %2654 = vst [vmem:[%s465 + $0xa9] sm:$0xff] %v2622
        %2655 = vst [vmem:[%s465 + $0xb1] sm:$0xff] %v2623
        %2656 = vst [vmem:[%s465 + $0xc1] sm:$0xff] %v2624
        %2657 = vst [vmem:[%s465 + $0xc9] sm:$0xff] %v2625
        %2658 = vst [vmem:[%s465 + $0xd9] sm:$0xff] %v2626
        %2659 = vst [vmem:[%s465 + $0xe1] sm:$0xff] %v2627
        %2660 = vst [vmem:[%s465 + $0xf1] sm:$0xff] %v2628
        %2661 = vst [vmem:[%s465 + $0xf9] sm:$0xff] %v2629
        %2662 = vst [vmem:[%s465 + $0x109] sm:$0xff] %v2630
        %2663 = vst [vmem:[%s465 + $0x111] sm:$0xff] %v2631
        %2664 = vst [vmem:[%s465 + $0x121] sm:$0xff] %v2632
        %2665 = vst [vmem:[%s465 + $0x129] sm:$0xff] %v2633
        %2666 = vst [vmem:[%s465 + $0x139] sm:$0xff] %v2634
        %2667 = vst [vmem:[%s465 + $0x141] sm:$0xff] %v2635
        %2668 = vst [vmem:[%s465 + $0x151] sm:$0xff] %v2636
        %2669 = vst [vmem:[%s465 + $0x159] sm:$0xff] %v2637
        %2670 = vst [vmem:[%s465 + $0x169] sm:$0xff] %v2638
        %2671 = vst [vmem:[%s465 + $0x171] sm:$0xff] %v2639
        %v2672 = vld [vmem:[#allocation2] sm:$0xff]
        %v2673 = vld [vmem:[#allocation2 + $0x8] sm:$0xff]
        %v2674 = vld [vmem:[#allocation2 + $0x18] sm:$0xff]
        %v2675 = vld [vmem:[#allocation2 + $0x20] sm:$0xff]
        %v2676 = vld [vmem:[#allocation2 + $0x30] sm:$0xff]
        %v2677 = vld [vmem:[#allocation2 + $0x38] sm:$0xff]
        %v2678 = vld [vmem:[#allocation2 + $0x48] sm:$0xff]
        %v2679 = vld [vmem:[#allocation2 + $0x50] sm:$0xff]
        %v2680 = vld [vmem:[#allocation2 + $0x60] sm:$0xff]
        %v2681 = vld [vmem:[#allocation2 + $0x68] sm:$0xff]
        %v2682 = vld [vmem:[#allocation2 + $0x78] sm:$0xff]
        %v2683 = vld [vmem:[#allocation2 + $0x80] sm:$0xff]
        %v2684 = vld [vmem:[#allocation2 + $0x90] sm:$0xff]
        %v2685 = vld [vmem:[#allocation2 + $0x98] sm:$0xff]
        %v2686 = vld [vmem:[#allocation2 + $0xa8] sm:$0xff]
        %v2687 = vld [vmem:[#allocation2 + $0xb0] sm:$0xff]
        %v2688 = vld [vmem:[#allocation2 + $0xc0] sm:$0xff]
        %v2689 = vld [vmem:[#allocation2 + $0xc8] sm:$0xff]
        %v2690 = vld [vmem:[#allocation2 + $0xd8] sm:$0xff]
        %v2691 = vld [vmem:[#allocation2 + $0xe0] sm:$0xff]
        %v2692 = vld [vmem:[#allocation2 + $0xf0] sm:$0xff]
        %v2693 = vld [vmem:[#allocation2 + $0xf8] sm:$0xff]
        %v2694 = vld [vmem:[#allocation2 + $0x108] sm:$0xff]
        %v2695 = vld [vmem:[#allocation2 + $0x110] sm:$0xff]
        %v2696 = vld [vmem:[#allocation2 + $0x120] sm:$0xff]
        %v2697 = vld [vmem:[#allocation2 + $0x128] sm:$0xff]
        %v2698 = vld [vmem:[#allocation2 + $0x138] sm:$0xff]
        %v2699 = vld [vmem:[#allocation2 + $0x140] sm:$0xff]
        %v2700 = vld [vmem:[#allocation2 + $0x150] sm:$0xff]
        %v2701 = vld [vmem:[#allocation2 + $0x158] sm:$0xff]
        %v2702 = vld [vmem:[#allocation2 + $0x168] sm:$0xff]
        %v2703 = vld [vmem:[#allocation2 + $0x170] sm:$0xff]
        %v2704 = vpack.c.bf16 %v2673, %v2672
        %v2705 = vpack.c.bf16 %v2675, %v2674
        %v2706 = vpack.c.bf16 %v2677, %v2676
        %v2707 = vpack.c.bf16 %v2679, %v2678
        %v2708 = vpack.c.bf16 %v2681, %v2680
        %v2709 = vpack.c.bf16 %v2683, %v2682
        %v2710 = vpack.c.bf16 %v2685, %v2684
        %v2711 = vpack.c.bf16 %v2687, %v2686
        %v2712 = vpack.c.bf16 %v2689, %v2688
        %v2713 = vpack.c.bf16 %v2691, %v2690
        %v2714 = vpack.c.bf16 %v2693, %v2692
        %v2715 = vpack.c.bf16 %v2695, %v2694
        %v2716 = vpack.c.bf16 %v2697, %v2696
        %v2717 = vpack.c.bf16 %v2699, %v2698
        %v2718 = vpack.c.bf16 %v2701, %v2700
        %v2719 = vpack.c.bf16 %v2703, %v2702
        %2720 = vst [vmem:[#allocation3] sm:$0xff] %v2704
        %2721 = vst [vmem:[#allocation3 + $0x48] sm:$0xff] %v2705
        %2722 = vst [vmem:[#allocation3 + $0x90] sm:$0xff] %v2706
        %2723 = vst [vmem:[#allocation3 + $0xd8] sm:$0xff] %v2707
        %2724 = vst [vmem:[#allocation3 + $0x120] sm:$0xff] %v2708
        %2725 = vst [vmem:[#allocation3 + $0x168] sm:$0xff] %v2709
        %2726 = vst [vmem:[#allocation3 + $0x1b0] sm:$0xff] %v2710
        %2727 = vst [vmem:[#allocation3 + $0x1f8] sm:$0xff] %v2711
        %2728 = vst [vmem:[#allocation3 + $0x240] sm:$0xff] %v2712
        %2729 = vst [vmem:[#allocation3 + $0x288] sm:$0xff] %v2713
        %2730 = vst [vmem:[#allocation3 + $0x2d0] sm:$0xff] %v2714
        %2731 = vst [vmem:[#allocation3 + $0x318] sm:$0xff] %v2715
        %2732 = vst [vmem:[#allocation3 + $0x360] sm:$0xff] %v2716
        %2733 = vst [vmem:[#allocation3 + $0x3a8] sm:$0xff] %v2717
        %2734 = vst [vmem:[#allocation3 + $0x3f0] sm:$0xff] %v2718
        %2735 = vst [vmem:[#allocation3 + $0x438] sm:$0xff] %v2719
        %v2736 = vld [vmem:[#allocation2 + $0x1] sm:$0xff]
        %v2737 = vld [vmem:[#allocation2 + $0x9] sm:$0xff]
        %v2738 = vld [vmem:[#allocation2 + $0x19] sm:$0xff]
        %v2739 = vld [vmem:[#allocation2 + $0x21] sm:$0xff]
        %v2740 = vld [vmem:[#allocation2 + $0x31] sm:$0xff]
        %v2741 = vld [vmem:[#allocation2 + $0x39] sm:$0xff]
        %v2742 = vld [vmem:[#allocation2 + $0x49] sm:$0xff]
        %v2743 = vld [vmem:[#allocation2 + $0x51] sm:$0xff]
        %v2744 = vld [vmem:[#allocation2 + $0x61] sm:$0xff]
        %v2745 = vld [vmem:[#allocation2 + $0x69] sm:$0xff]
        %v2746 = vld [vmem:[#allocation2 + $0x79] sm:$0xff]
        %v2747 = vld [vmem:[#allocation2 + $0x81] sm:$0xff]
        %v2748 = vld [vmem:[#allocation2 + $0x91] sm:$0xff]
        %v2749 = vld [vmem:[#allocation2 + $0x99] sm:$0xff]
        %v2750 = vld [vmem:[#allocation2 + $0xa9] sm:$0xff]
        %v2751 = vld [vmem:[#allocation2 + $0xb1] sm:$0xff]
        %v2752 = vld [vmem:[#allocation2 + $0xc1] sm:$0xff]
        %v2753 = vld [vmem:[#allocation2 + $0xc9] sm:$0xff]
        %v2754 = vld [vmem:[#allocation2 + $0xd9] sm:$0xff]
        %v2755 = vld [vmem:[#allocation2 + $0xe1] sm:$0xff]
        %v2756 = vld [vmem:[#allocation2 + $0xf1] sm:$0xff]
        %v2757 = vld [vmem:[#allocation2 + $0xf9] sm:$0xff]
        %v2758 = vld [vmem:[#allocation2 + $0x109] sm:$0xff]
        %v2759 = vld [vmem:[#allocation2 + $0x111] sm:$0xff]
        %v2760 = vld [vmem:[#allocation2 + $0x121] sm:$0xff]
        %v2761 = vld [vmem:[#allocation2 + $0x129] sm:$0xff]
        %v2762 = vld [vmem:[#allocation2 + $0x139] sm:$0xff]
        %v2763 = vld [vmem:[#allocation2 + $0x141] sm:$0xff]
        %v2764 = vld [vmem:[#allocation2 + $0x151] sm:$0xff]
        %v2765 = vld [vmem:[#allocation2 + $0x159] sm:$0xff]
        %v2766 = vld [vmem:[#allocation2 + $0x169] sm:$0xff]
        %v2767 = vld [vmem:[#allocation2 + $0x171] sm:$0xff]
        %v2768 = vpack.c.bf16 %v2737, %v2736
        %v2769 = vpack.c.bf16 %v2739, %v2738
        %v2770 = vpack.c.bf16 %v2741, %v2740
        %v2771 = vpack.c.bf16 %v2743, %v2742
        %v2772 = vpack.c.bf16 %v2745, %v2744
        %v2773 = vpack.c.bf16 %v2747, %v2746
        %v2774 = vpack.c.bf16 %v2749, %v2748
        %v2775 = vpack.c.bf16 %v2751, %v2750
        %v2776 = vpack.c.bf16 %v2753, %v2752
        %v2777 = vpack.c.bf16 %v2755, %v2754
        %v2778 = vpack.c.bf16 %v2757, %v2756
        %v2779 = vpack.c.bf16 %v2759, %v2758
        %v2780 = vpack.c.bf16 %v2761, %v2760
        %v2781 = vpack.c.bf16 %v2763, %v2762
        %v2782 = vpack.c.bf16 %v2765, %v2764
        %v2783 = vpack.c.bf16 %v2767, %v2766
        %2784 = vst [vmem:[#allocation3 + $0x8] sm:$0xff] %v2768
        %2785 = vst [vmem:[#allocation3 + $0x50] sm:$0xff] %v2769
        %2786 = vst [vmem:[#allocation3 + $0x98] sm:$0xff] %v2770
        %2787 = vst [vmem:[#allocation3 + $0xe0] sm:$0xff] %v2771
        %2788 = vst [vmem:[#allocation3 + $0x128] sm:$0xff] %v2772
        %2789 = vst [vmem:[#allocation3 + $0x170] sm:$0xff] %v2773
        %2790 = vst [vmem:[#allocation3 + $0x1b8] sm:$0xff] %v2774
        %2791 = vst [vmem:[#allocation3 + $0x200] sm:$0xff] %v2775
        %2792 = vst [vmem:[#allocation3 + $0x248] sm:$0xff] %v2776
        %2793 = vst [vmem:[#allocation3 + $0x290] sm:$0xff] %v2777
        %2794 = vst [vmem:[#allocation3 + $0x2d8] sm:$0xff] %v2778
        %2795 = vst [vmem:[#allocation3 + $0x320] sm:$0xff] %v2779
        %2796 = vst [vmem:[#allocation3 + $0x368] sm:$0xff] %v2780
        %2797 = vst [vmem:[#allocation3 + $0x3b0] sm:$0xff] %v2781
        %2798 = vst [vmem:[#allocation3 + $0x3f8] sm:$0xff] %v2782
        %2799 = vst [vmem:[#allocation3 + $0x440] sm:$0xff] %v2783
        %v2800 = vld [vmem:[#allocation2 + $0x2] sm:$0xff]
        %v2801 = vld [vmem:[#allocation2 + $0xa] sm:$0xff]
        %v2802 = vld [vmem:[#allocation2 + $0x1a] sm:$0xff]
        %v2803 = vld [vmem:[#allocation2 + $0x22] sm:$0xff]
        %v2804 = vld [vmem:[#allocation2 + $0x32] sm:$0xff]
        %v2805 = vld [vmem:[#allocation2 + $0x3a] sm:$0xff]
        %v2806 = vld [vmem:[#allocation2 + $0x4a] sm:$0xff]
        %v2807 = vld [vmem:[#allocation2 + $0x52] sm:$0xff]
        %v2808 = vld [vmem:[#allocation2 + $0x62] sm:$0xff]
        %v2809 = vld [vmem:[#allocation2 + $0x6a] sm:$0xff]
        %v2810 = vld [vmem:[#allocation2 + $0x7a] sm:$0xff]
        %v2811 = vld [vmem:[#allocation2 + $0x82] sm:$0xff]
        %v2812 = vld [vmem:[#allocation2 + $0x92] sm:$0xff]
        %v2813 = vld [vmem:[#allocation2 + $0x9a] sm:$0xff]
        %v2814 = vld [vmem:[#allocation2 + $0xaa] sm:$0xff]
        %v2815 = vld [vmem:[#allocation2 + $0xb2] sm:$0xff]
        %v2816 = vld [vmem:[#allocation2 + $0xc2] sm:$0xff]
        %v2817 = vld [vmem:[#allocation2 + $0xca] sm:$0xff]
        %v2818 = vld [vmem:[#allocation2 + $0xda] sm:$0xff]
        %v2819 = vld [vmem:[#allocation2 + $0xe2] sm:$0xff]
        %v2820 = vld [vmem:[#allocation2 + $0xf2] sm:$0xff]
        %v2821 = vld [vmem:[#allocation2 + $0xfa] sm:$0xff]
        %v2822 = vld [vmem:[#allocation2 + $0x10a] sm:$0xff]
        %v2823 = vld [vmem:[#allocation2 + $0x112] sm:$0xff]
        %v2824 = vld [vmem:[#allocation2 + $0x122] sm:$0xff]
        %v2825 = vld [vmem:[#allocation2 + $0x12a] sm:$0xff]
        %v2826 = vld [vmem:[#allocation2 + $0x13a] sm:$0xff]
        %v2827 = vld [vmem:[#allocation2 + $0x142] sm:$0xff]
        %v2828 = vld [vmem:[#allocation2 + $0x152] sm:$0xff]
        %v2829 = vld [vmem:[#allocation2 + $0x15a] sm:$0xff]
        %v2830 = vld [vmem:[#allocation2 + $0x16a] sm:$0xff]
        %v2831 = vld [vmem:[#allocation2 + $0x172] sm:$0xff]
        %v2832 = vpack.c.bf16 %v2801, %v2800
        %v2833 = vpack.c.bf16 %v2803, %v2802
        %v2834 = vpack.c.bf16 %v2805, %v2804
        %v2835 = vpack.c.bf16 %v2807, %v2806
        %v2836 = vpack.c.bf16 %v2809, %v2808
        %v2837 = vpack.c.bf16 %v2811, %v2810
        %v2838 = vpack.c.bf16 %v2813, %v2812
        %v2839 = vpack.c.bf16 %v2815, %v2814
        %v2840 = vpack.c.bf16 %v2817, %v2816
        %v2841 = vpack.c.bf16 %v2819, %v2818
        %v2842 = vpack.c.bf16 %v2821, %v2820
        %v2843 = vpack.c.bf16 %v2823, %v2822
        %v2844 = vpack.c.bf16 %v2825, %v2824
        %v2845 = vpack.c.bf16 %v2827, %v2826
        %v2846 = vpack.c.bf16 %v2829, %v2828
        %v2847 = vpack.c.bf16 %v2831, %v2830
        %2848 = vst [vmem:[#allocation3 + $0x10] sm:$0xff] %v2832
        %2849 = vst [vmem:[#allocation3 + $0x58] sm:$0xff] %v2833
        %2850 = vst [vmem:[#allocation3 + $0xa0] sm:$0xff] %v2834
        %2851 = vst [vmem:[#allocation3 + $0xe8] sm:$0xff] %v2835
        %2852 = vst [vmem:[#allocation3 + $0x130] sm:$0xff] %v2836
        %2853 = vst [vmem:[#allocation3 + $0x178] sm:$0xff] %v2837
        %2854 = vst [vmem:[#allocation3 + $0x1c0] sm:$0xff] %v2838
        %2855 = vst [vmem:[#allocation3 + $0x208] sm:$0xff] %v2839
        %2856 = vst [vmem:[#allocation3 + $0x250] sm:$0xff] %v2840
        %2857 = vst [vmem:[#allocation3 + $0x298] sm:$0xff] %v2841
        %2858 = vst [vmem:[#allocation3 + $0x2e0] sm:$0xff] %v2842
        %2859 = vst [vmem:[#allocation3 + $0x328] sm:$0xff] %v2843
        %2860 = vst [vmem:[#allocation3 + $0x370] sm:$0xff] %v2844
        %2861 = vst [vmem:[#allocation3 + $0x3b8] sm:$0xff] %v2845
        %2862 = vst [vmem:[#allocation3 + $0x400] sm:$0xff] %v2846
        %2863 = vst [vmem:[#allocation3 + $0x448] sm:$0xff] %v2847
        %v2864 = vld [vmem:[%s465] sm:$0xff]
        %v2865 = vld [vmem:[%s465 + $0x8] sm:$0xff]
        %v2866 = vld [vmem:[%s465 + $0x18] sm:$0xff]
        %v2867 = vld [vmem:[%s465 + $0x20] sm:$0xff]
        %v2868 = vld [vmem:[%s465 + $0x30] sm:$0xff]
        %v2869 = vld [vmem:[%s465 + $0x38] sm:$0xff]
        %v2870 = vld [vmem:[%s465 + $0x48] sm:$0xff]
        %v2871 = vld [vmem:[%s465 + $0x50] sm:$0xff]
        %v2872 = vld [vmem:[%s465 + $0x60] sm:$0xff]
        %v2873 = vld [vmem:[%s465 + $0x68] sm:$0xff]
        %v2874 = vld [vmem:[%s465 + $0x78] sm:$0xff]
        %v2875 = vld [vmem:[%s465 + $0x80] sm:$0xff]
        %v2876 = vld [vmem:[%s465 + $0x90] sm:$0xff]
        %v2877 = vld [vmem:[%s465 + $0x98] sm:$0xff]
        %v2878 = vld [vmem:[%s465 + $0xa8] sm:$0xff]
        %v2879 = vld [vmem:[%s465 + $0xb0] sm:$0xff]
        %v2880 = vld [vmem:[%s465 + $0xc0] sm:$0xff]
        %v2881 = vld [vmem:[%s465 + $0xc8] sm:$0xff]
        %v2882 = vld [vmem:[%s465 + $0xd8] sm:$0xff]
        %v2883 = vld [vmem:[%s465 + $0xe0] sm:$0xff]
        %v2884 = vld [vmem:[%s465 + $0xf0] sm:$0xff]
        %v2885 = vld [vmem:[%s465 + $0xf8] sm:$0xff]
        %v2886 = vld [vmem:[%s465 + $0x108] sm:$0xff]
        %v2887 = vld [vmem:[%s465 + $0x110] sm:$0xff]
        %v2888 = vld [vmem:[%s465 + $0x120] sm:$0xff]
        %v2889 = vld [vmem:[%s465 + $0x128] sm:$0xff]
        %v2890 = vld [vmem:[%s465 + $0x138] sm:$0xff]
        %v2891 = vld [vmem:[%s465 + $0x140] sm:$0xff]
        %v2892 = vld [vmem:[%s465 + $0x150] sm:$0xff]
        %v2893 = vld [vmem:[%s465 + $0x158] sm:$0xff]
        %v2894 = vld [vmem:[%s465 + $0x168] sm:$0xff]
        %v2895 = vld [vmem:[%s465 + $0x170] sm:$0xff]
        %v2896 = vpack.c.bf16 %v2865, %v2864
        %v2897 = vpack.c.bf16 %v2867, %v2866
        %v2898 = vpack.c.bf16 %v2869, %v2868
        %v2899 = vpack.c.bf16 %v2871, %v2870
        %v2900 = vpack.c.bf16 %v2873, %v2872
        %v2901 = vpack.c.bf16 %v2875, %v2874
        %v2902 = vpack.c.bf16 %v2877, %v2876
        %v2903 = vpack.c.bf16 %v2879, %v2878
        %v2904 = vpack.c.bf16 %v2881, %v2880
        %v2905 = vpack.c.bf16 %v2883, %v2882
        %v2906 = vpack.c.bf16 %v2885, %v2884
        %v2907 = vpack.c.bf16 %v2887, %v2886
        %v2908 = vpack.c.bf16 %v2889, %v2888
        %v2909 = vpack.c.bf16 %v2891, %v2890
        %v2910 = vpack.c.bf16 %v2893, %v2892
        %v2911 = vpack.c.bf16 %v2895, %v2894
        %2912 = vst [vmem:[#allocation3 + $0x18] sm:$0xff] %v2896
        %2913 = vst [vmem:[#allocation3 + $0x60] sm:$0xff] %v2897
        %2914 = vst [vmem:[#allocation3 + $0xa8] sm:$0xff] %v2898
        %2915 = vst [vmem:[#allocation3 + $0xf0] sm:$0xff] %v2899
        %2916 = vst [vmem:[#allocation3 + $0x138] sm:$0xff] %v2900
        %2917 = vst [vmem:[#allocation3 + $0x180] sm:$0xff] %v2901
        %2918 = vst [vmem:[#allocation3 + $0x1c8] sm:$0xff] %v2902
        %2919 = vst [vmem:[#allocation3 + $0x210] sm:$0xff] %v2903
        %2920 = vst [vmem:[#allocation3 + $0x258] sm:$0xff] %v2904
        %2921 = vst [vmem:[#allocation3 + $0x2a0] sm:$0xff] %v2905
        %2922 = vst [vmem:[#allocation3 + $0x2e8] sm:$0xff] %v2906
        %2923 = vst [vmem:[#allocation3 + $0x330] sm:$0xff] %v2907
        %2924 = vst [vmem:[#allocation3 + $0x378] sm:$0xff] %v2908
        %2925 = vst [vmem:[#allocation3 + $0x3c0] sm:$0xff] %v2909
        %2926 = vst [vmem:[#allocation3 + $0x408] sm:$0xff] %v2910
        %2927 = vst [vmem:[#allocation3 + $0x450] sm:$0xff] %v2911
        %v2928 = vld [vmem:[%s465 + $0x1] sm:$0xff]
        %v2929 = vld [vmem:[%s465 + $0x9] sm:$0xff]
        %v2930 = vld [vmem:[%s465 + $0x19] sm:$0xff]
        %v2931 = vld [vmem:[%s465 + $0x21] sm:$0xff]
        %v2932 = vld [vmem:[%s465 + $0x31] sm:$0xff]
        %v2933 = vld [vmem:[%s465 + $0x39] sm:$0xff]
        %v2934 = vld [vmem:[%s465 + $0x49] sm:$0xff]
        %v2935 = vld [vmem:[%s465 + $0x51] sm:$0xff]
        %v2936 = vld [vmem:[%s465 + $0x61] sm:$0xff]
        %v2937 = vld [vmem:[%s465 + $0x69] sm:$0xff]
        %v2938 = vld [vmem:[%s465 + $0x79] sm:$0xff]
        %v2939 = vld [vmem:[%s465 + $0x81] sm:$0xff]
        %v2940 = vld [vmem:[%s465 + $0x91] sm:$0xff]
        %v2941 = vld [vmem:[%s465 + $0x99] sm:$0xff]
        %v2942 = vld [vmem:[%s465 + $0xa9] sm:$0xff]
        %v2943 = vld [vmem:[%s465 + $0xb1] sm:$0xff]
        %v2944 = vld [vmem:[%s465 + $0xc1] sm:$0xff]
        %v2945 = vld [vmem:[%s465 + $0xc9] sm:$0xff]
        %v2946 = vld [vmem:[%s465 + $0xd9] sm:$0xff]
        %v2947 = vld [vmem:[%s465 + $0xe1] sm:$0xff]
        %v2948 = vld [vmem:[%s465 + $0xf1] sm:$0xff]
        %v2949 = vld [vmem:[%s465 + $0xf9] sm:$0xff]
        %v2950 = vld [vmem:[%s465 + $0x109] sm:$0xff]
        %v2951 = vld [vmem:[%s465 + $0x111] sm:$0xff]
        %v2952 = vld [vmem:[%s465 + $0x121] sm:$0xff]
        %v2953 = vld [vmem:[%s465 + $0x129] sm:$0xff]
        %v2954 = vld [vmem:[%s465 + $0x139] sm:$0xff]
        %v2955 = vld [vmem:[%s465 + $0x141] sm:$0xff]
        %v2956 = vld [vmem:[%s465 + $0x151] sm:$0xff]
        %v2957 = vld [vmem:[%s465 + $0x159] sm:$0xff]
        %v2958 = vld [vmem:[%s465 + $0x169] sm:$0xff]
        %v2959 = vld [vmem:[%s465 + $0x171] sm:$0xff]
        %v2960 = vpack.c.bf16 %v2929, %v2928
        %v2961 = vpack.c.bf16 %v2931, %v2930
        %v2962 = vpack.c.bf16 %v2933, %v2932
        %v2963 = vpack.c.bf16 %v2935, %v2934
        %v2964 = vpack.c.bf16 %v2937, %v2936
        %v2965 = vpack.c.bf16 %v2939, %v2938
        %v2966 = vpack.c.bf16 %v2941, %v2940
        %v2967 = vpack.c.bf16 %v2943, %v2942
        %v2968 = vpack.c.bf16 %v2945, %v2944
        %v2969 = vpack.c.bf16 %v2947, %v2946
        %v2970 = vpack.c.bf16 %v2949, %v2948
        %v2971 = vpack.c.bf16 %v2951, %v2950
        %v2972 = vpack.c.bf16 %v2953, %v2952
        %v2973 = vpack.c.bf16 %v2955, %v2954
        %v2974 = vpack.c.bf16 %v2957, %v2956
        %v2975 = vpack.c.bf16 %v2959, %v2958
        %2976 = vst [vmem:[#allocation3 + $0x20] sm:$0xff] %v2960
        %2977 = vst [vmem:[#allocation3 + $0x68] sm:$0xff] %v2961
        %2978 = vst [vmem:[#allocation3 + $0xb0] sm:$0xff] %v2962
        %2979 = vst [vmem:[#allocation3 + $0xf8] sm:$0xff] %v2963
        %2980 = vst [vmem:[#allocation3 + $0x140] sm:$0xff] %v2964
        %2981 = vst [vmem:[#allocation3 + $0x188] sm:$0xff] %v2965
        %2982 = vst [vmem:[#allocation3 + $0x1d0] sm:$0xff] %v2966
        %2983 = vst [vmem:[#allocation3 + $0x218] sm:$0xff] %v2967
        %2984 = vst [vmem:[#allocation3 + $0x260] sm:$0xff] %v2968
        %2985 = vst [vmem:[#allocation3 + $0x2a8] sm:$0xff] %v2969
        %2986 = vst [vmem:[#allocation3 + $0x2f0] sm:$0xff] %v2970
        %2987 = vst [vmem:[#allocation3 + $0x338] sm:$0xff] %v2971
        %2988 = vst [vmem:[#allocation3 + $0x380] sm:$0xff] %v2972
        %2989 = vst [vmem:[#allocation3 + $0x3c8] sm:$0xff] %v2973
        %2990 = vst [vmem:[#allocation3 + $0x410] sm:$0xff] %v2974
        %2991 = vst [vmem:[#allocation3 + $0x458] sm:$0xff] %v2975
        %v2992 = vld [vmem:[%s465 + $0x2] sm:$0xff]
        %v2993 = vld [vmem:[%s465 + $0xa] sm:$0xff]
        %v2994 = vld [vmem:[%s465 + $0x1a] sm:$0xff]
        %v2995 = vld [vmem:[%s465 + $0x22] sm:$0xff]
        %v2996 = vld [vmem:[%s465 + $0x32] sm:$0xff]
        %v2997 = vld [vmem:[%s465 + $0x3a] sm:$0xff]
        %v2998 = vld [vmem:[%s465 + $0x4a] sm:$0xff]
        %v2999 = vld [vmem:[%s465 + $0x52] sm:$0xff]
        %v3000 = vld [vmem:[%s465 + $0x62] sm:$0xff]
        %v3001 = vld [vmem:[%s465 + $0x6a] sm:$0xff]
        %v3002 = vld [vmem:[%s465 + $0x7a] sm:$0xff]
        %v3003 = vld [vmem:[%s465 + $0x82] sm:$0xff]
        %v3004 = vld [vmem:[%s465 + $0x92] sm:$0xff]
        %v3005 = vld [vmem:[%s465 + $0x9a] sm:$0xff]
        %v3006 = vld [vmem:[%s465 + $0xaa] sm:$0xff]
        %v3007 = vld [vmem:[%s465 + $0xb2] sm:$0xff]
        %v3008 = vld [vmem:[%s465 + $0xc2] sm:$0xff]
        %v3009 = vld [vmem:[%s465 + $0xca] sm:$0xff]
        %v3010 = vld [vmem:[%s465 + $0xda] sm:$0xff]
        %v3011 = vld [vmem:[%s465 + $0xe2] sm:$0xff]
        %v3012 = vld [vmem:[%s465 + $0xf2] sm:$0xff]
        %v3013 = vld [vmem:[%s465 + $0xfa] sm:$0xff]
        %v3014 = vld [vmem:[%s465 + $0x10a] sm:$0xff]
        %v3015 = vld [vmem:[%s465 + $0x112] sm:$0xff]
        %v3016 = vld [vmem:[%s465 + $0x122] sm:$0xff]
        %v3017 = vld [vmem:[%s465 + $0x12a] sm:$0xff]
        %v3018 = vld [vmem:[%s465 + $0x13a] sm:$0xff]
        %v3019 = vld [vmem:[%s465 + $0x142] sm:$0xff]
        %v3020 = vld [vmem:[%s465 + $0x152] sm:$0xff]
        %v3021 = vld [vmem:[%s465 + $0x15a] sm:$0xff]
        %v3022 = vld [vmem:[%s465 + $0x16a] sm:$0xff]
        %v3023 = vld [vmem:[%s465 + $0x172] sm:$0xff]
        %v3024 = vpack.c.bf16 %v2993, %v2992
        %v3025 = vpack.c.bf16 %v2995, %v2994
        %v3026 = vpack.c.bf16 %v2997, %v2996
        %v3027 = vpack.c.bf16 %v2999, %v2998
        %v3028 = vpack.c.bf16 %v3001, %v3000
        %v3029 = vpack.c.bf16 %v3003, %v3002
        %v3030 = vpack.c.bf16 %v3005, %v3004
        %v3031 = vpack.c.bf16 %v3007, %v3006
        %v3032 = vpack.c.bf16 %v3009, %v3008
        %v3033 = vpack.c.bf16 %v3011, %v3010
        %v3034 = vpack.c.bf16 %v3013, %v3012
        %v3035 = vpack.c.bf16 %v3015, %v3014
        %v3036 = vpack.c.bf16 %v3017, %v3016
        %v3037 = vpack.c.bf16 %v3019, %v3018
        %v3038 = vpack.c.bf16 %v3021, %v3020
        %v3039 = vpack.c.bf16 %v3023, %v3022
        %3040 = vst [vmem:[#allocation3 + $0x28] sm:$0xff] %v3024
        %3041 = vst [vmem:[#allocation3 + $0x70] sm:$0xff] %v3025
        %3042 = vst [vmem:[#allocation3 + $0xb8] sm:$0xff] %v3026
        %3043 = vst [vmem:[#allocation3 + $0x100] sm:$0xff] %v3027
        %3044 = vst [vmem:[#allocation3 + $0x148] sm:$0xff] %v3028
        %3045 = vst [vmem:[#allocation3 + $0x190] sm:$0xff] %v3029
        %3046 = vst [vmem:[#allocation3 + $0x1d8] sm:$0xff] %v3030
        %3047 = vst [vmem:[#allocation3 + $0x220] sm:$0xff] %v3031
        %3048 = vst [vmem:[#allocation3 + $0x268] sm:$0xff] %v3032
        %3049 = vst [vmem:[#allocation3 + $0x2b0] sm:$0xff] %v3033
        %3050 = vst [vmem:[#allocation3 + $0x2f8] sm:$0xff] %v3034
        %3051 = vst [vmem:[#allocation3 + $0x340] sm:$0xff] %v3035
        %3052 = vst [vmem:[#allocation3 + $0x388] sm:$0xff] %v3036
        %3053 = vst [vmem:[#allocation3 + $0x3d0] sm:$0xff] %v3037
        %3054 = vst [vmem:[#allocation3 + $0x418] sm:$0xff] %v3038
        %3055 = vst [vmem:[#allocation3 + $0x460] sm:$0xff] %v3039
        %v3056 = vld [vmem:[%s883] sm:$0xff]
        %v3057 = vld [vmem:[%s883 + $0x8] sm:$0xff]
        %v3058 = vld [vmem:[%s883 + $0x18] sm:$0xff]
        %v3059 = vld [vmem:[%s883 + $0x20] sm:$0xff]
        %v3060 = vld [vmem:[%s883 + $0x30] sm:$0xff]
        %v3061 = vld [vmem:[%s883 + $0x38] sm:$0xff]
        %v3062 = vld [vmem:[%s883 + $0x48] sm:$0xff]
        %v3063 = vld [vmem:[%s883 + $0x50] sm:$0xff]
        %v3064 = vld [vmem:[%s883 + $0x60] sm:$0xff]
        %v3065 = vld [vmem:[%s883 + $0x68] sm:$0xff]
        %v3066 = vld [vmem:[%s883 + $0x78] sm:$0xff]
        %v3067 = vld [vmem:[%s883 + $0x80] sm:$0xff]
        %v3068 = vld [vmem:[%s883 + $0x90] sm:$0xff]
        %v3069 = vld [vmem:[%s883 + $0x98] sm:$0xff]
        %v3070 = vld [vmem:[%s883 + $0xa8] sm:$0xff]
        %v3071 = vld [vmem:[%s883 + $0xb0] sm:$0xff]
        %v3072 = vld [vmem:[%s883 + $0xc0] sm:$0xff]
        %v3073 = vld [vmem:[%s883 + $0xc8] sm:$0xff]
        %v3074 = vld [vmem:[%s883 + $0xd8] sm:$0xff]
        %v3075 = vld [vmem:[%s883 + $0xe0] sm:$0xff]
        %v3076 = vld [vmem:[%s883 + $0xf0] sm:$0xff]
        %v3077 = vld [vmem:[%s883 + $0xf8] sm:$0xff]
        %v3078 = vld [vmem:[%s883 + $0x108] sm:$0xff]
        %v3079 = vld [vmem:[%s883 + $0x110] sm:$0xff]
        %v3080 = vld [vmem:[%s883 + $0x120] sm:$0xff]
        %v3081 = vld [vmem:[%s883 + $0x128] sm:$0xff]
        %v3082 = vld [vmem:[%s883 + $0x138] sm:$0xff]
        %v3083 = vld [vmem:[%s883 + $0x140] sm:$0xff]
        %v3084 = vld [vmem:[%s883 + $0x150] sm:$0xff]
        %v3085 = vld [vmem:[%s883 + $0x158] sm:$0xff]
        %v3086 = vld [vmem:[%s883 + $0x168] sm:$0xff]
        %v3087 = vld [vmem:[%s883 + $0x170] sm:$0xff]
        %v3088 = vpack.c.bf16 %v3057, %v3056
        %v3089 = vpack.c.bf16 %v3059, %v3058
        %v3090 = vpack.c.bf16 %v3061, %v3060
        %v3091 = vpack.c.bf16 %v3063, %v3062
        %v3092 = vpack.c.bf16 %v3065, %v3064
        %v3093 = vpack.c.bf16 %v3067, %v3066
        %v3094 = vpack.c.bf16 %v3069, %v3068
        %v3095 = vpack.c.bf16 %v3071, %v3070
        %v3096 = vpack.c.bf16 %v3073, %v3072
        %v3097 = vpack.c.bf16 %v3075, %v3074
        %v3098 = vpack.c.bf16 %v3077, %v3076
        %v3099 = vpack.c.bf16 %v3079, %v3078
        %v3100 = vpack.c.bf16 %v3081, %v3080
        %v3101 = vpack.c.bf16 %v3083, %v3082
        %v3102 = vpack.c.bf16 %v3085, %v3084
        %v3103 = vpack.c.bf16 %v3087, %v3086
        %3104 = vst [vmem:[#allocation3 + $0x30] sm:$0xff] %v3088
        %3105 = vst [vmem:[#allocation3 + $0x78] sm:$0xff] %v3089
        %3106 = vst [vmem:[#allocation3 + $0xc0] sm:$0xff] %v3090
        %3107 = vst [vmem:[#allocation3 + $0x108] sm:$0xff] %v3091
        %3108 = vst [vmem:[#allocation3 + $0x150] sm:$0xff] %v3092
        %3109 = vst [vmem:[#allocation3 + $0x198] sm:$0xff] %v3093
        %3110 = vst [vmem:[#allocation3 + $0x1e0] sm:$0xff] %v3094
        %3111 = vst [vmem:[#allocation3 + $0x228] sm:$0xff] %v3095
        %3112 = vst [vmem:[#allocation3 + $0x270] sm:$0xff] %v3096
        %3113 = vst [vmem:[#allocation3 + $0x2b8] sm:$0xff] %v3097
        %3114 = vst [vmem:[#allocation3 + $0x300] sm:$0xff] %v3098
        %3115 = vst [vmem:[#allocation3 + $0x348] sm:$0xff] %v3099
        %3116 = vst [vmem:[#allocation3 + $0x390] sm:$0xff] %v3100
        %3117 = vst [vmem:[#allocation3 + $0x3d8] sm:$0xff] %v3101
        %3118 = vst [vmem:[#allocation3 + $0x420] sm:$0xff] %v3102
        %3119 = vst [vmem:[#allocation3 + $0x468] sm:$0xff] %v3103
        %v3120 = vld [vmem:[%s883 + $0x1] sm:$0xff]
        %v3121 = vld [vmem:[%s883 + $0x9] sm:$0xff]
        %v3122 = vld [vmem:[%s883 + $0x19] sm:$0xff]
        %v3123 = vld [vmem:[%s883 + $0x21] sm:$0xff]
        %v3124 = vld [vmem:[%s883 + $0x31] sm:$0xff]
        %v3125 = vld [vmem:[%s883 + $0x39] sm:$0xff]
        %v3126 = vld [vmem:[%s883 + $0x49] sm:$0xff]
        %v3127 = vld [vmem:[%s883 + $0x51] sm:$0xff]
        %v3128 = vld [vmem:[%s883 + $0x61] sm:$0xff]
        %v3129 = vld [vmem:[%s883 + $0x69] sm:$0xff]
        %v3130 = vld [vmem:[%s883 + $0x79] sm:$0xff]
        %v3131 = vld [vmem:[%s883 + $0x81] sm:$0xff]
        %v3132 = vld [vmem:[%s883 + $0x91] sm:$0xff]
        %v3133 = vld [vmem:[%s883 + $0x99] sm:$0xff]
        %v3134 = vld [vmem:[%s883 + $0xa9] sm:$0xff]
        %v3135 = vld [vmem:[%s883 + $0xb1] sm:$0xff]
        %v3136 = vld [vmem:[%s883 + $0xc1] sm:$0xff]
        %v3137 = vld [vmem:[%s883 + $0xc9] sm:$0xff]
        %v3138 = vld [vmem:[%s883 + $0xd9] sm:$0xff]
        %v3139 = vld [vmem:[%s883 + $0xe1] sm:$0xff]
        %v3140 = vld [vmem:[%s883 + $0xf1] sm:$0xff]
        %v3141 = vld [vmem:[%s883 + $0xf9] sm:$0xff]
        %v3142 = vld [vmem:[%s883 + $0x109] sm:$0xff]
        %v3143 = vld [vmem:[%s883 + $0x111] sm:$0xff]
        %v3144 = vld [vmem:[%s883 + $0x121] sm:$0xff]
        %v3145 = vld [vmem:[%s883 + $0x129] sm:$0xff]
        %v3146 = vld [vmem:[%s883 + $0x139] sm:$0xff]
        %v3147 = vld [vmem:[%s883 + $0x141] sm:$0xff]
        %v3148 = vld [vmem:[%s883 + $0x151] sm:$0xff]
        %v3149 = vld [vmem:[%s883 + $0x159] sm:$0xff]
        %v3150 = vld [vmem:[%s883 + $0x169] sm:$0xff]
        %v3151 = vld [vmem:[%s883 + $0x171] sm:$0xff]
        %v3152 = vpack.c.bf16 %v3121, %v3120
        %v3153 = vpack.c.bf16 %v3123, %v3122
        %v3154 = vpack.c.bf16 %v3125, %v3124
        %v3155 = vpack.c.bf16 %v3127, %v3126
        %v3156 = vpack.c.bf16 %v3129, %v3128
        %v3157 = vpack.c.bf16 %v3131, %v3130
        %v3158 = vpack.c.bf16 %v3133, %v3132
        %v3159 = vpack.c.bf16 %v3135, %v3134
        %v3160 = vpack.c.bf16 %v3137, %v3136
        %v3161 = vpack.c.bf16 %v3139, %v3138
        %v3162 = vpack.c.bf16 %v3141, %v3140
        %v3163 = vpack.c.bf16 %v3143, %v3142
        %v3164 = vpack.c.bf16 %v3145, %v3144
        %v3165 = vpack.c.bf16 %v3147, %v3146
        %v3166 = vpack.c.bf16 %v3149, %v3148
        %v3167 = vpack.c.bf16 %v3151, %v3150
        %3168 = vst [vmem:[#allocation3 + $0x38] sm:$0xff] %v3152
        %3169 = vst [vmem:[#allocation3 + $0x80] sm:$0xff] %v3153
        %3170 = vst [vmem:[#allocation3 + $0xc8] sm:$0xff] %v3154
        %3171 = vst [vmem:[#allocation3 + $0x110] sm:$0xff] %v3155
        %3172 = vst [vmem:[#allocation3 + $0x158] sm:$0xff] %v3156
        %3173 = vst [vmem:[#allocation3 + $0x1a0] sm:$0xff] %v3157
        %3174 = vst [vmem:[#allocation3 + $0x1e8] sm:$0xff] %v3158
        %3175 = vst [vmem:[#allocation3 + $0x230] sm:$0xff] %v3159
        %3176 = vst [vmem:[#allocation3 + $0x278] sm:$0xff] %v3160
        %3177 = vst [vmem:[#allocation3 + $0x2c0] sm:$0xff] %v3161
        %3178 = vst [vmem:[#allocation3 + $0x308] sm:$0xff] %v3162
        %3179 = vst [vmem:[#allocation3 + $0x350] sm:$0xff] %v3163
        %3180 = vst [vmem:[#allocation3 + $0x398] sm:$0xff] %v3164
        %3181 = vst [vmem:[#allocation3 + $0x3e0] sm:$0xff] %v3165
        %3182 = vst [vmem:[#allocation3 + $0x428] sm:$0xff] %v3166
        %3183 = vst [vmem:[#allocation3 + $0x470] sm:$0xff] %v3167
        %v3184 = vld [vmem:[%s883 + $0x2] sm:$0xff]
        %v3185 = vld [vmem:[%s883 + $0xa] sm:$0xff]
        %v3186 = vld [vmem:[%s883 + $0x1a] sm:$0xff]
        %v3187 = vld [vmem:[%s883 + $0x22] sm:$0xff]
        %v3188 = vld [vmem:[%s883 + $0x32] sm:$0xff]
        %v3189 = vld [vmem:[%s883 + $0x3a] sm:$0xff]
        %v3190 = vld [vmem:[%s883 + $0x4a] sm:$0xff]
        %v3191 = vld [vmem:[%s883 + $0x52] sm:$0xff]
        %v3192 = vld [vmem:[%s883 + $0x62] sm:$0xff]
        %v3193 = vld [vmem:[%s883 + $0x6a] sm:$0xff]
        %v3194 = vld [vmem:[%s883 + $0x7a] sm:$0xff]
        %v3195 = vld [vmem:[%s883 + $0x82] sm:$0xff]
        %v3196 = vld [vmem:[%s883 + $0x92] sm:$0xff]
        %v3197 = vld [vmem:[%s883 + $0x9a] sm:$0xff]
        %v3198 = vld [vmem:[%s883 + $0xaa] sm:$0xff]
        %v3199 = vld [vmem:[%s883 + $0xb2] sm:$0xff]
        %v3200 = vld [vmem:[%s883 + $0xc2] sm:$0xff]
        %v3201 = vld [vmem:[%s883 + $0xca] sm:$0xff]
        %v3202 = vld [vmem:[%s883 + $0xda] sm:$0xff]
        %v3203 = vld [vmem:[%s883 + $0xe2] sm:$0xff]
        %v3204 = vld [vmem:[%s883 + $0xf2] sm:$0xff]
        %v3205 = vld [vmem:[%s883 + $0xfa] sm:$0xff]
        %v3206 = vld [vmem:[%s883 + $0x10a] sm:$0xff]
        %v3207 = vld [vmem:[%s883 + $0x112] sm:$0xff]
        %v3208 = vld [vmem:[%s883 + $0x122] sm:$0xff]
        %v3209 = vld [vmem:[%s883 + $0x12a] sm:$0xff]
        %v3210 = vld [vmem:[%s883 + $0x13a] sm:$0xff]
        %v3211 = vld [vmem:[%s883 + $0x142] sm:$0xff]
        %v3212 = vld [vmem:[%s883 + $0x152] sm:$0xff]
        %v3213 = vld [vmem:[%s883 + $0x15a] sm:$0xff]
        %v3214 = vld [vmem:[%s883 + $0x16a] sm:$0xff]
        %v3215 = vld [vmem:[%s883 + $0x172] sm:$0xff]
        %v3216 = vpack.c.bf16 %v3185, %v3184
        %v3217 = vpack.c.bf16 %v3187, %v3186
        %v3218 = vpack.c.bf16 %v3189, %v3188
        %v3219 = vpack.c.bf16 %v3191, %v3190
        %v3220 = vpack.c.bf16 %v3193, %v3192
        %v3221 = vpack.c.bf16 %v3195, %v3194
        %v3222 = vpack.c.bf16 %v3197, %v3196
        %v3223 = vpack.c.bf16 %v3199, %v3198
        %v3224 = vpack.c.bf16 %v3201, %v3200
        %v3225 = vpack.c.bf16 %v3203, %v3202
        %v3226 = vpack.c.bf16 %v3205, %v3204
        %v3227 = vpack.c.bf16 %v3207, %v3206
        %v3228 = vpack.c.bf16 %v3209, %v3208
        %v3229 = vpack.c.bf16 %v3211, %v3210
        %v3230 = vpack.c.bf16 %v3213, %v3212
        %v3231 = vpack.c.bf16 %v3215, %v3214
        %3232 = vst [vmem:[#allocation3 + $0x40] sm:$0xff] %v3216
        %3233 = vst [vmem:[#allocation3 + $0x88] sm:$0xff] %v3217
        %3234 = vst [vmem:[#allocation3 + $0xd0] sm:$0xff] %v3218
        %3235 = vst [vmem:[#allocation3 + $0x118] sm:$0xff] %v3219
        %3236 = vst [vmem:[#allocation3 + $0x160] sm:$0xff] %v3220
        %3237 = vst [vmem:[#allocation3 + $0x1a8] sm:$0xff] %v3221
        %3238 = vst [vmem:[#allocation3 + $0x1f0] sm:$0xff] %v3222
        %3239 = vst [vmem:[#allocation3 + $0x238] sm:$0xff] %v3223
        %3240 = vst [vmem:[#allocation3 + $0x280] sm:$0xff] %v3224
        %3241 = vst [vmem:[#allocation3 + $0x2c8] sm:$0xff] %v3225
        %3242 = vst [vmem:[#allocation3 + $0x310] sm:$0xff] %v3226
        %3243 = vst [vmem:[#allocation3 + $0x358] sm:$0xff] %v3227
        %3244 = vst [vmem:[#allocation3 + $0x3a0] sm:$0xff] %v3228
        %3245 = vst [vmem:[#allocation3 + $0x3e8] sm:$0xff] %v3229
        %3246 = vst [vmem:[#allocation3 + $0x430] sm:$0xff] %v3230
        %3247 = vst [vmem:[#allocation3 + $0x478] sm:$0xff] %v3231
        %v3248 = vld [vmem:[#allocation3] sm:$0xff]
        %v3249 = vld [vmem:[#allocation3 + $0x8] sm:$0xff]
        %v3250 = vld [vmem:[#allocation3 + $0x10] sm:$0xff]
        %v3251 = vld [vmem:[#allocation3 + $0x18] sm:$0xff]
        %v3252 = vld [vmem:[#allocation3 + $0x20] sm:$0xff]
        %v3253 = vld [vmem:[#allocation3 + $0x28] sm:$0xff]
        %v3254 = vld [vmem:[#allocation3 + $0x30] sm:$0xff]
        %v3255 = vld [vmem:[#allocation3 + $0x38] sm:$0xff]
        %v3256 = vld [vmem:[#allocation3 + $0x40] sm:$0xff]
        %v3257 = vld [vmem:[#allocation3 + $0x48] sm:$0xff]
        %v3258 = vld [vmem:[#allocation3 + $0x50] sm:$0xff]
        %v3259 = vld [vmem:[#allocation3 + $0x58] sm:$0xff]
        %v3260 = vld [vmem:[#allocation3 + $0x60] sm:$0xff]
        %v3261 = vld [vmem:[#allocation3 + $0x68] sm:$0xff]
        %v3262 = vld [vmem:[#allocation3 + $0x70] sm:$0xff]
        %v3263 = vld [vmem:[#allocation3 + $0x78] sm:$0xff]
        %v3264 = vld [vmem:[#allocation3 + $0x80] sm:$0xff]
        %v3265 = vld [vmem:[#allocation3 + $0x88] sm:$0xff]
        %v3266 = vld [vmem:[#allocation3 + $0x90] sm:$0xff]
        %v3267 = vld [vmem:[#allocation3 + $0x98] sm:$0xff]
        %v3268 = vld [vmem:[#allocation3 + $0xa0] sm:$0xff]
        %v3269 = vld [vmem:[#allocation3 + $0xa8] sm:$0xff]
        %v3270 = vld [vmem:[#allocation3 + $0xb0] sm:$0xff]
        %v3271 = vld [vmem:[#allocation3 + $0xb8] sm:$0xff]
        %v3272 = vld [vmem:[#allocation3 + $0xc0] sm:$0xff]
        %v3273 = vld [vmem:[#allocation3 + $0xc8] sm:$0xff]
        %v3274 = vld [vmem:[#allocation3 + $0xd0] sm:$0xff]
        %v3275 = vld [vmem:[#allocation3 + $0xd8] sm:$0xff]
        %v3276 = vld [vmem:[#allocation3 + $0xe0] sm:$0xff]
        %v3277 = vld [vmem:[#allocation3 + $0xe8] sm:$0xff]
        %v3278 = vld [vmem:[#allocation3 + $0xf0] sm:$0xff]
        %v3279 = vld [vmem:[#allocation3 + $0xf8] sm:$0xff]
        %v3280 = vld [vmem:[#allocation3 + $0x100] sm:$0xff]
        %v3281 = vld [vmem:[#allocation3 + $0x108] sm:$0xff]
        %v3282 = vld [vmem:[#allocation3 + $0x110] sm:$0xff]
        %v3283 = vld [vmem:[#allocation3 + $0x118] sm:$0xff]
        %v3284 = vld [vmem:[#allocation3 + $0x120] sm:$0xff]
        %v3285 = vld [vmem:[#allocation3 + $0x128] sm:$0xff]
        %v3286 = vld [vmem:[#allocation3 + $0x130] sm:$0xff]
        %v3287 = vld [vmem:[#allocation3 + $0x138] sm:$0xff]
        %v3288 = vld [vmem:[#allocation3 + $0x140] sm:$0xff]
        %v3289 = vld [vmem:[#allocation3 + $0x148] sm:$0xff]
        %v3290 = vld [vmem:[#allocation3 + $0x150] sm:$0xff]
        %v3291 = vld [vmem:[#allocation3 + $0x158] sm:$0xff]
        %v3292 = vld [vmem:[#allocation3 + $0x160] sm:$0xff]
        %v3293 = vld [vmem:[#allocation3 + $0x168] sm:$0xff]
        %v3294 = vld [vmem:[#allocation3 + $0x170] sm:$0xff]
        %v3295 = vld [vmem:[#allocation3 + $0x178] sm:$0xff]
        %v3296 = vld [vmem:[#allocation3 + $0x180] sm:$0xff]
        %v3297 = vld [vmem:[#allocation3 + $0x188] sm:$0xff]
        %v3298 = vld [vmem:[#allocation3 + $0x190] sm:$0xff]
        %v3299 = vld [vmem:[#allocation3 + $0x198] sm:$0xff]
        %v3300 = vld [vmem:[#allocation3 + $0x1a0] sm:$0xff]
        %v3301 = vld [vmem:[#allocation3 + $0x1a8] sm:$0xff]
        %v3302 = vld [vmem:[#allocation3 + $0x1b0] sm:$0xff]
        %v3303 = vld [vmem:[#allocation3 + $0x1b8] sm:$0xff]
        %v3304 = vld [vmem:[#allocation3 + $0x1c0] sm:$0xff]
        %v3305 = vld [vmem:[#allocation3 + $0x1c8] sm:$0xff]
        %v3306 = vld [vmem:[#allocation3 + $0x1d0] sm:$0xff]
        %v3307 = vld [vmem:[#allocation3 + $0x1d8] sm:$0xff]
        %v3308 = vld [vmem:[#allocation3 + $0x1e0] sm:$0xff]
        %v3309 = vld [vmem:[#allocation3 + $0x1e8] sm:$0xff]
        %v3310 = vld [vmem:[#allocation3 + $0x1f0] sm:$0xff]
        %v3311 = vld [vmem:[#allocation3 + $0x1f8] sm:$0xff]
        %v3312 = vld [vmem:[#allocation3 + $0x200] sm:$0xff]
        %v3313 = vld [vmem:[#allocation3 + $0x208] sm:$0xff]
        %v3314 = vld [vmem:[#allocation3 + $0x210] sm:$0xff]
        %v3315 = vld [vmem:[#allocation3 + $0x218] sm:$0xff]
        %v3316 = vld [vmem:[#allocation3 + $0x220] sm:$0xff]
        %v3317 = vld [vmem:[#allocation3 + $0x228] sm:$0xff]
        %v3318 = vld [vmem:[#allocation3 + $0x230] sm:$0xff]
        %v3319 = vld [vmem:[#allocation3 + $0x238] sm:$0xff]
        %v3320 = vld [vmem:[#allocation3 + $0x240] sm:$0xff]
        %v3321 = vld [vmem:[#allocation3 + $0x248] sm:$0xff]
        %v3322 = vld [vmem:[#allocation3 + $0x250] sm:$0xff]
        %v3323 = vld [vmem:[#allocation3 + $0x258] sm:$0xff]
        %v3324 = vld [vmem:[#allocation3 + $0x260] sm:$0xff]
        %v3325 = vld [vmem:[#allocation3 + $0x268] sm:$0xff]
        %v3326 = vld [vmem:[#allocation3 + $0x270] sm:$0xff]
        %v3327 = vld [vmem:[#allocation3 + $0x278] sm:$0xff]
        %v3328 = vld [vmem:[#allocation3 + $0x280] sm:$0xff]
        %v3329 = vld [vmem:[#allocation3 + $0x288] sm:$0xff]
        %v3330 = vld [vmem:[#allocation3 + $0x290] sm:$0xff]
        %v3331 = vld [vmem:[#allocation3 + $0x298] sm:$0xff]
        %v3332 = vld [vmem:[#allocation3 + $0x2a0] sm:$0xff]
        %v3333 = vld [vmem:[#allocation3 + $0x2a8] sm:$0xff]
        %v3334 = vld [vmem:[#allocation3 + $0x2b0] sm:$0xff]
        %v3335 = vld [vmem:[#allocation3 + $0x2b8] sm:$0xff]
        %v3336 = vld [vmem:[#allocation3 + $0x2c0] sm:$0xff]
        %v3337 = vld [vmem:[#allocation3 + $0x2c8] sm:$0xff]
        %v3338 = vld [vmem:[#allocation3 + $0x2d0] sm:$0xff]
        %v3339 = vld [vmem:[#allocation3 + $0x2d8] sm:$0xff]
        %v3340 = vld [vmem:[#allocation3 + $0x2e0] sm:$0xff]
        %v3341 = vld [vmem:[#allocation3 + $0x2e8] sm:$0xff]
        %v3342 = vld [vmem:[#allocation3 + $0x2f0] sm:$0xff]
        %v3343 = vld [vmem:[#allocation3 + $0x2f8] sm:$0xff]
        %v3344 = vld [vmem:[#allocation3 + $0x300] sm:$0xff]
        %v3345 = vld [vmem:[#allocation3 + $0x308] sm:$0xff]
        %v3346 = vld [vmem:[#allocation3 + $0x310] sm:$0xff]
        %v3347 = vld [vmem:[#allocation3 + $0x318] sm:$0xff]
        %v3348 = vld [vmem:[#allocation3 + $0x320] sm:$0xff]
        %v3349 = vld [vmem:[#allocation3 + $0x328] sm:$0xff]
        %v3350 = vld [vmem:[#allocation3 + $0x330] sm:$0xff]
        %v3351 = vld [vmem:[#allocation3 + $0x338] sm:$0xff]
        %v3352 = vld [vmem:[#allocation3 + $0x340] sm:$0xff]
        %v3353 = vld [vmem:[#allocation3 + $0x348] sm:$0xff]
        %v3354 = vld [vmem:[#allocation3 + $0x350] sm:$0xff]
        %v3355 = vld [vmem:[#allocation3 + $0x358] sm:$0xff]
        %v3356 = vld [vmem:[#allocation3 + $0x360] sm:$0xff]
        %v3357 = vld [vmem:[#allocation3 + $0x368] sm:$0xff]
        %v3358 = vld [vmem:[#allocation3 + $0x370] sm:$0xff]
        %v3359 = vld [vmem:[#allocation3 + $0x378] sm:$0xff]
        %v3360 = vld [vmem:[#allocation3 + $0x380] sm:$0xff]
        %v3361 = vld [vmem:[#allocation3 + $0x388] sm:$0xff]
        %v3362 = vld [vmem:[#allocation3 + $0x390] sm:$0xff]
        %v3363 = vld [vmem:[#allocation3 + $0x398] sm:$0xff]
        %v3364 = vld [vmem:[#allocation3 + $0x3a0] sm:$0xff]
        %v3365 = vld [vmem:[#allocation3 + $0x3a8] sm:$0xff]
        %v3366 = vld [vmem:[#allocation3 + $0x3b0] sm:$0xff]
        %v3367 = vld [vmem:[#allocation3 + $0x3b8] sm:$0xff]
        %v3368 = vld [vmem:[#allocation3 + $0x3c0] sm:$0xff]
        %v3369 = vld [vmem:[#allocation3 + $0x3c8] sm:$0xff]
        %v3370 = vld [vmem:[#allocation3 + $0x3d0] sm:$0xff]
        %v3371 = vld [vmem:[#allocation3 + $0x3d8] sm:$0xff]
        %v3372 = vld [vmem:[#allocation3 + $0x3e0] sm:$0xff]
        %v3373 = vld [vmem:[#allocation3 + $0x3e8] sm:$0xff]
        %v3374 = vld [vmem:[#allocation3 + $0x3f0] sm:$0xff]
        %v3375 = vld [vmem:[#allocation3 + $0x3f8] sm:$0xff]
        %v3376 = vld [vmem:[#allocation3 + $0x400] sm:$0xff]
        %v3377 = vld [vmem:[#allocation3 + $0x408] sm:$0xff]
        %v3378 = vld [vmem:[#allocation3 + $0x410] sm:$0xff]
        %v3379 = vld [vmem:[#allocation3 + $0x418] sm:$0xff]
        %v3380 = vld [vmem:[#allocation3 + $0x420] sm:$0xff]
        %v3381 = vld [vmem:[#allocation3 + $0x428] sm:$0xff]
        %v3382 = vld [vmem:[#allocation3 + $0x430] sm:$0xff]
        %v3383 = vld [vmem:[#allocation3 + $0x438] sm:$0xff]
        %v3384 = vld [vmem:[#allocation3 + $0x440] sm:$0xff]
        %v3385 = vld [vmem:[#allocation3 + $0x448] sm:$0xff]
        %v3386 = vld [vmem:[#allocation3 + $0x450] sm:$0xff]
        %v3387 = vld [vmem:[#allocation3 + $0x458] sm:$0xff]
        %v3388 = vld [vmem:[#allocation3 + $0x460] sm:$0xff]
        %v3389 = vld [vmem:[#allocation3 + $0x468] sm:$0xff]
        %v3390 = vld [vmem:[#allocation3 + $0x470] sm:$0xff]
        %v3391 = vld [vmem:[#allocation3 + $0x478] sm:$0xff]
        %v3392 = vld [vmem:[#allocation7] sm:$0xf]
        %v3393 = vld [vmem:[#allocation7 + $0x4] sm:$0xf]
        %v3394 = vld [vmem:[#allocation7 + $0x8] sm:$0xf]
        %v3395 = vld [vmem:[#allocation7 + $0xc] sm:$0xf]
        %v3396 = vld [vmem:[#allocation7 + $0x10] sm:$0xf]
        %v3397 = vld [vmem:[#allocation7 + $0x14] sm:$0xf]
        %v3398 = vld [vmem:[#allocation7 + $0x18] sm:$0xf]
        %v3399 = vld [vmem:[#allocation7 + $0x1c] sm:$0xf]
        %v3400 = vld [vmem:[#allocation7 + $0x20] sm:$0xf]
        %v3401 = vld [vmem:[#allocation7 + $0x24] sm:$0xf]
        %v3402 = vld [vmem:[#allocation7 + $0x28] sm:$0xf]
        %v3403 = vld [vmem:[#allocation7 + $0x2c] sm:$0xf]
        %v3404 = vld [vmem:[#allocation7 + $0x30] sm:$0xf]
        %v3405 = vld [vmem:[#allocation7 + $0x34] sm:$0xf]
        %v3406 = vld [vmem:[#allocation7 + $0x38] sm:$0xf]
        %v3407 = vld [vmem:[#allocation7 + $0x3c] sm:$0xf]
        %v3408 = vld [vmem:[#allocation7 + $0x40] sm:$0xf]
        %v3409 = vld [vmem:[#allocation7 + $0x44] sm:$0xf]
        %v3410 = vld [vmem:[#allocation7 + $0x48] sm:$0xf]
        %v3411 = vld [vmem:[#allocation7 + $0x4c] sm:$0xf]
        %v3412 = vld [vmem:[#allocation7 + $0x50] sm:$0xf]
        %v3413 = vld [vmem:[#allocation7 + $0x54] sm:$0xf]
        %v3414 = vld [vmem:[#allocation7 + $0x58] sm:$0xf]
        %v3415 = vld [vmem:[#allocation7 + $0x5c] sm:$0xf]
        %v3416 = vld [vmem:[#allocation7 + $0x60] sm:$0xf]
        %v3417 = vld [vmem:[#allocation7 + $0x64] sm:$0xf]
        %v3418 = vld [vmem:[#allocation7 + $0x68] sm:$0xf]
        %v3419 = vld [vmem:[#allocation7 + $0x6c] sm:$0xf]
        %v3420 = vld [vmem:[#allocation7 + $0x70] sm:$0xf]
        %v3421 = vld [vmem:[#allocation7 + $0x74] sm:$0xf]
        %v3422 = vld [vmem:[#allocation7 + $0x78] sm:$0xf]
        %v3423 = vld [vmem:[#allocation7 + $0x7c] sm:$0xf]
        %v3424 = vld [vmem:[#allocation7 + $0x80] sm:$0xf]
        %v3425 = vld [vmem:[#allocation7 + $0x84] sm:$0xf]
        %v3426 = vld [vmem:[#allocation7 + $0x88] sm:$0xf]
        %v3427 = vld [vmem:[#allocation7 + $0x8c] sm:$0xf]
        %v3428 = vld [vmem:[#allocation7 + $0x90] sm:$0xf]
        %v3429 = vld [vmem:[#allocation7 + $0x94] sm:$0xf]
        %v3430 = vld [vmem:[#allocation7 + $0x98] sm:$0xf]
        %v3431 = vld [vmem:[#allocation7 + $0x9c] sm:$0xf]
        %v3432 = vld [vmem:[#allocation7 + $0xa0] sm:$0xf]
        %v3433 = vld [vmem:[#allocation7 + $0xa4] sm:$0xf]
        %v3434 = vld [vmem:[#allocation7 + $0xa8] sm:$0xf]
        %v3435 = vld [vmem:[#allocation7 + $0xac] sm:$0xf]
        %v3436 = vld [vmem:[#allocation7 + $0xb0] sm:$0xf]
        %v3437 = vld [vmem:[#allocation7 + $0xb4] sm:$0xf]
        %v3438 = vld [vmem:[#allocation7 + $0xb8] sm:$0xf]
        %v3439 = vld [vmem:[#allocation7 + $0xbc] sm:$0xf]
        %v3440 = vld [vmem:[#allocation7 + $0xc0] sm:$0xf]
        %v3441 = vld [vmem:[#allocation7 + $0xc4] sm:$0xf]
        %v3442 = vld [vmem:[#allocation7 + $0xc8] sm:$0xf]
        %v3443 = vld [vmem:[#allocation7 + $0xcc] sm:$0xf]
        %v3444 = vld [vmem:[#allocation7 + $0xd0] sm:$0xf]
        %v3445 = vld [vmem:[#allocation7 + $0xd4] sm:$0xf]
        %v3446 = vld [vmem:[#allocation7 + $0xd8] sm:$0xf]
        %v3447 = vld [vmem:[#allocation7 + $0xdc] sm:$0xf]
        %v3448 = vld [vmem:[#allocation7 + $0xe0] sm:$0xf]
        %v3449 = vld [vmem:[#allocation7 + $0xe4] sm:$0xf]
        %v3450 = vld [vmem:[#allocation7 + $0xe8] sm:$0xf]
        %v3451 = vld [vmem:[#allocation7 + $0xec] sm:$0xf]
        %v3452 = vld [vmem:[#allocation7 + $0xf0] sm:$0xf]
        %v3453 = vld [vmem:[#allocation7 + $0xf4] sm:$0xf]
        %v3454 = vld [vmem:[#allocation7 + $0xf8] sm:$0xf]
        %v3455 = vld [vmem:[#allocation7 + $0xfc] sm:$0xf]
        %v3456 = vld [vmem:[#allocation7 + $0x100] sm:$0xf]
        %v3457 = vld [vmem:[#allocation7 + $0x104] sm:$0xf]
        %v3458 = vld [vmem:[#allocation7 + $0x108] sm:$0xf]
        %v3459 = vld [vmem:[#allocation7 + $0x10c] sm:$0xf]
        %v3460 = vld [vmem:[#allocation7 + $0x110] sm:$0xf]
        %v3461 = vld [vmem:[#allocation7 + $0x114] sm:$0xf]
        %v3462 = vld [vmem:[#allocation7 + $0x118] sm:$0xf]
        %v3463 = vld [vmem:[#allocation7 + $0x11c] sm:$0xf]
        %v3464 = vld [vmem:[#allocation7 + $0x120] sm:$0xf]
        %v3465 = vld [vmem:[#allocation7 + $0x124] sm:$0xf]
        %v3466 = vld [vmem:[#allocation7 + $0x128] sm:$0xf]
        %v3467 = vld [vmem:[#allocation7 + $0x12c] sm:$0xf]
        %v3468 = vld [vmem:[#allocation7 + $0x130] sm:$0xf]
        %v3469 = vld [vmem:[#allocation7 + $0x134] sm:$0xf]
        %v3470 = vld [vmem:[#allocation7 + $0x138] sm:$0xf]
        %v3471 = vld [vmem:[#allocation7 + $0x13c] sm:$0xf]
        %v3472 = vld [vmem:[#allocation7 + $0x140] sm:$0xf]
        %v3473 = vld [vmem:[#allocation7 + $0x144] sm:$0xf]
        %v3474 = vld [vmem:[#allocation7 + $0x148] sm:$0xf]
        %v3475 = vld [vmem:[#allocation7 + $0x14c] sm:$0xf]
        %v3476 = vld [vmem:[#allocation7 + $0x150] sm:$0xf]
        %v3477 = vld [vmem:[#allocation7 + $0x154] sm:$0xf]
        %v3478 = vld [vmem:[#allocation7 + $0x158] sm:$0xf]
        %v3479 = vld [vmem:[#allocation7 + $0x15c] sm:$0xf]
        %v3480 = vld [vmem:[#allocation7 + $0x160] sm:$0xf]
        %v3481 = vld [vmem:[#allocation7 + $0x164] sm:$0xf]
        %v3482 = vld [vmem:[#allocation7 + $0x168] sm:$0xf]
        %v3483 = vld [vmem:[#allocation7 + $0x16c] sm:$0xf]
        %v3484 = vld [vmem:[#allocation7 + $0x170] sm:$0xf]
        %v3485 = vld [vmem:[#allocation7 + $0x174] sm:$0xf]
        %v3486 = vld [vmem:[#allocation7 + $0x178] sm:$0xf]
        %v3487 = vld [vmem:[#allocation7 + $0x17c] sm:$0xf]
        %v3488 = vld [vmem:[#allocation7 + $0x180] sm:$0xf]
        %v3489 = vld [vmem:[#allocation7 + $0x184] sm:$0xf]
        %v3490 = vld [vmem:[#allocation7 + $0x188] sm:$0xf]
        %v3491 = vld [vmem:[#allocation7 + $0x18c] sm:$0xf]
        %v3492 = vld [vmem:[#allocation7 + $0x190] sm:$0xf]
        %v3493 = vld [vmem:[#allocation7 + $0x194] sm:$0xf]
        %v3494 = vld [vmem:[#allocation7 + $0x198] sm:$0xf]
        %v3495 = vld [vmem:[#allocation7 + $0x19c] sm:$0xf]
        %v3496 = vld [vmem:[#allocation7 + $0x1a0] sm:$0xf]
        %v3497 = vld [vmem:[#allocation7 + $0x1a4] sm:$0xf]
        %v3498 = vld [vmem:[#allocation7 + $0x1a8] sm:$0xf]
        %v3499 = vld [vmem:[#allocation7 + $0x1ac] sm:$0xf]
        %v3500 = vld [vmem:[#allocation7 + $0x1b0] sm:$0xf]
        %v3501 = vld [vmem:[#allocation7 + $0x1b4] sm:$0xf]
        %v3502 = vld [vmem:[#allocation7 + $0x1b8] sm:$0xf]
        %v3503 = vld [vmem:[#allocation7 + $0x1bc] sm:$0xf]
        %v3504 = vld [vmem:[#allocation7 + $0x1c0] sm:$0xf]
        %v3505 = vld [vmem:[#allocation7 + $0x1c4] sm:$0xf]
        %v3506 = vld [vmem:[#allocation7 + $0x1c8] sm:$0xf]
        %v3507 = vld [vmem:[#allocation7 + $0x1cc] sm:$0xf]
        %v3508 = vld [vmem:[#allocation7 + $0x1d0] sm:$0xf]
        %v3509 = vld [vmem:[#allocation7 + $0x1d4] sm:$0xf]
        %v3510 = vld [vmem:[#allocation7 + $0x1d8] sm:$0xf]
        %v3511 = vld [vmem:[#allocation7 + $0x1dc] sm:$0xf]
        %v3512 = vld [vmem:[#allocation7 + $0x1e0] sm:$0xf]
        %v3513 = vld [vmem:[#allocation7 + $0x1e4] sm:$0xf]
        %v3514 = vld [vmem:[#allocation7 + $0x1e8] sm:$0xf]
        %v3515 = vld [vmem:[#allocation7 + $0x1ec] sm:$0xf]
        %v3516 = vld [vmem:[#allocation7 + $0x1f0] sm:$0xf]
        %v3517 = vld [vmem:[#allocation7 + $0x1f4] sm:$0xf]
        %v3518 = vld [vmem:[#allocation7 + $0x1f8] sm:$0xf]
        %v3519 = vld [vmem:[#allocation7 + $0x1fc] sm:$0xf]
        %v3520 = vld [vmem:[#allocation7 + $0x200] sm:$0xf]
        %v3521 = vld [vmem:[#allocation7 + $0x204] sm:$0xf]
        %v3522 = vld [vmem:[#allocation7 + $0x208] sm:$0xf]
        %v3523 = vld [vmem:[#allocation7 + $0x20c] sm:$0xf]
        %v3524 = vld [vmem:[#allocation7 + $0x210] sm:$0xf]
        %v3525 = vld [vmem:[#allocation7 + $0x214] sm:$0xf]
        %v3526 = vld [vmem:[#allocation7 + $0x218] sm:$0xf]
        %v3527 = vld [vmem:[#allocation7 + $0x21c] sm:$0xf]
        %v3528 = vld [vmem:[#allocation7 + $0x220] sm:$0xf]
        %v3529 = vld [vmem:[#allocation7 + $0x224] sm:$0xf]
        %v3530 = vld [vmem:[#allocation7 + $0x228] sm:$0xf]
        %v3531 = vld [vmem:[#allocation7 + $0x22c] sm:$0xf]
        %v3532 = vld [vmem:[#allocation7 + $0x230] sm:$0xf]
        %v3533 = vld [vmem:[#allocation7 + $0x234] sm:$0xf]
        %v3534 = vld [vmem:[#allocation7 + $0x238] sm:$0xf]
        %v3535 = vld [vmem:[#allocation7 + $0x23c] sm:$0xf]
        %v3536 = vld [vmem:[%s4] sm:$0x1]
        %v3538 = vlaneseq
        %v3539 = vshrl.u32 %v3538, 7
        %v3540 = vsub.s32 0, %v3539
        %v3541 = vrot.slane %v3536, %v3540
        %v3687 = vunpack.c.l.b16 %v3392
        %v3688 = vunpack.c.l.b16 %v3393
        %v3689 = vunpack.c.l.b16 %v3394
        %v3690 = vunpack.c.l.b16 %v3395
        %v3691 = vunpack.c.l.b16 %v3396
        %v3692 = vunpack.c.l.b16 %v3397
        %v3693 = vunpack.c.l.b16 %v3398
        %v3694 = vunpack.c.l.b16 %v3399
        %v3695 = vunpack.c.l.b16 %v3400
        %v3696 = vunpack.c.l.b16 %v3401
        %v3697 = vunpack.c.l.b16 %v3402
        %v3698 = vunpack.c.l.b16 %v3403
        %v3699 = vunpack.c.l.b16 %v3404
        %v3700 = vunpack.c.l.b16 %v3405
        %v3701 = vunpack.c.l.b16 %v3406
        %v3702 = vunpack.c.l.b16 %v3407
        %v3703 = vunpack.c.l.b16 %v3408
        %v3704 = vunpack.c.l.b16 %v3409
        %v3705 = vunpack.c.l.b16 %v3410
        %v3706 = vunpack.c.l.b16 %v3411
        %v3707 = vunpack.c.l.b16 %v3412
        %v3708 = vunpack.c.l.b16 %v3413
        %v3709 = vunpack.c.l.b16 %v3414
        %v3710 = vunpack.c.l.b16 %v3415
        %v3711 = vunpack.c.l.b16 %v3416
        %v3712 = vunpack.c.l.b16 %v3417
        %v3713 = vunpack.c.l.b16 %v3418
        %v3714 = vunpack.c.l.b16 %v3419
        %v3715 = vunpack.c.l.b16 %v3420
        %v3716 = vunpack.c.l.b16 %v3421
        %v3717 = vunpack.c.l.b16 %v3422
        %v3718 = vunpack.c.l.b16 %v3423
        %v3719 = vunpack.c.l.b16 %v3424
        %v3720 = vunpack.c.l.b16 %v3425
        %v3721 = vunpack.c.l.b16 %v3426
        %v3722 = vunpack.c.l.b16 %v3427
        %v3723 = vunpack.c.l.b16 %v3428
        %v3724 = vunpack.c.l.b16 %v3429
        %v3725 = vunpack.c.l.b16 %v3430
        %v3726 = vunpack.c.l.b16 %v3431
        %v3727 = vunpack.c.l.b16 %v3432
        %v3728 = vunpack.c.l.b16 %v3433
        %v3729 = vunpack.c.l.b16 %v3434
        %v3730 = vunpack.c.l.b16 %v3435
        %v3731 = vunpack.c.l.b16 %v3436
        %v3732 = vunpack.c.l.b16 %v3437
        %v3733 = vunpack.c.l.b16 %v3438
        %v3734 = vunpack.c.l.b16 %v3439
        %v3735 = vunpack.c.l.b16 %v3440
        %v3736 = vunpack.c.l.b16 %v3441
        %v3737 = vunpack.c.l.b16 %v3442
        %v3738 = vunpack.c.l.b16 %v3443
        %v3739 = vunpack.c.l.b16 %v3444
        %v3740 = vunpack.c.l.b16 %v3445
        %v3741 = vunpack.c.l.b16 %v3446
        %v3742 = vunpack.c.l.b16 %v3447
        %v3743 = vunpack.c.l.b16 %v3448
        %v3744 = vunpack.c.l.b16 %v3449
        %v3745 = vunpack.c.l.b16 %v3450
        %v3746 = vunpack.c.l.b16 %v3451
        %v3747 = vunpack.c.l.b16 %v3452
        %v3748 = vunpack.c.l.b16 %v3453
        %v3749 = vunpack.c.l.b16 %v3454
        %v3750 = vunpack.c.l.b16 %v3455
        %v3751 = vunpack.c.l.b16 %v3456
        %v3752 = vunpack.c.l.b16 %v3457
        %v3753 = vunpack.c.l.b16 %v3458
        %v3754 = vunpack.c.l.b16 %v3459
        %v3755 = vunpack.c.l.b16 %v3460
        %v3756 = vunpack.c.l.b16 %v3461
        %v3757 = vunpack.c.l.b16 %v3462
        %v3758 = vunpack.c.l.b16 %v3463
        %v3759 = vunpack.c.l.b16 %v3464
        %v3760 = vunpack.c.l.b16 %v3465
        %v3761 = vunpack.c.l.b16 %v3466
        %v3762 = vunpack.c.l.b16 %v3467
        %v3763 = vunpack.c.l.b16 %v3468
        %v3764 = vunpack.c.l.b16 %v3469
        %v3765 = vunpack.c.l.b16 %v3470
        %v3766 = vunpack.c.l.b16 %v3471
        %v3767 = vunpack.c.l.b16 %v3472
        %v3768 = vunpack.c.l.b16 %v3473
        %v3769 = vunpack.c.l.b16 %v3474
        %v3770 = vunpack.c.l.b16 %v3475
        %v3771 = vunpack.c.l.b16 %v3476
        %v3772 = vunpack.c.l.b16 %v3477
        %v3773 = vunpack.c.l.b16 %v3478
        %v3774 = vunpack.c.l.b16 %v3479
        %v3775 = vunpack.c.l.b16 %v3480
        %v3776 = vunpack.c.l.b16 %v3481
        %v3777 = vunpack.c.l.b16 %v3482
        %v3778 = vunpack.c.l.b16 %v3483
        %v3779 = vunpack.c.l.b16 %v3484
        %v3780 = vunpack.c.l.b16 %v3485
        %v3781 = vunpack.c.l.b16 %v3486
        %v3782 = vunpack.c.l.b16 %v3487
        %v3783 = vunpack.c.l.b16 %v3488
        %v3784 = vunpack.c.l.b16 %v3489
        %v3785 = vunpack.c.l.b16 %v3490
        %v3786 = vunpack.c.l.b16 %v3491
        %v3787 = vunpack.c.l.b16 %v3492
        %v3788 = vunpack.c.l.b16 %v3493
        %v3789 = vunpack.c.l.b16 %v3494
        %v3790 = vunpack.c.l.b16 %v3495
        %v3791 = vunpack.c.l.b16 %v3496
        %v3792 = vunpack.c.l.b16 %v3497
        %v3793 = vunpack.c.l.b16 %v3498
        %v3794 = vunpack.c.l.b16 %v3499
        %v3795 = vunpack.c.l.b16 %v3500
        %v3796 = vunpack.c.l.b16 %v3501
        %v3797 = vunpack.c.l.b16 %v3502
        %v3798 = vunpack.c.l.b16 %v3503
        %v3799 = vunpack.c.l.b16 %v3504
        %v3800 = vunpack.c.l.b16 %v3505
        %v3801 = vunpack.c.l.b16 %v3506
        %v3802 = vunpack.c.l.b16 %v3507
        %v3803 = vunpack.c.l.b16 %v3508
        %v3804 = vunpack.c.l.b16 %v3509
        %v3805 = vunpack.c.l.b16 %v3510
        %v3806 = vunpack.c.l.b16 %v3511
        %v3807 = vunpack.c.l.b16 %v3512
        %v3808 = vunpack.c.l.b16 %v3513
        %v3809 = vunpack.c.l.b16 %v3514
        %v3810 = vunpack.c.l.b16 %v3515
        %v3811 = vunpack.c.l.b16 %v3516
        %v3812 = vunpack.c.l.b16 %v3517
        %v3813 = vunpack.c.l.b16 %v3518
        %v3814 = vunpack.c.l.b16 %v3519
        %v3815 = vunpack.c.l.b16 %v3520
        %v3816 = vunpack.c.l.b16 %v3521
        %v3817 = vunpack.c.l.b16 %v3522
        %v3818 = vunpack.c.l.b16 %v3523
        %v3819 = vunpack.c.l.b16 %v3524
        %v3820 = vunpack.c.l.b16 %v3525
        %v3821 = vunpack.c.l.b16 %v3526
        %v3822 = vunpack.c.l.b16 %v3527
        %v3823 = vunpack.c.l.b16 %v3528
        %v3824 = vunpack.c.l.b16 %v3529
        %v3825 = vunpack.c.l.b16 %v3530
        %v3826 = vunpack.c.l.b16 %v3531
        %v3827 = vunpack.c.l.b16 %v3532
        %v3828 = vunpack.c.l.b16 %v3533
        %v3829 = vunpack.c.l.b16 %v3534
        %v3830 = vunpack.c.l.b16 %v3535
        %v3831 = vpack.c.b16 %v3688, %v3687
        %v3832 = vpack.c.b16 %v3690, %v3689
        %v3833 = vpack.c.b16 %v3692, %v3691
        %v3834 = vpack.c.b16 %v3694, %v3693
        %v3835 = vpack.c.b16 %v3696, %v3695
        %v3836 = vpack.c.b16 %v3698, %v3697
        %v3837 = vpack.c.b16 %v3700, %v3699
        %v3838 = vpack.c.b16 %v3702, %v3701
        %v3839 = vpack.c.b16 %v3704, %v3703
        %v3840 = vpack.c.b16 %v3706, %v3705
        %v3841 = vpack.c.b16 %v3708, %v3707
        %v3842 = vpack.c.b16 %v3710, %v3709
        %v3843 = vpack.c.b16 %v3712, %v3711
        %v3844 = vpack.c.b16 %v3714, %v3713
        %v3845 = vpack.c.b16 %v3716, %v3715
        %v3846 = vpack.c.b16 %v3718, %v3717
        %v3847 = vpack.c.b16 %v3720, %v3719
        %v3848 = vpack.c.b16 %v3722, %v3721
        %v3849 = vpack.c.b16 %v3724, %v3723
        %v3850 = vpack.c.b16 %v3726, %v3725
        %v3851 = vpack.c.b16 %v3728, %v3727
        %v3852 = vpack.c.b16 %v3730, %v3729
        %v3853 = vpack.c.b16 %v3732, %v3731
        %v3854 = vpack.c.b16 %v3734, %v3733
        %v3855 = vpack.c.b16 %v3736, %v3735
        %v3856 = vpack.c.b16 %v3738, %v3737
        %v3857 = vpack.c.b16 %v3740, %v3739
        %v3858 = vpack.c.b16 %v3742, %v3741
        %v3859 = vpack.c.b16 %v3744, %v3743
        %v3860 = vpack.c.b16 %v3746, %v3745
        %v3861 = vpack.c.b16 %v3748, %v3747
        %v3862 = vpack.c.b16 %v3750, %v3749
        %v3863 = vpack.c.b16 %v3752, %v3751
        %v3864 = vpack.c.b16 %v3754, %v3753
        %v3865 = vpack.c.b16 %v3756, %v3755
        %v3866 = vpack.c.b16 %v3758, %v3757
        %v3867 = vpack.c.b16 %v3760, %v3759
        %v3868 = vpack.c.b16 %v3762, %v3761
        %v3869 = vpack.c.b16 %v3764, %v3763
        %v3870 = vpack.c.b16 %v3766, %v3765
        %v3871 = vpack.c.b16 %v3768, %v3767
        %v3872 = vpack.c.b16 %v3770, %v3769
        %v3873 = vpack.c.b16 %v3772, %v3771
        %v3874 = vpack.c.b16 %v3774, %v3773
        %v3875 = vpack.c.b16 %v3776, %v3775
        %v3876 = vpack.c.b16 %v3778, %v3777
        %v3877 = vpack.c.b16 %v3780, %v3779
        %v3878 = vpack.c.b16 %v3782, %v3781
        %v3879 = vpack.c.b16 %v3784, %v3783
        %v3880 = vpack.c.b16 %v3786, %v3785
        %v3881 = vpack.c.b16 %v3788, %v3787
        %v3882 = vpack.c.b16 %v3790, %v3789
        %v3883 = vpack.c.b16 %v3792, %v3791
        %v3884 = vpack.c.b16 %v3794, %v3793
        %v3885 = vpack.c.b16 %v3796, %v3795
        %v3886 = vpack.c.b16 %v3798, %v3797
        %v3887 = vpack.c.b16 %v3800, %v3799
        %v3888 = vpack.c.b16 %v3802, %v3801
        %v3889 = vpack.c.b16 %v3804, %v3803
        %v3890 = vpack.c.b16 %v3806, %v3805
        %v3891 = vpack.c.b16 %v3808, %v3807
        %v3892 = vpack.c.b16 %v3810, %v3809
        %v3893 = vpack.c.b16 %v3812, %v3811
        %v3894 = vpack.c.b16 %v3814, %v3813
        %v3895 = vpack.c.b16 %v3816, %v3815
        %v3896 = vpack.c.b16 %v3818, %v3817
        %v3897 = vpack.c.b16 %v3820, %v3819
        %v3898 = vpack.c.b16 %v3822, %v3821
        %v3899 = vpack.c.b16 %v3824, %v3823
        %v3900 = vpack.c.b16 %v3826, %v3825
        %v3901 = vpack.c.b16 %v3828, %v3827
        %v3902 = vpack.c.b16 %v3830, %v3829
        %3975 = vmatprep.subr.bf16.mxu0 0
        %3976 = vmatpush1.bf16.msra.mxu0 %v3831
        %3977 = vmatprep.subr.bf16.mxu0 0
        %3978 = vmatpush1.bf16.msra.mxu0 %v3832
        %3979 = vmatprep.subr.bf16.mxu0 0
        %3980 = vmatpush1.bf16.msra.mxu0 %v3833
        %3981 = vmatprep.subr.bf16.mxu0 0
        %3982 = vmatpush1.bf16.msra.mxu0 %v3834
        %3983 = vmatprep.subr.bf16.mxu0 0
        %3984 = vmatpush1.bf16.msra.mxu0 %v3835
        %3985 = vmatprep.subr.bf16.mxu0 0
        %3986 = vmatpush1.bf16.msra.mxu0 %v3836
        %3987 = vmatprep.subr.bf16.mxu0 0
        %3988 = vmatpush1.bf16.msra.mxu0 %v3837
        %3989 = vmatprep.subr.bf16.mxu0 0
        %3990 = vmatpush1.bf16.msra.mxu0 %v3838
        %3991 = vmatprep.subr.bf16.mxu0 0
        %3992 = vmatpush1.bf16.msra.mxu0 %v3839
        %3993 = vmatprep.subr.bf16.mxu0 0
        %3994 = vmatpush1.bf16.msra.mxu0 %v3840
        %3995 = vmatprep.subr.bf16.mxu0 0
        %3996 = vmatpush1.bf16.msra.mxu0 %v3841
        %3997 = vmatprep.subr.bf16.mxu0 0
        %3998 = vmatpush1.bf16.msra.mxu0 %v3842
        %3999 = vmatprep.subr.bf16.mxu0 0
        %4000 = vmatpush1.bf16.msra.mxu0 %v3843
        %4001 = vmatprep.subr.bf16.mxu0 0
        %4002 = vmatpush1.bf16.msra.mxu0 %v3844
        %4003 = vmatprep.subr.bf16.mxu0 0
        %4004 = vmatpush1.bf16.msra.mxu0 %v3845
        %4005 = vmatprep.subr.bf16.mxu0 0
        %4006 = vmatpush1.bf16.msra.mxu0 %v3846
        %4007 = vmatprep.mubr.bf16.mxu0 %v3249
        %4008 = vmatmul.mubr.bf16.gmra.mrb[0].mxu0 %v3248
        %v4009 = vpop.f32.mrb[0].mxu0
        %v4010 = vadd.f32 %v3541, %v4009
        %v4011 = vpop.f32.mrb[0].mxu0
        %v4012 = vpop.f32.mrb[0].mxu0
        %v4013 = vadd.f32 %v3541, %v4012
        %v4014 = vpop.f32.mrb[0].mxu0
        %4015 = vmatprep.mubr.bf16.mxu0 %v3258
        %4016 = vmatmul.mubr.bf16.gmra.mrb[0].mxu0 %v3257
        %v4017 = vpop.f32.mrb[0].mxu0
        %v4018 = vadd.f32 %v3541, %v4017
        %v4019 = vpop.f32.mrb[0].mxu0
        %v4020 = vpop.f32.mrb[0].mxu0
        %v4021 = vadd.f32 %v3541, %v4020
        %v4022 = vpop.f32.mrb[0].mxu0
        %4023 = vmatprep.mubr.bf16.mxu0 %v3267
        %4024 = vmatmul.mubr.bf16.gmra.mrb[0].mxu0 %v3266
        %v4025 = vpop.f32.mrb[0].mxu0
        %v4026 = vadd.f32 %v3541, %v4025
        %v4027 = vpop.f32.mrb[0].mxu0
        %v4028 = vpop.f32.mrb[0].mxu0
        %v4029 = vadd.f32 %v3541, %v4028
        %v4030 = vpop.f32.mrb[0].mxu0
        %4031 = vmatprep.mubr.bf16.mxu0 %v3276
        %4032 = vmatmul.mubr.bf16.gmra.mrb[0].mxu0 %v3275
        %v4033 = vpop.f32.mrb[0].mxu0
        %v4034 = vadd.f32 %v3541, %v4033
        %v4035 = vpop.f32.mrb[0].mxu0
        %v4036 = vpop.f32.mrb[0].mxu0
        %v4037 = vadd.f32 %v3541, %v4036
        %v4038 = vpop.f32.mrb[0].mxu0
        %4039 = vmatprep.mubr.bf16.mxu0 %v3285
        %4040 = vmatmul.mubr.bf16.gmra.mrb[0].mxu0 %v3284
        %v4041 = vpop.f32.mrb[0].mxu0
        %v4042 = vadd.f32 %v3541, %v4041
        %v4043 = vpop.f32.mrb[0].mxu0
        %v4044 = vpop.f32.mrb[0].mxu0
        %v4045 = vadd.f32 %v3541, %v4044
        %v4046 = vpop.f32.mrb[0].mxu0
        %4047 = vmatprep.mubr.bf16.mxu0 %v3294
        %4048 = vmatmul.mubr.bf16.gmra.mrb[0].mxu0 %v3293
        %v4049 = vpop.f32.mrb[0].mxu0
        %v4050 = vadd.f32 %v3541, %v4049
        %v4051 = vpop.f32.mrb[0].mxu0
        %v4052 = vpop.f32.mrb[0].mxu0
        %v4053 = vadd.f32 %v3541, %v4052
        %v4054 = vpop.f32.mrb[0].mxu0
        %4055 = vmatprep.mubr.bf16.mxu0 %v3303
        %4056 = vmatmul.mubr.bf16.gmra.mrb[0].mxu0 %v3302
        %v4057 = vpop.f32.mrb[0].mxu0
        %v4058 = vadd.f32 %v3541, %v4057
        %v4059 = vpop.f32.mrb[0].mxu0
        %v4060 = vpop.f32.mrb[0].mxu0
        %v4061 = vadd.f32 %v3541, %v4060
        %v4062 = vpop.f32.mrb[0].mxu0
        %4063 = vmatprep.mubr.bf16.mxu0 %v3312
        %4064 = vmatmul.mubr.bf16.gmra.mrb[0].mxu0 %v3311
        %v4065 = vpop.f32.mrb[0].mxu0
        %v4066 = vadd.f32 %v3541, %v4065
        %v4067 = vpop.f32.mrb[0].mxu0
        %v4068 = vpop.f32.mrb[0].mxu0
        %v4069 = vadd.f32 %v3541, %v4068
        %v4070 = vpop.f32.mrb[0].mxu0
        %4071 = vmatprep.mubr.bf16.mxu0 %v3321
        %4072 = vmatmul.mubr.bf16.gmra.mrb[0].mxu0 %v3320
        %v4073 = vpop.f32.mrb[0].mxu0
        %v4074 = vadd.f32 %v3541, %v4073
        %v4075 = vpop.f32.mrb[0].mxu0
        %v4076 = vpop.f32.mrb[0].mxu0
        %v4077 = vadd.f32 %v3541, %v4076
        %v4078 = vpop.f32.mrb[0].mxu0
        %4079 = vmatprep.mubr.bf16.mxu0 %v3330
        %4080 = vmatmul.mubr.bf16.gmra.mrb[0].mxu0 %v3329
        %v4081 = vpop.f32.mrb[0].mxu0
        %v4082 = vadd.f32 %v3541, %v4081
        %v4083 = vpop.f32.mrb[0].mxu0
        %v4084 = vpop.f32.mrb[0].mxu0
        %v4085 = vadd.f32 %v3541, %v4084
        %v4086 = vpop.f32.mrb[0].mxu0
        %4087 = vmatprep.mubr.bf16.mxu0 %v3339
        %4088 = vmatmul.mubr.bf16.gmra.mrb[0].mxu0 %v3338
        %v4089 = vpop.f32.mrb[0].mxu0
        %v4090 = vadd.f32 %v3541, %v4089
        %v4091 = vpop.f32.mrb[0].mxu0
        %v4092 = vpop.f32.mrb[0].mxu0
        %v4093 = vadd.f32 %v3541, %v4092
        %v4094 = vpop.f32.mrb[0].mxu0
        %4095 = vmatprep.mubr.bf16.mxu0 %v3348
        %4096 = vmatmul.mubr.bf16.gmra.mrb[0].mxu0 %v3347
        %v4097 = vpop.f32.mrb[0].mxu0
        %v4098 = vadd.f32 %v3541, %v4097
        %v4099 = vpop.f32.mrb[0].mxu0
        %v4100 = vpop.f32.mrb[0].mxu0
        %v4101 = vadd.f32 %v3541, %v4100
        %v4102 = vpop.f32.mrb[0].mxu0
        %4103 = vmatprep.mubr.bf16.mxu0 %v3357
        %4104 = vmatmul.mubr.bf16.gmra.mrb[0].mxu0 %v3356
        %v4105 = vpop.f32.mrb[0].mxu0
        %v4106 = vadd.f32 %v3541, %v4105
        %v4107 = vpop.f32.mrb[0].mxu0
        %v4108 = vpop.f32.mrb[0].mxu0
        %v4109 = vadd.f32 %v3541, %v4108
        %v4110 = vpop.f32.mrb[0].mxu0
        %4111 = vmatprep.mubr.bf16.mxu0 %v3366
        %4112 = vmatmul.mubr.bf16.gmra.mrb[0].mxu0 %v3365
        %v4113 = vpop.f32.mrb[0].mxu0
        %v4114 = vadd.f32 %v3541, %v4113
        %v4115 = vpop.f32.mrb[0].mxu0
        %v4116 = vpop.f32.mrb[0].mxu0
        %v4117 = vadd.f32 %v3541, %v4116
        %v4118 = vpop.f32.mrb[0].mxu0
        %4119 = vmatprep.mubr.bf16.mxu0 %v3375
        %4120 = vmatmul.mubr.bf16.gmra.mrb[0].mxu0 %v3374
        %v4121 = vpop.f32.mrb[0].mxu0
        %v4122 = vadd.f32 %v3541, %v4121
        %v4123 = vpop.f32.mrb[0].mxu0
        %v4124 = vpop.f32.mrb[0].mxu0
        %v4125 = vadd.f32 %v3541, %v4124
        %v4126 = vpop.f32.mrb[0].mxu0
        %4127 = vmatprep.mubr.bf16.mxu0 %v3384
        %4128 = vmatmul.mubr.bf16.gmra.mrb[0].mxu0 %v3383
        %v4129 = vpop.f32.mrb[0].mxu0
        %v4130 = vadd.f32 %v3541, %v4129
        %v4131 = vpop.f32.mrb[0].mxu0
        %v4132 = vpop.f32.mrb[0].mxu0
        %v4133 = vadd.f32 %v3541, %v4132
        %v4134 = vpop.f32.mrb[0].mxu0
        %4135 = vdwg.mxu0
        %4136 = vmatprep.subr.bf16.mxu0 0
        %4137 = vmatpush1.bf16.msra.mxu0 %v3847
        %4138 = vmatprep.subr.bf16.mxu0 0
        %4139 = vmatpush1.bf16.msra.mxu0 %v3848
        %4140 = vmatprep.subr.bf16.mxu0 0
        %4141 = vmatpush1.bf16.msra.mxu0 %v3849
        %4142 = vmatprep.subr.bf16.mxu0 0
        %4143 = vmatpush1.bf16.msra.mxu0 %v3850
        %4144 = vmatprep.subr.bf16.mxu0 0
        %4145 = vmatpush1.bf16.msra.mxu0 %v3851
        %4146 = vmatprep.subr.bf16.mxu0 0
        %4147 = vmatpush1.bf16.msra.mxu0 %v3852
        %4148 = vmatprep.subr.bf16.mxu0 0
        %4149 = vmatpush1.bf16.msra.mxu0 %v3853
        %4150 = vmatprep.subr.bf16.mxu0 0
        %4151 = vmatpush1.bf16.msra.mxu0 %v3854
        %4152 = vmatprep.subr.bf16.mxu0 0
        %4153 = vmatpush1.bf16.msra.mxu0 %v3855
        %4154 = vmatprep.subr.bf16.mxu0 0
        %4155 = vmatpush1.bf16.msra.mxu0 %v3856
        %4156 = vmatprep.subr.bf16.mxu0 0
        %4157 = vmatpush1.bf16.msra.mxu0 %v3857
        %4158 = vmatprep.subr.bf16.mxu0 0
        %4159 = vmatpush1.bf16.msra.mxu0 %v3858
        %4160 = vmatprep.subr.bf16.mxu0 0
        %4161 = vmatpush1.bf16.msra.mxu0 %v3859
        %4162 = vmatprep.subr.bf16.mxu0 0
        %4163 = vmatpush1.bf16.msra.mxu0 %v3860
        %4164 = vmatprep.subr.bf16.mxu0 0
        %4165 = vmatpush1.bf16.msra.mxu0 %v3861
        %4166 = vmatprep.subr.bf16.mxu0 0
        %4167 = vmatpush1.bf16.msra.mxu0 %v3862
        %4168 = vmatprep.mubr.bf16.mxu0 %v3251
        %4169 = vmatmul.mubr.bf16.gmra.mrb[0].mxu0 %v3250
        %v4170 = vpop.f32.mrb[0].mxu0
        %v4171 = vadd.f32 %v4010, %v4170
        %v4172 = vpop.f32.mrb[0].mxu0
        %v4173 = vpop.f32.mrb[0].mxu0
        %v4174 = vadd.f32 %v4013, %v4173
        %v4175 = vpop.f32.mrb[0].mxu0
        %4176 = vmatprep.mubr.bf16.mxu0 %v3260
        %4177 = vmatmul.mubr.bf16.gmra.mrb[0].mxu0 %v3259
        %v4178 = vpop.f32.mrb[0].mxu0
        %v4179 = vadd.f32 %v4018, %v4178
        %v4180 = vpop.f32.mrb[0].mxu0
        %v4181 = vpop.f32.mrb[0].mxu0
        %v4182 = vadd.f32 %v4021, %v4181
        %v4183 = vpop.f32.mrb[0].mxu0
        %4184 = vmatprep.mubr.bf16.mxu0 %v3269
        %4185 = vmatmul.mubr.bf16.gmra.mrb[0].mxu0 %v3268
        %v4186 = vpop.f32.mrb[0].mxu0
        %v4187 = vadd.f32 %v4026, %v4186
        %v4188 = vpop.f32.mrb[0].mxu0
        %v4189 = vpop.f32.mrb[0].mxu0
        %v4190 = vadd.f32 %v4029, %v4189
        %v4191 = vpop.f32.mrb[0].mxu0
        %4192 = vmatprep.mubr.bf16.mxu0 %v3278
        %4193 = vmatmul.mubr.bf16.gmra.mrb[0].mxu0 %v3277
        %v4194 = vpop.f32.mrb[0].mxu0
        %v4195 = vadd.f32 %v4034, %v4194
        %v4196 = vpop.f32.mrb[0].mxu0
        %v4197 = vpop.f32.mrb[0].mxu0
        %v4198 = vadd.f32 %v4037, %v4197
        %v4199 = vpop.f32.mrb[0].mxu0
        %4200 = vmatprep.mubr.bf16.mxu0 %v3287
        %4201 = vmatmul.mubr.bf16.gmra.mrb[0].mxu0 %v3286
        %v4202 = vpop.f32.mrb[0].mxu0
        %v4203 = vadd.f32 %v4042, %v4202
        %v4204 = vpop.f32.mrb[0].mxu0
        %v4205 = vpop.f32.mrb[0].mxu0
        %v4206 = vadd.f32 %v4045, %v4205
        %v4207 = vpop.f32.mrb[0].mxu0
        %4208 = vmatprep.mubr.bf16.mxu0 %v3296
        %4209 = vmatmul.mubr.bf16.gmra.mrb[0].mxu0 %v3295
        %v4210 = vpop.f32.mrb[0].mxu0
        %v4211 = vadd.f32 %v4050, %v4210
        %v4212 = vpop.f32.mrb[0].mxu0
        %v4213 = vpop.f32.mrb[0].mxu0
        %v4214 = vadd.f32 %v4053, %v4213
        %v4215 = vpop.f32.mrb[0].mxu0
        %4216 = vmatprep.mubr.bf16.mxu0 %v3305
        %4217 = vmatmul.mubr.bf16.gmra.mrb[0].mxu0 %v3304
        %v4218 = vpop.f32.mrb[0].mxu0
        %v4219 = vadd.f32 %v4058, %v4218
        %v4220 = vpop.f32.mrb[0].mxu0
        %v4221 = vpop.f32.mrb[0].mxu0
        %v4222 = vadd.f32 %v4061, %v4221
        %v4223 = vpop.f32.mrb[0].mxu0
        %4224 = vmatprep.mubr.bf16.mxu0 %v3314
        %4225 = vmatmul.mubr.bf16.gmra.mrb[0].mxu0 %v3313
        %v4226 = vpop.f32.mrb[0].mxu0
        %v4227 = vadd.f32 %v4066, %v4226
        %v4228 = vpop.f32.mrb[0].mxu0
        %v4229 = vpop.f32.mrb[0].mxu0
        %v4230 = vadd.f32 %v4069, %v4229
        %v4231 = vpop.f32.mrb[0].mxu0
        %4232 = vmatprep.mubr.bf16.mxu0 %v3323
        %4233 = vmatmul.mubr.bf16.gmra.mrb[0].mxu0 %v3322
        %v4234 = vpop.f32.mrb[0].mxu0
        %v4235 = vadd.f32 %v4074, %v4234
        %v4236 = vpop.f32.mrb[0].mxu0
        %v4237 = vpop.f32.mrb[0].mxu0
        %v4238 = vadd.f32 %v4077, %v4237
        %v4239 = vpop.f32.mrb[0].mxu0
        %4240 = vmatprep.mubr.bf16.mxu0 %v3332
        %4241 = vmatmul.mubr.bf16.gmra.mrb[0].mxu0 %v3331
        %v4242 = vpop.f32.mrb[0].mxu0
        %v4243 = vadd.f32 %v4082, %v4242
        %v4244 = vpop.f32.mrb[0].mxu0
        %v4245 = vpop.f32.mrb[0].mxu0
        %v4246 = vadd.f32 %v4085, %v4245
        %v4247 = vpop.f32.mrb[0].mxu0
        %4248 = vmatprep.mubr.bf16.mxu0 %v3341
        %4249 = vmatmul.mubr.bf16.gmra.mrb[0].mxu0 %v3340
        %v4250 = vpop.f32.mrb[0].mxu0
        %v4251 = vadd.f32 %v4090, %v4250
        %v4252 = vpop.f32.mrb[0].mxu0
        %v4253 = vpop.f32.mrb[0].mxu0
        %v4254 = vadd.f32 %v4093, %v4253
        %v4255 = vpop.f32.mrb[0].mxu0
        %4256 = vmatprep.mubr.bf16.mxu0 %v3350
        %4257 = vmatmul.mubr.bf16.gmra.mrb[0].mxu0 %v3349
        %v4258 = vpop.f32.mrb[0].mxu0
        %v4259 = vadd.f32 %v4098, %v4258
        %v4260 = vpop.f32.mrb[0].mxu0
        %v4261 = vpop.f32.mrb[0].mxu0
        %v4262 = vadd.f32 %v4101, %v4261
        %v4263 = vpop.f32.mrb[0].mxu0
        %4264 = vmatprep.mubr.bf16.mxu0 %v3359
        %4265 = vmatmul.mubr.bf16.gmra.mrb[0].mxu0 %v3358
        %v4266 = vpop.f32.mrb[0].mxu0
        %v4267 = vadd.f32 %v4106, %v4266
        %v4268 = vpop.f32.mrb[0].mxu0
        %v4269 = vpop.f32.mrb[0].mxu0
        %v4270 = vadd.f32 %v4109, %v4269
        %v4271 = vpop.f32.mrb[0].mxu0
        %4272 = vmatprep.mubr.bf16.mxu0 %v3368
        %4273 = vmatmul.mubr.bf16.gmra.mrb[0].mxu0 %v3367
        %v4274 = vpop.f32.mrb[0].mxu0
        %v4275 = vadd.f32 %v4114, %v4274
        %v4276 = vpop.f32.mrb[0].mxu0
        %v4277 = vpop.f32.mrb[0].mxu0
        %v4278 = vadd.f32 %v4117, %v4277
        %v4279 = vpop.f32.mrb[0].mxu0
        %4280 = vmatprep.mubr.bf16.mxu0 %v3377
        %4281 = vmatmul.mubr.bf16.gmra.mrb[0].mxu0 %v3376
        %v4282 = vpop.f32.mrb[0].mxu0
        %v4283 = vadd.f32 %v4122, %v4282
        %v4284 = vpop.f32.mrb[0].mxu0
        %v4285 = vpop.f32.mrb[0].mxu0
        %v4286 = vadd.f32 %v4125, %v4285
        %v4287 = vpop.f32.mrb[0].mxu0
        %4288 = vmatprep.mubr.bf16.mxu0 %v3386
        %4289 = vmatmul.mubr.bf16.gmra.mrb[0].mxu0 %v3385
        %v4290 = vpop.f32.mrb[0].mxu0
        %v4291 = vadd.f32 %v4130, %v4290
        %v4292 = vpop.f32.mrb[0].mxu0
        %v4293 = vpop.f32.mrb[0].mxu0
        %v4294 = vadd.f32 %v4133, %v4293
        %v4295 = vpop.f32.mrb[0].mxu0
        %4296 = vdwg.mxu0
        %4297 = vmatprep.subr.bf16.mxu0 0
        %4298 = vmatpush1.bf16.msra.mxu0 %v3863
        %4299 = vmatprep.subr.bf16.mxu0 0
        %4300 = vmatpush1.bf16.msra.mxu0 %v3864
        %4301 = vmatprep.subr.bf16.mxu0 0
        %4302 = vmatpush1.bf16.msra.mxu0 %v3865
        %4303 = vmatprep.subr.bf16.mxu0 0
        %4304 = vmatpush1.bf16.msra.mxu0 %v3866
        %4305 = vmatprep.subr.bf16.mxu0 0
        %4306 = vmatpush1.bf16.msra.mxu0 %v3867
        %4307 = vmatprep.subr.bf16.mxu0 0
        %4308 = vmatpush1.bf16.msra.mxu0 %v3868
        %4309 = vmatprep.subr.bf16.mxu0 0
        %4310 = vmatpush1.bf16.msra.mxu0 %v3869
        %4311 = vmatprep.subr.bf16.mxu0 0
        %4312 = vmatpush1.bf16.msra.mxu0 %v3870
        %4313 = vmatprep.subr.bf16.mxu0 0
        %4314 = vmatpush1.bf16.msra.mxu0 %v3871
        %4315 = vmatprep.subr.bf16.mxu0 0
        %4316 = vmatpush1.bf16.msra.mxu0 %v3872
        %4317 = vmatprep.subr.bf16.mxu0 0
        %4318 = vmatpush1.bf16.msra.mxu0 %v3873
        %4319 = vmatprep.subr.bf16.mxu0 0
        %4320 = vmatpush1.bf16.msra.mxu0 %v3874
        %4321 = vmatprep.subr.bf16.mxu0 0
        %4322 = vmatpush1.bf16.msra.mxu0 %v3875
        %4323 = vmatprep.subr.bf16.mxu0 0
        %4324 = vmatpush1.bf16.msra.mxu0 %v3876
        %4325 = vmatprep.subr.bf16.mxu0 0
        %4326 = vmatpush1.bf16.msra.mxu0 %v3877
        %4327 = vmatprep.subr.bf16.mxu0 0
        %4328 = vmatpush1.bf16.msra.mxu0 %v3878
        %4329 = vmatprep.mubr.bf16.mxu0 %v3253
        %4330 = vmatmul.mubr.bf16.gmra.mrb[0].mxu0 %v3252
        %v4331 = vpop.f32.mrb[0].mxu0
        %v4332 = vadd.f32 %v4171, %v4331
        %v4333 = vpop.f32.mrb[0].mxu0
        %v4334 = vpop.f32.mrb[0].mxu0
        %v4335 = vadd.f32 %v4174, %v4334
        %v4336 = vpop.f32.mrb[0].mxu0
        %4337 = vmatprep.mubr.bf16.mxu0 %v3262
        %4338 = vmatmul.mubr.bf16.gmra.mrb[0].mxu0 %v3261
        %v4339 = vpop.f32.mrb[0].mxu0
        %v4340 = vadd.f32 %v4179, %v4339
        %v4341 = vpop.f32.mrb[0].mxu0
        %v4342 = vpop.f32.mrb[0].mxu0
        %v4343 = vadd.f32 %v4182, %v4342
        %v4344 = vpop.f32.mrb[0].mxu0
        %4345 = vmatprep.mubr.bf16.mxu0 %v3271
        %4346 = vmatmul.mubr.bf16.gmra.mrb[0].mxu0 %v3270
        %v4347 = vpop.f32.mrb[0].mxu0
        %v4348 = vadd.f32 %v4187, %v4347
        %v4349 = vpop.f32.mrb[0].mxu0
        %v4350 = vpop.f32.mrb[0].mxu0
        %v4351 = vadd.f32 %v4190, %v4350
        %v4352 = vpop.f32.mrb[0].mxu0
        %4353 = vmatprep.mubr.bf16.mxu0 %v3280
        %4354 = vmatmul.mubr.bf16.gmra.mrb[0].mxu0 %v3279
        %v4355 = vpop.f32.mrb[0].mxu0
        %v4356 = vadd.f32 %v4195, %v4355
        %v4357 = vpop.f32.mrb[0].mxu0
        %v4358 = vpop.f32.mrb[0].mxu0
        %v4359 = vadd.f32 %v4198, %v4358
        %v4360 = vpop.f32.mrb[0].mxu0
        %4361 = vmatprep.mubr.bf16.mxu0 %v3289
        %4362 = vmatmul.mubr.bf16.gmra.mrb[0].mxu0 %v3288
        %v4363 = vpop.f32.mrb[0].mxu0
        %v4364 = vadd.f32 %v4203, %v4363
        %v4365 = vpop.f32.mrb[0].mxu0
        %v4366 = vpop.f32.mrb[0].mxu0
        %v4367 = vadd.f32 %v4206, %v4366
        %v4368 = vpop.f32.mrb[0].mxu0
        %4369 = vmatprep.mubr.bf16.mxu0 %v3298
        %4370 = vmatmul.mubr.bf16.gmra.mrb[0].mxu0 %v3297
        %v4371 = vpop.f32.mrb[0].mxu0
        %v4372 = vadd.f32 %v4211, %v4371
        %v4373 = vpop.f32.mrb[0].mxu0
        %v4374 = vpop.f32.mrb[0].mxu0
        %v4375 = vadd.f32 %v4214, %v4374
        %v4376 = vpop.f32.mrb[0].mxu0
        %4377 = vmatprep.mubr.bf16.mxu0 %v3307
        %4378 = vmatmul.mubr.bf16.gmra.mrb[0].mxu0 %v3306
        %v4379 = vpop.f32.mrb[0].mxu0
        %v4380 = vadd.f32 %v4219, %v4379
        %v4381 = vpop.f32.mrb[0].mxu0
        %v4382 = vpop.f32.mrb[0].mxu0
        %v4383 = vadd.f32 %v4222, %v4382
        %v4384 = vpop.f32.mrb[0].mxu0
        %4385 = vmatprep.mubr.bf16.mxu0 %v3316
        %4386 = vmatmul.mubr.bf16.gmra.mrb[0].mxu0 %v3315
        %v4387 = vpop.f32.mrb[0].mxu0
        %v4388 = vadd.f32 %v4227, %v4387
        %v4389 = vpop.f32.mrb[0].mxu0
        %v4390 = vpop.f32.mrb[0].mxu0
        %v4391 = vadd.f32 %v4230, %v4390
        %v4392 = vpop.f32.mrb[0].mxu0
        %4393 = vmatprep.mubr.bf16.mxu0 %v3325
        %4394 = vmatmul.mubr.bf16.gmra.mrb[0].mxu0 %v3324
        %v4395 = vpop.f32.mrb[0].mxu0
        %v4396 = vadd.f32 %v4235, %v4395
        %v4397 = vpop.f32.mrb[0].mxu0
        %v4398 = vpop.f32.mrb[0].mxu0
        %v4399 = vadd.f32 %v4238, %v4398
        %v4400 = vpop.f32.mrb[0].mxu0
        %4401 = vmatprep.mubr.bf16.mxu0 %v3334
        %4402 = vmatmul.mubr.bf16.gmra.mrb[0].mxu0 %v3333
        %v4403 = vpop.f32.mrb[0].mxu0
        %v4404 = vadd.f32 %v4243, %v4403
        %v4405 = vpop.f32.mrb[0].mxu0
        %v4406 = vpop.f32.mrb[0].mxu0
        %v4407 = vadd.f32 %v4246, %v4406
        %v4408 = vpop.f32.mrb[0].mxu0
        %4409 = vmatprep.mubr.bf16.mxu0 %v3343
        %4410 = vmatmul.mubr.bf16.gmra.mrb[0].mxu0 %v3342
        %v4411 = vpop.f32.mrb[0].mxu0
        %v4412 = vadd.f32 %v4251, %v4411
        %v4413 = vpop.f32.mrb[0].mxu0
        %v4414 = vpop.f32.mrb[0].mxu0
        %v4415 = vadd.f32 %v4254, %v4414
        %v4416 = vpop.f32.mrb[0].mxu0
        %4417 = vmatprep.mubr.bf16.mxu0 %v3352
        %4418 = vmatmul.mubr.bf16.gmra.mrb[0].mxu0 %v3351
        %v4419 = vpop.f32.mrb[0].mxu0
        %v4420 = vadd.f32 %v4259, %v4419
        %v4421 = vpop.f32.mrb[0].mxu0
        %v4422 = vpop.f32.mrb[0].mxu0
        %v4423 = vadd.f32 %v4262, %v4422
        %v4424 = vpop.f32.mrb[0].mxu0
        %4425 = vmatprep.mubr.bf16.mxu0 %v3361
        %4426 = vmatmul.mubr.bf16.gmra.mrb[0].mxu0 %v3360
        %v4427 = vpop.f32.mrb[0].mxu0
        %v4428 = vadd.f32 %v4267, %v4427
        %v4429 = vpop.f32.mrb[0].mxu0
        %v4430 = vpop.f32.mrb[0].mxu0
        %v4431 = vadd.f32 %v4270, %v4430
        %v4432 = vpop.f32.mrb[0].mxu0
        %4433 = vmatprep.mubr.bf16.mxu0 %v3370
        %4434 = vmatmul.mubr.bf16.gmra.mrb[0].mxu0 %v3369
        %v4435 = vpop.f32.mrb[0].mxu0
        %v4436 = vadd.f32 %v4275, %v4435
        %v4437 = vpop.f32.mrb[0].mxu0
        %v4438 = vpop.f32.mrb[0].mxu0
        %v4439 = vadd.f32 %v4278, %v4438
        %v4440 = vpop.f32.mrb[0].mxu0
        %4441 = vmatprep.mubr.bf16.mxu0 %v3379
        %4442 = vmatmul.mubr.bf16.gmra.mrb[0].mxu0 %v3378
        %v4443 = vpop.f32.mrb[0].mxu0
        %v4444 = vadd.f32 %v4283, %v4443
        %v4445 = vpop.f32.mrb[0].mxu0
        %v4446 = vpop.f32.mrb[0].mxu0
        %v4447 = vadd.f32 %v4286, %v4446
        %v4448 = vpop.f32.mrb[0].mxu0
        %4449 = vmatprep.mubr.bf16.mxu0 %v3388
        %4450 = vmatmul.mubr.bf16.gmra.mrb[0].mxu0 %v3387
        %v4451 = vpop.f32.mrb[0].mxu0
        %v4452 = vadd.f32 %v4291, %v4451
        %v4453 = vpop.f32.mrb[0].mxu0
        %v4454 = vpop.f32.mrb[0].mxu0
        %v4455 = vadd.f32 %v4294, %v4454
        %v4456 = vpop.f32.mrb[0].mxu0
        %4457 = vdwg.mxu0
        %4458 = vmatprep.subr.bf16.mxu0 0
        %4459 = vmatpush1.bf16.msra.mxu0 %v3879
        %4460 = vmatprep.subr.bf16.mxu0 0
        %4461 = vmatpush1.bf16.msra.mxu0 %v3880
        %4462 = vmatprep.subr.bf16.mxu0 0
        %4463 = vmatpush1.bf16.msra.mxu0 %v3881
        %4464 = vmatprep.subr.bf16.mxu0 0
        %4465 = vmatpush1.bf16.msra.mxu0 %v3882
        %4466 = vmatprep.subr.bf16.mxu0 0
        %4467 = vmatpush1.bf16.msra.mxu0 %v3883
        %4468 = vmatprep.subr.bf16.mxu0 0
        %4469 = vmatpush1.bf16.msra.mxu0 %v3884
        %4470 = vmatprep.subr.bf16.mxu0 0
        %4471 = vmatpush1.bf16.msra.mxu0 %v3885
        %4472 = vmatprep.subr.bf16.mxu0 0
        %4473 = vmatpush1.bf16.msra.mxu0 %v3886
        %4474 = vmatprep.subr.bf16.mxu0 0
        %4475 = vmatpush1.bf16.msra.mxu0 %v3887
        %4476 = vmatprep.subr.bf16.mxu0 0
        %4477 = vmatpush1.bf16.msra.mxu0 %v3888
        %4478 = vmatprep.subr.bf16.mxu0 0
        %4479 = vmatpush1.bf16.msra.mxu0 %v3889
        %4480 = vmatprep.subr.bf16.mxu0 0
        %4481 = vmatpush1.bf16.msra.mxu0 %v3890
        %4482 = vmatprep.subr.bf16.mxu0 0
        %4483 = vmatpush1.bf16.msra.mxu0 %v3891
        %4484 = vmatprep.subr.bf16.mxu0 0
        %4485 = vmatpush1.bf16.msra.mxu0 %v3892
        %4486 = vmatprep.subr.bf16.mxu0 0
        %4487 = vmatpush1.bf16.msra.mxu0 %v3893
        %4488 = vmatprep.subr.bf16.mxu0 0
        %4489 = vmatpush1.bf16.msra.mxu0 %v3894
        %4490 = vmatprep.mubr.bf16.mxu0 %v3255
        %4491 = vmatmul.mubr.bf16.gmra.mrb[0].mxu0 %v3254
        %v4492 = vpop.f32.mrb[0].mxu0
        %v4493 = vadd.f32 %v4332, %v4492
        %v4494 = vpop.f32.mrb[0].mxu0
        %v4495 = vpop.f32.mrb[0].mxu0
        %v4496 = vadd.f32 %v4335, %v4495
        %v4497 = vpop.f32.mrb[0].mxu0
        %4498 = vmatprep.mubr.bf16.mxu0 %v3264
        %4499 = vmatmul.mubr.bf16.gmra.mrb[0].mxu0 %v3263
        %v4500 = vpop.f32.mrb[0].mxu0
        %v4501 = vadd.f32 %v4340, %v4500
        %v4502 = vpop.f32.mrb[0].mxu0
        %v4503 = vpop.f32.mrb[0].mxu0
        %v4504 = vadd.f32 %v4343, %v4503
        %v4505 = vpop.f32.mrb[0].mxu0
        %4506 = vmatprep.mubr.bf16.mxu0 %v3273
        %4507 = vmatmul.mubr.bf16.gmra.mrb[0].mxu0 %v3272
        %v4508 = vpop.f32.mrb[0].mxu0
        %v4509 = vadd.f32 %v4348, %v4508
        %v4510 = vpop.f32.mrb[0].mxu0
        %v4511 = vpop.f32.mrb[0].mxu0
        %v4512 = vadd.f32 %v4351, %v4511
        %v4513 = vpop.f32.mrb[0].mxu0
        %4514 = vmatprep.mubr.bf16.mxu0 %v3282
        %4515 = vmatmul.mubr.bf16.gmra.mrb[0].mxu0 %v3281
        %v4516 = vpop.f32.mrb[0].mxu0
        %v4517 = vadd.f32 %v4356, %v4516
        %v4518 = vpop.f32.mrb[0].mxu0
        %v4519 = vpop.f32.mrb[0].mxu0
        %v4520 = vadd.f32 %v4359, %v4519
        %v4521 = vpop.f32.mrb[0].mxu0
        %4522 = vmatprep.mubr.bf16.mxu0 %v3291
        %4523 = vmatmul.mubr.bf16.gmra.mrb[0].mxu0 %v3290
        %v4524 = vpop.f32.mrb[0].mxu0
        %v4525 = vadd.f32 %v4364, %v4524
        %v4526 = vpop.f32.mrb[0].mxu0
        %v4527 = vpop.f32.mrb[0].mxu0
        %v4528 = vadd.f32 %v4367, %v4527
        %v4529 = vpop.f32.mrb[0].mxu0
        %4530 = vmatprep.mubr.bf16.mxu0 %v3300
        %4531 = vmatmul.mubr.bf16.gmra.mrb[0].mxu0 %v3299
        %v4532 = vpop.f32.mrb[0].mxu0
        %v4533 = vadd.f32 %v4372, %v4532
        %v4534 = vpop.f32.mrb[0].mxu0
        %v4535 = vpop.f32.mrb[0].mxu0
        %v4536 = vadd.f32 %v4375, %v4535
        %v4537 = vpop.f32.mrb[0].mxu0
        %4538 = vmatprep.mubr.bf16.mxu0 %v3309
        %4539 = vmatmul.mubr.bf16.gmra.mrb[0].mxu0 %v3308
        %v4540 = vpop.f32.mrb[0].mxu0
        %v4541 = vadd.f32 %v4380, %v4540
        %v4542 = vpop.f32.mrb[0].mxu0
        %v4543 = vpop.f32.mrb[0].mxu0
        %v4544 = vadd.f32 %v4383, %v4543
        %v4545 = vpop.f32.mrb[0].mxu0
        %4546 = vmatprep.mubr.bf16.mxu0 %v3318
        %4547 = vmatmul.mubr.bf16.gmra.mrb[0].mxu0 %v3317
        %v4548 = vpop.f32.mrb[0].mxu0
        %v4549 = vadd.f32 %v4388, %v4548
        %v4550 = vpop.f32.mrb[0].mxu0
        %v4551 = vpop.f32.mrb[0].mxu0
        %v4552 = vadd.f32 %v4391, %v4551
        %v4553 = vpop.f32.mrb[0].mxu0
        %4554 = vmatprep.mubr.bf16.mxu0 %v3327
        %4555 = vmatmul.mubr.bf16.gmra.mrb[0].mxu0 %v3326
        %v4556 = vpop.f32.mrb[0].mxu0
        %v4557 = vadd.f32 %v4396, %v4556
        %v4558 = vpop.f32.mrb[0].mxu0
        %v4559 = vpop.f32.mrb[0].mxu0
        %v4560 = vadd.f32 %v4399, %v4559
        %v4561 = vpop.f32.mrb[0].mxu0
        %4562 = vmatprep.mubr.bf16.mxu0 %v3336
        %4563 = vmatmul.mubr.bf16.gmra.mrb[0].mxu0 %v3335
        %v4564 = vpop.f32.mrb[0].mxu0
        %v4565 = vadd.f32 %v4404, %v4564
        %v4566 = vpop.f32.mrb[0].mxu0
        %v4567 = vpop.f32.mrb[0].mxu0
        %v4568 = vadd.f32 %v4407, %v4567
        %v4569 = vpop.f32.mrb[0].mxu0
        %4570 = vmatprep.mubr.bf16.mxu0 %v3345
        %4571 = vmatmul.mubr.bf16.gmra.mrb[0].mxu0 %v3344
        %v4572 = vpop.f32.mrb[0].mxu0
        %v4573 = vadd.f32 %v4412, %v4572
        %v4574 = vpop.f32.mrb[0].mxu0
        %v4575 = vpop.f32.mrb[0].mxu0
        %v4576 = vadd.f32 %v4415, %v4575
        %v4577 = vpop.f32.mrb[0].mxu0
        %4578 = vmatprep.mubr.bf16.mxu0 %v3354
        %4579 = vmatmul.mubr.bf16.gmra.mrb[0].mxu0 %v3353
        %v4580 = vpop.f32.mrb[0].mxu0
        %v4581 = vadd.f32 %v4420, %v4580
        %v4582 = vpop.f32.mrb[0].mxu0
        %v4583 = vpop.f32.mrb[0].mxu0
        %v4584 = vadd.f32 %v4423, %v4583
        %v4585 = vpop.f32.mrb[0].mxu0
        %4586 = vmatprep.mubr.bf16.mxu0 %v3363
        %4587 = vmatmul.mubr.bf16.gmra.mrb[0].mxu0 %v3362
        %v4588 = vpop.f32.mrb[0].mxu0
        %v4589 = vadd.f32 %v4428, %v4588
        %v4590 = vpop.f32.mrb[0].mxu0
        %v4591 = vpop.f32.mrb[0].mxu0
        %v4592 = vadd.f32 %v4431, %v4591
        %v4593 = vpop.f32.mrb[0].mxu0
        %4594 = vmatprep.mubr.bf16.mxu0 %v3372
        %4595 = vmatmul.mubr.bf16.gmra.mrb[0].mxu0 %v3371
        %v4596 = vpop.f32.mrb[0].mxu0
        %v4597 = vadd.f32 %v4436, %v4596
        %v4598 = vpop.f32.mrb[0].mxu0
        %v4599 = vpop.f32.mrb[0].mxu0
        %v4600 = vadd.f32 %v4439, %v4599
        %v4601 = vpop.f32.mrb[0].mxu0
        %4602 = vmatprep.mubr.bf16.mxu0 %v3381
        %4603 = vmatmul.mubr.bf16.gmra.mrb[0].mxu0 %v3380
        %v4604 = vpop.f32.mrb[0].mxu0
        %v4605 = vadd.f32 %v4444, %v4604
        %v4606 = vpop.f32.mrb[0].mxu0
        %v4607 = vpop.f32.mrb[0].mxu0
        %v4608 = vadd.f32 %v4447, %v4607
        %v4609 = vpop.f32.mrb[0].mxu0
        %4610 = vmatprep.mubr.bf16.mxu0 %v3390
        %4611 = vmatmul.mubr.bf16.gmra.mrb[0].mxu0 %v3389
        %v4612 = vpop.f32.mrb[0].mxu0
        %v4613 = vadd.f32 %v4452, %v4612
        %v4614 = vpop.f32.mrb[0].mxu0
        %v4615 = vpop.f32.mrb[0].mxu0
        %v4616 = vadd.f32 %v4455, %v4615
        %v4617 = vpop.f32.mrb[0].mxu0
        %4618 = vdwg.mxu0
        %4619 = vmatprep.subr.bf16.mxu0 0
        %4620 = vmatpush1.bf16.msra.mxu0 %v3895
        %4621 = vmatprep.subr.bf16.mxu0 0
        %4622 = vmatpush1.bf16.msra.mxu0 %v3896
        %4623 = vmatprep.subr.bf16.mxu0 0
        %4624 = vmatpush1.bf16.msra.mxu0 %v3897
        %4625 = vmatprep.subr.bf16.mxu0 0
        %4626 = vmatpush1.bf16.msra.mxu0 %v3898
        %4627 = vmatprep.subr.bf16.mxu0 0
        %4628 = vmatpush1.bf16.msra.mxu0 %v3899
        %4629 = vmatprep.subr.bf16.mxu0 0
        %4630 = vmatpush1.bf16.msra.mxu0 %v3900
        %4631 = vmatprep.subr.bf16.mxu0 0
        %4632 = vmatpush1.bf16.msra.mxu0 %v3901
        %4633 = vmatprep.subr.bf16.mxu0 0
        %4634 = vmatpush1.bf16.msra.mxu0 %v3902
        %4635 = vmatprep.subr.bf16.mxu0 0
        %4636 = vmatpush1.bf16.msra.mxu0 0
        %4637 = vmatprep.subr.bf16.mxu0 0
        %4638 = vmatpush1.bf16.msra.mxu0 0
        %4639 = vmatprep.subr.bf16.mxu0 0
        %4640 = vmatpush1.bf16.msra.mxu0 0
        %4641 = vmatprep.subr.bf16.mxu0 0
        %4642 = vmatpush1.bf16.msra.mxu0 0
        %4643 = vmatprep.subr.bf16.mxu0 0
        %4644 = vmatpush1.bf16.msra.mxu0 0
        %4645 = vmatprep.subr.bf16.mxu0 0
        %4646 = vmatpush1.bf16.msra.mxu0 0
        %4647 = vmatprep.subr.bf16.mxu0 0
        %4648 = vmatpush1.bf16.msra.mxu0 0
        %4649 = vmatprep.subr.bf16.mxu0 0
        %4650 = vmatpush1.bf16.msra.mxu0 0
        %4651 = vmatprep.mubr.bf16.mxu0 0
        %4652 = vmatmul.mubr.bf16.gmra.mrb[0].mxu0 %v3256
        %v4653 = vpop.f32.mrb[0].mxu0
        %v4654 = vadd.f32 %v4493, %v4653
        %v4655 = vpop.f32.mrb[0].mxu0
        %v4656 = vpop.f32.mrb[0].mxu0
        %v4657 = vadd.f32 %v4496, %v4656
        %v4658 = vpop.f32.mrb[0].mxu0
        %4659 = vmatprep.mubr.bf16.mxu0 0
        %4660 = vmatmul.mubr.bf16.gmra.mrb[0].mxu0 %v3265
        %v4661 = vpop.f32.mrb[0].mxu0
        %v4662 = vadd.f32 %v4501, %v4661
        %v4663 = vpop.f32.mrb[0].mxu0
        %v4664 = vpop.f32.mrb[0].mxu0
        %v4665 = vadd.f32 %v4504, %v4664
        %v4666 = vpop.f32.mrb[0].mxu0
        %4667 = vmatprep.mubr.bf16.mxu0 0
        %4668 = vmatmul.mubr.bf16.gmra.mrb[0].mxu0 %v3274
        %v4669 = vpop.f32.mrb[0].mxu0
        %v4670 = vadd.f32 %v4509, %v4669
        %v4671 = vpop.f32.mrb[0].mxu0
        %v4672 = vpop.f32.mrb[0].mxu0
        %v4673 = vadd.f32 %v4512, %v4672
        %v4674 = vpop.f32.mrb[0].mxu0
        %4675 = vmatprep.mubr.bf16.mxu0 0
        %4676 = vmatmul.mubr.bf16.gmra.mrb[0].mxu0 %v3283
        %v4677 = vpop.f32.mrb[0].mxu0
        %v4678 = vadd.f32 %v4517, %v4677
        %v4679 = vpop.f32.mrb[0].mxu0
        %v4680 = vpop.f32.mrb[0].mxu0
        %v4681 = vadd.f32 %v4520, %v4680
        %v4682 = vpop.f32.mrb[0].mxu0
        %4683 = vmatprep.mubr.bf16.mxu0 0
        %4684 = vmatmul.mubr.bf16.gmra.mrb[0].mxu0 %v3292
        %v4685 = vpop.f32.mrb[0].mxu0
        %v4686 = vadd.f32 %v4525, %v4685
        %v4687 = vpop.f32.mrb[0].mxu0
        %v4688 = vpop.f32.mrb[0].mxu0
        %v4689 = vadd.f32 %v4528, %v4688
        %v4690 = vpop.f32.mrb[0].mxu0
        %4691 = vmatprep.mubr.bf16.mxu0 0
        %4692 = vmatmul.mubr.bf16.gmra.mrb[0].mxu0 %v3301
        %v4693 = vpop.f32.mrb[0].mxu0
        %v4694 = vadd.f32 %v4533, %v4693
        %v4695 = vpop.f32.mrb[0].mxu0
        %v4696 = vpop.f32.mrb[0].mxu0
        %v4697 = vadd.f32 %v4536, %v4696
        %v4698 = vpop.f32.mrb[0].mxu0
        %4699 = vmatprep.mubr.bf16.mxu0 0
        %4700 = vmatmul.mubr.bf16.gmra.mrb[0].mxu0 %v3310
        %v4701 = vpop.f32.mrb[0].mxu0
        %v4702 = vadd.f32 %v4541, %v4701
        %v4703 = vpop.f32.mrb[0].mxu0
        %v4704 = vpop.f32.mrb[0].mxu0
        %v4705 = vadd.f32 %v4544, %v4704
        %v4706 = vpop.f32.mrb[0].mxu0
        %4707 = vmatprep.mubr.bf16.mxu0 0
        %4708 = vmatmul.mubr.bf16.gmra.mrb[0].mxu0 %v3319
        %v4709 = vpop.f32.mrb[0].mxu0
        %v4710 = vadd.f32 %v4549, %v4709
        %v4711 = vpop.f32.mrb[0].mxu0
        %v4712 = vpop.f32.mrb[0].mxu0
        %v4713 = vadd.f32 %v4552, %v4712
        %v4714 = vpop.f32.mrb[0].mxu0
        %4715 = vmatprep.mubr.bf16.mxu0 0
        %4716 = vmatmul.mubr.bf16.gmra.mrb[0].mxu0 %v3328
        %v4717 = vpop.f32.mrb[0].mxu0
        %v4718 = vadd.f32 %v4557, %v4717
        %v4719 = vpop.f32.mrb[0].mxu0
        %v4720 = vpop.f32.mrb[0].mxu0
        %v4721 = vadd.f32 %v4560, %v4720
        %v4722 = vpop.f32.mrb[0].mxu0
        %4723 = vmatprep.mubr.bf16.mxu0 0
        %4724 = vmatmul.mubr.bf16.gmra.mrb[0].mxu0 %v3337
        %v4725 = vpop.f32.mrb[0].mxu0
        %v4726 = vadd.f32 %v4565, %v4725
        %v4727 = vpop.f32.mrb[0].mxu0
        %v4728 = vpop.f32.mrb[0].mxu0
        %v4729 = vadd.f32 %v4568, %v4728
        %v4730 = vpop.f32.mrb[0].mxu0
        %4731 = vmatprep.mubr.bf16.mxu0 0
        %4732 = vmatmul.mubr.bf16.gmra.mrb[0].mxu0 %v3346
        %v4733 = vpop.f32.mrb[0].mxu0
        %v4734 = vadd.f32 %v4573, %v4733
        %v4735 = vpop.f32.mrb[0].mxu0
        %v4736 = vpop.f32.mrb[0].mxu0
        %v4737 = vadd.f32 %v4576, %v4736
        %v4738 = vpop.f32.mrb[0].mxu0
        %4739 = vmatprep.mubr.bf16.mxu0 0
        %4740 = vmatmul.mubr.bf16.gmra.mrb[0].mxu0 %v3355
        %v4741 = vpop.f32.mrb[0].mxu0
        %v4742 = vadd.f32 %v4581, %v4741
        %v4743 = vpop.f32.mrb[0].mxu0
        %v4744 = vpop.f32.mrb[0].mxu0
        %v4745 = vadd.f32 %v4584, %v4744
        %v4746 = vpop.f32.mrb[0].mxu0
        %4747 = vmatprep.mubr.bf16.mxu0 0
        %4748 = vmatmul.mubr.bf16.gmra.mrb[0].mxu0 %v3364
        %v4749 = vpop.f32.mrb[0].mxu0
        %v4750 = vadd.f32 %v4589, %v4749
        %v4751 = vpop.f32.mrb[0].mxu0
        %v4752 = vpop.f32.mrb[0].mxu0
        %v4753 = vadd.f32 %v4592, %v4752
        %v4754 = vpop.f32.mrb[0].mxu0
        %4755 = vmatprep.mubr.bf16.mxu0 0
        %4756 = vmatmul.mubr.bf16.gmra.mrb[0].mxu0 %v3373
        %v4757 = vpop.f32.mrb[0].mxu0
        %v4758 = vadd.f32 %v4597, %v4757
        %v4759 = vpop.f32.mrb[0].mxu0
        %v4760 = vpop.f32.mrb[0].mxu0
        %v4761 = vadd.f32 %v4600, %v4760
        %v4762 = vpop.f32.mrb[0].mxu0
        %4763 = vmatprep.mubr.bf16.mxu0 0
        %4764 = vmatmul.mubr.bf16.gmra.mrb[0].mxu0 %v3382
        %v4765 = vpop.f32.mrb[0].mxu0
        %v4766 = vadd.f32 %v4605, %v4765
        %v4767 = vpop.f32.mrb[0].mxu0
        %v4768 = vpop.f32.mrb[0].mxu0
        %v4769 = vadd.f32 %v4608, %v4768
        %v4770 = vpop.f32.mrb[0].mxu0
        %4771 = vmatprep.mubr.bf16.mxu0 0
        %4772 = vmatmul.mubr.bf16.gmra.mrb[0].mxu0 %v3391
        %v4773 = vpop.f32.mrb[0].mxu0
        %v4774 = vadd.f32 %v4613, %v4773
        %v4775 = vpop.f32.mrb[0].mxu0
        %v4776 = vpop.f32.mrb[0].mxu0
        %v4777 = vadd.f32 %v4616, %v4776
        %v4778 = vpop.f32.mrb[0].mxu0
        %4779 = vdwg.mxu0
        %v4780 = vmax.f32 %v4654, 0.0
        %v4781 = vmax.f32 %v4657, 0.0
        %v4782 = vmax.f32 %v4662, 0.0
        %v4783 = vmax.f32 %v4665, 0.0
        %v4784 = vmax.f32 %v4670, 0.0
        %v4785 = vmax.f32 %v4673, 0.0
        %v4786 = vmax.f32 %v4678, 0.0
        %v4787 = vmax.f32 %v4681, 0.0
        %v4788 = vmax.f32 %v4686, 0.0
        %v4789 = vmax.f32 %v4689, 0.0
        %v4790 = vmax.f32 %v4694, 0.0
        %v4791 = vmax.f32 %v4697, 0.0
        %v4792 = vmax.f32 %v4702, 0.0
        %v4793 = vmax.f32 %v4705, 0.0
        %v4794 = vmax.f32 %v4710, 0.0
        %v4795 = vmax.f32 %v4713, 0.0
        %v4796 = vmax.f32 %v4718, 0.0
        %v4797 = vmax.f32 %v4721, 0.0
        %v4798 = vmax.f32 %v4726, 0.0
        %v4799 = vmax.f32 %v4729, 0.0
        %v4800 = vmax.f32 %v4734, 0.0
        %v4801 = vmax.f32 %v4737, 0.0
        %v4802 = vmax.f32 %v4742, 0.0
        %v4803 = vmax.f32 %v4745, 0.0
        %v4804 = vmax.f32 %v4750, 0.0
        %v4805 = vmax.f32 %v4753, 0.0
        %v4806 = vmax.f32 %v4758, 0.0
        %v4807 = vmax.f32 %v4761, 0.0
        %v4808 = vmax.f32 %v4766, 0.0
        %v4809 = vmax.f32 %v4769, 0.0
        %v4810 = vmax.f32 %v4774, 0.0
        %v4811 = vmax.f32 %v4777, 0.0
        %4812 = vst [vmem:[%s465 + $0x1] sm:$0xff] %v4780
        %4813 = vst [vmem:[%s465 + $0x9] sm:$0xff] %v4781
        %4814 = vst [vmem:[%s465 + $0x19] sm:$0xff] %v4782
        %4815 = vst [vmem:[%s465 + $0x21] sm:$0xff] %v4783
        %4816 = vst [vmem:[%s465 + $0x31] sm:$0xff] %v4784
        %4817 = vst [vmem:[%s465 + $0x39] sm:$0xff] %v4785
        %4818 = vst [vmem:[%s465 + $0x49] sm:$0xff] %v4786
        %4819 = vst [vmem:[%s465 + $0x51] sm:$0xff] %v4787
        %4820 = vst [vmem:[%s465 + $0x61] sm:$0xff] %v4788
        %4821 = vst [vmem:[%s465 + $0x69] sm:$0xff] %v4789
        %4822 = vst [vmem:[%s465 + $0x79] sm:$0xff] %v4790
        %4823 = vst [vmem:[%s465 + $0x81] sm:$0xff] %v4791
        %4824 = vst [vmem:[%s465 + $0x91] sm:$0xff] %v4792
        %4825 = vst [vmem:[%s465 + $0x99] sm:$0xff] %v4793
        %4826 = vst [vmem:[%s465 + $0xa9] sm:$0xff] %v4794
        %4827 = vst [vmem:[%s465 + $0xb1] sm:$0xff] %v4795
        %4828 = vst [vmem:[%s465 + $0xc1] sm:$0xff] %v4796
        %4829 = vst [vmem:[%s465 + $0xc9] sm:$0xff] %v4797
        %4830 = vst [vmem:[%s465 + $0xd9] sm:$0xff] %v4798
        %4831 = vst [vmem:[%s465 + $0xe1] sm:$0xff] %v4799
        %4832 = vst [vmem:[%s465 + $0xf1] sm:$0xff] %v4800
        %4833 = vst [vmem:[%s465 + $0xf9] sm:$0xff] %v4801
        %4834 = vst [vmem:[%s465 + $0x109] sm:$0xff] %v4802
        %4835 = vst [vmem:[%s465 + $0x111] sm:$0xff] %v4803
        %4836 = vst [vmem:[%s465 + $0x121] sm:$0xff] %v4804
        %4837 = vst [vmem:[%s465 + $0x129] sm:$0xff] %v4805
        %4838 = vst [vmem:[%s465 + $0x139] sm:$0xff] %v4806
        %4839 = vst [vmem:[%s465 + $0x141] sm:$0xff] %v4807
        %4840 = vst [vmem:[%s465 + $0x151] sm:$0xff] %v4808
        %4841 = vst [vmem:[%s465 + $0x159] sm:$0xff] %v4809
        %4842 = vst [vmem:[%s465 + $0x169] sm:$0xff] %v4810
        %4843 = vst [vmem:[%s465 + $0x171] sm:$0xff] %v4811
        %v4844 = vld [vmem:[#allocation2] sm:$0xff]
        %v4845 = vld [vmem:[#allocation2 + $0x8] sm:$0xff]
        %v4846 = vld [vmem:[#allocation2 + $0x18] sm:$0xff]
        %v4847 = vld [vmem:[#allocation2 + $0x20] sm:$0xff]
        %v4848 = vld [vmem:[#allocation2 + $0x30] sm:$0xff]
        %v4849 = vld [vmem:[#allocation2 + $0x38] sm:$0xff]
        %v4850 = vld [vmem:[#allocation2 + $0x48] sm:$0xff]
        %v4851 = vld [vmem:[#allocation2 + $0x50] sm:$0xff]
        %v4852 = vld [vmem:[#allocation2 + $0x60] sm:$0xff]
        %v4853 = vld [vmem:[#allocation2 + $0x68] sm:$0xff]
        %v4854 = vld [vmem:[#allocation2 + $0x78] sm:$0xff]
        %v4855 = vld [vmem:[#allocation2 + $0x80] sm:$0xff]
        %v4856 = vld [vmem:[#allocation2 + $0x90] sm:$0xff]
        %v4857 = vld [vmem:[#allocation2 + $0x98] sm:$0xff]
        %v4858 = vld [vmem:[#allocation2 + $0xa8] sm:$0xff]
        %v4859 = vld [vmem:[#allocation2 + $0xb0] sm:$0xff]
        %v4860 = vld [vmem:[#allocation2 + $0xc0] sm:$0xff]
        %v4861 = vld [vmem:[#allocation2 + $0xc8] sm:$0xff]
        %v4862 = vld [vmem:[#allocation2 + $0xd8] sm:$0xff]
        %v4863 = vld [vmem:[#allocation2 + $0xe0] sm:$0xff]
        %v4864 = vld [vmem:[#allocation2 + $0xf0] sm:$0xff]
        %v4865 = vld [vmem:[#allocation2 + $0xf8] sm:$0xff]
        %v4866 = vld [vmem:[#allocation2 + $0x108] sm:$0xff]
        %v4867 = vld [vmem:[#allocation2 + $0x110] sm:$0xff]
        %v4868 = vld [vmem:[#allocation2 + $0x120] sm:$0xff]
        %v4869 = vld [vmem:[#allocation2 + $0x128] sm:$0xff]
        %v4870 = vld [vmem:[#allocation2 + $0x138] sm:$0xff]
        %v4871 = vld [vmem:[#allocation2 + $0x140] sm:$0xff]
        %v4872 = vld [vmem:[#allocation2 + $0x150] sm:$0xff]
        %v4873 = vld [vmem:[#allocation2 + $0x158] sm:$0xff]
        %v4874 = vld [vmem:[#allocation2 + $0x168] sm:$0xff]
        %v4875 = vld [vmem:[#allocation2 + $0x170] sm:$0xff]
        %v4876 = vpack.c.bf16 %v4845, %v4844
        %v4877 = vpack.c.bf16 %v4847, %v4846
        %v4878 = vpack.c.bf16 %v4849, %v4848
        %v4879 = vpack.c.bf16 %v4851, %v4850
        %v4880 = vpack.c.bf16 %v4853, %v4852
        %v4881 = vpack.c.bf16 %v4855, %v4854
        %v4882 = vpack.c.bf16 %v4857, %v4856
        %v4883 = vpack.c.bf16 %v4859, %v4858
        %v4884 = vpack.c.bf16 %v4861, %v4860
        %v4885 = vpack.c.bf16 %v4863, %v4862
        %v4886 = vpack.c.bf16 %v4865, %v4864
        %v4887 = vpack.c.bf16 %v4867, %v4866
        %v4888 = vpack.c.bf16 %v4869, %v4868
        %v4889 = vpack.c.bf16 %v4871, %v4870
        %v4890 = vpack.c.bf16 %v4873, %v4872
        %v4891 = vpack.c.bf16 %v4875, %v4874
        %4892 = vst [vmem:[#allocation3] sm:$0xff] %v4876
        %4893 = vst [vmem:[#allocation3 + $0x48] sm:$0xff] %v4877
        %4894 = vst [vmem:[#allocation3 + $0x90] sm:$0xff] %v4878
        %4895 = vst [vmem:[#allocation3 + $0xd8] sm:$0xff] %v4879
        %4896 = vst [vmem:[#allocation3 + $0x120] sm:$0xff] %v4880
        %4897 = vst [vmem:[#allocation3 + $0x168] sm:$0xff] %v4881
        %4898 = vst [vmem:[#allocation3 + $0x1b0] sm:$0xff] %v4882
        %4899 = vst [vmem:[#allocation3 + $0x1f8] sm:$0xff] %v4883
        %4900 = vst [vmem:[#allocation3 + $0x240] sm:$0xff] %v4884
        %4901 = vst [vmem:[#allocation3 + $0x288] sm:$0xff] %v4885
        %4902 = vst [vmem:[#allocation3 + $0x2d0] sm:$0xff] %v4886
        %4903 = vst [vmem:[#allocation3 + $0x318] sm:$0xff] %v4887
        %4904 = vst [vmem:[#allocation3 + $0x360] sm:$0xff] %v4888
        %4905 = vst [vmem:[#allocation3 + $0x3a8] sm:$0xff] %v4889
        %4906 = vst [vmem:[#allocation3 + $0x3f0] sm:$0xff] %v4890
        %4907 = vst [vmem:[#allocation3 + $0x438] sm:$0xff] %v4891
        %v4908 = vld [vmem:[#allocation2 + $0x1] sm:$0xff]
        %v4909 = vld [vmem:[#allocation2 + $0x9] sm:$0xff]
        %v4910 = vld [vmem:[#allocation2 + $0x19] sm:$0xff]
        %v4911 = vld [vmem:[#allocation2 + $0x21] sm:$0xff]
        %v4912 = vld [vmem:[#allocation2 + $0x31] sm:$0xff]
        %v4913 = vld [vmem:[#allocation2 + $0x39] sm:$0xff]
        %v4914 = vld [vmem:[#allocation2 + $0x49] sm:$0xff]
        %v4915 = vld [vmem:[#allocation2 + $0x51] sm:$0xff]
        %v4916 = vld [vmem:[#allocation2 + $0x61] sm:$0xff]
        %v4917 = vld [vmem:[#allocation2 + $0x69] sm:$0xff]
        %v4918 = vld [vmem:[#allocation2 + $0x79] sm:$0xff]
        %v4919 = vld [vmem:[#allocation2 + $0x81] sm:$0xff]
        %v4920 = vld [vmem:[#allocation2 + $0x91] sm:$0xff]
        %v4921 = vld [vmem:[#allocation2 + $0x99] sm:$0xff]
        %v4922 = vld [vmem:[#allocation2 + $0xa9] sm:$0xff]
        %v4923 = vld [vmem:[#allocation2 + $0xb1] sm:$0xff]
        %v4924 = vld [vmem:[#allocation2 + $0xc1] sm:$0xff]
        %v4925 = vld [vmem:[#allocation2 + $0xc9] sm:$0xff]
        %v4926 = vld [vmem:[#allocation2 + $0xd9] sm:$0xff]
        %v4927 = vld [vmem:[#allocation2 + $0xe1] sm:$0xff]
        %v4928 = vld [vmem:[#allocation2 + $0xf1] sm:$0xff]
        %v4929 = vld [vmem:[#allocation2 + $0xf9] sm:$0xff]
        %v4930 = vld [vmem:[#allocation2 + $0x109] sm:$0xff]
        %v4931 = vld [vmem:[#allocation2 + $0x111] sm:$0xff]
        %v4932 = vld [vmem:[#allocation2 + $0x121] sm:$0xff]
        %v4933 = vld [vmem:[#allocation2 + $0x129] sm:$0xff]
        %v4934 = vld [vmem:[#allocation2 + $0x139] sm:$0xff]
        %v4935 = vld [vmem:[#allocation2 + $0x141] sm:$0xff]
        %v4936 = vld [vmem:[#allocation2 + $0x151] sm:$0xff]
        %v4937 = vld [vmem:[#allocation2 + $0x159] sm:$0xff]
        %v4938 = vld [vmem:[#allocation2 + $0x169] sm:$0xff]
        %v4939 = vld [vmem:[#allocation2 + $0x171] sm:$0xff]
        %v4940 = vpack.c.bf16 %v4909, %v4908
        %v4941 = vpack.c.bf16 %v4911, %v4910
        %v4942 = vpack.c.bf16 %v4913, %v4912
        %v4943 = vpack.c.bf16 %v4915, %v4914
        %v4944 = vpack.c.bf16 %v4917, %v4916
        %v4945 = vpack.c.bf16 %v4919, %v4918
        %v4946 = vpack.c.bf16 %v4921, %v4920
        %v4947 = vpack.c.bf16 %v4923, %v4922
        %v4948 = vpack.c.bf16 %v4925, %v4924
        %v4949 = vpack.c.bf16 %v4927, %v4926
        %v4950 = vpack.c.bf16 %v4929, %v4928
        %v4951 = vpack.c.bf16 %v4931, %v4930
        %v4952 = vpack.c.bf16 %v4933, %v4932
        %v4953 = vpack.c.bf16 %v4935, %v4934
        %v4954 = vpack.c.bf16 %v4937, %v4936
        %v4955 = vpack.c.bf16 %v4939, %v4938
        %4956 = vst [vmem:[#allocation3 + $0x8] sm:$0xff] %v4940
        %4957 = vst [vmem:[#allocation3 + $0x50] sm:$0xff] %v4941
        %4958 = vst [vmem:[#allocation3 + $0x98] sm:$0xff] %v4942
        %4959 = vst [vmem:[#allocation3 + $0xe0] sm:$0xff] %v4943
        %4960 = vst [vmem:[#allocation3 + $0x128] sm:$0xff] %v4944
        %4961 = vst [vmem:[#allocation3 + $0x170] sm:$0xff] %v4945
        %4962 = vst [vmem:[#allocation3 + $0x1b8] sm:$0xff] %v4946
        %4963 = vst [vmem:[#allocation3 + $0x200] sm:$0xff] %v4947
        %4964 = vst [vmem:[#allocation3 + $0x248] sm:$0xff] %v4948
        %4965 = vst [vmem:[#allocation3 + $0x290] sm:$0xff] %v4949
        %4966 = vst [vmem:[#allocation3 + $0x2d8] sm:$0xff] %v4950
        %4967 = vst [vmem:[#allocation3 + $0x320] sm:$0xff] %v4951
        %4968 = vst [vmem:[#allocation3 + $0x368] sm:$0xff] %v4952
        %4969 = vst [vmem:[#allocation3 + $0x3b0] sm:$0xff] %v4953
        %4970 = vst [vmem:[#allocation3 + $0x3f8] sm:$0xff] %v4954
        %4971 = vst [vmem:[#allocation3 + $0x440] sm:$0xff] %v4955
        %v4972 = vld [vmem:[#allocation2 + $0x2] sm:$0xff]
        %v4973 = vld [vmem:[#allocation2 + $0xa] sm:$0xff]
        %v4974 = vld [vmem:[#allocation2 + $0x1a] sm:$0xff]
        %v4975 = vld [vmem:[#allocation2 + $0x22] sm:$0xff]
        %v4976 = vld [vmem:[#allocation2 + $0x32] sm:$0xff]
        %v4977 = vld [vmem:[#allocation2 + $0x3a] sm:$0xff]
        %v4978 = vld [vmem:[#allocation2 + $0x4a] sm:$0xff]
        %v4979 = vld [vmem:[#allocation2 + $0x52] sm:$0xff]
        %v4980 = vld [vmem:[#allocation2 + $0x62] sm:$0xff]
        %v4981 = vld [vmem:[#allocation2 + $0x6a] sm:$0xff]
        %v4982 = vld [vmem:[#allocation2 + $0x7a] sm:$0xff]
        %v4983 = vld [vmem:[#allocation2 + $0x82] sm:$0xff]
        %v4984 = vld [vmem:[#allocation2 + $0x92] sm:$0xff]
        %v4985 = vld [vmem:[#allocation2 + $0x9a] sm:$0xff]
        %v4986 = vld [vmem:[#allocation2 + $0xaa] sm:$0xff]
        %v4987 = vld [vmem:[#allocation2 + $0xb2] sm:$0xff]
        %v4988 = vld [vmem:[#allocation2 + $0xc2] sm:$0xff]
        %v4989 = vld [vmem:[#allocation2 + $0xca] sm:$0xff]
        %v4990 = vld [vmem:[#allocation2 + $0xda] sm:$0xff]
        %v4991 = vld [vmem:[#allocation2 + $0xe2] sm:$0xff]
        %v4992 = vld [vmem:[#allocation2 + $0xf2] sm:$0xff]
        %v4993 = vld [vmem:[#allocation2 + $0xfa] sm:$0xff]
        %v4994 = vld [vmem:[#allocation2 + $0x10a] sm:$0xff]
        %v4995 = vld [vmem:[#allocation2 + $0x112] sm:$0xff]
        %v4996 = vld [vmem:[#allocation2 + $0x122] sm:$0xff]
        %v4997 = vld [vmem:[#allocation2 + $0x12a] sm:$0xff]
        %v4998 = vld [vmem:[#allocation2 + $0x13a] sm:$0xff]
        %v4999 = vld [vmem:[#allocation2 + $0x142] sm:$0xff]
        %v5000 = vld [vmem:[#allocation2 + $0x152] sm:$0xff]
        %v5001 = vld [vmem:[#allocation2 + $0x15a] sm:$0xff]
        %v5002 = vld [vmem:[#allocation2 + $0x16a] sm:$0xff]
        %v5003 = vld [vmem:[#allocation2 + $0x172] sm:$0xff]
        %v5004 = vpack.c.bf16 %v4973, %v4972
        %v5005 = vpack.c.bf16 %v4975, %v4974
        %v5006 = vpack.c.bf16 %v4977, %v4976
        %v5007 = vpack.c.bf16 %v4979, %v4978
        %v5008 = vpack.c.bf16 %v4981, %v4980
        %v5009 = vpack.c.bf16 %v4983, %v4982
        %v5010 = vpack.c.bf16 %v4985, %v4984
        %v5011 = vpack.c.bf16 %v4987, %v4986
        %v5012 = vpack.c.bf16 %v4989, %v4988
        %v5013 = vpack.c.bf16 %v4991, %v4990
        %v5014 = vpack.c.bf16 %v4993, %v4992
        %v5015 = vpack.c.bf16 %v4995, %v4994
        %v5016 = vpack.c.bf16 %v4997, %v4996
        %v5017 = vpack.c.bf16 %v4999, %v4998
        %v5018 = vpack.c.bf16 %v5001, %v5000
        %v5019 = vpack.c.bf16 %v5003, %v5002
        %5020 = vst [vmem:[#allocation3 + $0x10] sm:$0xff] %v5004
        %5021 = vst [vmem:[#allocation3 + $0x58] sm:$0xff] %v5005
        %5022 = vst [vmem:[#allocation3 + $0xa0] sm:$0xff] %v5006
        %5023 = vst [vmem:[#allocation3 + $0xe8] sm:$0xff] %v5007
        %5024 = vst [vmem:[#allocation3 + $0x130] sm:$0xff] %v5008
        %5025 = vst [vmem:[#allocation3 + $0x178] sm:$0xff] %v5009
        %5026 = vst [vmem:[#allocation3 + $0x1c0] sm:$0xff] %v5010
        %5027 = vst [vmem:[#allocation3 + $0x208] sm:$0xff] %v5011
        %5028 = vst [vmem:[#allocation3 + $0x250] sm:$0xff] %v5012
        %5029 = vst [vmem:[#allocation3 + $0x298] sm:$0xff] %v5013
        %5030 = vst [vmem:[#allocation3 + $0x2e0] sm:$0xff] %v5014
        %5031 = vst [vmem:[#allocation3 + $0x328] sm:$0xff] %v5015
        %5032 = vst [vmem:[#allocation3 + $0x370] sm:$0xff] %v5016
        %5033 = vst [vmem:[#allocation3 + $0x3b8] sm:$0xff] %v5017
        %5034 = vst [vmem:[#allocation3 + $0x400] sm:$0xff] %v5018
        %5035 = vst [vmem:[#allocation3 + $0x448] sm:$0xff] %v5019
        %v5036 = vld [vmem:[%s465] sm:$0xff]
        %v5037 = vld [vmem:[%s465 + $0x8] sm:$0xff]
        %v5038 = vld [vmem:[%s465 + $0x18] sm:$0xff]
        %v5039 = vld [vmem:[%s465 + $0x20] sm:$0xff]
        %v5040 = vld [vmem:[%s465 + $0x30] sm:$0xff]
        %v5041 = vld [vmem:[%s465 + $0x38] sm:$0xff]
        %v5042 = vld [vmem:[%s465 + $0x48] sm:$0xff]
        %v5043 = vld [vmem:[%s465 + $0x50] sm:$0xff]
        %v5044 = vld [vmem:[%s465 + $0x60] sm:$0xff]
        %v5045 = vld [vmem:[%s465 + $0x68] sm:$0xff]
        %v5046 = vld [vmem:[%s465 + $0x78] sm:$0xff]
        %v5047 = vld [vmem:[%s465 + $0x80] sm:$0xff]
        %v5048 = vld [vmem:[%s465 + $0x90] sm:$0xff]
        %v5049 = vld [vmem:[%s465 + $0x98] sm:$0xff]
        %v5050 = vld [vmem:[%s465 + $0xa8] sm:$0xff]
        %v5051 = vld [vmem:[%s465 + $0xb0] sm:$0xff]
        %v5052 = vld [vmem:[%s465 + $0xc0] sm:$0xff]
        %v5053 = vld [vmem:[%s465 + $0xc8] sm:$0xff]
        %v5054 = vld [vmem:[%s465 + $0xd8] sm:$0xff]
        %v5055 = vld [vmem:[%s465 + $0xe0] sm:$0xff]
        %v5056 = vld [vmem:[%s465 + $0xf0] sm:$0xff]
        %v5057 = vld [vmem:[%s465 + $0xf8] sm:$0xff]
        %v5058 = vld [vmem:[%s465 + $0x108] sm:$0xff]
        %v5059 = vld [vmem:[%s465 + $0x110] sm:$0xff]
        %v5060 = vld [vmem:[%s465 + $0x120] sm:$0xff]
        %v5061 = vld [vmem:[%s465 + $0x128] sm:$0xff]
        %v5062 = vld [vmem:[%s465 + $0x138] sm:$0xff]
        %v5063 = vld [vmem:[%s465 + $0x140] sm:$0xff]
        %v5064 = vld [vmem:[%s465 + $0x150] sm:$0xff]
        %v5065 = vld [vmem:[%s465 + $0x158] sm:$0xff]
        %v5066 = vld [vmem:[%s465 + $0x168] sm:$0xff]
        %v5067 = vld [vmem:[%s465 + $0x170] sm:$0xff]
        %v5068 = vpack.c.bf16 %v5037, %v5036
        %v5069 = vpack.c.bf16 %v5039, %v5038
        %v5070 = vpack.c.bf16 %v5041, %v5040
        %v5071 = vpack.c.bf16 %v5043, %v5042
        %v5072 = vpack.c.bf16 %v5045, %v5044
        %v5073 = vpack.c.bf16 %v5047, %v5046
        %v5074 = vpack.c.bf16 %v5049, %v5048
        %v5075 = vpack.c.bf16 %v5051, %v5050
        %v5076 = vpack.c.bf16 %v5053, %v5052
        %v5077 = vpack.c.bf16 %v5055, %v5054
        %v5078 = vpack.c.bf16 %v5057, %v5056
        %v5079 = vpack.c.bf16 %v5059, %v5058
        %v5080 = vpack.c.bf16 %v5061, %v5060
        %v5081 = vpack.c.bf16 %v5063, %v5062
        %v5082 = vpack.c.bf16 %v5065, %v5064
        %v5083 = vpack.c.bf16 %v5067, %v5066
        %5084 = vst [vmem:[#allocation3 + $0x18] sm:$0xff] %v5068
        %5085 = vst [vmem:[#allocation3 + $0x60] sm:$0xff] %v5069
        %5086 = vst [vmem:[#allocation3 + $0xa8] sm:$0xff] %v5070
        %5087 = vst [vmem:[#allocation3 + $0xf0] sm:$0xff] %v5071
        %5088 = vst [vmem:[#allocation3 + $0x138] sm:$0xff] %v5072
        %5089 = vst [vmem:[#allocation3 + $0x180] sm:$0xff] %v5073
        %5090 = vst [vmem:[#allocation3 + $0x1c8] sm:$0xff] %v5074
        %5091 = vst [vmem:[#allocation3 + $0x210] sm:$0xff] %v5075
        %5092 = vst [vmem:[#allocation3 + $0x258] sm:$0xff] %v5076
        %5093 = vst [vmem:[#allocation3 + $0x2a0] sm:$0xff] %v5077
        %5094 = vst [vmem:[#allocation3 + $0x2e8] sm:$0xff] %v5078
        %5095 = vst [vmem:[#allocation3 + $0x330] sm:$0xff] %v5079
        %5096 = vst [vmem:[#allocation3 + $0x378] sm:$0xff] %v5080
        %5097 = vst [vmem:[#allocation3 + $0x3c0] sm:$0xff] %v5081
        %5098 = vst [vmem:[#allocation3 + $0x408] sm:$0xff] %v5082
        %5099 = vst [vmem:[#allocation3 + $0x450] sm:$0xff] %v5083
        %v5100 = vld [vmem:[%s465 + $0x1] sm:$0xff]
        %v5101 = vld [vmem:[%s465 + $0x9] sm:$0xff]
        %v5102 = vld [vmem:[%s465 + $0x19] sm:$0xff]
        %v5103 = vld [vmem:[%s465 + $0x21] sm:$0xff]
        %v5104 = vld [vmem:[%s465 + $0x31] sm:$0xff]
        %v5105 = vld [vmem:[%s465 + $0x39] sm:$0xff]
        %v5106 = vld [vmem:[%s465 + $0x49] sm:$0xff]
        %v5107 = vld [vmem:[%s465 + $0x51] sm:$0xff]
        %v5108 = vld [vmem:[%s465 + $0x61] sm:$0xff]
        %v5109 = vld [vmem:[%s465 + $0x69] sm:$0xff]
        %v5110 = vld [vmem:[%s465 + $0x79] sm:$0xff]
        %v5111 = vld [vmem:[%s465 + $0x81] sm:$0xff]
        %v5112 = vld [vmem:[%s465 + $0x91] sm:$0xff]
        %v5113 = vld [vmem:[%s465 + $0x99] sm:$0xff]
        %v5114 = vld [vmem:[%s465 + $0xa9] sm:$0xff]
        %v5115 = vld [vmem:[%s465 + $0xb1] sm:$0xff]
        %v5116 = vld [vmem:[%s465 + $0xc1] sm:$0xff]
        %v5117 = vld [vmem:[%s465 + $0xc9] sm:$0xff]
        %v5118 = vld [vmem:[%s465 + $0xd9] sm:$0xff]
        %v5119 = vld [vmem:[%s465 + $0xe1] sm:$0xff]
        %v5120 = vld [vmem:[%s465 + $0xf1] sm:$0xff]
        %v5121 = vld [vmem:[%s465 + $0xf9] sm:$0xff]
        %v5122 = vld [vmem:[%s465 + $0x109] sm:$0xff]
        %v5123 = vld [vmem:[%s465 + $0x111] sm:$0xff]
        %v5124 = vld [vmem:[%s465 + $0x121] sm:$0xff]
        %v5125 = vld [vmem:[%s465 + $0x129] sm:$0xff]
        %v5126 = vld [vmem:[%s465 + $0x139] sm:$0xff]
        %v5127 = vld [vmem:[%s465 + $0x141] sm:$0xff]
        %v5128 = vld [vmem:[%s465 + $0x151] sm:$0xff]
        %v5129 = vld [vmem:[%s465 + $0x159] sm:$0xff]
        %v5130 = vld [vmem:[%s465 + $0x169] sm:$0xff]
        %v5131 = vld [vmem:[%s465 + $0x171] sm:$0xff]
        %v5132 = vpack.c.bf16 %v5101, %v5100
        %v5133 = vpack.c.bf16 %v5103, %v5102
        %v5134 = vpack.c.bf16 %v5105, %v5104
        %v5135 = vpack.c.bf16 %v5107, %v5106
        %v5136 = vpack.c.bf16 %v5109, %v5108
        %v5137 = vpack.c.bf16 %v5111, %v5110
        %v5138 = vpack.c.bf16 %v5113, %v5112
        %v5139 = vpack.c.bf16 %v5115, %v5114
        %v5140 = vpack.c.bf16 %v5117, %v5116
        %v5141 = vpack.c.bf16 %v5119, %v5118
        %v5142 = vpack.c.bf16 %v5121, %v5120
        %v5143 = vpack.c.bf16 %v5123, %v5122
        %v5144 = vpack.c.bf16 %v5125, %v5124
        %v5145 = vpack.c.bf16 %v5127, %v5126
        %v5146 = vpack.c.bf16 %v5129, %v5128
        %v5147 = vpack.c.bf16 %v5131, %v5130
        %5148 = vst [vmem:[#allocation3 + $0x20] sm:$0xff] %v5132
        %5149 = vst [vmem:[#allocation3 + $0x68] sm:$0xff] %v5133
        %5150 = vst [vmem:[#allocation3 + $0xb0] sm:$0xff] %v5134
        %5151 = vst [vmem:[#allocation3 + $0xf8] sm:$0xff] %v5135
        %5152 = vst [vmem:[#allocation3 + $0x140] sm:$0xff] %v5136
        %5153 = vst [vmem:[#allocation3 + $0x188] sm:$0xff] %v5137
        %5154 = vst [vmem:[#allocation3 + $0x1d0] sm:$0xff] %v5138
        %5155 = vst [vmem:[#allocation3 + $0x218] sm:$0xff] %v5139
        %5156 = vst [vmem:[#allocation3 + $0x260] sm:$0xff] %v5140
        %5157 = vst [vmem:[#allocation3 + $0x2a8] sm:$0xff] %v5141
        %5158 = vst [vmem:[#allocation3 + $0x2f0] sm:$0xff] %v5142
        %5159 = vst [vmem:[#allocation3 + $0x338] sm:$0xff] %v5143
        %5160 = vst [vmem:[#allocation3 + $0x380] sm:$0xff] %v5144
        %5161 = vst [vmem:[#allocation3 + $0x3c8] sm:$0xff] %v5145
        %5162 = vst [vmem:[#allocation3 + $0x410] sm:$0xff] %v5146
        %5163 = vst [vmem:[#allocation3 + $0x458] sm:$0xff] %v5147
        %v5164 = vld [vmem:[%s465 + $0x2] sm:$0xff]
        %v5165 = vld [vmem:[%s465 + $0xa] sm:$0xff]
        %v5166 = vld [vmem:[%s465 + $0x1a] sm:$0xff]
        %v5167 = vld [vmem:[%s465 + $0x22] sm:$0xff]
        %v5168 = vld [vmem:[%s465 + $0x32] sm:$0xff]
        %v5169 = vld [vmem:[%s465 + $0x3a] sm:$0xff]
        %v5170 = vld [vmem:[%s465 + $0x4a] sm:$0xff]
        %v5171 = vld [vmem:[%s465 + $0x52] sm:$0xff]
        %v5172 = vld [vmem:[%s465 + $0x62] sm:$0xff]
        %v5173 = vld [vmem:[%s465 + $0x6a] sm:$0xff]
        %v5174 = vld [vmem:[%s465 + $0x7a] sm:$0xff]
        %v5175 = vld [vmem:[%s465 + $0x82] sm:$0xff]
        %v5176 = vld [vmem:[%s465 + $0x92] sm:$0xff]
        %v5177 = vld [vmem:[%s465 + $0x9a] sm:$0xff]
        %v5178 = vld [vmem:[%s465 + $0xaa] sm:$0xff]
        %v5179 = vld [vmem:[%s465 + $0xb2] sm:$0xff]
        %v5180 = vld [vmem:[%s465 + $0xc2] sm:$0xff]
        %v5181 = vld [vmem:[%s465 + $0xca] sm:$0xff]
        %v5182 = vld [vmem:[%s465 + $0xda] sm:$0xff]
        %v5183 = vld [vmem:[%s465 + $0xe2] sm:$0xff]
        %v5184 = vld [vmem:[%s465 + $0xf2] sm:$0xff]
        %v5185 = vld [vmem:[%s465 + $0xfa] sm:$0xff]
        %v5186 = vld [vmem:[%s465 + $0x10a] sm:$0xff]
        %v5187 = vld [vmem:[%s465 + $0x112] sm:$0xff]
        %v5188 = vld [vmem:[%s465 + $0x122] sm:$0xff]
        %v5189 = vld [vmem:[%s465 + $0x12a] sm:$0xff]
        %v5190 = vld [vmem:[%s465 + $0x13a] sm:$0xff]
        %v5191 = vld [vmem:[%s465 + $0x142] sm:$0xff]
        %v5192 = vld [vmem:[%s465 + $0x152] sm:$0xff]
        %v5193 = vld [vmem:[%s465 + $0x15a] sm:$0xff]
        %v5194 = vld [vmem:[%s465 + $0x16a] sm:$0xff]
        %v5195 = vld [vmem:[%s465 + $0x172] sm:$0xff]
        %v5196 = vpack.c.bf16 %v5165, %v5164
        %v5197 = vpack.c.bf16 %v5167, %v5166
        %v5198 = vpack.c.bf16 %v5169, %v5168
        %v5199 = vpack.c.bf16 %v5171, %v5170
        %v5200 = vpack.c.bf16 %v5173, %v5172
        %v5201 = vpack.c.bf16 %v5175, %v5174
        %v5202 = vpack.c.bf16 %v5177, %v5176
        %v5203 = vpack.c.bf16 %v5179, %v5178
        %v5204 = vpack.c.bf16 %v5181, %v5180
        %v5205 = vpack.c.bf16 %v5183, %v5182
        %v5206 = vpack.c.bf16 %v5185, %v5184
        %v5207 = vpack.c.bf16 %v5187, %v5186
        %v5208 = vpack.c.bf16 %v5189, %v5188
        %v5209 = vpack.c.bf16 %v5191, %v5190
        %v5210 = vpack.c.bf16 %v5193, %v5192
        %v5211 = vpack.c.bf16 %v5195, %v5194
        %5212 = vst [vmem:[#allocation3 + $0x28] sm:$0xff] %v5196
        %5213 = vst [vmem:[#allocation3 + $0x70] sm:$0xff] %v5197
        %5214 = vst [vmem:[#allocation3 + $0xb8] sm:$0xff] %v5198
        %5215 = vst [vmem:[#allocation3 + $0x100] sm:$0xff] %v5199
        %5216 = vst [vmem:[#allocation3 + $0x148] sm:$0xff] %v5200
        %5217 = vst [vmem:[#allocation3 + $0x190] sm:$0xff] %v5201
        %5218 = vst [vmem:[#allocation3 + $0x1d8] sm:$0xff] %v5202
        %5219 = vst [vmem:[#allocation3 + $0x220] sm:$0xff] %v5203
        %5220 = vst [vmem:[#allocation3 + $0x268] sm:$0xff] %v5204
        %5221 = vst [vmem:[#allocation3 + $0x2b0] sm:$0xff] %v5205
        %5222 = vst [vmem:[#allocation3 + $0x2f8] sm:$0xff] %v5206
        %5223 = vst [vmem:[#allocation3 + $0x340] sm:$0xff] %v5207
        %5224 = vst [vmem:[#allocation3 + $0x388] sm:$0xff] %v5208
        %5225 = vst [vmem:[#allocation3 + $0x3d0] sm:$0xff] %v5209
        %5226 = vst [vmem:[#allocation3 + $0x418] sm:$0xff] %v5210
        %5227 = vst [vmem:[#allocation3 + $0x460] sm:$0xff] %v5211
        %v5228 = vld [vmem:[%s883] sm:$0xff]
        %v5229 = vld [vmem:[%s883 + $0x8] sm:$0xff]
        %v5230 = vld [vmem:[%s883 + $0x18] sm:$0xff]
        %v5231 = vld [vmem:[%s883 + $0x20] sm:$0xff]
        %v5232 = vld [vmem:[%s883 + $0x30] sm:$0xff]
        %v5233 = vld [vmem:[%s883 + $0x38] sm:$0xff]
        %v5234 = vld [vmem:[%s883 + $0x48] sm:$0xff]
        %v5235 = vld [vmem:[%s883 + $0x50] sm:$0xff]
        %v5236 = vld [vmem:[%s883 + $0x60] sm:$0xff]
        %v5237 = vld [vmem:[%s883 + $0x68] sm:$0xff]
        %v5238 = vld [vmem:[%s883 + $0x78] sm:$0xff]
        %v5239 = vld [vmem:[%s883 + $0x80] sm:$0xff]
        %v5240 = vld [vmem:[%s883 + $0x90] sm:$0xff]
        %v5241 = vld [vmem:[%s883 + $0x98] sm:$0xff]
        %v5242 = vld [vmem:[%s883 + $0xa8] sm:$0xff]
        %v5243 = vld [vmem:[%s883 + $0xb0] sm:$0xff]
        %v5244 = vld [vmem:[%s883 + $0xc0] sm:$0xff]
        %v5245 = vld [vmem:[%s883 + $0xc8] sm:$0xff]
        %v5246 = vld [vmem:[%s883 + $0xd8] sm:$0xff]
        %v5247 = vld [vmem:[%s883 + $0xe0] sm:$0xff]
        %v5248 = vld [vmem:[%s883 + $0xf0] sm:$0xff]
        %v5249 = vld [vmem:[%s883 + $0xf8] sm:$0xff]
        %v5250 = vld [vmem:[%s883 + $0x108] sm:$0xff]
        %v5251 = vld [vmem:[%s883 + $0x110] sm:$0xff]
        %v5252 = vld [vmem:[%s883 + $0x120] sm:$0xff]
        %v5253 = vld [vmem:[%s883 + $0x128] sm:$0xff]
        %v5254 = vld [vmem:[%s883 + $0x138] sm:$0xff]
        %v5255 = vld [vmem:[%s883 + $0x140] sm:$0xff]
        %v5256 = vld [vmem:[%s883 + $0x150] sm:$0xff]
        %v5257 = vld [vmem:[%s883 + $0x158] sm:$0xff]
        %v5258 = vld [vmem:[%s883 + $0x168] sm:$0xff]
        %v5259 = vld [vmem:[%s883 + $0x170] sm:$0xff]
        %v5260 = vpack.c.bf16 %v5229, %v5228
        %v5261 = vpack.c.bf16 %v5231, %v5230
        %v5262 = vpack.c.bf16 %v5233, %v5232
        %v5263 = vpack.c.bf16 %v5235, %v5234
        %v5264 = vpack.c.bf16 %v5237, %v5236
        %v5265 = vpack.c.bf16 %v5239, %v5238
        %v5266 = vpack.c.bf16 %v5241, %v5240
        %v5267 = vpack.c.bf16 %v5243, %v5242
        %v5268 = vpack.c.bf16 %v5245, %v5244
        %v5269 = vpack.c.bf16 %v5247, %v5246
        %v5270 = vpack.c.bf16 %v5249, %v5248
        %v5271 = vpack.c.bf16 %v5251, %v5250
        %v5272 = vpack.c.bf16 %v5253, %v5252
        %v5273 = vpack.c.bf16 %v5255, %v5254
        %v5274 = vpack.c.bf16 %v5257, %v5256
        %v5275 = vpack.c.bf16 %v5259, %v5258
        %5276 = vst [vmem:[#allocation3 + $0x30] sm:$0xff] %v5260
        %5277 = vst [vmem:[#allocation3 + $0x78] sm:$0xff] %v5261
        %5278 = vst [vmem:[#allocation3 + $0xc0] sm:$0xff] %v5262
        %5279 = vst [vmem:[#allocation3 + $0x108] sm:$0xff] %v5263
        %5280 = vst [vmem:[#allocation3 + $0x150] sm:$0xff] %v5264
        %5281 = vst [vmem:[#allocation3 + $0x198] sm:$0xff] %v5265
        %5282 = vst [vmem:[#allocation3 + $0x1e0] sm:$0xff] %v5266
        %5283 = vst [vmem:[#allocation3 + $0x228] sm:$0xff] %v5267
        %5284 = vst [vmem:[#allocation3 + $0x270] sm:$0xff] %v5268
        %5285 = vst [vmem:[#allocation3 + $0x2b8] sm:$0xff] %v5269
        %5286 = vst [vmem:[#allocation3 + $0x300] sm:$0xff] %v5270
        %5287 = vst [vmem:[#allocation3 + $0x348] sm:$0xff] %v5271
        %5288 = vst [vmem:[#allocation3 + $0x390] sm:$0xff] %v5272
        %5289 = vst [vmem:[#allocation3 + $0x3d8] sm:$0xff] %v5273
        %5290 = vst [vmem:[#allocation3 + $0x420] sm:$0xff] %v5274
        %5291 = vst [vmem:[#allocation3 + $0x468] sm:$0xff] %v5275
        %v5292 = vld [vmem:[%s883 + $0x1] sm:$0xff]
        %v5293 = vld [vmem:[%s883 + $0x9] sm:$0xff]
        %v5294 = vld [vmem:[%s883 + $0x19] sm:$0xff]
        %v5295 = vld [vmem:[%s883 + $0x21] sm:$0xff]
        %v5296 = vld [vmem:[%s883 + $0x31] sm:$0xff]
        %v5297 = vld [vmem:[%s883 + $0x39] sm:$0xff]
        %v5298 = vld [vmem:[%s883 + $0x49] sm:$0xff]
        %v5299 = vld [vmem:[%s883 + $0x51] sm:$0xff]
        %v5300 = vld [vmem:[%s883 + $0x61] sm:$0xff]
        %v5301 = vld [vmem:[%s883 + $0x69] sm:$0xff]
        %v5302 = vld [vmem:[%s883 + $0x79] sm:$0xff]
        %v5303 = vld [vmem:[%s883 + $0x81] sm:$0xff]
        %v5304 = vld [vmem:[%s883 + $0x91] sm:$0xff]
        %v5305 = vld [vmem:[%s883 + $0x99] sm:$0xff]
        %v5306 = vld [vmem:[%s883 + $0xa9] sm:$0xff]
        %v5307 = vld [vmem:[%s883 + $0xb1] sm:$0xff]
        %v5308 = vld [vmem:[%s883 + $0xc1] sm:$0xff]
        %v5309 = vld [vmem:[%s883 + $0xc9] sm:$0xff]
        %v5310 = vld [vmem:[%s883 + $0xd9] sm:$0xff]
        %v5311 = vld [vmem:[%s883 + $0xe1] sm:$0xff]
        %v5312 = vld [vmem:[%s883 + $0xf1] sm:$0xff]
        %v5313 = vld [vmem:[%s883 + $0xf9] sm:$0xff]
        %v5314 = vld [vmem:[%s883 + $0x109] sm:$0xff]
        %v5315 = vld [vmem:[%s883 + $0x111] sm:$0xff]
        %v5316 = vld [vmem:[%s883 + $0x121] sm:$0xff]
        %v5317 = vld [vmem:[%s883 + $0x129] sm:$0xff]
        %v5318 = vld [vmem:[%s883 + $0x139] sm:$0xff]
        %v5319 = vld [vmem:[%s883 + $0x141] sm:$0xff]
        %v5320 = vld [vmem:[%s883 + $0x151] sm:$0xff]
        %v5321 = vld [vmem:[%s883 + $0x159] sm:$0xff]
        %v5322 = vld [vmem:[%s883 + $0x169] sm:$0xff]
        %v5323 = vld [vmem:[%s883 + $0x171] sm:$0xff]
        %v5324 = vpack.c.bf16 %v5293, %v5292
        %v5325 = vpack.c.bf16 %v5295, %v5294
        %v5326 = vpack.c.bf16 %v5297, %v5296
        %v5327 = vpack.c.bf16 %v5299, %v5298
        %v5328 = vpack.c.bf16 %v5301, %v5300
        %v5329 = vpack.c.bf16 %v5303, %v5302
        %v5330 = vpack.c.bf16 %v5305, %v5304
        %v5331 = vpack.c.bf16 %v5307, %v5306
        %v5332 = vpack.c.bf16 %v5309, %v5308
        %v5333 = vpack.c.bf16 %v5311, %v5310
        %v5334 = vpack.c.bf16 %v5313, %v5312
        %v5335 = vpack.c.bf16 %v5315, %v5314
        %v5336 = vpack.c.bf16 %v5317, %v5316
        %v5337 = vpack.c.bf16 %v5319, %v5318
        %v5338 = vpack.c.bf16 %v5321, %v5320
        %v5339 = vpack.c.bf16 %v5323, %v5322
        %5340 = vst [vmem:[#allocation3 + $0x38] sm:$0xff] %v5324
        %5341 = vst [vmem:[#allocation3 + $0x80] sm:$0xff] %v5325
        %5342 = vst [vmem:[#allocation3 + $0xc8] sm:$0xff] %v5326
        %5343 = vst [vmem:[#allocation3 + $0x110] sm:$0xff] %v5327
        %5344 = vst [vmem:[#allocation3 + $0x158] sm:$0xff] %v5328
        %5345 = vst [vmem:[#allocation3 + $0x1a0] sm:$0xff] %v5329
        %5346 = vst [vmem:[#allocation3 + $0x1e8] sm:$0xff] %v5330
        %5347 = vst [vmem:[#allocation3 + $0x230] sm:$0xff] %v5331
        %5348 = vst [vmem:[#allocation3 + $0x278] sm:$0xff] %v5332
        %5349 = vst [vmem:[#allocation3 + $0x2c0] sm:$0xff] %v5333
        %5350 = vst [vmem:[#allocation3 + $0x308] sm:$0xff] %v5334
        %5351 = vst [vmem:[#allocation3 + $0x350] sm:$0xff] %v5335
        %5352 = vst [vmem:[#allocation3 + $0x398] sm:$0xff] %v5336
        %5353 = vst [vmem:[#allocation3 + $0x3e0] sm:$0xff] %v5337
        %5354 = vst [vmem:[#allocation3 + $0x428] sm:$0xff] %v5338
        %5355 = vst [vmem:[#allocation3 + $0x470] sm:$0xff] %v5339
        %v5356 = vld [vmem:[%s883 + $0x2] sm:$0xff]
        %v5357 = vld [vmem:[%s883 + $0xa] sm:$0xff]
        %v5358 = vld [vmem:[%s883 + $0x1a] sm:$0xff]
        %v5359 = vld [vmem:[%s883 + $0x22] sm:$0xff]
        %v5360 = vld [vmem:[%s883 + $0x32] sm:$0xff]
        %v5361 = vld [vmem:[%s883 + $0x3a] sm:$0xff]
        %v5362 = vld [vmem:[%s883 + $0x4a] sm:$0xff]
        %v5363 = vld [vmem:[%s883 + $0x52] sm:$0xff]
        %v5364 = vld [vmem:[%s883 + $0x62] sm:$0xff]
        %v5365 = vld [vmem:[%s883 + $0x6a] sm:$0xff]
        %v5366 = vld [vmem:[%s883 + $0x7a] sm:$0xff]
        %v5367 = vld [vmem:[%s883 + $0x82] sm:$0xff]
        %v5368 = vld [vmem:[%s883 + $0x92] sm:$0xff]
        %v5369 = vld [vmem:[%s883 + $0x9a] sm:$0xff]
        %v5370 = vld [vmem:[%s883 + $0xaa] sm:$0xff]
        %v5371 = vld [vmem:[%s883 + $0xb2] sm:$0xff]
        %v5372 = vld [vmem:[%s883 + $0xc2] sm:$0xff]
        %v5373 = vld [vmem:[%s883 + $0xca] sm:$0xff]
        %v5374 = vld [vmem:[%s883 + $0xda] sm:$0xff]
        %v5375 = vld [vmem:[%s883 + $0xe2] sm:$0xff]
        %v5376 = vld [vmem:[%s883 + $0xf2] sm:$0xff]
        %v5377 = vld [vmem:[%s883 + $0xfa] sm:$0xff]
        %v5378 = vld [vmem:[%s883 + $0x10a] sm:$0xff]
        %v5379 = vld [vmem:[%s883 + $0x112] sm:$0xff]
        %v5380 = vld [vmem:[%s883 + $0x122] sm:$0xff]
        %v5381 = vld [vmem:[%s883 + $0x12a] sm:$0xff]
        %v5382 = vld [vmem:[%s883 + $0x13a] sm:$0xff]
        %v5383 = vld [vmem:[%s883 + $0x142] sm:$0xff]
        %v5384 = vld [vmem:[%s883 + $0x152] sm:$0xff]
        %v5385 = vld [vmem:[%s883 + $0x15a] sm:$0xff]
        %v5386 = vld [vmem:[%s883 + $0x16a] sm:$0xff]
        %v5387 = vld [vmem:[%s883 + $0x172] sm:$0xff]
        %v5388 = vpack.c.bf16 %v5357, %v5356
        %v5389 = vpack.c.bf16 %v5359, %v5358
        %v5390 = vpack.c.bf16 %v5361, %v5360
        %v5391 = vpack.c.bf16 %v5363, %v5362
        %v5392 = vpack.c.bf16 %v5365, %v5364
        %v5393 = vpack.c.bf16 %v5367, %v5366
        %v5394 = vpack.c.bf16 %v5369, %v5368
        %v5395 = vpack.c.bf16 %v5371, %v5370
        %v5396 = vpack.c.bf16 %v5373, %v5372
        %v5397 = vpack.c.bf16 %v5375, %v5374
        %v5398 = vpack.c.bf16 %v5377, %v5376
        %v5399 = vpack.c.bf16 %v5379, %v5378
        %v5400 = vpack.c.bf16 %v5381, %v5380
        %v5401 = vpack.c.bf16 %v5383, %v5382
        %v5402 = vpack.c.bf16 %v5385, %v5384
        %v5403 = vpack.c.bf16 %v5387, %v5386
        %5404 = vst [vmem:[#allocation3 + $0x40] sm:$0xff] %v5388
        %5405 = vst [vmem:[#allocation3 + $0x88] sm:$0xff] %v5389
        %5406 = vst [vmem:[#allocation3 + $0xd0] sm:$0xff] %v5390
        %5407 = vst [vmem:[#allocation3 + $0x118] sm:$0xff] %v5391
        %5408 = vst [vmem:[#allocation3 + $0x160] sm:$0xff] %v5392
        %5409 = vst [vmem:[#allocation3 + $0x1a8] sm:$0xff] %v5393
        %5410 = vst [vmem:[#allocation3 + $0x1f0] sm:$0xff] %v5394
        %5411 = vst [vmem:[#allocation3 + $0x238] sm:$0xff] %v5395
        %5412 = vst [vmem:[#allocation3 + $0x280] sm:$0xff] %v5396
        %5413 = vst [vmem:[#allocation3 + $0x2c8] sm:$0xff] %v5397
        %5414 = vst [vmem:[#allocation3 + $0x310] sm:$0xff] %v5398
        %5415 = vst [vmem:[#allocation3 + $0x358] sm:$0xff] %v5399
        %5416 = vst [vmem:[#allocation3 + $0x3a0] sm:$0xff] %v5400
        %5417 = vst [vmem:[#allocation3 + $0x3e8] sm:$0xff] %v5401
        %5418 = vst [vmem:[#allocation3 + $0x430] sm:$0xff] %v5402
        %5419 = vst [vmem:[#allocation3 + $0x478] sm:$0xff] %v5403
        %v5420 = vld [vmem:[#allocation3] sm:$0xff]
        %v5421 = vld [vmem:[#allocation3 + $0x8] sm:$0xff]
        %v5422 = vld [vmem:[#allocation3 + $0x10] sm:$0xff]
        %v5423 = vld [vmem:[#allocation3 + $0x18] sm:$0xff]
        %v5424 = vld [vmem:[#allocation3 + $0x20] sm:$0xff]
        %v5425 = vld [vmem:[#allocation3 + $0x28] sm:$0xff]
        %v5426 = vld [vmem:[#allocation3 + $0x30] sm:$0xff]
        %v5427 = vld [vmem:[#allocation3 + $0x38] sm:$0xff]
        %v5428 = vld [vmem:[#allocation3 + $0x40] sm:$0xff]
        %v5429 = vld [vmem:[#allocation3 + $0x48] sm:$0xff]
        %v5430 = vld [vmem:[#allocation3 + $0x50] sm:$0xff]
        %v5431 = vld [vmem:[#allocation3 + $0x58] sm:$0xff]
        %v5432 = vld [vmem:[#allocation3 + $0x60] sm:$0xff]
        %v5433 = vld [vmem:[#allocation3 + $0x68] sm:$0xff]
        %v5434 = vld [vmem:[#allocation3 + $0x70] sm:$0xff]
        %v5435 = vld [vmem:[#allocation3 + $0x78] sm:$0xff]
        %v5436 = vld [vmem:[#allocation3 + $0x80] sm:$0xff]
        %v5437 = vld [vmem:[#allocation3 + $0x88] sm:$0xff]
        %v5438 = vld [vmem:[#allocation3 + $0x90] sm:$0xff]
        %v5439 = vld [vmem:[#allocation3 + $0x98] sm:$0xff]
        %v5440 = vld [vmem:[#allocation3 + $0xa0] sm:$0xff]
        %v5441 = vld [vmem:[#allocation3 + $0xa8] sm:$0xff]
        %v5442 = vld [vmem:[#allocation3 + $0xb0] sm:$0xff]
        %v5443 = vld [vmem:[#allocation3 + $0xb8] sm:$0xff]
        %v5444 = vld [vmem:[#allocation3 + $0xc0] sm:$0xff]
        %v5445 = vld [vmem:[#allocation3 + $0xc8] sm:$0xff]
        %v5446 = vld [vmem:[#allocation3 + $0xd0] sm:$0xff]
        %v5447 = vld [vmem:[#allocation3 + $0xd8] sm:$0xff]
        %v5448 = vld [vmem:[#allocation3 + $0xe0] sm:$0xff]
        %v5449 = vld [vmem:[#allocation3 + $0xe8] sm:$0xff]
        %v5450 = vld [vmem:[#allocation3 + $0xf0] sm:$0xff]
        %v5451 = vld [vmem:[#allocation3 + $0xf8] sm:$0xff]
        %v5452 = vld [vmem:[#allocation3 + $0x100] sm:$0xff]
        %v5453 = vld [vmem:[#allocation3 + $0x108] sm:$0xff]
        %v5454 = vld [vmem:[#allocation3 + $0x110] sm:$0xff]
        %v5455 = vld [vmem:[#allocation3 + $0x118] sm:$0xff]
        %v5456 = vld [vmem:[#allocation3 + $0x120] sm:$0xff]
        %v5457 = vld [vmem:[#allocation3 + $0x128] sm:$0xff]
        %v5458 = vld [vmem:[#allocation3 + $0x130] sm:$0xff]
        %v5459 = vld [vmem:[#allocation3 + $0x138] sm:$0xff]
        %v5460 = vld [vmem:[#allocation3 + $0x140] sm:$0xff]
        %v5461 = vld [vmem:[#allocation3 + $0x148] sm:$0xff]
        %v5462 = vld [vmem:[#allocation3 + $0x150] sm:$0xff]
        %v5463 = vld [vmem:[#allocation3 + $0x158] sm:$0xff]
        %v5464 = vld [vmem:[#allocation3 + $0x160] sm:$0xff]
        %v5465 = vld [vmem:[#allocation3 + $0x168] sm:$0xff]
        %v5466 = vld [vmem:[#allocation3 + $0x170] sm:$0xff]
        %v5467 = vld [vmem:[#allocation3 + $0x178] sm:$0xff]
        %v5468 = vld [vmem:[#allocation3 + $0x180] sm:$0xff]
        %v5469 = vld [vmem:[#allocation3 + $0x188] sm:$0xff]
        %v5470 = vld [vmem:[#allocation3 + $0x190] sm:$0xff]
        %v5471 = vld [vmem:[#allocation3 + $0x198] sm:$0xff]
        %v5472 = vld [vmem:[#allocation3 + $0x1a0] sm:$0xff]
        %v5473 = vld [vmem:[#allocation3 + $0x1a8] sm:$0xff]
        %v5474 = vld [vmem:[#allocation3 + $0x1b0] sm:$0xff]
        %v5475 = vld [vmem:[#allocation3 + $0x1b8] sm:$0xff]
        %v5476 = vld [vmem:[#allocation3 + $0x1c0] sm:$0xff]
        %v5477 = vld [vmem:[#allocation3 + $0x1c8] sm:$0xff]
        %v5478 = vld [vmem:[#allocation3 + $0x1d0] sm:$0xff]
        %v5479 = vld [vmem:[#allocation3 + $0x1d8] sm:$0xff]
        %v5480 = vld [vmem:[#allocation3 + $0x1e0] sm:$0xff]
        %v5481 = vld [vmem:[#allocation3 + $0x1e8] sm:$0xff]
        %v5482 = vld [vmem:[#allocation3 + $0x1f0] sm:$0xff]
        %v5483 = vld [vmem:[#allocation3 + $0x1f8] sm:$0xff]
        %v5484 = vld [vmem:[#allocation3 + $0x200] sm:$0xff]
        %v5485 = vld [vmem:[#allocation3 + $0x208] sm:$0xff]
        %v5486 = vld [vmem:[#allocation3 + $0x210] sm:$0xff]
        %v5487 = vld [vmem:[#allocation3 + $0x218] sm:$0xff]
        %v5488 = vld [vmem:[#allocation3 + $0x220] sm:$0xff]
        %v5489 = vld [vmem:[#allocation3 + $0x228] sm:$0xff]
        %v5490 = vld [vmem:[#allocation3 + $0x230] sm:$0xff]
        %v5491 = vld [vmem:[#allocation3 + $0x238] sm:$0xff]
        %v5492 = vld [vmem:[#allocation3 + $0x240] sm:$0xff]
        %v5493 = vld [vmem:[#allocation3 + $0x248] sm:$0xff]
        %v5494 = vld [vmem:[#allocation3 + $0x250] sm:$0xff]
        %v5495 = vld [vmem:[#allocation3 + $0x258] sm:$0xff]
        %v5496 = vld [vmem:[#allocation3 + $0x260] sm:$0xff]
        %v5497 = vld [vmem:[#allocation3 + $0x268] sm:$0xff]
        %v5498 = vld [vmem:[#allocation3 + $0x270] sm:$0xff]
        %v5499 = vld [vmem:[#allocation3 + $0x278] sm:$0xff]
        %v5500 = vld [vmem:[#allocation3 + $0x280] sm:$0xff]
        %v5501 = vld [vmem:[#allocation3 + $0x288] sm:$0xff]
        %v5502 = vld [vmem:[#allocation3 + $0x290] sm:$0xff]
        %v5503 = vld [vmem:[#allocation3 + $0x298] sm:$0xff]
        %v5504 = vld [vmem:[#allocation3 + $0x2a0] sm:$0xff]
        %v5505 = vld [vmem:[#allocation3 + $0x2a8] sm:$0xff]
        %v5506 = vld [vmem:[#allocation3 + $0x2b0] sm:$0xff]
        %v5507 = vld [vmem:[#allocation3 + $0x2b8] sm:$0xff]
        %v5508 = vld [vmem:[#allocation3 + $0x2c0] sm:$0xff]
        %v5509 = vld [vmem:[#allocation3 + $0x2c8] sm:$0xff]
        %v5510 = vld [vmem:[#allocation3 + $0x2d0] sm:$0xff]
        %v5511 = vld [vmem:[#allocation3 + $0x2d8] sm:$0xff]
        %v5512 = vld [vmem:[#allocation3 + $0x2e0] sm:$0xff]
        %v5513 = vld [vmem:[#allocation3 + $0x2e8] sm:$0xff]
        %v5514 = vld [vmem:[#allocation3 + $0x2f0] sm:$0xff]
        %v5515 = vld [vmem:[#allocation3 + $0x2f8] sm:$0xff]
        %v5516 = vld [vmem:[#allocation3 + $0x300] sm:$0xff]
        %v5517 = vld [vmem:[#allocation3 + $0x308] sm:$0xff]
        %v5518 = vld [vmem:[#allocation3 + $0x310] sm:$0xff]
        %v5519 = vld [vmem:[#allocation3 + $0x318] sm:$0xff]
        %v5520 = vld [vmem:[#allocation3 + $0x320] sm:$0xff]
        %v5521 = vld [vmem:[#allocation3 + $0x328] sm:$0xff]
        %v5522 = vld [vmem:[#allocation3 + $0x330] sm:$0xff]
        %v5523 = vld [vmem:[#allocation3 + $0x338] sm:$0xff]
        %v5524 = vld [vmem:[#allocation3 + $0x340] sm:$0xff]
        %v5525 = vld [vmem:[#allocation3 + $0x348] sm:$0xff]
        %v5526 = vld [vmem:[#allocation3 + $0x350] sm:$0xff]
        %v5527 = vld [vmem:[#allocation3 + $0x358] sm:$0xff]
        %v5528 = vld [vmem:[#allocation3 + $0x360] sm:$0xff]
        %v5529 = vld [vmem:[#allocation3 + $0x368] sm:$0xff]
        %v5530 = vld [vmem:[#allocation3 + $0x370] sm:$0xff]
        %v5531 = vld [vmem:[#allocation3 + $0x378] sm:$0xff]
        %v5532 = vld [vmem:[#allocation3 + $0x380] sm:$0xff]
        %v5533 = vld [vmem:[#allocation3 + $0x388] sm:$0xff]
        %v5534 = vld [vmem:[#allocation3 + $0x390] sm:$0xff]
        %v5535 = vld [vmem:[#allocation3 + $0x398] sm:$0xff]
        %v5536 = vld [vmem:[#allocation3 + $0x3a0] sm:$0xff]
        %v5537 = vld [vmem:[#allocation3 + $0x3a8] sm:$0xff]
        %v5538 = vld [vmem:[#allocation3 + $0x3b0] sm:$0xff]
        %v5539 = vld [vmem:[#allocation3 + $0x3b8] sm:$0xff]
        %v5540 = vld [vmem:[#allocation3 + $0x3c0] sm:$0xff]
        %v5541 = vld [vmem:[#allocation3 + $0x3c8] sm:$0xff]
        %v5542 = vld [vmem:[#allocation3 + $0x3d0] sm:$0xff]
        %v5543 = vld [vmem:[#allocation3 + $0x3d8] sm:$0xff]
        %v5544 = vld [vmem:[#allocation3 + $0x3e0] sm:$0xff]
        %v5545 = vld [vmem:[#allocation3 + $0x3e8] sm:$0xff]
        %v5546 = vld [vmem:[#allocation3 + $0x3f0] sm:$0xff]
        %v5547 = vld [vmem:[#allocation3 + $0x3f8] sm:$0xff]
        %v5548 = vld [vmem:[#allocation3 + $0x400] sm:$0xff]
        %v5549 = vld [vmem:[#allocation3 + $0x408] sm:$0xff]
        %v5550 = vld [vmem:[#allocation3 + $0x410] sm:$0xff]
        %v5551 = vld [vmem:[#allocation3 + $0x418] sm:$0xff]
        %v5552 = vld [vmem:[#allocation3 + $0x420] sm:$0xff]
        %v5553 = vld [vmem:[#allocation3 + $0x428] sm:$0xff]
        %v5554 = vld [vmem:[#allocation3 + $0x430] sm:$0xff]
        %v5555 = vld [vmem:[#allocation3 + $0x438] sm:$0xff]
        %v5556 = vld [vmem:[#allocation3 + $0x440] sm:$0xff]
        %v5557 = vld [vmem:[#allocation3 + $0x448] sm:$0xff]
        %v5558 = vld [vmem:[#allocation3 + $0x450] sm:$0xff]
        %v5559 = vld [vmem:[#allocation3 + $0x458] sm:$0xff]
        %v5560 = vld [vmem:[#allocation3 + $0x460] sm:$0xff]
        %v5561 = vld [vmem:[#allocation3 + $0x468] sm:$0xff]
        %v5562 = vld [vmem:[#allocation3 + $0x470] sm:$0xff]
        %v5563 = vld [vmem:[#allocation3 + $0x478] sm:$0xff]
        %v5564 = vld [vmem:[#allocation9] sm:$0xf]
        %v5565 = vld [vmem:[#allocation9 + $0x4] sm:$0xf]
        %v5566 = vld [vmem:[#allocation9 + $0x8] sm:$0xf]
        %v5567 = vld [vmem:[#allocation9 + $0xc] sm:$0xf]
        %v5568 = vld [vmem:[#allocation9 + $0x10] sm:$0xf]
        %v5569 = vld [vmem:[#allocation9 + $0x14] sm:$0xf]
        %v5570 = vld [vmem:[#allocation9 + $0x18] sm:$0xf]
        %v5571 = vld [vmem:[#allocation9 + $0x1c] sm:$0xf]
        %v5572 = vld [vmem:[#allocation9 + $0x20] sm:$0xf]
        %v5573 = vld [vmem:[#allocation9 + $0x24] sm:$0xf]
        %v5574 = vld [vmem:[#allocation9 + $0x28] sm:$0xf]
        %v5575 = vld [vmem:[#allocation9 + $0x2c] sm:$0xf]
        %v5576 = vld [vmem:[#allocation9 + $0x30] sm:$0xf]
        %v5577 = vld [vmem:[#allocation9 + $0x34] sm:$0xf]
        %v5578 = vld [vmem:[#allocation9 + $0x38] sm:$0xf]
        %v5579 = vld [vmem:[#allocation9 + $0x3c] sm:$0xf]
        %v5580 = vld [vmem:[#allocation9 + $0x40] sm:$0xf]
        %v5581 = vld [vmem:[#allocation9 + $0x44] sm:$0xf]
        %v5582 = vld [vmem:[#allocation9 + $0x48] sm:$0xf]
        %v5583 = vld [vmem:[#allocation9 + $0x4c] sm:$0xf]
        %v5584 = vld [vmem:[#allocation9 + $0x50] sm:$0xf]
        %v5585 = vld [vmem:[#allocation9 + $0x54] sm:$0xf]
        %v5586 = vld [vmem:[#allocation9 + $0x58] sm:$0xf]
        %v5587 = vld [vmem:[#allocation9 + $0x5c] sm:$0xf]
        %v5588 = vld [vmem:[#allocation9 + $0x60] sm:$0xf]
        %v5589 = vld [vmem:[#allocation9 + $0x64] sm:$0xf]
        %v5590 = vld [vmem:[#allocation9 + $0x68] sm:$0xf]
        %v5591 = vld [vmem:[#allocation9 + $0x6c] sm:$0xf]
        %v5592 = vld [vmem:[#allocation9 + $0x70] sm:$0xf]
        %v5593 = vld [vmem:[#allocation9 + $0x74] sm:$0xf]
        %v5594 = vld [vmem:[#allocation9 + $0x78] sm:$0xf]
        %v5595 = vld [vmem:[#allocation9 + $0x7c] sm:$0xf]
        %v5596 = vld [vmem:[#allocation9 + $0x80] sm:$0xf]
        %v5597 = vld [vmem:[#allocation9 + $0x84] sm:$0xf]
        %v5598 = vld [vmem:[#allocation9 + $0x88] sm:$0xf]
        %v5599 = vld [vmem:[#allocation9 + $0x8c] sm:$0xf]
        %v5600 = vld [vmem:[#allocation9 + $0x90] sm:$0xf]
        %v5601 = vld [vmem:[#allocation9 + $0x94] sm:$0xf]
        %v5602 = vld [vmem:[#allocation9 + $0x98] sm:$0xf]
        %v5603 = vld [vmem:[#allocation9 + $0x9c] sm:$0xf]
        %v5604 = vld [vmem:[#allocation9 + $0xa0] sm:$0xf]
        %v5605 = vld [vmem:[#allocation9 + $0xa4] sm:$0xf]
        %v5606 = vld [vmem:[#allocation9 + $0xa8] sm:$0xf]
        %v5607 = vld [vmem:[#allocation9 + $0xac] sm:$0xf]
        %v5608 = vld [vmem:[#allocation9 + $0xb0] sm:$0xf]
        %v5609 = vld [vmem:[#allocation9 + $0xb4] sm:$0xf]
        %v5610 = vld [vmem:[#allocation9 + $0xb8] sm:$0xf]
        %v5611 = vld [vmem:[#allocation9 + $0xbc] sm:$0xf]
        %v5612 = vld [vmem:[#allocation9 + $0xc0] sm:$0xf]
        %v5613 = vld [vmem:[#allocation9 + $0xc4] sm:$0xf]
        %v5614 = vld [vmem:[#allocation9 + $0xc8] sm:$0xf]
        %v5615 = vld [vmem:[#allocation9 + $0xcc] sm:$0xf]
        %v5616 = vld [vmem:[#allocation9 + $0xd0] sm:$0xf]
        %v5617 = vld [vmem:[#allocation9 + $0xd4] sm:$0xf]
        %v5618 = vld [vmem:[#allocation9 + $0xd8] sm:$0xf]
        %v5619 = vld [vmem:[#allocation9 + $0xdc] sm:$0xf]
        %v5620 = vld [vmem:[#allocation9 + $0xe0] sm:$0xf]
        %v5621 = vld [vmem:[#allocation9 + $0xe4] sm:$0xf]
        %v5622 = vld [vmem:[#allocation9 + $0xe8] sm:$0xf]
        %v5623 = vld [vmem:[#allocation9 + $0xec] sm:$0xf]
        %v5624 = vld [vmem:[#allocation9 + $0xf0] sm:$0xf]
        %v5625 = vld [vmem:[#allocation9 + $0xf4] sm:$0xf]
        %v5626 = vld [vmem:[#allocation9 + $0xf8] sm:$0xf]
        %v5627 = vld [vmem:[#allocation9 + $0xfc] sm:$0xf]
        %v5628 = vld [vmem:[#allocation9 + $0x100] sm:$0xf]
        %v5629 = vld [vmem:[#allocation9 + $0x104] sm:$0xf]
        %v5630 = vld [vmem:[#allocation9 + $0x108] sm:$0xf]
        %v5631 = vld [vmem:[#allocation9 + $0x10c] sm:$0xf]
        %v5632 = vld [vmem:[#allocation9 + $0x110] sm:$0xf]
        %v5633 = vld [vmem:[#allocation9 + $0x114] sm:$0xf]
        %v5634 = vld [vmem:[#allocation9 + $0x118] sm:$0xf]
        %v5635 = vld [vmem:[#allocation9 + $0x11c] sm:$0xf]
        %v5636 = vld [vmem:[#allocation9 + $0x120] sm:$0xf]
        %v5637 = vld [vmem:[#allocation9 + $0x124] sm:$0xf]
        %v5638 = vld [vmem:[#allocation9 + $0x128] sm:$0xf]
        %v5639 = vld [vmem:[#allocation9 + $0x12c] sm:$0xf]
        %v5640 = vld [vmem:[#allocation9 + $0x130] sm:$0xf]
        %v5641 = vld [vmem:[#allocation9 + $0x134] sm:$0xf]
        %v5642 = vld [vmem:[#allocation9 + $0x138] sm:$0xf]
        %v5643 = vld [vmem:[#allocation9 + $0x13c] sm:$0xf]
        %v5644 = vld [vmem:[#allocation9 + $0x140] sm:$0xf]
        %v5645 = vld [vmem:[#allocation9 + $0x144] sm:$0xf]
        %v5646 = vld [vmem:[#allocation9 + $0x148] sm:$0xf]
        %v5647 = vld [vmem:[#allocation9 + $0x14c] sm:$0xf]
        %v5648 = vld [vmem:[#allocation9 + $0x150] sm:$0xf]
        %v5649 = vld [vmem:[#allocation9 + $0x154] sm:$0xf]
        %v5650 = vld [vmem:[#allocation9 + $0x158] sm:$0xf]
        %v5651 = vld [vmem:[#allocation9 + $0x15c] sm:$0xf]
        %v5652 = vld [vmem:[#allocation9 + $0x160] sm:$0xf]
        %v5653 = vld [vmem:[#allocation9 + $0x164] sm:$0xf]
        %v5654 = vld [vmem:[#allocation9 + $0x168] sm:$0xf]
        %v5655 = vld [vmem:[#allocation9 + $0x16c] sm:$0xf]
        %v5656 = vld [vmem:[#allocation9 + $0x170] sm:$0xf]
        %v5657 = vld [vmem:[#allocation9 + $0x174] sm:$0xf]
        %v5658 = vld [vmem:[#allocation9 + $0x178] sm:$0xf]
        %v5659 = vld [vmem:[#allocation9 + $0x17c] sm:$0xf]
        %v5660 = vld [vmem:[#allocation9 + $0x180] sm:$0xf]
        %v5661 = vld [vmem:[#allocation9 + $0x184] sm:$0xf]
        %v5662 = vld [vmem:[#allocation9 + $0x188] sm:$0xf]
        %v5663 = vld [vmem:[#allocation9 + $0x18c] sm:$0xf]
        %v5664 = vld [vmem:[#allocation9 + $0x190] sm:$0xf]
        %v5665 = vld [vmem:[#allocation9 + $0x194] sm:$0xf]
        %v5666 = vld [vmem:[#allocation9 + $0x198] sm:$0xf]
        %v5667 = vld [vmem:[#allocation9 + $0x19c] sm:$0xf]
        %v5668 = vld [vmem:[#allocation9 + $0x1a0] sm:$0xf]
        %v5669 = vld [vmem:[#allocation9 + $0x1a4] sm:$0xf]
        %v5670 = vld [vmem:[#allocation9 + $0x1a8] sm:$0xf]
        %v5671 = vld [vmem:[#allocation9 + $0x1ac] sm:$0xf]
        %v5672 = vld [vmem:[#allocation9 + $0x1b0] sm:$0xf]
        %v5673 = vld [vmem:[#allocation9 + $0x1b4] sm:$0xf]
        %v5674 = vld [vmem:[#allocation9 + $0x1b8] sm:$0xf]
        %v5675 = vld [vmem:[#allocation9 + $0x1bc] sm:$0xf]
        %v5676 = vld [vmem:[#allocation9 + $0x1c0] sm:$0xf]
        %v5677 = vld [vmem:[#allocation9 + $0x1c4] sm:$0xf]
        %v5678 = vld [vmem:[#allocation9 + $0x1c8] sm:$0xf]
        %v5679 = vld [vmem:[#allocation9 + $0x1cc] sm:$0xf]
        %v5680 = vld [vmem:[#allocation9 + $0x1d0] sm:$0xf]
        %v5681 = vld [vmem:[#allocation9 + $0x1d4] sm:$0xf]
        %v5682 = vld [vmem:[#allocation9 + $0x1d8] sm:$0xf]
        %v5683 = vld [vmem:[#allocation9 + $0x1dc] sm:$0xf]
        %v5684 = vld [vmem:[#allocation9 + $0x1e0] sm:$0xf]
        %v5685 = vld [vmem:[#allocation9 + $0x1e4] sm:$0xf]
        %v5686 = vld [vmem:[#allocation9 + $0x1e8] sm:$0xf]
        %v5687 = vld [vmem:[#allocation9 + $0x1ec] sm:$0xf]
        %v5688 = vld [vmem:[#allocation9 + $0x1f0] sm:$0xf]
        %v5689 = vld [vmem:[#allocation9 + $0x1f4] sm:$0xf]
        %v5690 = vld [vmem:[#allocation9 + $0x1f8] sm:$0xf]
        %v5691 = vld [vmem:[#allocation9 + $0x1fc] sm:$0xf]
        %v5692 = vld [vmem:[#allocation9 + $0x200] sm:$0xf]
        %v5693 = vld [vmem:[#allocation9 + $0x204] sm:$0xf]
        %v5694 = vld [vmem:[#allocation9 + $0x208] sm:$0xf]
        %v5695 = vld [vmem:[#allocation9 + $0x20c] sm:$0xf]
        %v5696 = vld [vmem:[#allocation9 + $0x210] sm:$0xf]
        %v5697 = vld [vmem:[#allocation9 + $0x214] sm:$0xf]
        %v5698 = vld [vmem:[#allocation9 + $0x218] sm:$0xf]
        %v5699 = vld [vmem:[#allocation9 + $0x21c] sm:$0xf]
        %v5700 = vld [vmem:[#allocation9 + $0x220] sm:$0xf]
        %v5701 = vld [vmem:[#allocation9 + $0x224] sm:$0xf]
        %v5702 = vld [vmem:[#allocation9 + $0x228] sm:$0xf]
        %v5703 = vld [vmem:[#allocation9 + $0x22c] sm:$0xf]
        %v5704 = vld [vmem:[#allocation9 + $0x230] sm:$0xf]
        %v5705 = vld [vmem:[#allocation9 + $0x234] sm:$0xf]
        %v5706 = vld [vmem:[#allocation9 + $0x238] sm:$0xf]
        %v5707 = vld [vmem:[#allocation9 + $0x23c] sm:$0xf]
        %v5708 = vld [vmem:[%s6] sm:$0x1]
        %v5710 = vlaneseq
        %v5711 = vshrl.u32 %v5710, 7
        %v5712 = vsub.s32 0, %v5711
        %v5713 = vrot.slane %v5708, %v5712
        %v5859 = vunpack.c.l.b16 %v5564
        %v5860 = vunpack.c.l.b16 %v5565
        %v5861 = vunpack.c.l.b16 %v5566
        %v5862 = vunpack.c.l.b16 %v5567
        %v5863 = vunpack.c.l.b16 %v5568
        %v5864 = vunpack.c.l.b16 %v5569
        %v5865 = vunpack.c.l.b16 %v5570
        %v5866 = vunpack.c.l.b16 %v5571
        %v5867 = vunpack.c.l.b16 %v5572
        %v5868 = vunpack.c.l.b16 %v5573
        %v5869 = vunpack.c.l.b16 %v5574
        %v5870 = vunpack.c.l.b16 %v5575
        %v5871 = vunpack.c.l.b16 %v5576
        %v5872 = vunpack.c.l.b16 %v5577
        %v5873 = vunpack.c.l.b16 %v5578
        %v5874 = vunpack.c.l.b16 %v5579
        %v5875 = vunpack.c.l.b16 %v5580
        %v5876 = vunpack.c.l.b16 %v5581
        %v5877 = vunpack.c.l.b16 %v5582
        %v5878 = vunpack.c.l.b16 %v5583
        %v5879 = vunpack.c.l.b16 %v5584
        %v5880 = vunpack.c.l.b16 %v5585
        %v5881 = vunpack.c.l.b16 %v5586
        %v5882 = vunpack.c.l.b16 %v5587
        %v5883 = vunpack.c.l.b16 %v5588
        %v5884 = vunpack.c.l.b16 %v5589
        %v5885 = vunpack.c.l.b16 %v5590
        %v5886 = vunpack.c.l.b16 %v5591
        %v5887 = vunpack.c.l.b16 %v5592
        %v5888 = vunpack.c.l.b16 %v5593
        %v5889 = vunpack.c.l.b16 %v5594
        %v5890 = vunpack.c.l.b16 %v5595
        %v5891 = vunpack.c.l.b16 %v5596
        %v5892 = vunpack.c.l.b16 %v5597
        %v5893 = vunpack.c.l.b16 %v5598
        %v5894 = vunpack.c.l.b16 %v5599
        %v5895 = vunpack.c.l.b16 %v5600
        %v5896 = vunpack.c.l.b16 %v5601
        %v5897 = vunpack.c.l.b16 %v5602
        %v5898 = vunpack.c.l.b16 %v5603
        %v5899 = vunpack.c.l.b16 %v5604
        %v5900 = vunpack.c.l.b16 %v5605
        %v5901 = vunpack.c.l.b16 %v5606
        %v5902 = vunpack.c.l.b16 %v5607
        %v5903 = vunpack.c.l.b16 %v5608
        %v5904 = vunpack.c.l.b16 %v5609
        %v5905 = vunpack.c.l.b16 %v5610
        %v5906 = vunpack.c.l.b16 %v5611
        %v5907 = vunpack.c.l.b16 %v5612
        %v5908 = vunpack.c.l.b16 %v5613
        %v5909 = vunpack.c.l.b16 %v5614
        %v5910 = vunpack.c.l.b16 %v5615
        %v5911 = vunpack.c.l.b16 %v5616
        %v5912 = vunpack.c.l.b16 %v5617
        %v5913 = vunpack.c.l.b16 %v5618
        %v5914 = vunpack.c.l.b16 %v5619
        %v5915 = vunpack.c.l.b16 %v5620
        %v5916 = vunpack.c.l.b16 %v5621
        %v5917 = vunpack.c.l.b16 %v5622
        %v5918 = vunpack.c.l.b16 %v5623
        %v5919 = vunpack.c.l.b16 %v5624
        %v5920 = vunpack.c.l.b16 %v5625
        %v5921 = vunpack.c.l.b16 %v5626
        %v5922 = vunpack.c.l.b16 %v5627
        %v5923 = vunpack.c.l.b16 %v5628
        %v5924 = vunpack.c.l.b16 %v5629
        %v5925 = vunpack.c.l.b16 %v5630
        %v5926 = vunpack.c.l.b16 %v5631
        %v5927 = vunpack.c.l.b16 %v5632
        %v5928 = vunpack.c.l.b16 %v5633
        %v5929 = vunpack.c.l.b16 %v5634
        %v5930 = vunpack.c.l.b16 %v5635
        %v5931 = vunpack.c.l.b16 %v5636
        %v5932 = vunpack.c.l.b16 %v5637
        %v5933 = vunpack.c.l.b16 %v5638
        %v5934 = vunpack.c.l.b16 %v5639
        %v5935 = vunpack.c.l.b16 %v5640
        %v5936 = vunpack.c.l.b16 %v5641
        %v5937 = vunpack.c.l.b16 %v5642
        %v5938 = vunpack.c.l.b16 %v5643
        %v5939 = vunpack.c.l.b16 %v5644
        %v5940 = vunpack.c.l.b16 %v5645
        %v5941 = vunpack.c.l.b16 %v5646
        %v5942 = vunpack.c.l.b16 %v5647
        %v5943 = vunpack.c.l.b16 %v5648
        %v5944 = vunpack.c.l.b16 %v5649
        %v5945 = vunpack.c.l.b16 %v5650
        %v5946 = vunpack.c.l.b16 %v5651
        %v5947 = vunpack.c.l.b16 %v5652
        %v5948 = vunpack.c.l.b16 %v5653
        %v5949 = vunpack.c.l.b16 %v5654
        %v5950 = vunpack.c.l.b16 %v5655
        %v5951 = vunpack.c.l.b16 %v5656
        %v5952 = vunpack.c.l.b16 %v5657
        %v5953 = vunpack.c.l.b16 %v5658
        %v5954 = vunpack.c.l.b16 %v5659
        %v5955 = vunpack.c.l.b16 %v5660
        %v5956 = vunpack.c.l.b16 %v5661
        %v5957 = vunpack.c.l.b16 %v5662
        %v5958 = vunpack.c.l.b16 %v5663
        %v5959 = vunpack.c.l.b16 %v5664
        %v5960 = vunpack.c.l.b16 %v5665
        %v5961 = vunpack.c.l.b16 %v5666
        %v5962 = vunpack.c.l.b16 %v5667
        %v5963 = vunpack.c.l.b16 %v5668
        %v5964 = vunpack.c.l.b16 %v5669
        %v5965 = vunpack.c.l.b16 %v5670
        %v5966 = vunpack.c.l.b16 %v5671
        %v5967 = vunpack.c.l.b16 %v5672
        %v5968 = vunpack.c.l.b16 %v5673
        %v5969 = vunpack.c.l.b16 %v5674
        %v5970 = vunpack.c.l.b16 %v5675
        %v5971 = vunpack.c.l.b16 %v5676
        %v5972 = vunpack.c.l.b16 %v5677
        %v5973 = vunpack.c.l.b16 %v5678
        %v5974 = vunpack.c.l.b16 %v5679
        %v5975 = vunpack.c.l.b16 %v5680
        %v5976 = vunpack.c.l.b16 %v5681
        %v5977 = vunpack.c.l.b16 %v5682
        %v5978 = vunpack.c.l.b16 %v5683
        %v5979 = vunpack.c.l.b16 %v5684
        %v5980 = vunpack.c.l.b16 %v5685
        %v5981 = vunpack.c.l.b16 %v5686
        %v5982 = vunpack.c.l.b16 %v5687
        %v5983 = vunpack.c.l.b16 %v5688
        %v5984 = vunpack.c.l.b16 %v5689
        %v5985 = vunpack.c.l.b16 %v5690
        %v5986 = vunpack.c.l.b16 %v5691
        %v5987 = vunpack.c.l.b16 %v5692
        %v5988 = vunpack.c.l.b16 %v5693
        %v5989 = vunpack.c.l.b16 %v5694
        %v5990 = vunpack.c.l.b16 %v5695
        %v5991 = vunpack.c.l.b16 %v5696
        %v5992 = vunpack.c.l.b16 %v5697
        %v5993 = vunpack.c.l.b16 %v5698
        %v5994 = vunpack.c.l.b16 %v5699
        %v5995 = vunpack.c.l.b16 %v5700
        %v5996 = vunpack.c.l.b16 %v5701
        %v5997 = vunpack.c.l.b16 %v5702
        %v5998 = vunpack.c.l.b16 %v5703
        %v5999 = vunpack.c.l.b16 %v5704
        %v6000 = vunpack.c.l.b16 %v5705
        %v6001 = vunpack.c.l.b16 %v5706
        %v6002 = vunpack.c.l.b16 %v5707
        %v6003 = vpack.c.b16 %v5860, %v5859
        %v6004 = vpack.c.b16 %v5862, %v5861
        %v6005 = vpack.c.b16 %v5864, %v5863
        %v6006 = vpack.c.b16 %v5866, %v5865
        %v6007 = vpack.c.b16 %v5868, %v5867
        %v6008 = vpack.c.b16 %v5870, %v5869
        %v6009 = vpack.c.b16 %v5872, %v5871
        %v6010 = vpack.c.b16 %v5874, %v5873
        %v6011 = vpack.c.b16 %v5876, %v5875
        %v6012 = vpack.c.b16 %v5878, %v5877
        %v6013 = vpack.c.b16 %v5880, %v5879
        %v6014 = vpack.c.b16 %v5882, %v5881
        %v6015 = vpack.c.b16 %v5884, %v5883
        %v6016 = vpack.c.b16 %v5886, %v5885
        %v6017 = vpack.c.b16 %v5888, %v5887
        %v6018 = vpack.c.b16 %v5890, %v5889
        %v6019 = vpack.c.b16 %v5892, %v5891
        %v6020 = vpack.c.b16 %v5894, %v5893
        %v6021 = vpack.c.b16 %v5896, %v5895
        %v6022 = vpack.c.b16 %v5898, %v5897
        %v6023 = vpack.c.b16 %v5900, %v5899
        %v6024 = vpack.c.b16 %v5902, %v5901
        %v6025 = vpack.c.b16 %v5904, %v5903
        %v6026 = vpack.c.b16 %v5906, %v5905
        %v6027 = vpack.c.b16 %v5908, %v5907
        %v6028 = vpack.c.b16 %v5910, %v5909
        %v6029 = vpack.c.b16 %v5912, %v5911
        %v6030 = vpack.c.b16 %v5914, %v5913
        %v6031 = vpack.c.b16 %v5916, %v5915
        %v6032 = vpack.c.b16 %v5918, %v5917
        %v6033 = vpack.c.b16 %v5920, %v5919
        %v6034 = vpack.c.b16 %v5922, %v5921
        %v6035 = vpack.c.b16 %v5924, %v5923
        %v6036 = vpack.c.b16 %v5926, %v5925
        %v6037 = vpack.c.b16 %v5928, %v5927
        %v6038 = vpack.c.b16 %v5930, %v5929
        %v6039 = vpack.c.b16 %v5932, %v5931
        %v6040 = vpack.c.b16 %v5934, %v5933
        %v6041 = vpack.c.b16 %v5936, %v5935
        %v6042 = vpack.c.b16 %v5938, %v5937
        %v6043 = vpack.c.b16 %v5940, %v5939
        %v6044 = vpack.c.b16 %v5942, %v5941
        %v6045 = vpack.c.b16 %v5944, %v5943
        %v6046 = vpack.c.b16 %v5946, %v5945
        %v6047 = vpack.c.b16 %v5948, %v5947
        %v6048 = vpack.c.b16 %v5950, %v5949
        %v6049 = vpack.c.b16 %v5952, %v5951
        %v6050 = vpack.c.b16 %v5954, %v5953
        %v6051 = vpack.c.b16 %v5956, %v5955
        %v6052 = vpack.c.b16 %v5958, %v5957
        %v6053 = vpack.c.b16 %v5960, %v5959
        %v6054 = vpack.c.b16 %v5962, %v5961
        %v6055 = vpack.c.b16 %v5964, %v5963
        %v6056 = vpack.c.b16 %v5966, %v5965
        %v6057 = vpack.c.b16 %v5968, %v5967
        %v6058 = vpack.c.b16 %v5970, %v5969
        %v6059 = vpack.c.b16 %v5972, %v5971
        %v6060 = vpack.c.b16 %v5974, %v5973
        %v6061 = vpack.c.b16 %v5976, %v5975
        %v6062 = vpack.c.b16 %v5978, %v5977
        %v6063 = vpack.c.b16 %v5980, %v5979
        %v6064 = vpack.c.b16 %v5982, %v5981
        %v6065 = vpack.c.b16 %v5984, %v5983
        %v6066 = vpack.c.b16 %v5986, %v5985
        %v6067 = vpack.c.b16 %v5988, %v5987
        %v6068 = vpack.c.b16 %v5990, %v5989
        %v6069 = vpack.c.b16 %v5992, %v5991
        %v6070 = vpack.c.b16 %v5994, %v5993
        %v6071 = vpack.c.b16 %v5996, %v5995
        %v6072 = vpack.c.b16 %v5998, %v5997
        %v6073 = vpack.c.b16 %v6000, %v5999
        %v6074 = vpack.c.b16 %v6002, %v6001
        %6147 = vmatprep.subr.bf16.mxu0 0
        %6148 = vmatpush1.bf16.msra.mxu0 %v6003
        %6149 = vmatprep.subr.bf16.mxu0 0
        %6150 = vmatpush1.bf16.msra.mxu0 %v6004
        %6151 = vmatprep.subr.bf16.mxu0 0
        %6152 = vmatpush1.bf16.msra.mxu0 %v6005
        %6153 = vmatprep.subr.bf16.mxu0 0
        %6154 = vmatpush1.bf16.msra.mxu0 %v6006
        %6155 = vmatprep.subr.bf16.mxu0 0
        %6156 = vmatpush1.bf16.msra.mxu0 %v6007
        %6157 = vmatprep.subr.bf16.mxu0 0
        %6158 = vmatpush1.bf16.msra.mxu0 %v6008
        %6159 = vmatprep.subr.bf16.mxu0 0
        %6160 = vmatpush1.bf16.msra.mxu0 %v6009
        %6161 = vmatprep.subr.bf16.mxu0 0
        %6162 = vmatpush1.bf16.msra.mxu0 %v6010
        %6163 = vmatprep.subr.bf16.mxu0 0
        %6164 = vmatpush1.bf16.msra.mxu0 %v6011
        %6165 = vmatprep.subr.bf16.mxu0 0
        %6166 = vmatpush1.bf16.msra.mxu0 %v6012
        %6167 = vmatprep.subr.bf16.mxu0 0
        %6168 = vmatpush1.bf16.msra.mxu0 %v6013
        %6169 = vmatprep.subr.bf16.mxu0 0
        %6170 = vmatpush1.bf16.msra.mxu0 %v6014
        %6171 = vmatprep.subr.bf16.mxu0 0
        %6172 = vmatpush1.bf16.msra.mxu0 %v6015
        %6173 = vmatprep.subr.bf16.mxu0 0
        %6174 = vmatpush1.bf16.msra.mxu0 %v6016
        %6175 = vmatprep.subr.bf16.mxu0 0
        %6176 = vmatpush1.bf16.msra.mxu0 %v6017
        %6177 = vmatprep.subr.bf16.mxu0 0
        %6178 = vmatpush1.bf16.msra.mxu0 %v6018
        %6179 = vmatprep.mubr.bf16.mxu0 %v5421
        %6180 = vmatmul.mubr.bf16.gmra.mrb[0].mxu0 %v5420
        %v6181 = vpop.f32.mrb[0].mxu0
        %v6182 = vadd.f32 %v5713, %v6181
        %v6183 = vpop.f32.mrb[0].mxu0
        %v6184 = vpop.f32.mrb[0].mxu0
        %v6185 = vadd.f32 %v5713, %v6184
        %v6186 = vpop.f32.mrb[0].mxu0
        %6187 = vmatprep.mubr.bf16.mxu0 %v5430
        %6188 = vmatmul.mubr.bf16.gmra.mrb[0].mxu0 %v5429
        %v6189 = vpop.f32.mrb[0].mxu0
        %v6190 = vadd.f32 %v5713, %v6189
        %v6191 = vpop.f32.mrb[0].mxu0
        %v6192 = vpop.f32.mrb[0].mxu0
        %v6193 = vadd.f32 %v5713, %v6192
        %v6194 = vpop.f32.mrb[0].mxu0
        %6195 = vmatprep.mubr.bf16.mxu0 %v5439
        %6196 = vmatmul.mubr.bf16.gmra.mrb[0].mxu0 %v5438
        %v6197 = vpop.f32.mrb[0].mxu0
        %v6198 = vadd.f32 %v5713, %v6197
        %v6199 = vpop.f32.mrb[0].mxu0
        %v6200 = vpop.f32.mrb[0].mxu0
        %v6201 = vadd.f32 %v5713, %v6200
        %v6202 = vpop.f32.mrb[0].mxu0
        %6203 = vmatprep.mubr.bf16.mxu0 %v5448
        %6204 = vmatmul.mubr.bf16.gmra.mrb[0].mxu0 %v5447
        %v6205 = vpop.f32.mrb[0].mxu0
        %v6206 = vadd.f32 %v5713, %v6205
        %v6207 = vpop.f32.mrb[0].mxu0
        %v6208 = vpop.f32.mrb[0].mxu0
        %v6209 = vadd.f32 %v5713, %v6208
        %v6210 = vpop.f32.mrb[0].mxu0
        %6211 = vmatprep.mubr.bf16.mxu0 %v5457
        %6212 = vmatmul.mubr.bf16.gmra.mrb[0].mxu0 %v5456
        %v6213 = vpop.f32.mrb[0].mxu0
        %v6214 = vadd.f32 %v5713, %v6213
        %v6215 = vpop.f32.mrb[0].mxu0
        %v6216 = vpop.f32.mrb[0].mxu0
        %v6217 = vadd.f32 %v5713, %v6216
        %v6218 = vpop.f32.mrb[0].mxu0
        %6219 = vmatprep.mubr.bf16.mxu0 %v5466
        %6220 = vmatmul.mubr.bf16.gmra.mrb[0].mxu0 %v5465
        %v6221 = vpop.f32.mrb[0].mxu0
        %v6222 = vadd.f32 %v5713, %v6221
        %v6223 = vpop.f32.mrb[0].mxu0
        %v6224 = vpop.f32.mrb[0].mxu0
        %v6225 = vadd.f32 %v5713, %v6224
        %v6226 = vpop.f32.mrb[0].mxu0
        %6227 = vmatprep.mubr.bf16.mxu0 %v5475
        %6228 = vmatmul.mubr.bf16.gmra.mrb[0].mxu0 %v5474
        %v6229 = vpop.f32.mrb[0].mxu0
        %v6230 = vadd.f32 %v5713, %v6229
        %v6231 = vpop.f32.mrb[0].mxu0
        %v6232 = vpop.f32.mrb[0].mxu0
        %v6233 = vadd.f32 %v5713, %v6232
        %v6234 = vpop.f32.mrb[0].mxu0
        %6235 = vmatprep.mubr.bf16.mxu0 %v5484
        %6236 = vmatmul.mubr.bf16.gmra.mrb[0].mxu0 %v5483
        %v6237 = vpop.f32.mrb[0].mxu0
        %v6238 = vadd.f32 %v5713, %v6237
        %v6239 = vpop.f32.mrb[0].mxu0
        %v6240 = vpop.f32.mrb[0].mxu0
        %v6241 = vadd.f32 %v5713, %v6240
        %v6242 = vpop.f32.mrb[0].mxu0
        %6243 = vmatprep.mubr.bf16.mxu0 %v5493
        %6244 = vmatmul.mubr.bf16.gmra.mrb[0].mxu0 %v5492
        %v6245 = vpop.f32.mrb[0].mxu0
        %v6246 = vadd.f32 %v5713, %v6245
        %v6247 = vpop.f32.mrb[0].mxu0
        %v6248 = vpop.f32.mrb[0].mxu0
        %v6249 = vadd.f32 %v5713, %v6248
        %v6250 = vpop.f32.mrb[0].mxu0
        %6251 = vmatprep.mubr.bf16.mxu0 %v5502
        %6252 = vmatmul.mubr.bf16.gmra.mrb[0].mxu0 %v5501
        %v6253 = vpop.f32.mrb[0].mxu0
        %v6254 = vadd.f32 %v5713, %v6253
        %v6255 = vpop.f32.mrb[0].mxu0
        %v6256 = vpop.f32.mrb[0].mxu0
        %v6257 = vadd.f32 %v5713, %v6256
        %v6258 = vpop.f32.mrb[0].mxu0
        %6259 = vmatprep.mubr.bf16.mxu0 %v5511
        %6260 = vmatmul.mubr.bf16.gmra.mrb[0].mxu0 %v5510
        %v6261 = vpop.f32.mrb[0].mxu0
        %v6262 = vadd.f32 %v5713, %v6261
        %v6263 = vpop.f32.mrb[0].mxu0
        %v6264 = vpop.f32.mrb[0].mxu0
        %v6265 = vadd.f32 %v5713, %v6264
        %v6266 = vpop.f32.mrb[0].mxu0
        %6267 = vmatprep.mubr.bf16.mxu0 %v5520
        %6268 = vmatmul.mubr.bf16.gmra.mrb[0].mxu0 %v5519
        %v6269 = vpop.f32.mrb[0].mxu0
        %v6270 = vadd.f32 %v5713, %v6269
        %v6271 = vpop.f32.mrb[0].mxu0
        %v6272 = vpop.f32.mrb[0].mxu0
        %v6273 = vadd.f32 %v5713, %v6272
        %v6274 = vpop.f32.mrb[0].mxu0
        %6275 = vmatprep.mubr.bf16.mxu0 %v5529
        %6276 = vmatmul.mubr.bf16.gmra.mrb[0].mxu0 %v5528
        %v6277 = vpop.f32.mrb[0].mxu0
        %v6278 = vadd.f32 %v5713, %v6277
        %v6279 = vpop.f32.mrb[0].mxu0
        %v6280 = vpop.f32.mrb[0].mxu0
        %v6281 = vadd.f32 %v5713, %v6280
        %v6282 = vpop.f32.mrb[0].mxu0
        %6283 = vmatprep.mubr.bf16.mxu0 %v5538
        %6284 = vmatmul.mubr.bf16.gmra.mrb[0].mxu0 %v5537
        %v6285 = vpop.f32.mrb[0].mxu0
        %v6286 = vadd.f32 %v5713, %v6285
        %v6287 = vpop.f32.mrb[0].mxu0
        %v6288 = vpop.f32.mrb[0].mxu0
        %v6289 = vadd.f32 %v5713, %v6288
        %v6290 = vpop.f32.mrb[0].mxu0
        %6291 = vmatprep.mubr.bf16.mxu0 %v5547
        %6292 = vmatmul.mubr.bf16.gmra.mrb[0].mxu0 %v5546
        %v6293 = vpop.f32.mrb[0].mxu0
        %v6294 = vadd.f32 %v5713, %v6293
        %v6295 = vpop.f32.mrb[0].mxu0
        %v6296 = vpop.f32.mrb[0].mxu0
        %v6297 = vadd.f32 %v5713, %v6296
        %v6298 = vpop.f32.mrb[0].mxu0
        %6299 = vmatprep.mubr.bf16.mxu0 %v5556
        %6300 = vmatmul.mubr.bf16.gmra.mrb[0].mxu0 %v5555
        %v6301 = vpop.f32.mrb[0].mxu0
        %v6302 = vadd.f32 %v5713, %v6301
        %v6303 = vpop.f32.mrb[0].mxu0
        %v6304 = vpop.f32.mrb[0].mxu0
        %v6305 = vadd.f32 %v5713, %v6304
        %v6306 = vpop.f32.mrb[0].mxu0
        %6307 = vdwg.mxu0
        %6308 = vmatprep.subr.bf16.mxu0 0
        %6309 = vmatpush1.bf16.msra.mxu0 %v6019
        %6310 = vmatprep.subr.bf16.mxu0 0
        %6311 = vmatpush1.bf16.msra.mxu0 %v6020
        %6312 = vmatprep.subr.bf16.mxu0 0
        %6313 = vmatpush1.bf16.msra.mxu0 %v6021
        %6314 = vmatprep.subr.bf16.mxu0 0
        %6315 = vmatpush1.bf16.msra.mxu0 %v6022
        %6316 = vmatprep.subr.bf16.mxu0 0
        %6317 = vmatpush1.bf16.msra.mxu0 %v6023
        %6318 = vmatprep.subr.bf16.mxu0 0
        %6319 = vmatpush1.bf16.msra.mxu0 %v6024
        %6320 = vmatprep.subr.bf16.mxu0 0
        %6321 = vmatpush1.bf16.msra.mxu0 %v6025
        %6322 = vmatprep.subr.bf16.mxu0 0
        %6323 = vmatpush1.bf16.msra.mxu0 %v6026
        %6324 = vmatprep.subr.bf16.mxu0 0
        %6325 = vmatpush1.bf16.msra.mxu0 %v6027
        %6326 = vmatprep.subr.bf16.mxu0 0
        %6327 = vmatpush1.bf16.msra.mxu0 %v6028
        %6328 = vmatprep.subr.bf16.mxu0 0
        %6329 = vmatpush1.bf16.msra.mxu0 %v6029
        %6330 = vmatprep.subr.bf16.mxu0 0
        %6331 = vmatpush1.bf16.msra.mxu0 %v6030
        %6332 = vmatprep.subr.bf16.mxu0 0
        %6333 = vmatpush1.bf16.msra.mxu0 %v6031
        %6334 = vmatprep.subr.bf16.mxu0 0
        %6335 = vmatpush1.bf16.msra.mxu0 %v6032
        %6336 = vmatprep.subr.bf16.mxu0 0
        %6337 = vmatpush1.bf16.msra.mxu0 %v6033
        %6338 = vmatprep.subr.bf16.mxu0 0
        %6339 = vmatpush1.bf16.msra.mxu0 %v6034
        %6340 = vmatprep.mubr.bf16.mxu0 %v5423
        %6341 = vmatmul.mubr.bf16.gmra.mrb[0].mxu0 %v5422
        %v6342 = vpop.f32.mrb[0].mxu0
        %v6343 = vadd.f32 %v6182, %v6342
        %v6344 = vpop.f32.mrb[0].mxu0
        %v6345 = vpop.f32.mrb[0].mxu0
        %v6346 = vadd.f32 %v6185, %v6345
        %v6347 = vpop.f32.mrb[0].mxu0
        %6348 = vmatprep.mubr.bf16.mxu0 %v5432
        %6349 = vmatmul.mubr.bf16.gmra.mrb[0].mxu0 %v5431
        %v6350 = vpop.f32.mrb[0].mxu0
        %v6351 = vadd.f32 %v6190, %v6350
        %v6352 = vpop.f32.mrb[0].mxu0
        %v6353 = vpop.f32.mrb[0].mxu0
        %v6354 = vadd.f32 %v6193, %v6353
        %v6355 = vpop.f32.mrb[0].mxu0
        %6356 = vmatprep.mubr.bf16.mxu0 %v5441
        %6357 = vmatmul.mubr.bf16.gmra.mrb[0].mxu0 %v5440
        %v6358 = vpop.f32.mrb[0].mxu0
        %v6359 = vadd.f32 %v6198, %v6358
        %v6360 = vpop.f32.mrb[0].mxu0
        %v6361 = vpop.f32.mrb[0].mxu0
        %v6362 = vadd.f32 %v6201, %v6361
        %v6363 = vpop.f32.mrb[0].mxu0
        %6364 = vmatprep.mubr.bf16.mxu0 %v5450
        %6365 = vmatmul.mubr.bf16.gmra.mrb[0].mxu0 %v5449
        %v6366 = vpop.f32.mrb[0].mxu0
        %v6367 = vadd.f32 %v6206, %v6366
        %v6368 = vpop.f32.mrb[0].mxu0
        %v6369 = vpop.f32.mrb[0].mxu0
        %v6370 = vadd.f32 %v6209, %v6369
        %v6371 = vpop.f32.mrb[0].mxu0
        %6372 = vmatprep.mubr.bf16.mxu0 %v5459
        %6373 = vmatmul.mubr.bf16.gmra.mrb[0].mxu0 %v5458
        %v6374 = vpop.f32.mrb[0].mxu0
        %v6375 = vadd.f32 %v6214, %v6374
        %v6376 = vpop.f32.mrb[0].mxu0
        %v6377 = vpop.f32.mrb[0].mxu0
        %v6378 = vadd.f32 %v6217, %v6377
        %v6379 = vpop.f32.mrb[0].mxu0
        %6380 = vmatprep.mubr.bf16.mxu0 %v5468
        %6381 = vmatmul.mubr.bf16.gmra.mrb[0].mxu0 %v5467
        %v6382 = vpop.f32.mrb[0].mxu0
        %v6383 = vadd.f32 %v6222, %v6382
        %v6384 = vpop.f32.mrb[0].mxu0
        %v6385 = vpop.f32.mrb[0].mxu0
        %v6386 = vadd.f32 %v6225, %v6385
        %v6387 = vpop.f32.mrb[0].mxu0
        %6388 = vmatprep.mubr.bf16.mxu0 %v5477
        %6389 = vmatmul.mubr.bf16.gmra.mrb[0].mxu0 %v5476
        %v6390 = vpop.f32.mrb[0].mxu0
        %v6391 = vadd.f32 %v6230, %v6390
        %v6392 = vpop.f32.mrb[0].mxu0
        %v6393 = vpop.f32.mrb[0].mxu0
        %v6394 = vadd.f32 %v6233, %v6393
        %v6395 = vpop.f32.mrb[0].mxu0
        %6396 = vmatprep.mubr.bf16.mxu0 %v5486
        %6397 = vmatmul.mubr.bf16.gmra.mrb[0].mxu0 %v5485
        %v6398 = vpop.f32.mrb[0].mxu0
        %v6399 = vadd.f32 %v6238, %v6398
        %v6400 = vpop.f32.mrb[0].mxu0
        %v6401 = vpop.f32.mrb[0].mxu0
        %v6402 = vadd.f32 %v6241, %v6401
        %v6403 = vpop.f32.mrb[0].mxu0
        %6404 = vmatprep.mubr.bf16.mxu0 %v5495
        %6405 = vmatmul.mubr.bf16.gmra.mrb[0].mxu0 %v5494
        %v6406 = vpop.f32.mrb[0].mxu0
        %v6407 = vadd.f32 %v6246, %v6406
        %v6408 = vpop.f32.mrb[0].mxu0
        %v6409 = vpop.f32.mrb[0].mxu0
        %v6410 = vadd.f32 %v6249, %v6409
        %v6411 = vpop.f32.mrb[0].mxu0
        %6412 = vmatprep.mubr.bf16.mxu0 %v5504
        %6413 = vmatmul.mubr.bf16.gmra.mrb[0].mxu0 %v5503
        %v6414 = vpop.f32.mrb[0].mxu0
        %v6415 = vadd.f32 %v6254, %v6414
        %v6416 = vpop.f32.mrb[0].mxu0
        %v6417 = vpop.f32.mrb[0].mxu0
        %v6418 = vadd.f32 %v6257, %v6417
        %v6419 = vpop.f32.mrb[0].mxu0
        %6420 = vmatprep.mubr.bf16.mxu0 %v5513
        %6421 = vmatmul.mubr.bf16.gmra.mrb[0].mxu0 %v5512
        %v6422 = vpop.f32.mrb[0].mxu0
        %v6423 = vadd.f32 %v6262, %v6422
        %v6424 = vpop.f32.mrb[0].mxu0
        %v6425 = vpop.f32.mrb[0].mxu0
        %v6426 = vadd.f32 %v6265, %v6425
        %v6427 = vpop.f32.mrb[0].mxu0
        %6428 = vmatprep.mubr.bf16.mxu0 %v5522
        %6429 = vmatmul.mubr.bf16.gmra.mrb[0].mxu0 %v5521
        %v6430 = vpop.f32.mrb[0].mxu0
        %v6431 = vadd.f32 %v6270, %v6430
        %v6432 = vpop.f32.mrb[0].mxu0
        %v6433 = vpop.f32.mrb[0].mxu0
        %v6434 = vadd.f32 %v6273, %v6433
        %v6435 = vpop.f32.mrb[0].mxu0
        %6436 = vmatprep.mubr.bf16.mxu0 %v5531
        %6437 = vmatmul.mubr.bf16.gmra.mrb[0].mxu0 %v5530
        %v6438 = vpop.f32.mrb[0].mxu0
        %v6439 = vadd.f32 %v6278, %v6438
        %v6440 = vpop.f32.mrb[0].mxu0
        %v6441 = vpop.f32.mrb[0].mxu0
        %v6442 = vadd.f32 %v6281, %v6441
        %v6443 = vpop.f32.mrb[0].mxu0
        %6444 = vmatprep.mubr.bf16.mxu0 %v5540
        %6445 = vmatmul.mubr.bf16.gmra.mrb[0].mxu0 %v5539
        %v6446 = vpop.f32.mrb[0].mxu0
        %v6447 = vadd.f32 %v6286, %v6446
        %v6448 = vpop.f32.mrb[0].mxu0
        %v6449 = vpop.f32.mrb[0].mxu0
        %v6450 = vadd.f32 %v6289, %v6449
        %v6451 = vpop.f32.mrb[0].mxu0
        %6452 = vmatprep.mubr.bf16.mxu0 %v5549
        %6453 = vmatmul.mubr.bf16.gmra.mrb[0].mxu0 %v5548
        %v6454 = vpop.f32.mrb[0].mxu0
        %v6455 = vadd.f32 %v6294, %v6454
        %v6456 = vpop.f32.mrb[0].mxu0
        %v6457 = vpop.f32.mrb[0].mxu0
        %v6458 = vadd.f32 %v6297, %v6457
        %v6459 = vpop.f32.mrb[0].mxu0
        %6460 = vmatprep.mubr.bf16.mxu0 %v5558
        %6461 = vmatmul.mubr.bf16.gmra.mrb[0].mxu0 %v5557
        %v6462 = vpop.f32.mrb[0].mxu0
        %v6463 = vadd.f32 %v6302, %v6462
        %v6464 = vpop.f32.mrb[0].mxu0
        %v6465 = vpop.f32.mrb[0].mxu0
        %v6466 = vadd.f32 %v6305, %v6465
        %v6467 = vpop.f32.mrb[0].mxu0
        %6468 = vdwg.mxu0
        %6469 = vmatprep.subr.bf16.mxu0 0
        %6470 = vmatpush1.bf16.msra.mxu0 %v6035
        %6471 = vmatprep.subr.bf16.mxu0 0
        %6472 = vmatpush1.bf16.msra.mxu0 %v6036
        %6473 = vmatprep.subr.bf16.mxu0 0
        %6474 = vmatpush1.bf16.msra.mxu0 %v6037
        %6475 = vmatprep.subr.bf16.mxu0 0
        %6476 = vmatpush1.bf16.msra.mxu0 %v6038
        %6477 = vmatprep.subr.bf16.mxu0 0
        %6478 = vmatpush1.bf16.msra.mxu0 %v6039
        %6479 = vmatprep.subr.bf16.mxu0 0
        %6480 = vmatpush1.bf16.msra.mxu0 %v6040
        %6481 = vmatprep.subr.bf16.mxu0 0
        %6482 = vmatpush1.bf16.msra.mxu0 %v6041
        %6483 = vmatprep.subr.bf16.mxu0 0
        %6484 = vmatpush1.bf16.msra.mxu0 %v6042
        %6485 = vmatprep.subr.bf16.mxu0 0
        %6486 = vmatpush1.bf16.msra.mxu0 %v6043
        %6487 = vmatprep.subr.bf16.mxu0 0
        %6488 = vmatpush1.bf16.msra.mxu0 %v6044
        %6489 = vmatprep.subr.bf16.mxu0 0
        %6490 = vmatpush1.bf16.msra.mxu0 %v6045
        %6491 = vmatprep.subr.bf16.mxu0 0
        %6492 = vmatpush1.bf16.msra.mxu0 %v6046
        %6493 = vmatprep.subr.bf16.mxu0 0
        %6494 = vmatpush1.bf16.msra.mxu0 %v6047
        %6495 = vmatprep.subr.bf16.mxu0 0
        %6496 = vmatpush1.bf16.msra.mxu0 %v6048
        %6497 = vmatprep.subr.bf16.mxu0 0
        %6498 = vmatpush1.bf16.msra.mxu0 %v6049
        %6499 = vmatprep.subr.bf16.mxu0 0
        %6500 = vmatpush1.bf16.msra.mxu0 %v6050
        %6501 = vmatprep.mubr.bf16.mxu0 %v5425
        %6502 = vmatmul.mubr.bf16.gmra.mrb[0].mxu0 %v5424
        %v6503 = vpop.f32.mrb[0].mxu0
        %v6504 = vadd.f32 %v6343, %v6503
        %v6505 = vpop.f32.mrb[0].mxu0
        %v6506 = vpop.f32.mrb[0].mxu0
        %v6507 = vadd.f32 %v6346, %v6506
        %v6508 = vpop.f32.mrb[0].mxu0
        %6509 = vmatprep.mubr.bf16.mxu0 %v5434
        %6510 = vmatmul.mubr.bf16.gmra.mrb[0].mxu0 %v5433
        %v6511 = vpop.f32.mrb[0].mxu0
        %v6512 = vadd.f32 %v6351, %v6511
        %v6513 = vpop.f32.mrb[0].mxu0
        %v6514 = vpop.f32.mrb[0].mxu0
        %v6515 = vadd.f32 %v6354, %v6514
        %v6516 = vpop.f32.mrb[0].mxu0
        %6517 = vmatprep.mubr.bf16.mxu0 %v5443
        %6518 = vmatmul.mubr.bf16.gmra.mrb[0].mxu0 %v5442
        %v6519 = vpop.f32.mrb[0].mxu0
        %v6520 = vadd.f32 %v6359, %v6519
        %v6521 = vpop.f32.mrb[0].mxu0
        %v6522 = vpop.f32.mrb[0].mxu0
        %v6523 = vadd.f32 %v6362, %v6522
        %v6524 = vpop.f32.mrb[0].mxu0
        %6525 = vmatprep.mubr.bf16.mxu0 %v5452
        %6526 = vmatmul.mubr.bf16.gmra.mrb[0].mxu0 %v5451
        %v6527 = vpop.f32.mrb[0].mxu0
        %v6528 = vadd.f32 %v6367, %v6527
        %v6529 = vpop.f32.mrb[0].mxu0
        %v6530 = vpop.f32.mrb[0].mxu0
        %v6531 = vadd.f32 %v6370, %v6530
        %v6532 = vpop.f32.mrb[0].mxu0
        %6533 = vmatprep.mubr.bf16.mxu0 %v5461
        %6534 = vmatmul.mubr.bf16.gmra.mrb[0].mxu0 %v5460
        %v6535 = vpop.f32.mrb[0].mxu0
        %v6536 = vadd.f32 %v6375, %v6535
        %v6537 = vpop.f32.mrb[0].mxu0
        %v6538 = vpop.f32.mrb[0].mxu0
        %v6539 = vadd.f32 %v6378, %v6538
        %v6540 = vpop.f32.mrb[0].mxu0
        %6541 = vmatprep.mubr.bf16.mxu0 %v5470
        %6542 = vmatmul.mubr.bf16.gmra.mrb[0].mxu0 %v5469
        %v6543 = vpop.f32.mrb[0].mxu0
        %v6544 = vadd.f32 %v6383, %v6543
        %v6545 = vpop.f32.mrb[0].mxu0
        %v6546 = vpop.f32.mrb[0].mxu0
        %v6547 = vadd.f32 %v6386, %v6546
        %v6548 = vpop.f32.mrb[0].mxu0
        %6549 = vmatprep.mubr.bf16.mxu0 %v5479
        %6550 = vmatmul.mubr.bf16.gmra.mrb[0].mxu0 %v5478
        %v6551 = vpop.f32.mrb[0].mxu0
        %v6552 = vadd.f32 %v6391, %v6551
        %v6553 = vpop.f32.mrb[0].mxu0
        %v6554 = vpop.f32.mrb[0].mxu0
        %v6555 = vadd.f32 %v6394, %v6554
        %v6556 = vpop.f32.mrb[0].mxu0
        %6557 = vmatprep.mubr.bf16.mxu0 %v5488
        %6558 = vmatmul.mubr.bf16.gmra.mrb[0].mxu0 %v5487
        %v6559 = vpop.f32.mrb[0].mxu0
        %v6560 = vadd.f32 %v6399, %v6559
        %v6561 = vpop.f32.mrb[0].mxu0
        %v6562 = vpop.f32.mrb[0].mxu0
        %v6563 = vadd.f32 %v6402, %v6562
        %v6564 = vpop.f32.mrb[0].mxu0
        %6565 = vmatprep.mubr.bf16.mxu0 %v5497
        %6566 = vmatmul.mubr.bf16.gmra.mrb[0].mxu0 %v5496
        %v6567 = vpop.f32.mrb[0].mxu0
        %v6568 = vadd.f32 %v6407, %v6567
        %v6569 = vpop.f32.mrb[0].mxu0
        %v6570 = vpop.f32.mrb[0].mxu0
        %v6571 = vadd.f32 %v6410, %v6570
        %v6572 = vpop.f32.mrb[0].mxu0
        %6573 = vmatprep.mubr.bf16.mxu0 %v5506
        %6574 = vmatmul.mubr.bf16.gmra.mrb[0].mxu0 %v5505
        %v6575 = vpop.f32.mrb[0].mxu0
        %v6576 = vadd.f32 %v6415, %v6575
        %v6577 = vpop.f32.mrb[0].mxu0
        %v6578 = vpop.f32.mrb[0].mxu0
        %v6579 = vadd.f32 %v6418, %v6578
        %v6580 = vpop.f32.mrb[0].mxu0
        %6581 = vmatprep.mubr.bf16.mxu0 %v5515
        %6582 = vmatmul.mubr.bf16.gmra.mrb[0].mxu0 %v5514
        %v6583 = vpop.f32.mrb[0].mxu0
        %v6584 = vadd.f32 %v6423, %v6583
        %v6585 = vpop.f32.mrb[0].mxu0
        %v6586 = vpop.f32.mrb[0].mxu0
        %v6587 = vadd.f32 %v6426, %v6586
        %v6588 = vpop.f32.mrb[0].mxu0
        %6589 = vmatprep.mubr.bf16.mxu0 %v5524
        %6590 = vmatmul.mubr.bf16.gmra.mrb[0].mxu0 %v5523
        %v6591 = vpop.f32.mrb[0].mxu0
        %v6592 = vadd.f32 %v6431, %v6591
        %v6593 = vpop.f32.mrb[0].mxu0
        %v6594 = vpop.f32.mrb[0].mxu0
        %v6595 = vadd.f32 %v6434, %v6594
        %v6596 = vpop.f32.mrb[0].mxu0
        %6597 = vmatprep.mubr.bf16.mxu0 %v5533
        %6598 = vmatmul.mubr.bf16.gmra.mrb[0].mxu0 %v5532
        %v6599 = vpop.f32.mrb[0].mxu0
        %v6600 = vadd.f32 %v6439, %v6599
        %v6601 = vpop.f32.mrb[0].mxu0
        %v6602 = vpop.f32.mrb[0].mxu0
        %v6603 = vadd.f32 %v6442, %v6602
        %v6604 = vpop.f32.mrb[0].mxu0
        %6605 = vmatprep.mubr.bf16.mxu0 %v5542
        %6606 = vmatmul.mubr.bf16.gmra.mrb[0].mxu0 %v5541
        %v6607 = vpop.f32.mrb[0].mxu0
        %v6608 = vadd.f32 %v6447, %v6607
        %v6609 = vpop.f32.mrb[0].mxu0
        %v6610 = vpop.f32.mrb[0].mxu0
        %v6611 = vadd.f32 %v6450, %v6610
        %v6612 = vpop.f32.mrb[0].mxu0
        %6613 = vmatprep.mubr.bf16.mxu0 %v5551
        %6614 = vmatmul.mubr.bf16.gmra.mrb[0].mxu0 %v5550
        %v6615 = vpop.f32.mrb[0].mxu0
        %v6616 = vadd.f32 %v6455, %v6615
        %v6617 = vpop.f32.mrb[0].mxu0
        %v6618 = vpop.f32.mrb[0].mxu0
        %v6619 = vadd.f32 %v6458, %v6618
        %v6620 = vpop.f32.mrb[0].mxu0
        %6621 = vmatprep.mubr.bf16.mxu0 %v5560
        %6622 = vmatmul.mubr.bf16.gmra.mrb[0].mxu0 %v5559
        %v6623 = vpop.f32.mrb[0].mxu0
        %v6624 = vadd.f32 %v6463, %v6623
        %v6625 = vpop.f32.mrb[0].mxu0
        %v6626 = vpop.f32.mrb[0].mxu0
        %v6627 = vadd.f32 %v6466, %v6626
        %v6628 = vpop.f32.mrb[0].mxu0
        %6629 = vdwg.mxu0
        %6630 = vmatprep.subr.bf16.mxu0 0
        %6631 = vmatpush1.bf16.msra.mxu0 %v6051
        %6632 = vmatprep.subr.bf16.mxu0 0
        %6633 = vmatpush1.bf16.msra.mxu0 %v6052
        %6634 = vmatprep.subr.bf16.mxu0 0
        %6635 = vmatpush1.bf16.msra.mxu0 %v6053
        %6636 = vmatprep.subr.bf16.mxu0 0
        %6637 = vmatpush1.bf16.msra.mxu0 %v6054
        %6638 = vmatprep.subr.bf16.mxu0 0
        %6639 = vmatpush1.bf16.msra.mxu0 %v6055
        %6640 = vmatprep.subr.bf16.mxu0 0
        %6641 = vmatpush1.bf16.msra.mxu0 %v6056
        %6642 = vmatprep.subr.bf16.mxu0 0
        %6643 = vmatpush1.bf16.msra.mxu0 %v6057
        %6644 = vmatprep.subr.bf16.mxu0 0
        %6645 = vmatpush1.bf16.msra.mxu0 %v6058
        %6646 = vmatprep.subr.bf16.mxu0 0
        %6647 = vmatpush1.bf16.msra.mxu0 %v6059
        %6648 = vmatprep.subr.bf16.mxu0 0
        %6649 = vmatpush1.bf16.msra.mxu0 %v6060
        %6650 = vmatprep.subr.bf16.mxu0 0
        %6651 = vmatpush1.bf16.msra.mxu0 %v6061
        %6652 = vmatprep.subr.bf16.mxu0 0
        %6653 = vmatpush1.bf16.msra.mxu0 %v6062
        %6654 = vmatprep.subr.bf16.mxu0 0
        %6655 = vmatpush1.bf16.msra.mxu0 %v6063
        %6656 = vmatprep.subr.bf16.mxu0 0
        %6657 = vmatpush1.bf16.msra.mxu0 %v6064
        %6658 = vmatprep.subr.bf16.mxu0 0
        %6659 = vmatpush1.bf16.msra.mxu0 %v6065
        %6660 = vmatprep.subr.bf16.mxu0 0
        %6661 = vmatpush1.bf16.msra.mxu0 %v6066
        %6662 = vmatprep.mubr.bf16.mxu0 %v5427
        %6663 = vmatmul.mubr.bf16.gmra.mrb[0].mxu0 %v5426
        %v6664 = vpop.f32.mrb[0].mxu0
        %v6665 = vadd.f32 %v6504, %v6664
        %v6666 = vpop.f32.mrb[0].mxu0
        %v6667 = vpop.f32.mrb[0].mxu0
        %v6668 = vadd.f32 %v6507, %v6667
        %v6669 = vpop.f32.mrb[0].mxu0
        %6670 = vmatprep.mubr.bf16.mxu0 %v5436
        %6671 = vmatmul.mubr.bf16.gmra.mrb[0].mxu0 %v5435
        %v6672 = vpop.f32.mrb[0].mxu0
        %v6673 = vadd.f32 %v6512, %v6672
        %v6674 = vpop.f32.mrb[0].mxu0
        %v6675 = vpop.f32.mrb[0].mxu0
        %v6676 = vadd.f32 %v6515, %v6675
        %v6677 = vpop.f32.mrb[0].mxu0
        %6678 = vmatprep.mubr.bf16.mxu0 %v5445
        %6679 = vmatmul.mubr.bf16.gmra.mrb[0].mxu0 %v5444
        %v6680 = vpop.f32.mrb[0].mxu0
        %v6681 = vadd.f32 %v6520, %v6680
        %v6682 = vpop.f32.mrb[0].mxu0
        %v6683 = vpop.f32.mrb[0].mxu0
        %v6684 = vadd.f32 %v6523, %v6683
        %v6685 = vpop.f32.mrb[0].mxu0
        %6686 = vmatprep.mubr.bf16.mxu0 %v5454
        %6687 = vmatmul.mubr.bf16.gmra.mrb[0].mxu0 %v5453
        %v6688 = vpop.f32.mrb[0].mxu0
        %v6689 = vadd.f32 %v6528, %v6688
        %v6690 = vpop.f32.mrb[0].mxu0
        %v6691 = vpop.f32.mrb[0].mxu0
        %v6692 = vadd.f32 %v6531, %v6691
        %v6693 = vpop.f32.mrb[0].mxu0
        %6694 = vmatprep.mubr.bf16.mxu0 %v5463
        %6695 = vmatmul.mubr.bf16.gmra.mrb[0].mxu0 %v5462
        %v6696 = vpop.f32.mrb[0].mxu0
        %v6697 = vadd.f32 %v6536, %v6696
        %v6698 = vpop.f32.mrb[0].mxu0
        %v6699 = vpop.f32.mrb[0].mxu0
        %v6700 = vadd.f32 %v6539, %v6699
        %v6701 = vpop.f32.mrb[0].mxu0
        %6702 = vmatprep.mubr.bf16.mxu0 %v5472
        %6703 = vmatmul.mubr.bf16.gmra.mrb[0].mxu0 %v5471
        %v6704 = vpop.f32.mrb[0].mxu0
        %v6705 = vadd.f32 %v6544, %v6704
        %v6706 = vpop.f32.mrb[0].mxu0
        %v6707 = vpop.f32.mrb[0].mxu0
        %v6708 = vadd.f32 %v6547, %v6707
        %v6709 = vpop.f32.mrb[0].mxu0
        %6710 = vmatprep.mubr.bf16.mxu0 %v5481
        %6711 = vmatmul.mubr.bf16.gmra.mrb[0].mxu0 %v5480
        %v6712 = vpop.f32.mrb[0].mxu0
        %v6713 = vadd.f32 %v6552, %v6712
        %v6714 = vpop.f32.mrb[0].mxu0
        %v6715 = vpop.f32.mrb[0].mxu0
        %v6716 = vadd.f32 %v6555, %v6715
        %v6717 = vpop.f32.mrb[0].mxu0
        %6718 = vmatprep.mubr.bf16.mxu0 %v5490
        %6719 = vmatmul.mubr.bf16.gmra.mrb[0].mxu0 %v5489
        %v6720 = vpop.f32.mrb[0].mxu0
        %v6721 = vadd.f32 %v6560, %v6720
        %v6722 = vpop.f32.mrb[0].mxu0
        %v6723 = vpop.f32.mrb[0].mxu0
        %v6724 = vadd.f32 %v6563, %v6723
        %v6725 = vpop.f32.mrb[0].mxu0
        %6726 = vmatprep.mubr.bf16.mxu0 %v5499
        %6727 = vmatmul.mubr.bf16.gmra.mrb[0].mxu0 %v5498
        %v6728 = vpop.f32.mrb[0].mxu0
        %v6729 = vadd.f32 %v6568, %v6728
        %v6730 = vpop.f32.mrb[0].mxu0
        %v6731 = vpop.f32.mrb[0].mxu0
        %v6732 = vadd.f32 %v6571, %v6731
        %v6733 = vpop.f32.mrb[0].mxu0
        %6734 = vmatprep.mubr.bf16.mxu0 %v5508
        %6735 = vmatmul.mubr.bf16.gmra.mrb[0].mxu0 %v5507
        %v6736 = vpop.f32.mrb[0].mxu0
        %v6737 = vadd.f32 %v6576, %v6736
        %v6738 = vpop.f32.mrb[0].mxu0
        %v6739 = vpop.f32.mrb[0].mxu0
        %v6740 = vadd.f32 %v6579, %v6739
        %v6741 = vpop.f32.mrb[0].mxu0
        %6742 = vmatprep.mubr.bf16.mxu0 %v5517
        %6743 = vmatmul.mubr.bf16.gmra.mrb[0].mxu0 %v5516
        %v6744 = vpop.f32.mrb[0].mxu0
        %v6745 = vadd.f32 %v6584, %v6744
        %v6746 = vpop.f32.mrb[0].mxu0
        %v6747 = vpop.f32.mrb[0].mxu0
        %v6748 = vadd.f32 %v6587, %v6747
        %v6749 = vpop.f32.mrb[0].mxu0
        %6750 = vmatprep.mubr.bf16.mxu0 %v5526
        %6751 = vmatmul.mubr.bf16.gmra.mrb[0].mxu0 %v5525
        %v6752 = vpop.f32.mrb[0].mxu0
        %v6753 = vadd.f32 %v6592, %v6752
        %v6754 = vpop.f32.mrb[0].mxu0
        %v6755 = vpop.f32.mrb[0].mxu0
        %v6756 = vadd.f32 %v6595, %v6755
        %v6757 = vpop.f32.mrb[0].mxu0
        %6758 = vmatprep.mubr.bf16.mxu0 %v5535
        %6759 = vmatmul.mubr.bf16.gmra.mrb[0].mxu0 %v5534
        %v6760 = vpop.f32.mrb[0].mxu0
        %v6761 = vadd.f32 %v6600, %v6760
        %v6762 = vpop.f32.mrb[0].mxu0
        %v6763 = vpop.f32.mrb[0].mxu0
        %v6764 = vadd.f32 %v6603, %v6763
        %v6765 = vpop.f32.mrb[0].mxu0
        %6766 = vmatprep.mubr.bf16.mxu0 %v5544
        %6767 = vmatmul.mubr.bf16.gmra.mrb[0].mxu0 %v5543
        %v6768 = vpop.f32.mrb[0].mxu0
        %v6769 = vadd.f32 %v6608, %v6768
        %v6770 = vpop.f32.mrb[0].mxu0
        %v6771 = vpop.f32.mrb[0].mxu0
        %v6772 = vadd.f32 %v6611, %v6771
        %v6773 = vpop.f32.mrb[0].mxu0
        %6774 = vmatprep.mubr.bf16.mxu0 %v5553
        %6775 = vmatmul.mubr.bf16.gmra.mrb[0].mxu0 %v5552
        %v6776 = vpop.f32.mrb[0].mxu0
        %v6777 = vadd.f32 %v6616, %v6776
        %v6778 = vpop.f32.mrb[0].mxu0
        %v6779 = vpop.f32.mrb[0].mxu0
        %v6780 = vadd.f32 %v6619, %v6779
        %v6781 = vpop.f32.mrb[0].mxu0
        %6782 = vmatprep.mubr.bf16.mxu0 %v5562
        %6783 = vmatmul.mubr.bf16.gmra.mrb[0].mxu0 %v5561
        %v6784 = vpop.f32.mrb[0].mxu0
        %v6785 = vadd.f32 %v6624, %v6784
        %v6786 = vpop.f32.mrb[0].mxu0
        %v6787 = vpop.f32.mrb[0].mxu0
        %v6788 = vadd.f32 %v6627, %v6787
        %v6789 = vpop.f32.mrb[0].mxu0
        %6790 = vdwg.mxu0
        %6791 = vmatprep.subr.bf16.mxu0 0
        %6792 = vmatpush1.bf16.msra.mxu0 %v6067
        %6793 = vmatprep.subr.bf16.mxu0 0
        %6794 = vmatpush1.bf16.msra.mxu0 %v6068
        %6795 = vmatprep.subr.bf16.mxu0 0
        %6796 = vmatpush1.bf16.msra.mxu0 %v6069
        %6797 = vmatprep.subr.bf16.mxu0 0
        %6798 = vmatpush1.bf16.msra.mxu0 %v6070
        %6799 = vmatprep.subr.bf16.mxu0 0
        %6800 = vmatpush1.bf16.msra.mxu0 %v6071
        %6801 = vmatprep.subr.bf16.mxu0 0
        %6802 = vmatpush1.bf16.msra.mxu0 %v6072
        %6803 = vmatprep.subr.bf16.mxu0 0
        %6804 = vmatpush1.bf16.msra.mxu0 %v6073
        %6805 = vmatprep.subr.bf16.mxu0 0
        %6806 = vmatpush1.bf16.msra.mxu0 %v6074
        %6807 = vmatprep.subr.bf16.mxu0 0
        %6808 = vmatpush1.bf16.msra.mxu0 0
        %6809 = vmatprep.subr.bf16.mxu0 0
        %6810 = vmatpush1.bf16.msra.mxu0 0
        %6811 = vmatprep.subr.bf16.mxu0 0
        %6812 = vmatpush1.bf16.msra.mxu0 0
        %6813 = vmatprep.subr.bf16.mxu0 0
        %6814 = vmatpush1.bf16.msra.mxu0 0
        %6815 = vmatprep.subr.bf16.mxu0 0
        %6816 = vmatpush1.bf16.msra.mxu0 0
        %6817 = vmatprep.subr.bf16.mxu0 0
        %6818 = vmatpush1.bf16.msra.mxu0 0
        %6819 = vmatprep.subr.bf16.mxu0 0
        %6820 = vmatpush1.bf16.msra.mxu0 0
        %6821 = vmatprep.subr.bf16.mxu0 0
        %6822 = vmatpush1.bf16.msra.mxu0 0
        %6823 = vmatprep.mubr.bf16.mxu0 0
        %6824 = vmatmul.mubr.bf16.gmra.mrb[0].mxu0 %v5428
        %v6825 = vpop.f32.mrb[0].mxu0
        %v6826 = vadd.f32 %v6665, %v6825
        %v6827 = vpop.f32.mrb[0].mxu0
        %v6828 = vpop.f32.mrb[0].mxu0
        %v6829 = vadd.f32 %v6668, %v6828
        %v6830 = vpop.f32.mrb[0].mxu0
        %6831 = vmatprep.mubr.bf16.mxu0 0
        %6832 = vmatmul.mubr.bf16.gmra.mrb[0].mxu0 %v5437
        %v6833 = vpop.f32.mrb[0].mxu0
        %v6834 = vadd.f32 %v6673, %v6833
        %v6835 = vpop.f32.mrb[0].mxu0
        %v6836 = vpop.f32.mrb[0].mxu0
        %v6837 = vadd.f32 %v6676, %v6836
        %v6838 = vpop.f32.mrb[0].mxu0
        %6839 = vmatprep.mubr.bf16.mxu0 0
        %6840 = vmatmul.mubr.bf16.gmra.mrb[0].mxu0 %v5446
        %v6841 = vpop.f32.mrb[0].mxu0
        %v6842 = vadd.f32 %v6681, %v6841
        %v6843 = vpop.f32.mrb[0].mxu0
        %v6844 = vpop.f32.mrb[0].mxu0
        %v6845 = vadd.f32 %v6684, %v6844
        %v6846 = vpop.f32.mrb[0].mxu0
        %6847 = vmatprep.mubr.bf16.mxu0 0
        %6848 = vmatmul.mubr.bf16.gmra.mrb[0].mxu0 %v5455
        %v6849 = vpop.f32.mrb[0].mxu0
        %v6850 = vadd.f32 %v6689, %v6849
        %v6851 = vpop.f32.mrb[0].mxu0
        %v6852 = vpop.f32.mrb[0].mxu0
        %v6853 = vadd.f32 %v6692, %v6852
        %v6854 = vpop.f32.mrb[0].mxu0
        %6855 = vmatprep.mubr.bf16.mxu0 0
        %6856 = vmatmul.mubr.bf16.gmra.mrb[0].mxu0 %v5464
        %v6857 = vpop.f32.mrb[0].mxu0
        %v6858 = vadd.f32 %v6697, %v6857
        %v6859 = vpop.f32.mrb[0].mxu0
        %v6860 = vpop.f32.mrb[0].mxu0
        %v6861 = vadd.f32 %v6700, %v6860
        %v6862 = vpop.f32.mrb[0].mxu0
        %6863 = vmatprep.mubr.bf16.mxu0 0
        %6864 = vmatmul.mubr.bf16.gmra.mrb[0].mxu0 %v5473
        %v6865 = vpop.f32.mrb[0].mxu0
        %v6866 = vadd.f32 %v6705, %v6865
        %v6867 = vpop.f32.mrb[0].mxu0
        %v6868 = vpop.f32.mrb[0].mxu0
        %v6869 = vadd.f32 %v6708, %v6868
        %v6870 = vpop.f32.mrb[0].mxu0
        %6871 = vmatprep.mubr.bf16.mxu0 0
        %6872 = vmatmul.mubr.bf16.gmra.mrb[0].mxu0 %v5482
        %v6873 = vpop.f32.mrb[0].mxu0
        %v6874 = vadd.f32 %v6713, %v6873
        %v6875 = vpop.f32.mrb[0].mxu0
        %v6876 = vpop.f32.mrb[0].mxu0
        %v6877 = vadd.f32 %v6716, %v6876
        %v6878 = vpop.f32.mrb[0].mxu0
        %6879 = vmatprep.mubr.bf16.mxu0 0
        %6880 = vmatmul.mubr.bf16.gmra.mrb[0].mxu0 %v5491
        %v6881 = vpop.f32.mrb[0].mxu0
        %v6882 = vadd.f32 %v6721, %v6881
        %v6883 = vpop.f32.mrb[0].mxu0
        %v6884 = vpop.f32.mrb[0].mxu0
        %v6885 = vadd.f32 %v6724, %v6884
        %v6886 = vpop.f32.mrb[0].mxu0
        %6887 = vmatprep.mubr.bf16.mxu0 0
        %6888 = vmatmul.mubr.bf16.gmra.mrb[0].mxu0 %v5500
        %v6889 = vpop.f32.mrb[0].mxu0
        %v6890 = vadd.f32 %v6729, %v6889
        %v6891 = vpop.f32.mrb[0].mxu0
        %v6892 = vpop.f32.mrb[0].mxu0
        %v6893 = vadd.f32 %v6732, %v6892
        %v6894 = vpop.f32.mrb[0].mxu0
        %6895 = vmatprep.mubr.bf16.mxu0 0
        %6896 = vmatmul.mubr.bf16.gmra.mrb[0].mxu0 %v5509
        %v6897 = vpop.f32.mrb[0].mxu0
        %v6898 = vadd.f32 %v6737, %v6897
        %v6899 = vpop.f32.mrb[0].mxu0
        %v6900 = vpop.f32.mrb[0].mxu0
        %v6901 = vadd.f32 %v6740, %v6900
        %v6902 = vpop.f32.mrb[0].mxu0
        %6903 = vmatprep.mubr.bf16.mxu0 0
        %6904 = vmatmul.mubr.bf16.gmra.mrb[0].mxu0 %v5518
        %v6905 = vpop.f32.mrb[0].mxu0
        %v6906 = vadd.f32 %v6745, %v6905
        %v6907 = vpop.f32.mrb[0].mxu0
        %v6908 = vpop.f32.mrb[0].mxu0
        %v6909 = vadd.f32 %v6748, %v6908
        %v6910 = vpop.f32.mrb[0].mxu0
        %6911 = vmatprep.mubr.bf16.mxu0 0
        %6912 = vmatmul.mubr.bf16.gmra.mrb[0].mxu0 %v5527
        %v6913 = vpop.f32.mrb[0].mxu0
        %v6914 = vadd.f32 %v6753, %v6913
        %v6915 = vpop.f32.mrb[0].mxu0
        %v6916 = vpop.f32.mrb[0].mxu0
        %v6917 = vadd.f32 %v6756, %v6916
        %v6918 = vpop.f32.mrb[0].mxu0
        %6919 = vmatprep.mubr.bf16.mxu0 0
        %6920 = vmatmul.mubr.bf16.gmra.mrb[0].mxu0 %v5536
        %v6921 = vpop.f32.mrb[0].mxu0
        %v6922 = vadd.f32 %v6761, %v6921
        %v6923 = vpop.f32.mrb[0].mxu0
        %v6924 = vpop.f32.mrb[0].mxu0
        %v6925 = vadd.f32 %v6764, %v6924
        %v6926 = vpop.f32.mrb[0].mxu0
        %6927 = vmatprep.mubr.bf16.mxu0 0
        %6928 = vmatmul.mubr.bf16.gmra.mrb[0].mxu0 %v5545
        %v6929 = vpop.f32.mrb[0].mxu0
        %v6930 = vadd.f32 %v6769, %v6929
        %v6931 = vpop.f32.mrb[0].mxu0
        %v6932 = vpop.f32.mrb[0].mxu0
        %v6933 = vadd.f32 %v6772, %v6932
        %v6934 = vpop.f32.mrb[0].mxu0
        %6935 = vmatprep.mubr.bf16.mxu0 0
        %6936 = vmatmul.mubr.bf16.gmra.mrb[0].mxu0 %v5554
        %v6937 = vpop.f32.mrb[0].mxu0
        %v6938 = vadd.f32 %v6777, %v6937
        %v6939 = vpop.f32.mrb[0].mxu0
        %v6940 = vpop.f32.mrb[0].mxu0
        %v6941 = vadd.f32 %v6780, %v6940
        %v6942 = vpop.f32.mrb[0].mxu0
        %6943 = vmatprep.mubr.bf16.mxu0 0
        %6944 = vmatmul.mubr.bf16.gmra.mrb[0].mxu0 %v5563
        %v6945 = vpop.f32.mrb[0].mxu0
        %v6946 = vadd.f32 %v6785, %v6945
        %v6947 = vpop.f32.mrb[0].mxu0
        %v6948 = vpop.f32.mrb[0].mxu0
        %v6949 = vadd.f32 %v6788, %v6948
        %v6950 = vpop.f32.mrb[0].mxu0
        %6951 = vdwg.mxu0
        %v6952 = vmax.f32 %v6826, 0.0
        %v6953 = vmax.f32 %v6829, 0.0
        %v6954 = vmax.f32 %v6834, 0.0
        %v6955 = vmax.f32 %v6837, 0.0
        %v6956 = vmax.f32 %v6842, 0.0
        %v6957 = vmax.f32 %v6845, 0.0
        %v6958 = vmax.f32 %v6850, 0.0
        %v6959 = vmax.f32 %v6853, 0.0
        %v6960 = vmax.f32 %v6858, 0.0
        %v6961 = vmax.f32 %v6861, 0.0
        %v6962 = vmax.f32 %v6866, 0.0
        %v6963 = vmax.f32 %v6869, 0.0
        %v6964 = vmax.f32 %v6874, 0.0
        %v6965 = vmax.f32 %v6877, 0.0
        %v6966 = vmax.f32 %v6882, 0.0
        %v6967 = vmax.f32 %v6885, 0.0
        %v6968 = vmax.f32 %v6890, 0.0
        %v6969 = vmax.f32 %v6893, 0.0
        %v6970 = vmax.f32 %v6898, 0.0
        %v6971 = vmax.f32 %v6901, 0.0
        %v6972 = vmax.f32 %v6906, 0.0
        %v6973 = vmax.f32 %v6909, 0.0
        %v6974 = vmax.f32 %v6914, 0.0
        %v6975 = vmax.f32 %v6917, 0.0
        %v6976 = vmax.f32 %v6922, 0.0
        %v6977 = vmax.f32 %v6925, 0.0
        %v6978 = vmax.f32 %v6930, 0.0
        %v6979 = vmax.f32 %v6933, 0.0
        %v6980 = vmax.f32 %v6938, 0.0
        %v6981 = vmax.f32 %v6941, 0.0
        %v6982 = vmax.f32 %v6946, 0.0
        %v6983 = vmax.f32 %v6949, 0.0
        %6984 = vst [vmem:[%s465 + $0x1] sm:$0xff] %v6952
        %6985 = vst [vmem:[%s465 + $0x9] sm:$0xff] %v6953
        %6986 = vst [vmem:[%s465 + $0x19] sm:$0xff] %v6954
        %6987 = vst [vmem:[%s465 + $0x21] sm:$0xff] %v6955
        %6988 = vst [vmem:[%s465 + $0x31] sm:$0xff] %v6956
        %6989 = vst [vmem:[%s465 + $0x39] sm:$0xff] %v6957
        %6990 = vst [vmem:[%s465 + $0x49] sm:$0xff] %v6958
        %6991 = vst [vmem:[%s465 + $0x51] sm:$0xff] %v6959
        %6992 = vst [vmem:[%s465 + $0x61] sm:$0xff] %v6960
        %6993 = vst [vmem:[%s465 + $0x69] sm:$0xff] %v6961
        %6994 = vst [vmem:[%s465 + $0x79] sm:$0xff] %v6962
        %6995 = vst [vmem:[%s465 + $0x81] sm:$0xff] %v6963
        %6996 = vst [vmem:[%s465 + $0x91] sm:$0xff] %v6964
        %6997 = vst [vmem:[%s465 + $0x99] sm:$0xff] %v6965
        %6998 = vst [vmem:[%s465 + $0xa9] sm:$0xff] %v6966
        %6999 = vst [vmem:[%s465 + $0xb1] sm:$0xff] %v6967
        %7000 = vst [vmem:[%s465 + $0xc1] sm:$0xff] %v6968
        %7001 = vst [vmem:[%s465 + $0xc9] sm:$0xff] %v6969
        %7002 = vst [vmem:[%s465 + $0xd9] sm:$0xff] %v6970
        %7003 = vst [vmem:[%s465 + $0xe1] sm:$0xff] %v6971
        %7004 = vst [vmem:[%s465 + $0xf1] sm:$0xff] %v6972
        %7005 = vst [vmem:[%s465 + $0xf9] sm:$0xff] %v6973
        %7006 = vst [vmem:[%s465 + $0x109] sm:$0xff] %v6974
        %7007 = vst [vmem:[%s465 + $0x111] sm:$0xff] %v6975
        %7008 = vst [vmem:[%s465 + $0x121] sm:$0xff] %v6976
        %7009 = vst [vmem:[%s465 + $0x129] sm:$0xff] %v6977
        %7010 = vst [vmem:[%s465 + $0x139] sm:$0xff] %v6978
        %7011 = vst [vmem:[%s465 + $0x141] sm:$0xff] %v6979
        %7012 = vst [vmem:[%s465 + $0x151] sm:$0xff] %v6980
        %7013 = vst [vmem:[%s465 + $0x159] sm:$0xff] %v6981
        %7014 = vst [vmem:[%s465 + $0x169] sm:$0xff] %v6982
        %7015 = vst [vmem:[%s465 + $0x171] sm:$0xff] %v6983
        %v7016 = vld [vmem:[#allocation2] sm:$0xff]
        %v7017 = vld [vmem:[#allocation2 + $0x8] sm:$0xff]
        %v7018 = vld [vmem:[#allocation2 + $0x18] sm:$0xff]
        %v7019 = vld [vmem:[#allocation2 + $0x20] sm:$0xff]
        %v7020 = vld [vmem:[#allocation2 + $0x30] sm:$0xff]
        %v7021 = vld [vmem:[#allocation2 + $0x38] sm:$0xff]
        %v7022 = vld [vmem:[#allocation2 + $0x48] sm:$0xff]
        %v7023 = vld [vmem:[#allocation2 + $0x50] sm:$0xff]
        %v7024 = vld [vmem:[#allocation2 + $0x60] sm:$0xff]
        %v7025 = vld [vmem:[#allocation2 + $0x68] sm:$0xff]
        %v7026 = vld [vmem:[#allocation2 + $0x78] sm:$0xff]
        %v7027 = vld [vmem:[#allocation2 + $0x80] sm:$0xff]
        %v7028 = vld [vmem:[#allocation2 + $0x90] sm:$0xff]
        %v7029 = vld [vmem:[#allocation2 + $0x98] sm:$0xff]
        %v7030 = vld [vmem:[#allocation2 + $0xa8] sm:$0xff]
        %v7031 = vld [vmem:[#allocation2 + $0xb0] sm:$0xff]
        %v7032 = vld [vmem:[#allocation2 + $0xc0] sm:$0xff]
        %v7033 = vld [vmem:[#allocation2 + $0xc8] sm:$0xff]
        %v7034 = vld [vmem:[#allocation2 + $0xd8] sm:$0xff]
        %v7035 = vld [vmem:[#allocation2 + $0xe0] sm:$0xff]
        %v7036 = vld [vmem:[#allocation2 + $0xf0] sm:$0xff]
        %v7037 = vld [vmem:[#allocation2 + $0xf8] sm:$0xff]
        %v7038 = vld [vmem:[#allocation2 + $0x108] sm:$0xff]
        %v7039 = vld [vmem:[#allocation2 + $0x110] sm:$0xff]
        %v7040 = vld [vmem:[#allocation2 + $0x120] sm:$0xff]
        %v7041 = vld [vmem:[#allocation2 + $0x128] sm:$0xff]
        %v7042 = vld [vmem:[#allocation2 + $0x138] sm:$0xff]
        %v7043 = vld [vmem:[#allocation2 + $0x140] sm:$0xff]
        %v7044 = vld [vmem:[#allocation2 + $0x150] sm:$0xff]
        %v7045 = vld [vmem:[#allocation2 + $0x158] sm:$0xff]
        %v7046 = vld [vmem:[#allocation2 + $0x168] sm:$0xff]
        %v7047 = vld [vmem:[#allocation2 + $0x170] sm:$0xff]
        %v7048 = vld [vmem:[%s7] sm:$0x1]
        %v7049 = vlaneseq
        %v7050 = vshrl.u32 %v7049, 7
        %v7051 = vsub.s32 0, %v7050
        %v7052 = vrot.slane %v7048, %v7051
        %v7053 = vmul.f32 %v7016, %v7052
        %v7054 = vmul.f32 %v7017, %v7052
        %v7055 = vmul.f32 %v7018, %v7052
        %v7056 = vmul.f32 %v7019, %v7052
        %v7057 = vmul.f32 %v7020, %v7052
        %v7058 = vmul.f32 %v7021, %v7052
        %v7059 = vmul.f32 %v7022, %v7052
        %v7060 = vmul.f32 %v7023, %v7052
        %v7061 = vmul.f32 %v7024, %v7052
        %v7062 = vmul.f32 %v7025, %v7052
        %v7063 = vmul.f32 %v7026, %v7052
        %v7064 = vmul.f32 %v7027, %v7052
        %v7065 = vmul.f32 %v7028, %v7052
        %v7066 = vmul.f32 %v7029, %v7052
        %v7067 = vmul.f32 %v7030, %v7052
        %v7068 = vmul.f32 %v7031, %v7052
        %v7069 = vmul.f32 %v7032, %v7052
        %v7070 = vmul.f32 %v7033, %v7052
        %v7071 = vmul.f32 %v7034, %v7052
        %v7072 = vmul.f32 %v7035, %v7052
        %v7073 = vmul.f32 %v7036, %v7052
        %v7074 = vmul.f32 %v7037, %v7052
        %v7075 = vmul.f32 %v7038, %v7052
        %v7076 = vmul.f32 %v7039, %v7052
        %v7077 = vmul.f32 %v7040, %v7052
        %v7078 = vmul.f32 %v7041, %v7052
        %v7079 = vmul.f32 %v7042, %v7052
        %v7080 = vmul.f32 %v7043, %v7052
        %v7081 = vmul.f32 %v7044, %v7052
        %v7082 = vmul.f32 %v7045, %v7052
        %v7083 = vmul.f32 %v7046, %v7052
        %v7084 = vmul.f32 %v7047, %v7052
        %7085 = vadd.xlane.f32.xlu0 %v7053
        %v7086 = vpop.xlane.xlu0 %7085
        %7087 = vadd.xlane.f32.xlu0 %v7054
        %v7088 = vpop.xlane.xlu0 %7087
        %7089 = vadd.xlane.f32.xlu0 %v7055
        %v7090 = vpop.xlane.xlu0 %7089
        %7091 = vadd.xlane.f32.xlu0 %v7056
        %v7092 = vpop.xlane.xlu0 %7091
        %7093 = vadd.xlane.f32.xlu0 %v7057
        %v7094 = vpop.xlane.xlu0 %7093
        %7095 = vadd.xlane.f32.xlu0 %v7058
        %v7096 = vpop.xlane.xlu0 %7095
        %7097 = vadd.xlane.f32.xlu0 %v7059
        %v7098 = vpop.xlane.xlu0 %7097
        %7099 = vadd.xlane.f32.xlu0 %v7060
        %v7100 = vpop.xlane.xlu0 %7099
        %7101 = vadd.xlane.f32.xlu0 %v7061
        %v7102 = vpop.xlane.xlu0 %7101
        %7103 = vadd.xlane.f32.xlu0 %v7062
        %v7104 = vpop.xlane.xlu0 %7103
        %7105 = vadd.xlane.f32.xlu0 %v7063
        %v7106 = vpop.xlane.xlu0 %7105
        %7107 = vadd.xlane.f32.xlu0 %v7064
        %v7108 = vpop.xlane.xlu0 %7107
        %7109 = vadd.xlane.f32.xlu0 %v7065
        %v7110 = vpop.xlane.xlu0 %7109
        %7111 = vadd.xlane.f32.xlu0 %v7066
        %v7112 = vpop.xlane.xlu0 %7111
        %7113 = vadd.xlane.f32.xlu0 %v7067
        %v7114 = vpop.xlane.xlu0 %7113
        %7115 = vadd.xlane.f32.xlu0 %v7068
        %v7116 = vpop.xlane.xlu0 %7115
        %7117 = vadd.xlane.f32.xlu0 %v7069
        %v7118 = vpop.xlane.xlu0 %7117
        %7119 = vadd.xlane.f32.xlu0 %v7070
        %v7120 = vpop.xlane.xlu0 %7119
        %7121 = vadd.xlane.f32.xlu0 %v7071
        %v7122 = vpop.xlane.xlu0 %7121
        %7123 = vadd.xlane.f32.xlu0 %v7072
        %v7124 = vpop.xlane.xlu0 %7123
        %7125 = vadd.xlane.f32.xlu0 %v7073
        %v7126 = vpop.xlane.xlu0 %7125
        %7127 = vadd.xlane.f32.xlu0 %v7074
        %v7128 = vpop.xlane.xlu0 %7127
        %7129 = vadd.xlane.f32.xlu0 %v7075
        %v7130 = vpop.xlane.xlu0 %7129
        %7131 = vadd.xlane.f32.xlu0 %v7076
        %v7132 = vpop.xlane.xlu0 %7131
        %7133 = vadd.xlane.f32.xlu0 %v7077
        %v7134 = vpop.xlane.xlu0 %7133
        %7135 = vadd.xlane.f32.xlu0 %v7078
        %v7136 = vpop.xlane.xlu0 %7135
        %7137 = vadd.xlane.f32.xlu0 %v7079
        %v7138 = vpop.xlane.xlu0 %7137
        %7139 = vadd.xlane.f32.xlu0 %v7080
        %v7140 = vpop.xlane.xlu0 %7139
        %7141 = vadd.xlane.f32.xlu0 %v7081
        %v7142 = vpop.xlane.xlu0 %7141
        %7143 = vadd.xlane.f32.xlu0 %v7082
        %v7144 = vpop.xlane.xlu0 %7143
        %7145 = vadd.xlane.f32.xlu0 %v7083
        %v7146 = vpop.xlane.xlu0 %7145
        %7147 = vadd.xlane.f32.xlu0 %v7084
        %v7148 = vpop.xlane.xlu0 %7147
        %v7149 = vadd.f32 %v7086, 0.0
        %v7150 = vadd.f32 %v7088, 0.0
        %v7151 = vadd.f32 %v7090, 0.0
        %v7152 = vadd.f32 %v7092, 0.0
        %v7153 = vadd.f32 %v7094, 0.0
        %v7154 = vadd.f32 %v7096, 0.0
        %v7155 = vadd.f32 %v7098, 0.0
        %v7156 = vadd.f32 %v7100, 0.0
        %v7157 = vadd.f32 %v7102, 0.0
        %v7158 = vadd.f32 %v7104, 0.0
        %v7159 = vadd.f32 %v7106, 0.0
        %v7160 = vadd.f32 %v7108, 0.0
        %v7161 = vadd.f32 %v7110, 0.0
        %v7162 = vadd.f32 %v7112, 0.0
        %v7163 = vadd.f32 %v7114, 0.0
        %v7164 = vadd.f32 %v7116, 0.0
        %v7165 = vadd.f32 %v7118, 0.0
        %v7166 = vadd.f32 %v7120, 0.0
        %v7167 = vadd.f32 %v7122, 0.0
        %v7168 = vadd.f32 %v7124, 0.0
        %v7169 = vadd.f32 %v7126, 0.0
        %v7170 = vadd.f32 %v7128, 0.0
        %v7171 = vadd.f32 %v7130, 0.0
        %v7172 = vadd.f32 %v7132, 0.0
        %v7173 = vadd.f32 %v7134, 0.0
        %v7174 = vadd.f32 %v7136, 0.0
        %v7175 = vadd.f32 %v7138, 0.0
        %v7176 = vadd.f32 %v7140, 0.0
        %v7177 = vadd.f32 %v7142, 0.0
        %v7178 = vadd.f32 %v7144, 0.0
        %v7179 = vadd.f32 %v7146, 0.0
        %v7180 = vadd.f32 %v7148, 0.0
        %v7181 = vld [vmem:[#allocation2 + $0x1] sm:$0xff]
        %v7182 = vld [vmem:[#allocation2 + $0x9] sm:$0xff]
        %v7183 = vld [vmem:[#allocation2 + $0x19] sm:$0xff]
        %v7184 = vld [vmem:[#allocation2 + $0x21] sm:$0xff]
        %v7185 = vld [vmem:[#allocation2 + $0x31] sm:$0xff]
        %v7186 = vld [vmem:[#allocation2 + $0x39] sm:$0xff]
        %v7187 = vld [vmem:[#allocation2 + $0x49] sm:$0xff]
        %v7188 = vld [vmem:[#allocation2 + $0x51] sm:$0xff]
        %v7189 = vld [vmem:[#allocation2 + $0x61] sm:$0xff]
        %v7190 = vld [vmem:[#allocation2 + $0x69] sm:$0xff]
        %v7191 = vld [vmem:[#allocation2 + $0x79] sm:$0xff]
        %v7192 = vld [vmem:[#allocation2 + $0x81] sm:$0xff]
        %v7193 = vld [vmem:[#allocation2 + $0x91] sm:$0xff]
        %v7194 = vld [vmem:[#allocation2 + $0x99] sm:$0xff]
        %v7195 = vld [vmem:[#allocation2 + $0xa9] sm:$0xff]
        %v7196 = vld [vmem:[#allocation2 + $0xb1] sm:$0xff]
        %v7197 = vld [vmem:[#allocation2 + $0xc1] sm:$0xff]
        %v7198 = vld [vmem:[#allocation2 + $0xc9] sm:$0xff]
        %v7199 = vld [vmem:[#allocation2 + $0xd9] sm:$0xff]
        %v7200 = vld [vmem:[#allocation2 + $0xe1] sm:$0xff]
        %v7201 = vld [vmem:[#allocation2 + $0xf1] sm:$0xff]
        %v7202 = vld [vmem:[#allocation2 + $0xf9] sm:$0xff]
        %v7203 = vld [vmem:[#allocation2 + $0x109] sm:$0xff]
        %v7204 = vld [vmem:[#allocation2 + $0x111] sm:$0xff]
        %v7205 = vld [vmem:[#allocation2 + $0x121] sm:$0xff]
        %v7206 = vld [vmem:[#allocation2 + $0x129] sm:$0xff]
        %v7207 = vld [vmem:[#allocation2 + $0x139] sm:$0xff]
        %v7208 = vld [vmem:[#allocation2 + $0x141] sm:$0xff]
        %v7209 = vld [vmem:[#allocation2 + $0x151] sm:$0xff]
        %v7210 = vld [vmem:[#allocation2 + $0x159] sm:$0xff]
        %v7211 = vld [vmem:[#allocation2 + $0x169] sm:$0xff]
        %v7212 = vld [vmem:[#allocation2 + $0x171] sm:$0xff]
        %v7213 = vld [vmem:[%s7 + $0x1] sm:$0x1]
        %v7214 = vlaneseq
        %v7215 = vshrl.u32 %v7214, 7
        %v7216 = vsub.s32 0, %v7215
        %v7217 = vrot.slane %v7213, %v7216
        %v7218 = vmul.f32 %v7181, %v7217
        %v7219 = vmul.f32 %v7182, %v7217
        %v7220 = vmul.f32 %v7183, %v7217
        %v7221 = vmul.f32 %v7184, %v7217
        %v7222 = vmul.f32 %v7185, %v7217
        %v7223 = vmul.f32 %v7186, %v7217
        %v7224 = vmul.f32 %v7187, %v7217
        %v7225 = vmul.f32 %v7188, %v7217
        %v7226 = vmul.f32 %v7189, %v7217
        %v7227 = vmul.f32 %v7190, %v7217
        %v7228 = vmul.f32 %v7191, %v7217
        %v7229 = vmul.f32 %v7192, %v7217
        %v7230 = vmul.f32 %v7193, %v7217
        %v7231 = vmul.f32 %v7194, %v7217
        %v7232 = vmul.f32 %v7195, %v7217
        %v7233 = vmul.f32 %v7196, %v7217
        %v7234 = vmul.f32 %v7197, %v7217
        %v7235 = vmul.f32 %v7198, %v7217
        %v7236 = vmul.f32 %v7199, %v7217
        %v7237 = vmul.f32 %v7200, %v7217
        %v7238 = vmul.f32 %v7201, %v7217
        %v7239 = vmul.f32 %v7202, %v7217
        %v7240 = vmul.f32 %v7203, %v7217
        %v7241 = vmul.f32 %v7204, %v7217
        %v7242 = vmul.f32 %v7205, %v7217
        %v7243 = vmul.f32 %v7206, %v7217
        %v7244 = vmul.f32 %v7207, %v7217
        %v7245 = vmul.f32 %v7208, %v7217
        %v7246 = vmul.f32 %v7209, %v7217
        %v7247 = vmul.f32 %v7210, %v7217
        %v7248 = vmul.f32 %v7211, %v7217
        %v7249 = vmul.f32 %v7212, %v7217
        %7250 = vadd.xlane.f32.xlu0 %v7218
        %v7251 = vpop.xlane.xlu0 %7250
        %7252 = vadd.xlane.f32.xlu0 %v7219
        %v7253 = vpop.xlane.xlu0 %7252
        %7254 = vadd.xlane.f32.xlu0 %v7220
        %v7255 = vpop.xlane.xlu0 %7254
        %7256 = vadd.xlane.f32.xlu0 %v7221
        %v7257 = vpop.xlane.xlu0 %7256
        %7258 = vadd.xlane.f32.xlu0 %v7222
        %v7259 = vpop.xlane.xlu0 %7258
        %7260 = vadd.xlane.f32.xlu0 %v7223
        %v7261 = vpop.xlane.xlu0 %7260
        %7262 = vadd.xlane.f32.xlu0 %v7224
        %v7263 = vpop.xlane.xlu0 %7262
        %7264 = vadd.xlane.f32.xlu0 %v7225
        %v7265 = vpop.xlane.xlu0 %7264
        %7266 = vadd.xlane.f32.xlu0 %v7226
        %v7267 = vpop.xlane.xlu0 %7266
        %7268 = vadd.xlane.f32.xlu0 %v7227
        %v7269 = vpop.xlane.xlu0 %7268
        %7270 = vadd.xlane.f32.xlu0 %v7228
        %v7271 = vpop.xlane.xlu0 %7270
        %7272 = vadd.xlane.f32.xlu0 %v7229
        %v7273 = vpop.xlane.xlu0 %7272
        %7274 = vadd.xlane.f32.xlu0 %v7230
        %v7275 = vpop.xlane.xlu0 %7274
        %7276 = vadd.xlane.f32.xlu0 %v7231
        %v7277 = vpop.xlane.xlu0 %7276
        %7278 = vadd.xlane.f32.xlu0 %v7232
        %v7279 = vpop.xlane.xlu0 %7278
        %7280 = vadd.xlane.f32.xlu0 %v7233
        %v7281 = vpop.xlane.xlu0 %7280
        %7282 = vadd.xlane.f32.xlu0 %v7234
        %v7283 = vpop.xlane.xlu0 %7282
        %7284 = vadd.xlane.f32.xlu0 %v7235
        %v7285 = vpop.xlane.xlu0 %7284
        %7286 = vadd.xlane.f32.xlu0 %v7236
        %v7287 = vpop.xlane.xlu0 %7286
        %7288 = vadd.xlane.f32.xlu0 %v7237
        %v7289 = vpop.xlane.xlu0 %7288
        %7290 = vadd.xlane.f32.xlu0 %v7238
        %v7291 = vpop.xlane.xlu0 %7290
        %7292 = vadd.xlane.f32.xlu0 %v7239
        %v7293 = vpop.xlane.xlu0 %7292
        %7294 = vadd.xlane.f32.xlu0 %v7240
        %v7295 = vpop.xlane.xlu0 %7294
        %7296 = vadd.xlane.f32.xlu0 %v7241
        %v7297 = vpop.xlane.xlu0 %7296
        %7298 = vadd.xlane.f32.xlu0 %v7242
        %v7299 = vpop.xlane.xlu0 %7298
        %7300 = vadd.xlane.f32.xlu0 %v7243
        %v7301 = vpop.xlane.xlu0 %7300
        %7302 = vadd.xlane.f32.xlu0 %v7244
        %v7303 = vpop.xlane.xlu0 %7302
        %7304 = vadd.xlane.f32.xlu0 %v7245
        %v7305 = vpop.xlane.xlu0 %7304
        %7306 = vadd.xlane.f32.xlu0 %v7246
        %v7307 = vpop.xlane.xlu0 %7306
        %7308 = vadd.xlane.f32.xlu0 %v7247
        %v7309 = vpop.xlane.xlu0 %7308
        %7310 = vadd.xlane.f32.xlu0 %v7248
        %v7311 = vpop.xlane.xlu0 %7310
        %7312 = vadd.xlane.f32.xlu0 %v7249
        %v7313 = vpop.xlane.xlu0 %7312
        %v7314 = vadd.f32 %v7149, %v7251
        %v7315 = vadd.f32 %v7150, %v7253
        %v7316 = vadd.f32 %v7151, %v7255
        %v7317 = vadd.f32 %v7152, %v7257
        %v7318 = vadd.f32 %v7153, %v7259
        %v7319 = vadd.f32 %v7154, %v7261
        %v7320 = vadd.f32 %v7155, %v7263
        %v7321 = vadd.f32 %v7156, %v7265
        %v7322 = vadd.f32 %v7157, %v7267
        %v7323 = vadd.f32 %v7158, %v7269
        %v7324 = vadd.f32 %v7159, %v7271
        %v7325 = vadd.f32 %v7160, %v7273
        %v7326 = vadd.f32 %v7161, %v7275
        %v7327 = vadd.f32 %v7162, %v7277
        %v7328 = vadd.f32 %v7163, %v7279
        %v7329 = vadd.f32 %v7164, %v7281
        %v7330 = vadd.f32 %v7165, %v7283
        %v7331 = vadd.f32 %v7166, %v7285
        %v7332 = vadd.f32 %v7167, %v7287
        %v7333 = vadd.f32 %v7168, %v7289
        %v7334 = vadd.f32 %v7169, %v7291
        %v7335 = vadd.f32 %v7170, %v7293
        %v7336 = vadd.f32 %v7171, %v7295
        %v7337 = vadd.f32 %v7172, %v7297
        %v7338 = vadd.f32 %v7173, %v7299
        %v7339 = vadd.f32 %v7174, %v7301
        %v7340 = vadd.f32 %v7175, %v7303
        %v7341 = vadd.f32 %v7176, %v7305
        %v7342 = vadd.f32 %v7177, %v7307
        %v7343 = vadd.f32 %v7178, %v7309
        %v7344 = vadd.f32 %v7179, %v7311
        %v7345 = vadd.f32 %v7180, %v7313
        %v7346 = vld [vmem:[#allocation2 + $0x2] sm:$0xff]
        %v7347 = vld [vmem:[#allocation2 + $0xa] sm:$0xff]
        %v7348 = vld [vmem:[#allocation2 + $0x1a] sm:$0xff]
        %v7349 = vld [vmem:[#allocation2 + $0x22] sm:$0xff]
        %v7350 = vld [vmem:[#allocation2 + $0x32] sm:$0xff]
        %v7351 = vld [vmem:[#allocation2 + $0x3a] sm:$0xff]
        %v7352 = vld [vmem:[#allocation2 + $0x4a] sm:$0xff]
        %v7353 = vld [vmem:[#allocation2 + $0x52] sm:$0xff]
        %v7354 = vld [vmem:[#allocation2 + $0x62] sm:$0xff]
        %v7355 = vld [vmem:[#allocation2 + $0x6a] sm:$0xff]
        %v7356 = vld [vmem:[#allocation2 + $0x7a] sm:$0xff]
        %v7357 = vld [vmem:[#allocation2 + $0x82] sm:$0xff]
        %v7358 = vld [vmem:[#allocation2 + $0x92] sm:$0xff]
        %v7359 = vld [vmem:[#allocation2 + $0x9a] sm:$0xff]
        %v7360 = vld [vmem:[#allocation2 + $0xaa] sm:$0xff]
        %v7361 = vld [vmem:[#allocation2 + $0xb2] sm:$0xff]
        %v7362 = vld [vmem:[#allocation2 + $0xc2] sm:$0xff]
        %v7363 = vld [vmem:[#allocation2 + $0xca] sm:$0xff]
        %v7364 = vld [vmem:[#allocation2 + $0xda] sm:$0xff]
        %v7365 = vld [vmem:[#allocation2 + $0xe2] sm:$0xff]
        %v7366 = vld [vmem:[#allocation2 + $0xf2] sm:$0xff]
        %v7367 = vld [vmem:[#allocation2 + $0xfa] sm:$0xff]
        %v7368 = vld [vmem:[#allocation2 + $0x10a] sm:$0xff]
        %v7369 = vld [vmem:[#allocation2 + $0x112] sm:$0xff]
        %v7370 = vld [vmem:[#allocation2 + $0x122] sm:$0xff]
        %v7371 = vld [vmem:[#allocation2 + $0x12a] sm:$0xff]
        %v7372 = vld [vmem:[#allocation2 + $0x13a] sm:$0xff]
        %v7373 = vld [vmem:[#allocation2 + $0x142] sm:$0xff]
        %v7374 = vld [vmem:[#allocation2 + $0x152] sm:$0xff]
        %v7375 = vld [vmem:[#allocation2 + $0x15a] sm:$0xff]
        %v7376 = vld [vmem:[#allocation2 + $0x16a] sm:$0xff]
        %v7377 = vld [vmem:[#allocation2 + $0x172] sm:$0xff]
        %v7378 = vld [vmem:[%s7 + $0x2] sm:$0x1]
        %v7379 = vlaneseq
        %v7380 = vshrl.u32 %v7379, 7
        %v7381 = vsub.s32 0, %v7380
        %v7382 = vrot.slane %v7378, %v7381
        %v7383 = vmul.f32 %v7346, %v7382
        %v7384 = vmul.f32 %v7347, %v7382
        %v7385 = vmul.f32 %v7348, %v7382
        %v7386 = vmul.f32 %v7349, %v7382
        %v7387 = vmul.f32 %v7350, %v7382
        %v7388 = vmul.f32 %v7351, %v7382
        %v7389 = vmul.f32 %v7352, %v7382
        %v7390 = vmul.f32 %v7353, %v7382
        %v7391 = vmul.f32 %v7354, %v7382
        %v7392 = vmul.f32 %v7355, %v7382
        %v7393 = vmul.f32 %v7356, %v7382
        %v7394 = vmul.f32 %v7357, %v7382
        %v7395 = vmul.f32 %v7358, %v7382
        %v7396 = vmul.f32 %v7359, %v7382
        %v7397 = vmul.f32 %v7360, %v7382
        %v7398 = vmul.f32 %v7361, %v7382
        %v7399 = vmul.f32 %v7362, %v7382
        %v7400 = vmul.f32 %v7363, %v7382
        %v7401 = vmul.f32 %v7364, %v7382
        %v7402 = vmul.f32 %v7365, %v7382
        %v7403 = vmul.f32 %v7366, %v7382
        %v7404 = vmul.f32 %v7367, %v7382
        %v7405 = vmul.f32 %v7368, %v7382
        %v7406 = vmul.f32 %v7369, %v7382
        %v7407 = vmul.f32 %v7370, %v7382
        %v7408 = vmul.f32 %v7371, %v7382
        %v7409 = vmul.f32 %v7372, %v7382
        %v7410 = vmul.f32 %v7373, %v7382
        %v7411 = vmul.f32 %v7374, %v7382
        %v7412 = vmul.f32 %v7375, %v7382
        %v7413 = vmul.f32 %v7376, %v7382
        %v7414 = vmul.f32 %v7377, %v7382
        %7415 = vadd.xlane.f32.xlu0 %v7383
        %v7416 = vpop.xlane.xlu0 %7415
        %7417 = vadd.xlane.f32.xlu0 %v7384
        %v7418 = vpop.xlane.xlu0 %7417
        %7419 = vadd.xlane.f32.xlu0 %v7385
        %v7420 = vpop.xlane.xlu0 %7419
        %7421 = vadd.xlane.f32.xlu0 %v7386
        %v7422 = vpop.xlane.xlu0 %7421
        %7423 = vadd.xlane.f32.xlu0 %v7387
        %v7424 = vpop.xlane.xlu0 %7423
        %7425 = vadd.xlane.f32.xlu0 %v7388
        %v7426 = vpop.xlane.xlu0 %7425
        %7427 = vadd.xlane.f32.xlu0 %v7389
        %v7428 = vpop.xlane.xlu0 %7427
        %7429 = vadd.xlane.f32.xlu0 %v7390
        %v7430 = vpop.xlane.xlu0 %7429
        %7431 = vadd.xlane.f32.xlu0 %v7391
        %v7432 = vpop.xlane.xlu0 %7431
        %7433 = vadd.xlane.f32.xlu0 %v7392
        %v7434 = vpop.xlane.xlu0 %7433
        %7435 = vadd.xlane.f32.xlu0 %v7393
        %v7436 = vpop.xlane.xlu0 %7435
        %7437 = vadd.xlane.f32.xlu0 %v7394
        %v7438 = vpop.xlane.xlu0 %7437
        %7439 = vadd.xlane.f32.xlu0 %v7395
        %v7440 = vpop.xlane.xlu0 %7439
        %7441 = vadd.xlane.f32.xlu0 %v7396
        %v7442 = vpop.xlane.xlu0 %7441
        %7443 = vadd.xlane.f32.xlu0 %v7397
        %v7444 = vpop.xlane.xlu0 %7443
        %7445 = vadd.xlane.f32.xlu0 %v7398
        %v7446 = vpop.xlane.xlu0 %7445
        %7447 = vadd.xlane.f32.xlu0 %v7399
        %v7448 = vpop.xlane.xlu0 %7447
        %7449 = vadd.xlane.f32.xlu0 %v7400
        %v7450 = vpop.xlane.xlu0 %7449
        %7451 = vadd.xlane.f32.xlu0 %v7401
        %v7452 = vpop.xlane.xlu0 %7451
        %7453 = vadd.xlane.f32.xlu0 %v7402
        %v7454 = vpop.xlane.xlu0 %7453
        %7455 = vadd.xlane.f32.xlu0 %v7403
        %v7456 = vpop.xlane.xlu0 %7455
        %7457 = vadd.xlane.f32.xlu0 %v7404
        %v7458 = vpop.xlane.xlu0 %7457
        %7459 = vadd.xlane.f32.xlu0 %v7405
        %v7460 = vpop.xlane.xlu0 %7459
        %7461 = vadd.xlane.f32.xlu0 %v7406
        %v7462 = vpop.xlane.xlu0 %7461
        %7463 = vadd.xlane.f32.xlu0 %v7407
        %v7464 = vpop.xlane.xlu0 %7463
        %7465 = vadd.xlane.f32.xlu0 %v7408
        %v7466 = vpop.xlane.xlu0 %7465
        %7467 = vadd.xlane.f32.xlu0 %v7409
        %v7468 = vpop.xlane.xlu0 %7467
        %7469 = vadd.xlane.f32.xlu0 %v7410
        %v7470 = vpop.xlane.xlu0 %7469
        %7471 = vadd.xlane.f32.xlu0 %v7411
        %v7472 = vpop.xlane.xlu0 %7471
        %7473 = vadd.xlane.f32.xlu0 %v7412
        %v7474 = vpop.xlane.xlu0 %7473
        %7475 = vadd.xlane.f32.xlu0 %v7413
        %v7476 = vpop.xlane.xlu0 %7475
        %7477 = vadd.xlane.f32.xlu0 %v7414
        %v7478 = vpop.xlane.xlu0 %7477
        %v7479 = vadd.f32 %v7314, %v7416
        %v7480 = vadd.f32 %v7315, %v7418
        %v7481 = vadd.f32 %v7316, %v7420
        %v7482 = vadd.f32 %v7317, %v7422
        %v7483 = vadd.f32 %v7318, %v7424
        %v7484 = vadd.f32 %v7319, %v7426
        %v7485 = vadd.f32 %v7320, %v7428
        %v7486 = vadd.f32 %v7321, %v7430
        %v7487 = vadd.f32 %v7322, %v7432
        %v7488 = vadd.f32 %v7323, %v7434
        %v7489 = vadd.f32 %v7324, %v7436
        %v7490 = vadd.f32 %v7325, %v7438
        %v7491 = vadd.f32 %v7326, %v7440
        %v7492 = vadd.f32 %v7327, %v7442
        %v7493 = vadd.f32 %v7328, %v7444
        %v7494 = vadd.f32 %v7329, %v7446
        %v7495 = vadd.f32 %v7330, %v7448
        %v7496 = vadd.f32 %v7331, %v7450
        %v7497 = vadd.f32 %v7332, %v7452
        %v7498 = vadd.f32 %v7333, %v7454
        %v7499 = vadd.f32 %v7334, %v7456
        %v7500 = vadd.f32 %v7335, %v7458
        %v7501 = vadd.f32 %v7336, %v7460
        %v7502 = vadd.f32 %v7337, %v7462
        %v7503 = vadd.f32 %v7338, %v7464
        %v7504 = vadd.f32 %v7339, %v7466
        %v7505 = vadd.f32 %v7340, %v7468
        %v7506 = vadd.f32 %v7341, %v7470
        %v7507 = vadd.f32 %v7342, %v7472
        %v7508 = vadd.f32 %v7343, %v7474
        %v7509 = vadd.f32 %v7344, %v7476
        %v7510 = vadd.f32 %v7345, %v7478
        %v7511 = vld [vmem:[%s465] sm:$0xff]
        %v7512 = vld [vmem:[%s465 + $0x8] sm:$0xff]
        %v7513 = vld [vmem:[%s465 + $0x18] sm:$0xff]
        %v7514 = vld [vmem:[%s465 + $0x20] sm:$0xff]
        %v7515 = vld [vmem:[%s465 + $0x30] sm:$0xff]
        %v7516 = vld [vmem:[%s465 + $0x38] sm:$0xff]
        %v7517 = vld [vmem:[%s465 + $0x48] sm:$0xff]
        %v7518 = vld [vmem:[%s465 + $0x50] sm:$0xff]
        %v7519 = vld [vmem:[%s465 + $0x60] sm:$0xff]
        %v7520 = vld [vmem:[%s465 + $0x68] sm:$0xff]
        %v7521 = vld [vmem:[%s465 + $0x78] sm:$0xff]
        %v7522 = vld [vmem:[%s465 + $0x80] sm:$0xff]
        %v7523 = vld [vmem:[%s465 + $0x90] sm:$0xff]
        %v7524 = vld [vmem:[%s465 + $0x98] sm:$0xff]
        %v7525 = vld [vmem:[%s465 + $0xa8] sm:$0xff]
        %v7526 = vld [vmem:[%s465 + $0xb0] sm:$0xff]
        %v7527 = vld [vmem:[%s465 + $0xc0] sm:$0xff]
        %v7528 = vld [vmem:[%s465 + $0xc8] sm:$0xff]
        %v7529 = vld [vmem:[%s465 + $0xd8] sm:$0xff]
        %v7530 = vld [vmem:[%s465 + $0xe0] sm:$0xff]
        %v7531 = vld [vmem:[%s465 + $0xf0] sm:$0xff]
        %v7532 = vld [vmem:[%s465 + $0xf8] sm:$0xff]
        %v7533 = vld [vmem:[%s465 + $0x108] sm:$0xff]
        %v7534 = vld [vmem:[%s465 + $0x110] sm:$0xff]
        %v7535 = vld [vmem:[%s465 + $0x120] sm:$0xff]
        %v7536 = vld [vmem:[%s465 + $0x128] sm:$0xff]
        %v7537 = vld [vmem:[%s465 + $0x138] sm:$0xff]
        %v7538 = vld [vmem:[%s465 + $0x140] sm:$0xff]
        %v7539 = vld [vmem:[%s465 + $0x150] sm:$0xff]
        %v7540 = vld [vmem:[%s465 + $0x158] sm:$0xff]
        %v7541 = vld [vmem:[%s465 + $0x168] sm:$0xff]
        %v7542 = vld [vmem:[%s465 + $0x170] sm:$0xff]
        %v7543 = vld [vmem:[%s7 + $0x3] sm:$0x1]
        %v7544 = vlaneseq
        %v7545 = vshrl.u32 %v7544, 7
        %v7546 = vsub.s32 0, %v7545
        %v7547 = vrot.slane %v7543, %v7546
        %v7548 = vmul.f32 %v7511, %v7547
        %v7549 = vmul.f32 %v7512, %v7547
        %v7550 = vmul.f32 %v7513, %v7547
        %v7551 = vmul.f32 %v7514, %v7547
        %v7552 = vmul.f32 %v7515, %v7547
        %v7553 = vmul.f32 %v7516, %v7547
        %v7554 = vmul.f32 %v7517, %v7547
        %v7555 = vmul.f32 %v7518, %v7547
        %v7556 = vmul.f32 %v7519, %v7547
        %v7557 = vmul.f32 %v7520, %v7547
        %v7558 = vmul.f32 %v7521, %v7547
        %v7559 = vmul.f32 %v7522, %v7547
        %v7560 = vmul.f32 %v7523, %v7547
        %v7561 = vmul.f32 %v7524, %v7547
        %v7562 = vmul.f32 %v7525, %v7547
        %v7563 = vmul.f32 %v7526, %v7547
        %v7564 = vmul.f32 %v7527, %v7547
        %v7565 = vmul.f32 %v7528, %v7547
        %v7566 = vmul.f32 %v7529, %v7547
        %v7567 = vmul.f32 %v7530, %v7547
        %v7568 = vmul.f32 %v7531, %v7547
        %v7569 = vmul.f32 %v7532, %v7547
        %v7570 = vmul.f32 %v7533, %v7547
        %v7571 = vmul.f32 %v7534, %v7547
        %v7572 = vmul.f32 %v7535, %v7547
        %v7573 = vmul.f32 %v7536, %v7547
        %v7574 = vmul.f32 %v7537, %v7547
        %v7575 = vmul.f32 %v7538, %v7547
        %v7576 = vmul.f32 %v7539, %v7547
        %v7577 = vmul.f32 %v7540, %v7547
        %v7578 = vmul.f32 %v7541, %v7547
        %v7579 = vmul.f32 %v7542, %v7547
        %7580 = vadd.xlane.f32.xlu0 %v7548
        %v7581 = vpop.xlane.xlu0 %7580
        %7582 = vadd.xlane.f32.xlu0 %v7549
        %v7583 = vpop.xlane.xlu0 %7582
        %7584 = vadd.xlane.f32.xlu0 %v7550
        %v7585 = vpop.xlane.xlu0 %7584
        %7586 = vadd.xlane.f32.xlu0 %v7551
        %v7587 = vpop.xlane.xlu0 %7586
        %7588 = vadd.xlane.f32.xlu0 %v7552
        %v7589 = vpop.xlane.xlu0 %7588
        %7590 = vadd.xlane.f32.xlu0 %v7553
        %v7591 = vpop.xlane.xlu0 %7590
        %7592 = vadd.xlane.f32.xlu0 %v7554
        %v7593 = vpop.xlane.xlu0 %7592
        %7594 = vadd.xlane.f32.xlu0 %v7555
        %v7595 = vpop.xlane.xlu0 %7594
        %7596 = vadd.xlane.f32.xlu0 %v7556
        %v7597 = vpop.xlane.xlu0 %7596
        %7598 = vadd.xlane.f32.xlu0 %v7557
        %v7599 = vpop.xlane.xlu0 %7598
        %7600 = vadd.xlane.f32.xlu0 %v7558
        %v7601 = vpop.xlane.xlu0 %7600
        %7602 = vadd.xlane.f32.xlu0 %v7559
        %v7603 = vpop.xlane.xlu0 %7602
        %7604 = vadd.xlane.f32.xlu0 %v7560
        %v7605 = vpop.xlane.xlu0 %7604
        %7606 = vadd.xlane.f32.xlu0 %v7561
        %v7607 = vpop.xlane.xlu0 %7606
        %7608 = vadd.xlane.f32.xlu0 %v7562
        %v7609 = vpop.xlane.xlu0 %7608
        %7610 = vadd.xlane.f32.xlu0 %v7563
        %v7611 = vpop.xlane.xlu0 %7610
        %7612 = vadd.xlane.f32.xlu0 %v7564
        %v7613 = vpop.xlane.xlu0 %7612
        %7614 = vadd.xlane.f32.xlu0 %v7565
        %v7615 = vpop.xlane.xlu0 %7614
        %7616 = vadd.xlane.f32.xlu0 %v7566
        %v7617 = vpop.xlane.xlu0 %7616
        %7618 = vadd.xlane.f32.xlu0 %v7567
        %v7619 = vpop.xlane.xlu0 %7618
        %7620 = vadd.xlane.f32.xlu0 %v7568
        %v7621 = vpop.xlane.xlu0 %7620
        %7622 = vadd.xlane.f32.xlu0 %v7569
        %v7623 = vpop.xlane.xlu0 %7622
        %7624 = vadd.xlane.f32.xlu0 %v7570
        %v7625 = vpop.xlane.xlu0 %7624
        %7626 = vadd.xlane.f32.xlu0 %v7571
        %v7627 = vpop.xlane.xlu0 %7626
        %7628 = vadd.xlane.f32.xlu0 %v7572
        %v7629 = vpop.xlane.xlu0 %7628
        %7630 = vadd.xlane.f32.xlu0 %v7573
        %v7631 = vpop.xlane.xlu0 %7630
        %7632 = vadd.xlane.f32.xlu0 %v7574
        %v7633 = vpop.xlane.xlu0 %7632
        %7634 = vadd.xlane.f32.xlu0 %v7575
        %v7635 = vpop.xlane.xlu0 %7634
        %7636 = vadd.xlane.f32.xlu0 %v7576
        %v7637 = vpop.xlane.xlu0 %7636
        %7638 = vadd.xlane.f32.xlu0 %v7577
        %v7639 = vpop.xlane.xlu0 %7638
        %7640 = vadd.xlane.f32.xlu0 %v7578
        %v7641 = vpop.xlane.xlu0 %7640
        %7642 = vadd.xlane.f32.xlu0 %v7579
        %v7643 = vpop.xlane.xlu0 %7642
        %v7644 = vadd.f32 %v7479, %v7581
        %v7645 = vadd.f32 %v7480, %v7583
        %v7646 = vadd.f32 %v7481, %v7585
        %v7647 = vadd.f32 %v7482, %v7587
        %v7648 = vadd.f32 %v7483, %v7589
        %v7649 = vadd.f32 %v7484, %v7591
        %v7650 = vadd.f32 %v7485, %v7593
        %v7651 = vadd.f32 %v7486, %v7595
        %v7652 = vadd.f32 %v7487, %v7597
        %v7653 = vadd.f32 %v7488, %v7599
        %v7654 = vadd.f32 %v7489, %v7601
        %v7655 = vadd.f32 %v7490, %v7603
        %v7656 = vadd.f32 %v7491, %v7605
        %v7657 = vadd.f32 %v7492, %v7607
        %v7658 = vadd.f32 %v7493, %v7609
        %v7659 = vadd.f32 %v7494, %v7611
        %v7660 = vadd.f32 %v7495, %v7613
        %v7661 = vadd.f32 %v7496, %v7615
        %v7662 = vadd.f32 %v7497, %v7617
        %v7663 = vadd.f32 %v7498, %v7619
        %v7664 = vadd.f32 %v7499, %v7621
        %v7665 = vadd.f32 %v7500, %v7623
        %v7666 = vadd.f32 %v7501, %v7625
        %v7667 = vadd.f32 %v7502, %v7627
        %v7668 = vadd.f32 %v7503, %v7629
        %v7669 = vadd.f32 %v7504, %v7631
        %v7670 = vadd.f32 %v7505, %v7633
        %v7671 = vadd.f32 %v7506, %v7635
        %v7672 = vadd.f32 %v7507, %v7637
        %v7673 = vadd.f32 %v7508, %v7639
        %v7674 = vadd.f32 %v7509, %v7641
        %v7675 = vadd.f32 %v7510, %v7643
        %v7676 = vld [vmem:[%s465 + $0x1] sm:$0xff]
        %v7677 = vld [vmem:[%s465 + $0x9] sm:$0xff]
        %v7678 = vld [vmem:[%s465 + $0x19] sm:$0xff]
        %v7679 = vld [vmem:[%s465 + $0x21] sm:$0xff]
        %v7680 = vld [vmem:[%s465 + $0x31] sm:$0xff]
        %v7681 = vld [vmem:[%s465 + $0x39] sm:$0xff]
        %v7682 = vld [vmem:[%s465 + $0x49] sm:$0xff]
        %v7683 = vld [vmem:[%s465 + $0x51] sm:$0xff]
        %v7684 = vld [vmem:[%s465 + $0x61] sm:$0xff]
        %v7685 = vld [vmem:[%s465 + $0x69] sm:$0xff]
        %v7686 = vld [vmem:[%s465 + $0x79] sm:$0xff]
        %v7687 = vld [vmem:[%s465 + $0x81] sm:$0xff]
        %v7688 = vld [vmem:[%s465 + $0x91] sm:$0xff]
        %v7689 = vld [vmem:[%s465 + $0x99] sm:$0xff]
        %v7690 = vld [vmem:[%s465 + $0xa9] sm:$0xff]
        %v7691 = vld [vmem:[%s465 + $0xb1] sm:$0xff]
        %v7692 = vld [vmem:[%s465 + $0xc1] sm:$0xff]
        %v7693 = vld [vmem:[%s465 + $0xc9] sm:$0xff]
        %v7694 = vld [vmem:[%s465 + $0xd9] sm:$0xff]
        %v7695 = vld [vmem:[%s465 + $0xe1] sm:$0xff]
        %v7696 = vld [vmem:[%s465 + $0xf1] sm:$0xff]
        %v7697 = vld [vmem:[%s465 + $0xf9] sm:$0xff]
        %v7698 = vld [vmem:[%s465 + $0x109] sm:$0xff]
        %v7699 = vld [vmem:[%s465 + $0x111] sm:$0xff]
        %v7700 = vld [vmem:[%s465 + $0x121] sm:$0xff]
        %v7701 = vld [vmem:[%s465 + $0x129] sm:$0xff]
        %v7702 = vld [vmem:[%s465 + $0x139] sm:$0xff]
        %v7703 = vld [vmem:[%s465 + $0x141] sm:$0xff]
        %v7704 = vld [vmem:[%s465 + $0x151] sm:$0xff]
        %v7705 = vld [vmem:[%s465 + $0x159] sm:$0xff]
        %v7706 = vld [vmem:[%s465 + $0x169] sm:$0xff]
        %v7707 = vld [vmem:[%s465 + $0x171] sm:$0xff]
        %v7708 = vld [vmem:[%s7 + $0x4] sm:$0x1]
        %v7709 = vlaneseq
        %v7710 = vshrl.u32 %v7709, 7
        %v7711 = vsub.s32 0, %v7710
        %v7712 = vrot.slane %v7708, %v7711
        %v7713 = vmul.f32 %v7676, %v7712
        %v7714 = vmul.f32 %v7677, %v7712
        %v7715 = vmul.f32 %v7678, %v7712
        %v7716 = vmul.f32 %v7679, %v7712
        %v7717 = vmul.f32 %v7680, %v7712
        %v7718 = vmul.f32 %v7681, %v7712
        %v7719 = vmul.f32 %v7682, %v7712
        %v7720 = vmul.f32 %v7683, %v7712
        %v7721 = vmul.f32 %v7684, %v7712
        %v7722 = vmul.f32 %v7685, %v7712
        %v7723 = vmul.f32 %v7686, %v7712
        %v7724 = vmul.f32 %v7687, %v7712
        %v7725 = vmul.f32 %v7688, %v7712
        %v7726 = vmul.f32 %v7689, %v7712
        %v7727 = vmul.f32 %v7690, %v7712
        %v7728 = vmul.f32 %v7691, %v7712
        %v7729 = vmul.f32 %v7692, %v7712
        %v7730 = vmul.f32 %v7693, %v7712
        %v7731 = vmul.f32 %v7694, %v7712
        %v7732 = vmul.f32 %v7695, %v7712
        %v7733 = vmul.f32 %v7696, %v7712
        %v7734 = vmul.f32 %v7697, %v7712
        %v7735 = vmul.f32 %v7698, %v7712
        %v7736 = vmul.f32 %v7699, %v7712
        %v7737 = vmul.f32 %v7700, %v7712
        %v7738 = vmul.f32 %v7701, %v7712
        %v7739 = vmul.f32 %v7702, %v7712
        %v7740 = vmul.f32 %v7703, %v7712
        %v7741 = vmul.f32 %v7704, %v7712
        %v7742 = vmul.f32 %v7705, %v7712
        %v7743 = vmul.f32 %v7706, %v7712
        %v7744 = vmul.f32 %v7707, %v7712
        %7745 = vadd.xlane.f32.xlu0 %v7713
        %v7746 = vpop.xlane.xlu0 %7745
        %7747 = vadd.xlane.f32.xlu0 %v7714
        %v7748 = vpop.xlane.xlu0 %7747
        %7749 = vadd.xlane.f32.xlu0 %v7715
        %v7750 = vpop.xlane.xlu0 %7749
        %7751 = vadd.xlane.f32.xlu0 %v7716
        %v7752 = vpop.xlane.xlu0 %7751
        %7753 = vadd.xlane.f32.xlu0 %v7717
        %v7754 = vpop.xlane.xlu0 %7753
        %7755 = vadd.xlane.f32.xlu0 %v7718
        %v7756 = vpop.xlane.xlu0 %7755
        %7757 = vadd.xlane.f32.xlu0 %v7719
        %v7758 = vpop.xlane.xlu0 %7757
        %7759 = vadd.xlane.f32.xlu0 %v7720
        %v7760 = vpop.xlane.xlu0 %7759
        %7761 = vadd.xlane.f32.xlu0 %v7721
        %v7762 = vpop.xlane.xlu0 %7761
        %7763 = vadd.xlane.f32.xlu0 %v7722
        %v7764 = vpop.xlane.xlu0 %7763
        %7765 = vadd.xlane.f32.xlu0 %v7723
        %v7766 = vpop.xlane.xlu0 %7765
        %7767 = vadd.xlane.f32.xlu0 %v7724
        %v7768 = vpop.xlane.xlu0 %7767
        %7769 = vadd.xlane.f32.xlu0 %v7725
        %v7770 = vpop.xlane.xlu0 %7769
        %7771 = vadd.xlane.f32.xlu0 %v7726
        %v7772 = vpop.xlane.xlu0 %7771
        %7773 = vadd.xlane.f32.xlu0 %v7727
        %v7774 = vpop.xlane.xlu0 %7773
        %7775 = vadd.xlane.f32.xlu0 %v7728
        %v7776 = vpop.xlane.xlu0 %7775
        %7777 = vadd.xlane.f32.xlu0 %v7729
        %v7778 = vpop.xlane.xlu0 %7777
        %7779 = vadd.xlane.f32.xlu0 %v7730
        %v7780 = vpop.xlane.xlu0 %7779
        %7781 = vadd.xlane.f32.xlu0 %v7731
        %v7782 = vpop.xlane.xlu0 %7781
        %7783 = vadd.xlane.f32.xlu0 %v7732
        %v7784 = vpop.xlane.xlu0 %7783
        %7785 = vadd.xlane.f32.xlu0 %v7733
        %v7786 = vpop.xlane.xlu0 %7785
        %7787 = vadd.xlane.f32.xlu0 %v7734
        %v7788 = vpop.xlane.xlu0 %7787
        %7789 = vadd.xlane.f32.xlu0 %v7735
        %v7790 = vpop.xlane.xlu0 %7789
        %7791 = vadd.xlane.f32.xlu0 %v7736
        %v7792 = vpop.xlane.xlu0 %7791
        %7793 = vadd.xlane.f32.xlu0 %v7737
        %v7794 = vpop.xlane.xlu0 %7793
        %7795 = vadd.xlane.f32.xlu0 %v7738
        %v7796 = vpop.xlane.xlu0 %7795
        %7797 = vadd.xlane.f32.xlu0 %v7739
        %v7798 = vpop.xlane.xlu0 %7797
        %7799 = vadd.xlane.f32.xlu0 %v7740
        %v7800 = vpop.xlane.xlu0 %7799
        %7801 = vadd.xlane.f32.xlu0 %v7741
        %v7802 = vpop.xlane.xlu0 %7801
        %7803 = vadd.xlane.f32.xlu0 %v7742
        %v7804 = vpop.xlane.xlu0 %7803
        %7805 = vadd.xlane.f32.xlu0 %v7743
        %v7806 = vpop.xlane.xlu0 %7805
        %7807 = vadd.xlane.f32.xlu0 %v7744
        %v7808 = vpop.xlane.xlu0 %7807
        %v7809 = vadd.f32 %v7644, %v7746
        %v7810 = vadd.f32 %v7645, %v7748
        %v7811 = vadd.f32 %v7646, %v7750
        %v7812 = vadd.f32 %v7647, %v7752
        %v7813 = vadd.f32 %v7648, %v7754
        %v7814 = vadd.f32 %v7649, %v7756
        %v7815 = vadd.f32 %v7650, %v7758
        %v7816 = vadd.f32 %v7651, %v7760
        %v7817 = vadd.f32 %v7652, %v7762
        %v7818 = vadd.f32 %v7653, %v7764
        %v7819 = vadd.f32 %v7654, %v7766
        %v7820 = vadd.f32 %v7655, %v7768
        %v7821 = vadd.f32 %v7656, %v7770
        %v7822 = vadd.f32 %v7657, %v7772
        %v7823 = vadd.f32 %v7658, %v7774
        %v7824 = vadd.f32 %v7659, %v7776
        %v7825 = vadd.f32 %v7660, %v7778
        %v7826 = vadd.f32 %v7661, %v7780
        %v7827 = vadd.f32 %v7662, %v7782
        %v7828 = vadd.f32 %v7663, %v7784
        %v7829 = vadd.f32 %v7664, %v7786
        %v7830 = vadd.f32 %v7665, %v7788
        %v7831 = vadd.f32 %v7666, %v7790
        %v7832 = vadd.f32 %v7667, %v7792
        %v7833 = vadd.f32 %v7668, %v7794
        %v7834 = vadd.f32 %v7669, %v7796
        %v7835 = vadd.f32 %v7670, %v7798
        %v7836 = vadd.f32 %v7671, %v7800
        %v7837 = vadd.f32 %v7672, %v7802
        %v7838 = vadd.f32 %v7673, %v7804
        %v7839 = vadd.f32 %v7674, %v7806
        %v7840 = vadd.f32 %v7675, %v7808
        %v7841 = vld [vmem:[%s465 + $0x2] sm:$0xff]
        %v7842 = vld [vmem:[%s465 + $0xa] sm:$0xff]
        %v7843 = vld [vmem:[%s465 + $0x1a] sm:$0xff]
        %v7844 = vld [vmem:[%s465 + $0x22] sm:$0xff]
        %v7845 = vld [vmem:[%s465 + $0x32] sm:$0xff]
        %v7846 = vld [vmem:[%s465 + $0x3a] sm:$0xff]
        %v7847 = vld [vmem:[%s465 + $0x4a] sm:$0xff]
        %v7848 = vld [vmem:[%s465 + $0x52] sm:$0xff]
        %v7849 = vld [vmem:[%s465 + $0x62] sm:$0xff]
        %v7850 = vld [vmem:[%s465 + $0x6a] sm:$0xff]
        %v7851 = vld [vmem:[%s465 + $0x7a] sm:$0xff]
        %v7852 = vld [vmem:[%s465 + $0x82] sm:$0xff]
        %v7853 = vld [vmem:[%s465 + $0x92] sm:$0xff]
        %v7854 = vld [vmem:[%s465 + $0x9a] sm:$0xff]
        %v7855 = vld [vmem:[%s465 + $0xaa] sm:$0xff]
        %v7856 = vld [vmem:[%s465 + $0xb2] sm:$0xff]
        %v7857 = vld [vmem:[%s465 + $0xc2] sm:$0xff]
        %v7858 = vld [vmem:[%s465 + $0xca] sm:$0xff]
        %v7859 = vld [vmem:[%s465 + $0xda] sm:$0xff]
        %v7860 = vld [vmem:[%s465 + $0xe2] sm:$0xff]
        %v7861 = vld [vmem:[%s465 + $0xf2] sm:$0xff]
        %v7862 = vld [vmem:[%s465 + $0xfa] sm:$0xff]
        %v7863 = vld [vmem:[%s465 + $0x10a] sm:$0xff]
        %v7864 = vld [vmem:[%s465 + $0x112] sm:$0xff]
        %v7865 = vld [vmem:[%s465 + $0x122] sm:$0xff]
        %v7866 = vld [vmem:[%s465 + $0x12a] sm:$0xff]
        %v7867 = vld [vmem:[%s465 + $0x13a] sm:$0xff]
        %v7868 = vld [vmem:[%s465 + $0x142] sm:$0xff]
        %v7869 = vld [vmem:[%s465 + $0x152] sm:$0xff]
        %v7870 = vld [vmem:[%s465 + $0x15a] sm:$0xff]
        %v7871 = vld [vmem:[%s465 + $0x16a] sm:$0xff]
        %v7872 = vld [vmem:[%s465 + $0x172] sm:$0xff]
        %v7873 = vld [vmem:[%s7 + $0x5] sm:$0x1]
        %v7874 = vlaneseq
        %v7875 = vshrl.u32 %v7874, 7
        %v7876 = vsub.s32 0, %v7875
        %v7877 = vrot.slane %v7873, %v7876
        %v7878 = vmul.f32 %v7841, %v7877
        %v7879 = vmul.f32 %v7842, %v7877
        %v7880 = vmul.f32 %v7843, %v7877
        %v7881 = vmul.f32 %v7844, %v7877
        %v7882 = vmul.f32 %v7845, %v7877
        %v7883 = vmul.f32 %v7846, %v7877
        %v7884 = vmul.f32 %v7847, %v7877
        %v7885 = vmul.f32 %v7848, %v7877
        %v7886 = vmul.f32 %v7849, %v7877
        %v7887 = vmul.f32 %v7850, %v7877
        %v7888 = vmul.f32 %v7851, %v7877
        %v7889 = vmul.f32 %v7852, %v7877
        %v7890 = vmul.f32 %v7853, %v7877
        %v7891 = vmul.f32 %v7854, %v7877
        %v7892 = vmul.f32 %v7855, %v7877
        %v7893 = vmul.f32 %v7856, %v7877
        %v7894 = vmul.f32 %v7857, %v7877
        %v7895 = vmul.f32 %v7858, %v7877
        %v7896 = vmul.f32 %v7859, %v7877
        %v7897 = vmul.f32 %v7860, %v7877
        %v7898 = vmul.f32 %v7861, %v7877
        %v7899 = vmul.f32 %v7862, %v7877
        %v7900 = vmul.f32 %v7863, %v7877
        %v7901 = vmul.f32 %v7864, %v7877
        %v7902 = vmul.f32 %v7865, %v7877
        %v7903 = vmul.f32 %v7866, %v7877
        %v7904 = vmul.f32 %v7867, %v7877
        %v7905 = vmul.f32 %v7868, %v7877
        %v7906 = vmul.f32 %v7869, %v7877
        %v7907 = vmul.f32 %v7870, %v7877
        %v7908 = vmul.f32 %v7871, %v7877
        %v7909 = vmul.f32 %v7872, %v7877
        %7910 = vadd.xlane.f32.xlu0 %v7878
        %v7911 = vpop.xlane.xlu0 %7910
        %7912 = vadd.xlane.f32.xlu0 %v7879
        %v7913 = vpop.xlane.xlu0 %7912
        %7914 = vadd.xlane.f32.xlu0 %v7880
        %v7915 = vpop.xlane.xlu0 %7914
        %7916 = vadd.xlane.f32.xlu0 %v7881
        %v7917 = vpop.xlane.xlu0 %7916
        %7918 = vadd.xlane.f32.xlu0 %v7882
        %v7919 = vpop.xlane.xlu0 %7918
        %7920 = vadd.xlane.f32.xlu0 %v7883
        %v7921 = vpop.xlane.xlu0 %7920
        %7922 = vadd.xlane.f32.xlu0 %v7884
        %v7923 = vpop.xlane.xlu0 %7922
        %7924 = vadd.xlane.f32.xlu0 %v7885
        %v7925 = vpop.xlane.xlu0 %7924
        %7926 = vadd.xlane.f32.xlu0 %v7886
        %v7927 = vpop.xlane.xlu0 %7926
        %7928 = vadd.xlane.f32.xlu0 %v7887
        %v7929 = vpop.xlane.xlu0 %7928
        %7930 = vadd.xlane.f32.xlu0 %v7888
        %v7931 = vpop.xlane.xlu0 %7930
        %7932 = vadd.xlane.f32.xlu0 %v7889
        %v7933 = vpop.xlane.xlu0 %7932
        %7934 = vadd.xlane.f32.xlu0 %v7890
        %v7935 = vpop.xlane.xlu0 %7934
        %7936 = vadd.xlane.f32.xlu0 %v7891
        %v7937 = vpop.xlane.xlu0 %7936
        %7938 = vadd.xlane.f32.xlu0 %v7892
        %v7939 = vpop.xlane.xlu0 %7938
        %7940 = vadd.xlane.f32.xlu0 %v7893
        %v7941 = vpop.xlane.xlu0 %7940
        %7942 = vadd.xlane.f32.xlu0 %v7894
        %v7943 = vpop.xlane.xlu0 %7942
        %7944 = vadd.xlane.f32.xlu0 %v7895
        %v7945 = vpop.xlane.xlu0 %7944
        %7946 = vadd.xlane.f32.xlu0 %v7896
        %v7947 = vpop.xlane.xlu0 %7946
        %7948 = vadd.xlane.f32.xlu0 %v7897
        %v7949 = vpop.xlane.xlu0 %7948
        %7950 = vadd.xlane.f32.xlu0 %v7898
        %v7951 = vpop.xlane.xlu0 %7950
        %7952 = vadd.xlane.f32.xlu0 %v7899
        %v7953 = vpop.xlane.xlu0 %7952
        %7954 = vadd.xlane.f32.xlu0 %v7900
        %v7955 = vpop.xlane.xlu0 %7954
        %7956 = vadd.xlane.f32.xlu0 %v7901
        %v7957 = vpop.xlane.xlu0 %7956
        %7958 = vadd.xlane.f32.xlu0 %v7902
        %v7959 = vpop.xlane.xlu0 %7958
        %7960 = vadd.xlane.f32.xlu0 %v7903
        %v7961 = vpop.xlane.xlu0 %7960
        %7962 = vadd.xlane.f32.xlu0 %v7904
        %v7963 = vpop.xlane.xlu0 %7962
        %7964 = vadd.xlane.f32.xlu0 %v7905
        %v7965 = vpop.xlane.xlu0 %7964
        %7966 = vadd.xlane.f32.xlu0 %v7906
        %v7967 = vpop.xlane.xlu0 %7966
        %7968 = vadd.xlane.f32.xlu0 %v7907
        %v7969 = vpop.xlane.xlu0 %7968
        %7970 = vadd.xlane.f32.xlu0 %v7908
        %v7971 = vpop.xlane.xlu0 %7970
        %7972 = vadd.xlane.f32.xlu0 %v7909
        %v7973 = vpop.xlane.xlu0 %7972
        %v7974 = vadd.f32 %v7809, %v7911
        %v7975 = vadd.f32 %v7810, %v7913
        %v7976 = vadd.f32 %v7811, %v7915
        %v7977 = vadd.f32 %v7812, %v7917
        %v7978 = vadd.f32 %v7813, %v7919
        %v7979 = vadd.f32 %v7814, %v7921
        %v7980 = vadd.f32 %v7815, %v7923
        %v7981 = vadd.f32 %v7816, %v7925
        %v7982 = vadd.f32 %v7817, %v7927
        %v7983 = vadd.f32 %v7818, %v7929
        %v7984 = vadd.f32 %v7819, %v7931
        %v7985 = vadd.f32 %v7820, %v7933
        %v7986 = vadd.f32 %v7821, %v7935
        %v7987 = vadd.f32 %v7822, %v7937
        %v7988 = vadd.f32 %v7823, %v7939
        %v7989 = vadd.f32 %v7824, %v7941
        %v7990 = vadd.f32 %v7825, %v7943
        %v7991 = vadd.f32 %v7826, %v7945
        %v7992 = vadd.f32 %v7827, %v7947
        %v7993 = vadd.f32 %v7828, %v7949
        %v7994 = vadd.f32 %v7829, %v7951
        %v7995 = vadd.f32 %v7830, %v7953
        %v7996 = vadd.f32 %v7831, %v7955
        %v7997 = vadd.f32 %v7832, %v7957
        %v7998 = vadd.f32 %v7833, %v7959
        %v7999 = vadd.f32 %v7834, %v7961
        %v8000 = vadd.f32 %v7835, %v7963
        %v8001 = vadd.f32 %v7836, %v7965
        %v8002 = vadd.f32 %v7837, %v7967
        %v8003 = vadd.f32 %v7838, %v7969
        %v8004 = vadd.f32 %v7839, %v7971
        %v8005 = vadd.f32 %v7840, %v7973
        %v8006 = vld [vmem:[%s883] sm:$0xff]
        %v8007 = vld [vmem:[%s883 + $0x8] sm:$0xff]
        %v8008 = vld [vmem:[%s883 + $0x18] sm:$0xff]
        %v8009 = vld [vmem:[%s883 + $0x20] sm:$0xff]
        %v8010 = vld [vmem:[%s883 + $0x30] sm:$0xff]
        %v8011 = vld [vmem:[%s883 + $0x38] sm:$0xff]
        %v8012 = vld [vmem:[%s883 + $0x48] sm:$0xff]
        %v8013 = vld [vmem:[%s883 + $0x50] sm:$0xff]
        %v8014 = vld [vmem:[%s883 + $0x60] sm:$0xff]
        %v8015 = vld [vmem:[%s883 + $0x68] sm:$0xff]
        %v8016 = vld [vmem:[%s883 + $0x78] sm:$0xff]
        %v8017 = vld [vmem:[%s883 + $0x80] sm:$0xff]
        %v8018 = vld [vmem:[%s883 + $0x90] sm:$0xff]
        %v8019 = vld [vmem:[%s883 + $0x98] sm:$0xff]
        %v8020 = vld [vmem:[%s883 + $0xa8] sm:$0xff]
        %v8021 = vld [vmem:[%s883 + $0xb0] sm:$0xff]
        %v8022 = vld [vmem:[%s883 + $0xc0] sm:$0xff]
        %v8023 = vld [vmem:[%s883 + $0xc8] sm:$0xff]
        %v8024 = vld [vmem:[%s883 + $0xd8] sm:$0xff]
        %v8025 = vld [vmem:[%s883 + $0xe0] sm:$0xff]
        %v8026 = vld [vmem:[%s883 + $0xf0] sm:$0xff]
        %v8027 = vld [vmem:[%s883 + $0xf8] sm:$0xff]
        %v8028 = vld [vmem:[%s883 + $0x108] sm:$0xff]
        %v8029 = vld [vmem:[%s883 + $0x110] sm:$0xff]
        %v8030 = vld [vmem:[%s883 + $0x120] sm:$0xff]
        %v8031 = vld [vmem:[%s883 + $0x128] sm:$0xff]
        %v8032 = vld [vmem:[%s883 + $0x138] sm:$0xff]
        %v8033 = vld [vmem:[%s883 + $0x140] sm:$0xff]
        %v8034 = vld [vmem:[%s883 + $0x150] sm:$0xff]
        %v8035 = vld [vmem:[%s883 + $0x158] sm:$0xff]
        %v8036 = vld [vmem:[%s883 + $0x168] sm:$0xff]
        %v8037 = vld [vmem:[%s883 + $0x170] sm:$0xff]
        %v8038 = vld [vmem:[%s7 + $0x6] sm:$0x1]
        %v8039 = vlaneseq
        %v8040 = vshrl.u32 %v8039, 7
        %v8041 = vsub.s32 0, %v8040
        %v8042 = vrot.slane %v8038, %v8041
        %v8043 = vmul.f32 %v8006, %v8042
        %v8044 = vmul.f32 %v8007, %v8042
        %v8045 = vmul.f32 %v8008, %v8042
        %v8046 = vmul.f32 %v8009, %v8042
        %v8047 = vmul.f32 %v8010, %v8042
        %v8048 = vmul.f32 %v8011, %v8042
        %v8049 = vmul.f32 %v8012, %v8042
        %v8050 = vmul.f32 %v8013, %v8042
        %v8051 = vmul.f32 %v8014, %v8042
        %v8052 = vmul.f32 %v8015, %v8042
        %v8053 = vmul.f32 %v8016, %v8042
        %v8054 = vmul.f32 %v8017, %v8042
        %v8055 = vmul.f32 %v8018, %v8042
        %v8056 = vmul.f32 %v8019, %v8042
        %v8057 = vmul.f32 %v8020, %v8042
        %v8058 = vmul.f32 %v8021, %v8042
        %v8059 = vmul.f32 %v8022, %v8042
        %v8060 = vmul.f32 %v8023, %v8042
        %v8061 = vmul.f32 %v8024, %v8042
        %v8062 = vmul.f32 %v8025, %v8042
        %v8063 = vmul.f32 %v8026, %v8042
        %v8064 = vmul.f32 %v8027, %v8042
        %v8065 = vmul.f32 %v8028, %v8042
        %v8066 = vmul.f32 %v8029, %v8042
        %v8067 = vmul.f32 %v8030, %v8042
        %v8068 = vmul.f32 %v8031, %v8042
        %v8069 = vmul.f32 %v8032, %v8042
        %v8070 = vmul.f32 %v8033, %v8042
        %v8071 = vmul.f32 %v8034, %v8042
        %v8072 = vmul.f32 %v8035, %v8042
        %v8073 = vmul.f32 %v8036, %v8042
        %v8074 = vmul.f32 %v8037, %v8042
        %8075 = vadd.xlane.f32.xlu0 %v8043
        %v8076 = vpop.xlane.xlu0 %8075
        %8077 = vadd.xlane.f32.xlu0 %v8044
        %v8078 = vpop.xlane.xlu0 %8077
        %8079 = vadd.xlane.f32.xlu0 %v8045
        %v8080 = vpop.xlane.xlu0 %8079
        %8081 = vadd.xlane.f32.xlu0 %v8046
        %v8082 = vpop.xlane.xlu0 %8081
        %8083 = vadd.xlane.f32.xlu0 %v8047
        %v8084 = vpop.xlane.xlu0 %8083
        %8085 = vadd.xlane.f32.xlu0 %v8048
        %v8086 = vpop.xlane.xlu0 %8085
        %8087 = vadd.xlane.f32.xlu0 %v8049
        %v8088 = vpop.xlane.xlu0 %8087
        %8089 = vadd.xlane.f32.xlu0 %v8050
        %v8090 = vpop.xlane.xlu0 %8089
        %8091 = vadd.xlane.f32.xlu0 %v8051
        %v8092 = vpop.xlane.xlu0 %8091
        %8093 = vadd.xlane.f32.xlu0 %v8052
        %v8094 = vpop.xlane.xlu0 %8093
        %8095 = vadd.xlane.f32.xlu0 %v8053
        %v8096 = vpop.xlane.xlu0 %8095
        %8097 = vadd.xlane.f32.xlu0 %v8054
        %v8098 = vpop.xlane.xlu0 %8097
        %8099 = vadd.xlane.f32.xlu0 %v8055
        %v8100 = vpop.xlane.xlu0 %8099
        %8101 = vadd.xlane.f32.xlu0 %v8056
        %v8102 = vpop.xlane.xlu0 %8101
        %8103 = vadd.xlane.f32.xlu0 %v8057
        %v8104 = vpop.xlane.xlu0 %8103
        %8105 = vadd.xlane.f32.xlu0 %v8058
        %v8106 = vpop.xlane.xlu0 %8105
        %8107 = vadd.xlane.f32.xlu0 %v8059
        %v8108 = vpop.xlane.xlu0 %8107
        %8109 = vadd.xlane.f32.xlu0 %v8060
        %v8110 = vpop.xlane.xlu0 %8109
        %8111 = vadd.xlane.f32.xlu0 %v8061
        %v8112 = vpop.xlane.xlu0 %8111
        %8113 = vadd.xlane.f32.xlu0 %v8062
        %v8114 = vpop.xlane.xlu0 %8113
        %8115 = vadd.xlane.f32.xlu0 %v8063
        %v8116 = vpop.xlane.xlu0 %8115
        %8117 = vadd.xlane.f32.xlu0 %v8064
        %v8118 = vpop.xlane.xlu0 %8117
        %8119 = vadd.xlane.f32.xlu0 %v8065
        %v8120 = vpop.xlane.xlu0 %8119
        %8121 = vadd.xlane.f32.xlu0 %v8066
        %v8122 = vpop.xlane.xlu0 %8121
        %8123 = vadd.xlane.f32.xlu0 %v8067
        %v8124 = vpop.xlane.xlu0 %8123
        %8125 = vadd.xlane.f32.xlu0 %v8068
        %v8126 = vpop.xlane.xlu0 %8125
        %8127 = vadd.xlane.f32.xlu0 %v8069
        %v8128 = vpop.xlane.xlu0 %8127
        %8129 = vadd.xlane.f32.xlu0 %v8070
        %v8130 = vpop.xlane.xlu0 %8129
        %8131 = vadd.xlane.f32.xlu0 %v8071
        %v8132 = vpop.xlane.xlu0 %8131
        %8133 = vadd.xlane.f32.xlu0 %v8072
        %v8134 = vpop.xlane.xlu0 %8133
        %8135 = vadd.xlane.f32.xlu0 %v8073
        %v8136 = vpop.xlane.xlu0 %8135
        %8137 = vadd.xlane.f32.xlu0 %v8074
        %v8138 = vpop.xlane.xlu0 %8137
        %v8139 = vadd.f32 %v7974, %v8076
        %v8140 = vadd.f32 %v7975, %v8078
        %v8141 = vadd.f32 %v7976, %v8080
        %v8142 = vadd.f32 %v7977, %v8082
        %v8143 = vadd.f32 %v7978, %v8084
        %v8144 = vadd.f32 %v7979, %v8086
        %v8145 = vadd.f32 %v7980, %v8088
        %v8146 = vadd.f32 %v7981, %v8090
        %v8147 = vadd.f32 %v7982, %v8092
        %v8148 = vadd.f32 %v7983, %v8094
        %v8149 = vadd.f32 %v7984, %v8096
        %v8150 = vadd.f32 %v7985, %v8098
        %v8151 = vadd.f32 %v7986, %v8100
        %v8152 = vadd.f32 %v7987, %v8102
        %v8153 = vadd.f32 %v7988, %v8104
        %v8154 = vadd.f32 %v7989, %v8106
        %v8155 = vadd.f32 %v7990, %v8108
        %v8156 = vadd.f32 %v7991, %v8110
        %v8157 = vadd.f32 %v7992, %v8112
        %v8158 = vadd.f32 %v7993, %v8114
        %v8159 = vadd.f32 %v7994, %v8116
        %v8160 = vadd.f32 %v7995, %v8118
        %v8161 = vadd.f32 %v7996, %v8120
        %v8162 = vadd.f32 %v7997, %v8122
        %v8163 = vadd.f32 %v7998, %v8124
        %v8164 = vadd.f32 %v7999, %v8126
        %v8165 = vadd.f32 %v8000, %v8128
        %v8166 = vadd.f32 %v8001, %v8130
        %v8167 = vadd.f32 %v8002, %v8132
        %v8168 = vadd.f32 %v8003, %v8134
        %v8169 = vadd.f32 %v8004, %v8136
        %v8170 = vadd.f32 %v8005, %v8138
        %v8171 = vld [vmem:[%s883 + $0x1] sm:$0xff]
        %v8172 = vld [vmem:[%s883 + $0x9] sm:$0xff]
        %v8173 = vld [vmem:[%s883 + $0x19] sm:$0xff]
        %v8174 = vld [vmem:[%s883 + $0x21] sm:$0xff]
        %v8175 = vld [vmem:[%s883 + $0x31] sm:$0xff]
        %v8176 = vld [vmem:[%s883 + $0x39] sm:$0xff]
        %v8177 = vld [vmem:[%s883 + $0x49] sm:$0xff]
        %v8178 = vld [vmem:[%s883 + $0x51] sm:$0xff]
        %v8179 = vld [vmem:[%s883 + $0x61] sm:$0xff]
        %v8180 = vld [vmem:[%s883 + $0x69] sm:$0xff]
        %v8181 = vld [vmem:[%s883 + $0x79] sm:$0xff]
        %v8182 = vld [vmem:[%s883 + $0x81] sm:$0xff]
        %v8183 = vld [vmem:[%s883 + $0x91] sm:$0xff]
        %v8184 = vld [vmem:[%s883 + $0x99] sm:$0xff]
        %v8185 = vld [vmem:[%s883 + $0xa9] sm:$0xff]
        %v8186 = vld [vmem:[%s883 + $0xb1] sm:$0xff]
        %v8187 = vld [vmem:[%s883 + $0xc1] sm:$0xff]
        %v8188 = vld [vmem:[%s883 + $0xc9] sm:$0xff]
        %v8189 = vld [vmem:[%s883 + $0xd9] sm:$0xff]
        %v8190 = vld [vmem:[%s883 + $0xe1] sm:$0xff]
        %v8191 = vld [vmem:[%s883 + $0xf1] sm:$0xff]
        %v8192 = vld [vmem:[%s883 + $0xf9] sm:$0xff]
        %v8193 = vld [vmem:[%s883 + $0x109] sm:$0xff]
        %v8194 = vld [vmem:[%s883 + $0x111] sm:$0xff]
        %v8195 = vld [vmem:[%s883 + $0x121] sm:$0xff]
        %v8196 = vld [vmem:[%s883 + $0x129] sm:$0xff]
        %v8197 = vld [vmem:[%s883 + $0x139] sm:$0xff]
        %v8198 = vld [vmem:[%s883 + $0x141] sm:$0xff]
        %v8199 = vld [vmem:[%s883 + $0x151] sm:$0xff]
        %v8200 = vld [vmem:[%s883 + $0x159] sm:$0xff]
        %v8201 = vld [vmem:[%s883 + $0x169] sm:$0xff]
        %v8202 = vld [vmem:[%s883 + $0x171] sm:$0xff]
        %v8203 = vld [vmem:[%s7 + $0x7] sm:$0x1]
        %v8204 = vlaneseq
        %v8205 = vshrl.u32 %v8204, 7
        %v8206 = vsub.s32 0, %v8205
        %v8207 = vrot.slane %v8203, %v8206
        %v8208 = vmul.f32 %v8171, %v8207
        %v8209 = vmul.f32 %v8172, %v8207
        %v8210 = vmul.f32 %v8173, %v8207
        %v8211 = vmul.f32 %v8174, %v8207
        %v8212 = vmul.f32 %v8175, %v8207
        %v8213 = vmul.f32 %v8176, %v8207
        %v8214 = vmul.f32 %v8177, %v8207
        %v8215 = vmul.f32 %v8178, %v8207
        %v8216 = vmul.f32 %v8179, %v8207
        %v8217 = vmul.f32 %v8180, %v8207
        %v8218 = vmul.f32 %v8181, %v8207
        %v8219 = vmul.f32 %v8182, %v8207
        %v8220 = vmul.f32 %v8183, %v8207
        %v8221 = vmul.f32 %v8184, %v8207
        %v8222 = vmul.f32 %v8185, %v8207
        %v8223 = vmul.f32 %v8186, %v8207
        %v8224 = vmul.f32 %v8187, %v8207
        %v8225 = vmul.f32 %v8188, %v8207
        %v8226 = vmul.f32 %v8189, %v8207
        %v8227 = vmul.f32 %v8190, %v8207
        %v8228 = vmul.f32 %v8191, %v8207
        %v8229 = vmul.f32 %v8192, %v8207
        %v8230 = vmul.f32 %v8193, %v8207
        %v8231 = vmul.f32 %v8194, %v8207
        %v8232 = vmul.f32 %v8195, %v8207
        %v8233 = vmul.f32 %v8196, %v8207
        %v8234 = vmul.f32 %v8197, %v8207
        %v8235 = vmul.f32 %v8198, %v8207
        %v8236 = vmul.f32 %v8199, %v8207
        %v8237 = vmul.f32 %v8200, %v8207
        %v8238 = vmul.f32 %v8201, %v8207
        %v8239 = vmul.f32 %v8202, %v8207
        %8240 = vadd.xlane.f32.xlu0 %v8208
        %v8241 = vpop.xlane.xlu0 %8240
        %8242 = vadd.xlane.f32.xlu0 %v8209
        %v8243 = vpop.xlane.xlu0 %8242
        %8244 = vadd.xlane.f32.xlu0 %v8210
        %v8245 = vpop.xlane.xlu0 %8244
        %8246 = vadd.xlane.f32.xlu0 %v8211
        %v8247 = vpop.xlane.xlu0 %8246
        %8248 = vadd.xlane.f32.xlu0 %v8212
        %v8249 = vpop.xlane.xlu0 %8248
        %8250 = vadd.xlane.f32.xlu0 %v8213
        %v8251 = vpop.xlane.xlu0 %8250
        %8252 = vadd.xlane.f32.xlu0 %v8214
        %v8253 = vpop.xlane.xlu0 %8252
        %8254 = vadd.xlane.f32.xlu0 %v8215
        %v8255 = vpop.xlane.xlu0 %8254
        %8256 = vadd.xlane.f32.xlu0 %v8216
        %v8257 = vpop.xlane.xlu0 %8256
        %8258 = vadd.xlane.f32.xlu0 %v8217
        %v8259 = vpop.xlane.xlu0 %8258
        %8260 = vadd.xlane.f32.xlu0 %v8218
        %v8261 = vpop.xlane.xlu0 %8260
        %8262 = vadd.xlane.f32.xlu0 %v8219
        %v8263 = vpop.xlane.xlu0 %8262
        %8264 = vadd.xlane.f32.xlu0 %v8220
        %v8265 = vpop.xlane.xlu0 %8264
        %8266 = vadd.xlane.f32.xlu0 %v8221
        %v8267 = vpop.xlane.xlu0 %8266
        %8268 = vadd.xlane.f32.xlu0 %v8222
        %v8269 = vpop.xlane.xlu0 %8268
        %8270 = vadd.xlane.f32.xlu0 %v8223
        %v8271 = vpop.xlane.xlu0 %8270
        %8272 = vadd.xlane.f32.xlu0 %v8224
        %v8273 = vpop.xlane.xlu0 %8272
        %8274 = vadd.xlane.f32.xlu0 %v8225
        %v8275 = vpop.xlane.xlu0 %8274
        %8276 = vadd.xlane.f32.xlu0 %v8226
        %v8277 = vpop.xlane.xlu0 %8276
        %8278 = vadd.xlane.f32.xlu0 %v8227
        %v8279 = vpop.xlane.xlu0 %8278
        %8280 = vadd.xlane.f32.xlu0 %v8228
        %v8281 = vpop.xlane.xlu0 %8280
        %8282 = vadd.xlane.f32.xlu0 %v8229
        %v8283 = vpop.xlane.xlu0 %8282
        %8284 = vadd.xlane.f32.xlu0 %v8230
        %v8285 = vpop.xlane.xlu0 %8284
        %8286 = vadd.xlane.f32.xlu0 %v8231
        %v8287 = vpop.xlane.xlu0 %8286
        %8288 = vadd.xlane.f32.xlu0 %v8232
        %v8289 = vpop.xlane.xlu0 %8288
        %8290 = vadd.xlane.f32.xlu0 %v8233
        %v8291 = vpop.xlane.xlu0 %8290
        %8292 = vadd.xlane.f32.xlu0 %v8234
        %v8293 = vpop.xlane.xlu0 %8292
        %8294 = vadd.xlane.f32.xlu0 %v8235
        %v8295 = vpop.xlane.xlu0 %8294
        %8296 = vadd.xlane.f32.xlu0 %v8236
        %v8297 = vpop.xlane.xlu0 %8296
        %8298 = vadd.xlane.f32.xlu0 %v8237
        %v8299 = vpop.xlane.xlu0 %8298
        %8300 = vadd.xlane.f32.xlu0 %v8238
        %v8301 = vpop.xlane.xlu0 %8300
        %8302 = vadd.xlane.f32.xlu0 %v8239
        %v8303 = vpop.xlane.xlu0 %8302
        %v8304 = vadd.f32 %v8139, %v8241
        %v8305 = vadd.f32 %v8140, %v8243
        %v8306 = vadd.f32 %v8141, %v8245
        %v8307 = vadd.f32 %v8142, %v8247
        %v8308 = vadd.f32 %v8143, %v8249
        %v8309 = vadd.f32 %v8144, %v8251
        %v8310 = vadd.f32 %v8145, %v8253
        %v8311 = vadd.f32 %v8146, %v8255
        %v8312 = vadd.f32 %v8147, %v8257
        %v8313 = vadd.f32 %v8148, %v8259
        %v8314 = vadd.f32 %v8149, %v8261
        %v8315 = vadd.f32 %v8150, %v8263
        %v8316 = vadd.f32 %v8151, %v8265
        %v8317 = vadd.f32 %v8152, %v8267
        %v8318 = vadd.f32 %v8153, %v8269
        %v8319 = vadd.f32 %v8154, %v8271
        %v8320 = vadd.f32 %v8155, %v8273
        %v8321 = vadd.f32 %v8156, %v8275
        %v8322 = vadd.f32 %v8157, %v8277
        %v8323 = vadd.f32 %v8158, %v8279
        %v8324 = vadd.f32 %v8159, %v8281
        %v8325 = vadd.f32 %v8160, %v8283
        %v8326 = vadd.f32 %v8161, %v8285
        %v8327 = vadd.f32 %v8162, %v8287
        %v8328 = vadd.f32 %v8163, %v8289
        %v8329 = vadd.f32 %v8164, %v8291
        %v8330 = vadd.f32 %v8165, %v8293
        %v8331 = vadd.f32 %v8166, %v8295
        %v8332 = vadd.f32 %v8167, %v8297
        %v8333 = vadd.f32 %v8168, %v8299
        %v8334 = vadd.f32 %v8169, %v8301
        %v8335 = vadd.f32 %v8170, %v8303
        %v8336 = vld [vmem:[%s883 + $0x2] sm:$0xff]
        %v8337 = vld [vmem:[%s883 + $0xa] sm:$0xff]
        %v8338 = vld [vmem:[%s883 + $0x1a] sm:$0xff]
        %v8339 = vld [vmem:[%s883 + $0x22] sm:$0xff]
        %v8340 = vld [vmem:[%s883 + $0x32] sm:$0xff]
        %v8341 = vld [vmem:[%s883 + $0x3a] sm:$0xff]
        %v8342 = vld [vmem:[%s883 + $0x4a] sm:$0xff]
        %v8343 = vld [vmem:[%s883 + $0x52] sm:$0xff]
        %v8344 = vld [vmem:[%s883 + $0x62] sm:$0xff]
        %v8345 = vld [vmem:[%s883 + $0x6a] sm:$0xff]
        %v8346 = vld [vmem:[%s883 + $0x7a] sm:$0xff]
        %v8347 = vld [vmem:[%s883 + $0x82] sm:$0xff]
        %v8348 = vld [vmem:[%s883 + $0x92] sm:$0xff]
        %v8349 = vld [vmem:[%s883 + $0x9a] sm:$0xff]
        %v8350 = vld [vmem:[%s883 + $0xaa] sm:$0xff]
        %v8351 = vld [vmem:[%s883 + $0xb2] sm:$0xff]
        %v8352 = vld [vmem:[%s883 + $0xc2] sm:$0xff]
        %v8353 = vld [vmem:[%s883 + $0xca] sm:$0xff]
        %v8354 = vld [vmem:[%s883 + $0xda] sm:$0xff]
        %v8355 = vld [vmem:[%s883 + $0xe2] sm:$0xff]
        %v8356 = vld [vmem:[%s883 + $0xf2] sm:$0xff]
        %v8357 = vld [vmem:[%s883 + $0xfa] sm:$0xff]
        %v8358 = vld [vmem:[%s883 + $0x10a] sm:$0xff]
        %v8359 = vld [vmem:[%s883 + $0x112] sm:$0xff]
        %v8360 = vld [vmem:[%s883 + $0x122] sm:$0xff]
        %v8361 = vld [vmem:[%s883 + $0x12a] sm:$0xff]
        %v8362 = vld [vmem:[%s883 + $0x13a] sm:$0xff]
        %v8363 = vld [vmem:[%s883 + $0x142] sm:$0xff]
        %v8364 = vld [vmem:[%s883 + $0x152] sm:$0xff]
        %v8365 = vld [vmem:[%s883 + $0x15a] sm:$0xff]
        %v8366 = vld [vmem:[%s883 + $0x16a] sm:$0xff]
        %v8367 = vld [vmem:[%s883 + $0x172] sm:$0xff]
        %v8368 = vld [vmem:[%s7 + $0x8] sm:$0x1]
        %v8369 = vlaneseq
        %v8370 = vshrl.u32 %v8369, 7
        %v8371 = vsub.s32 0, %v8370
        %v8372 = vrot.slane %v8368, %v8371
        %v8373 = vmul.f32 %v8336, %v8372
        %v8374 = vmul.f32 %v8337, %v8372
        %v8375 = vmul.f32 %v8338, %v8372
        %v8376 = vmul.f32 %v8339, %v8372
        %v8377 = vmul.f32 %v8340, %v8372
        %v8378 = vmul.f32 %v8341, %v8372
        %v8379 = vmul.f32 %v8342, %v8372
        %v8380 = vmul.f32 %v8343, %v8372
        %v8381 = vmul.f32 %v8344, %v8372
        %v8382 = vmul.f32 %v8345, %v8372
        %v8383 = vmul.f32 %v8346, %v8372
        %v8384 = vmul.f32 %v8347, %v8372
        %v8385 = vmul.f32 %v8348, %v8372
        %v8386 = vmul.f32 %v8349, %v8372
        %v8387 = vmul.f32 %v8350, %v8372
        %v8388 = vmul.f32 %v8351, %v8372
        %v8389 = vmul.f32 %v8352, %v8372
        %v8390 = vmul.f32 %v8353, %v8372
        %v8391 = vmul.f32 %v8354, %v8372
        %v8392 = vmul.f32 %v8355, %v8372
        %v8393 = vmul.f32 %v8356, %v8372
        %v8394 = vmul.f32 %v8357, %v8372
        %v8395 = vmul.f32 %v8358, %v8372
        %v8396 = vmul.f32 %v8359, %v8372
        %v8397 = vmul.f32 %v8360, %v8372
        %v8398 = vmul.f32 %v8361, %v8372
        %v8399 = vmul.f32 %v8362, %v8372
        %v8400 = vmul.f32 %v8363, %v8372
        %v8401 = vmul.f32 %v8364, %v8372
        %v8402 = vmul.f32 %v8365, %v8372
        %v8403 = vmul.f32 %v8366, %v8372
        %v8404 = vmul.f32 %v8367, %v8372
        %8405 = vadd.xlane.f32.xlu0 %v8373
        %v8406 = vpop.xlane.xlu0 %8405
        %8407 = vadd.xlane.f32.xlu0 %v8374
        %v8408 = vpop.xlane.xlu0 %8407
        %8409 = vadd.xlane.f32.xlu0 %v8375
        %v8410 = vpop.xlane.xlu0 %8409
        %8411 = vadd.xlane.f32.xlu0 %v8376
        %v8412 = vpop.xlane.xlu0 %8411
        %8413 = vadd.xlane.f32.xlu0 %v8377
        %v8414 = vpop.xlane.xlu0 %8413
        %8415 = vadd.xlane.f32.xlu0 %v8378
        %v8416 = vpop.xlane.xlu0 %8415
        %8417 = vadd.xlane.f32.xlu0 %v8379
        %v8418 = vpop.xlane.xlu0 %8417
        %8419 = vadd.xlane.f32.xlu0 %v8380
        %v8420 = vpop.xlane.xlu0 %8419
        %8421 = vadd.xlane.f32.xlu0 %v8381
        %v8422 = vpop.xlane.xlu0 %8421
        %8423 = vadd.xlane.f32.xlu0 %v8382
        %v8424 = vpop.xlane.xlu0 %8423
        %8425 = vadd.xlane.f32.xlu0 %v8383
        %v8426 = vpop.xlane.xlu0 %8425
        %8427 = vadd.xlane.f32.xlu0 %v8384
        %v8428 = vpop.xlane.xlu0 %8427
        %8429 = vadd.xlane.f32.xlu0 %v8385
        %v8430 = vpop.xlane.xlu0 %8429
        %8431 = vadd.xlane.f32.xlu0 %v8386
        %v8432 = vpop.xlane.xlu0 %8431
        %8433 = vadd.xlane.f32.xlu0 %v8387
        %v8434 = vpop.xlane.xlu0 %8433
        %8435 = vadd.xlane.f32.xlu0 %v8388
        %v8436 = vpop.xlane.xlu0 %8435
        %8437 = vadd.xlane.f32.xlu0 %v8389
        %v8438 = vpop.xlane.xlu0 %8437
        %8439 = vadd.xlane.f32.xlu0 %v8390
        %v8440 = vpop.xlane.xlu0 %8439
        %8441 = vadd.xlane.f32.xlu0 %v8391
        %v8442 = vpop.xlane.xlu0 %8441
        %8443 = vadd.xlane.f32.xlu0 %v8392
        %v8444 = vpop.xlane.xlu0 %8443
        %8445 = vadd.xlane.f32.xlu0 %v8393
        %v8446 = vpop.xlane.xlu0 %8445
        %8447 = vadd.xlane.f32.xlu0 %v8394
        %v8448 = vpop.xlane.xlu0 %8447
        %8449 = vadd.xlane.f32.xlu0 %v8395
        %v8450 = vpop.xlane.xlu0 %8449
        %8451 = vadd.xlane.f32.xlu0 %v8396
        %v8452 = vpop.xlane.xlu0 %8451
        %8453 = vadd.xlane.f32.xlu0 %v8397
        %v8454 = vpop.xlane.xlu0 %8453
        %8455 = vadd.xlane.f32.xlu0 %v8398
        %v8456 = vpop.xlane.xlu0 %8455
        %8457 = vadd.xlane.f32.xlu0 %v8399
        %v8458 = vpop.xlane.xlu0 %8457
        %8459 = vadd.xlane.f32.xlu0 %v8400
        %v8460 = vpop.xlane.xlu0 %8459
        %8461 = vadd.xlane.f32.xlu0 %v8401
        %v8462 = vpop.xlane.xlu0 %8461
        %8463 = vadd.xlane.f32.xlu0 %v8402
        %v8464 = vpop.xlane.xlu0 %8463
        %8465 = vadd.xlane.f32.xlu0 %v8403
        %v8466 = vpop.xlane.xlu0 %8465
        %8467 = vadd.xlane.f32.xlu0 %v8404
        %v8468 = vpop.xlane.xlu0 %8467
        %v8469 = vadd.f32 %v8304, %v8406
        %v8470 = vadd.f32 %v8305, %v8408
        %v8471 = vadd.f32 %v8306, %v8410
        %v8472 = vadd.f32 %v8307, %v8412
        %v8473 = vadd.f32 %v8308, %v8414
        %v8474 = vadd.f32 %v8309, %v8416
        %v8475 = vadd.f32 %v8310, %v8418
        %v8476 = vadd.f32 %v8311, %v8420
        %v8477 = vadd.f32 %v8312, %v8422
        %v8478 = vadd.f32 %v8313, %v8424
        %v8479 = vadd.f32 %v8314, %v8426
        %v8480 = vadd.f32 %v8315, %v8428
        %v8481 = vadd.f32 %v8316, %v8430
        %v8482 = vadd.f32 %v8317, %v8432
        %v8483 = vadd.f32 %v8318, %v8434
        %v8484 = vadd.f32 %v8319, %v8436
        %v8485 = vadd.f32 %v8320, %v8438
        %v8486 = vadd.f32 %v8321, %v8440
        %v8487 = vadd.f32 %v8322, %v8442
        %v8488 = vadd.f32 %v8323, %v8444
        %v8489 = vadd.f32 %v8324, %v8446
        %v8490 = vadd.f32 %v8325, %v8448
        %v8491 = vadd.f32 %v8326, %v8450
        %v8492 = vadd.f32 %v8327, %v8452
        %v8493 = vadd.f32 %v8328, %v8454
        %v8494 = vadd.f32 %v8329, %v8456
        %v8495 = vadd.f32 %v8330, %v8458
        %v8496 = vadd.f32 %v8331, %v8460
        %v8497 = vadd.f32 %v8332, %v8462
        %v8498 = vadd.f32 %v8333, %v8464
        %v8499 = vadd.f32 %v8334, %v8466
        %v8500 = vadd.f32 %v8335, %v8468
        %s8501 = sld [smem:[#allocation4]]
        %v8502 = vstv %s8501
        %v8503 = vadd.f32 %v8469, %v8502
        %v8504 = vadd.f32 %v8470, %v8502
        %v8505 = vadd.f32 %v8471, %v8502
        %v8506 = vadd.f32 %v8472, %v8502
        %v8507 = vadd.f32 %v8473, %v8502
        %v8508 = vadd.f32 %v8474, %v8502
        %v8509 = vadd.f32 %v8475, %v8502
        %v8510 = vadd.f32 %v8476, %v8502
        %v8511 = vadd.f32 %v8477, %v8502
        %v8512 = vadd.f32 %v8478, %v8502
        %v8513 = vadd.f32 %v8479, %v8502
        %v8514 = vadd.f32 %v8480, %v8502
        %v8515 = vadd.f32 %v8481, %v8502
        %v8516 = vadd.f32 %v8482, %v8502
        %v8517 = vadd.f32 %v8483, %v8502
        %v8518 = vadd.f32 %v8484, %v8502
        %v8519 = vadd.f32 %v8485, %v8502
        %v8520 = vadd.f32 %v8486, %v8502
        %v8521 = vadd.f32 %v8487, %v8502
        %v8522 = vadd.f32 %v8488, %v8502
        %v8523 = vadd.f32 %v8489, %v8502
        %v8524 = vadd.f32 %v8490, %v8502
        %v8525 = vadd.f32 %v8491, %v8502
        %v8526 = vadd.f32 %v8492, %v8502
        %v8527 = vadd.f32 %v8493, %v8502
        %v8528 = vadd.f32 %v8494, %v8502
        %v8529 = vadd.f32 %v8495, %v8502
        %v8530 = vadd.f32 %v8496, %v8502
        %v8531 = vadd.f32 %v8497, %v8502
        %v8532 = vadd.f32 %v8498, %v8502
        %v8533 = vadd.f32 %v8499, %v8502
        %v8534 = vadd.f32 %v8500, %v8502
        %8535 = vst.msk [vmem:[%s377] sm:$0xff] %vm466, %v8503
        %8536 = vst.msk [vmem:[%s377 + $0x8] sm:$0xff] %vm466, %v8504
        %8537 = vst.msk [vmem:[%s377 + $0x10] sm:$0xff] %vm466, %v8505
        %8538 = vst.msk [vmem:[%s377 + $0x18] sm:$0xff] %vm466, %v8506
        %8539 = vst.msk [vmem:[%s377 + $0x20] sm:$0xff] %vm466, %v8507
        %8540 = vst.msk [vmem:[%s377 + $0x28] sm:$0xff] %vm466, %v8508
        %8541 = vst.msk [vmem:[%s377 + $0x30] sm:$0xff] %vm466, %v8509
        %8542 = vst.msk [vmem:[%s377 + $0x38] sm:$0xff] %vm466, %v8510
        %8543 = vst.msk [vmem:[%s377 + $0x40] sm:$0xff] %vm466, %v8511
        %8544 = vst.msk [vmem:[%s377 + $0x48] sm:$0xff] %vm466, %v8512
        %8545 = vst.msk [vmem:[%s377 + $0x50] sm:$0xff] %vm466, %v8513
        %8546 = vst.msk [vmem:[%s377 + $0x58] sm:$0xff] %vm466, %v8514
        %8547 = vst.msk [vmem:[%s377 + $0x60] sm:$0xff] %vm466, %v8515
        %8548 = vst.msk [vmem:[%s377 + $0x68] sm:$0xff] %vm466, %v8516
        %8549 = vst.msk [vmem:[%s377 + $0x70] sm:$0xff] %vm466, %v8517
        %8550 = vst.msk [vmem:[%s377 + $0x78] sm:$0xff] %vm466, %v8518
        %8551 = vst.msk [vmem:[%s377 + $0x80] sm:$0xff] %vm466, %v8519
        %8552 = vst.msk [vmem:[%s377 + $0x88] sm:$0xff] %vm466, %v8520
        %8553 = vst.msk [vmem:[%s377 + $0x90] sm:$0xff] %vm466, %v8521
        %8554 = vst.msk [vmem:[%s377 + $0x98] sm:$0xff] %vm466, %v8522
        %8555 = vst.msk [vmem:[%s377 + $0xa0] sm:$0xff] %vm466, %v8523
        %8556 = vst.msk [vmem:[%s377 + $0xa8] sm:$0xff] %vm466, %v8524
        %8557 = vst.msk [vmem:[%s377 + $0xb0] sm:$0xff] %vm466, %v8525
        %8558 = vst.msk [vmem:[%s377 + $0xb8] sm:$0xff] %vm466, %v8526
        %8559 = vst.msk [vmem:[%s377 + $0xc0] sm:$0xff] %vm466, %v8527
        %8560 = vst.msk [vmem:[%s377 + $0xc8] sm:$0xff] %vm466, %v8528
        %8561 = vst.msk [vmem:[%s377 + $0xd0] sm:$0xff] %vm466, %v8529
        %8562 = vst.msk [vmem:[%s377 + $0xd8] sm:$0xff] %vm466, %v8530
        %8563 = vst.msk [vmem:[%s377 + $0xe0] sm:$0xff] %vm466, %v8531
        %8564 = vst.msk [vmem:[%s377 + $0xe8] sm:$0xff] %vm466, %v8532
        %8565 = vst.msk [vmem:[%s377 + $0xf0] sm:$0xff] %vm466, %v8533
        %8566 = vst.msk [vmem:[%s377 + $0xf8] sm:$0xff] %vm466, %v8534
        %p8567 = scmp.lt.s32.totalorder %s23, 1
        %s8568 = scalar_select %p8567, %s23, 1
        %s8569 = smul.addr %s8568, 32
        %s8570 = smul.addr %s8569, 8
        %s8571 = scalar_lea.vmem %s9, %s8570
        // Predicated region
        $region69: #{tpu_custom_call.1} parent=55 // pred_check
          %p8572 = pneg %p235
        $region70: #{tpu_custom_call.1} parent=55 // pred_check_branch
          %8574 = sbr.rel (%p8572) target = $region72
        $region71: #{tpu_custom_call.1} parent=55 // pred_region
          _
        $region72: #{tpu_custom_call.1} parent=55 // pred_fallthru
          _
      $region56: #{tpu_custom_call.1} parent=5 // pred_fallthru
        _
      %p8575 = scmp.le.s32.totalorder 2, %s18
      // Predicated region
      $region73: #{tpu_custom_call.1} parent=5 // pred_check
        %p8576 = pneg %p8575
      $region74: #{tpu_custom_call.1} parent=5 // pred_check_branch
        %8578 = sbr.rel (%p8576) target = $region76
      $region75: #{tpu_custom_call.1} parent=5 // pred_region
        %s8579 = ssub.s32 %s18, 2
        // Predicated region
        $region77: #{tpu_custom_call.1} parent=75 // pred_check
          %p8580 = pneg %p241
        $region78: #{tpu_custom_call.1} parent=75 // pred_check_branch
          %8582 = sbr.rel (%p8580) target = $region80
        $region79: #{tpu_custom_call.1} parent=75 // pred_region
          %p8583 = scmp.lt.s32.totalorder %s24, 1
          %s8584 = scalar_select %p8583, %s24, 1
          %s8585 = smul.addr %s8584, 32
          %s8586 = smul.addr %s8585, 8
          %s8587 = scalar_lea.vmem %s9, %s8586
        $region80: #{tpu_custom_call.1} parent=75 // pred_fallthru
          _
      $region76: #{tpu_custom_call.1} parent=5 // pred_fallthru
        _
    $region6: #{tpu_custom_call.1} parent=1 // loop_footer
      %s22 = sadd.s32 1, %s18
    $region7: #{tpu_custom_call.1} parent=1 // loop_footer_branch
      %17 = sbr.rel target = $region3
    $region8: #{tpu_custom_call.1} parent=1 // loop_exit
      _
    %8588 = vsyncpa [#allocation6], 1
    %s8589 = scalar_lea.sflag [#allocation6], 1
    %8590 = vsyncpa %s8589, 1
    %8591 = vsyncpa [#allocation8], 1

</llo_original>
